<compile_context>
chip_gen: v7x
topology: tpu7x:2x2x1
jax: 0.10.0
libtpu: 0.0.40
codegen_flags: <defaults>
</compile_context>

<pallas_src>
import functools

import jax
import jax.numpy as jnp
from jax import lax
from jax.experimental import pallas as pl
from jax.experimental.pallas import tpu as pltpu

H = W = 56           # spatial size fixed by Linear(mid_channels * 56 * 56, 30)
WP = 64              # padded width (was 128): half-tile, halves dead lanes
HP = 60              # padded height: >= 59 keeps tap slices in bounds, 60*64 % 128 == 0
HWP = H * WP         # 3584 activation lanes per conv output channel (28 lane tiles)
HPWP = HP * WP       # 3840 lanes per padded input channel
N1, N2 = 30, 10      # MLP hidden widths
MAX_BBLK = 8         # images per grid step (M dim of the MLP matmuls)


# ---------------------------------------------------------------------------
# Fused kernel: conv3x3 + BN + ReLU + Linear/ReLU/Linear/ReLU/Linear, Bblk imgs/step
# ---------------------------------------------------------------------------
def _make_kernel(bblk, cin, cmid):
    def kernel(x_ref, wc_ref, shift_ref, w1_ref, b1_ref, w2_ref, b2_ref,
               w3_ref, b3_ref, o_ref, act_scr):
        # x_ref    : (bblk, cin, HPWP) f32  row-major flattened zero-padded images
        # wc_ref   : (3, cmid, 3*cin)  f32  conv weights (BN scale folded), ky-major
        # shift_ref: (cmid, 1)         f32  folded BN shift (+ conv bias)
        # w1_ref   : (N1, cmid*HWP)    bf16 Linear-1 weights, padded flatten order
        # act_scr  : (bblk, cmid*HWP)  bf16 conv+BN+ReLU activations, one row/image
        shift = shift_ref[...]
        for b in range(bblk):
            # 3x3 conv, padding=1: tap (ky, kx) of the flattened padded image is
            # the lane slice starting at ky*WP + kx.  The three taps of a kernel
            # row ky are merged along K (3 matmuls/image instead of 9) and the
            # tap sum is value-accumulated (no VMEM RMW accumulator).
            acc = None
            for ky in range(3):
                base = ky * WP
                rhs = jnp.concatenate(
                    [x_ref[b, :, base + kx: base + kx + HWP] for kx in range(3)],
                    axis=0)                                        # (3*cin, HWP)
                part = jnp.dot(wc_ref[ky], rhs,
                               preferred_element_type=jnp.float32)  # (cmid, HWP)
                acc = part if acc is None else acc + part
            act = jnp.maximum(acc + shift, 0.0).astype(jnp.bfloat16)
            # PyTorch flatten order (c, y, x): lane-concat the channel rows.
            # HWP is a multiple of 128, so every placement is tile aligned.
            row = jnp.concatenate([act[c:c + 1, :] for c in range(cmid)], axis=1)
            act_scr[b:b + 1, :] = row                              # (1, cmid*HWP)
        # Linear(mid*56*56, 30): ONE trans-B contraction with M = bblk.  The
        # padded lanes (x >= 56) hit zero columns of w1 and contribute nothing.
        h = lax.dot_general(act_scr[...], w1_ref[...],
                            dimension_numbers=(((1,), (1,)), ((), ())),
                            preferred_element_type=jnp.float32) + b1_ref[...]
        h = jnp.maximum(h, 0.0)
        h = jnp.dot(h, w2_ref[...], preferred_element_type=jnp.float32) + b2_ref[...]
        h = jnp.maximum(h, 0.0)
        o_ref[...] = (jnp.dot(h, w3_ref[...], preferred_element_type=jnp.float32)
                      + b3_ref[...])
    return kernel


# ---------------------------------------------------------------------------
# Forward wrapper
# ---------------------------------------------------------------------------
@jax.jit
def class_head_forward(x_nchw, params):
    B, cin, h, w = x_nchw.shape
    assert (h, w) == (H, W), "ClassHead requires 56x56 spatial input"
    cmid = params["shift"].shape[0]
    out_c = params["w3"].shape[1]
    bblk = min(MAX_BBLK, B)
    b_pad = -(-B // bblk) * bblk
    # Zero-pad batch to a multiple of bblk and spatial to (HP, WP) so conv taps
    # become pure lane offsets of the row-major flattened image.
    # TODO(synk): the pad/reshape is one cheap XLA copy of x (~1.2x inflation);
    # it could be folded into the kernel with row-strided stores into a zeroed
    # VMEM scratch if it ever shows up in a profile.
    xp = jnp.pad(x_nchw, ((0, b_pad - B), (0, 0),
                          (1, HP - H - 1), (1, WP - W - 1)))
    xflat = xp.reshape(b_pad, cin, HPWP)

    # Grid-invariant weights: constant index_map + single buffering.
    wspec = functools.partial(pl.BlockSpec, pipeline_mode=pl.Buffered(1))
    out = pl.pallas_call(
        _make_kernel(bblk, cin, cmid),
        out_shape=jax.ShapeDtypeStruct((b_pad, out_c), jnp.float32),
        grid=(b_pad // bblk,),
        in_specs=[
            pl.BlockSpec((bblk, cin, HPWP), lambda i: (i, 0, 0)),
            wspec((3, cmid, 3 * cin), lambda i: (0, 0, 0)),
            wspec((cmid, 1), lambda i: (0, 0)),
            wspec((N1, cmid * HWP), lambda i: (0, 0)),
            wspec((1, N1), lambda i: (0, 0)),
            wspec((N1, N2), lambda i: (0, 0)),
            wspec((1, N2), lambda i: (0, 0)),
            wspec((N2, out_c), lambda i: (0, 0)),
            wspec((1, out_c), lambda i: (0, 0)),
        ],
        out_specs=pl.BlockSpec((bblk, out_c), lambda i: (i, 0)),
        scratch_shapes=[pltpu.VMEM((bblk, cmid * HWP), jnp.bfloat16)],
        compiler_params=pltpu.CompilerParams(
            dimension_semantics=("parallel",),
            vmem_limit_bytes=64 * 1024 * 1024),
    )(xflat, params["wc"], params["shift"], params["w1"], params["b1"],
      params["w2"], params["b2"], params["w3"], params["b3"])
    return out[:B]


# ---------------------------------------------------------------------------
# Parameter setup (PyTorch-layout params + kernel-ready conversions)
# ---------------------------------------------------------------------------
def init_params(key, in_channels, out_channels):
    assert in_channels >= 4, "in_channels // 4 must be >= 1"
    mid = in_channels // 4
    feat = mid * H * W
    ks = jax.random.split(key, 12)
    # --- PyTorch-layout parameters (what the nn.Module would hold) ---
    wc_t = jax.random.normal(ks[0], (mid, in_channels, 3, 3), jnp.float32) * 0.05
    bc_t = jax.random.normal(ks[1], (mid,), jnp.float32) * 0.05
    gamma = 1.0 + 0.1 * jax.random.normal(ks[2], (mid,), jnp.float32)
    beta = 0.1 * jax.random.normal(ks[3], (mid,), jnp.float32)
    mean = 0.1 * jax.random.normal(ks[4], (mid,), jnp.float32)
    var = jnp.abs(jax.random.normal(ks[5], (mid,), jnp.float32)) + 0.5
    w1_t = jax.random.normal(ks[6], (N1, feat), jnp.float32) * 0.02
    b1_t = jax.random.normal(ks[7], (N1,), jnp.float32) * 0.02
    w2_t = jax.random.normal(ks[8], (N2, N1), jnp.float32) * 0.1
    b2_t = jax.random.normal(ks[9], (N2,), jnp.float32) * 0.1
    w3_t = jax.random.normal(ks[10], (out_channels, N2), jnp.float32) * 0.1
    b3_t = jax.random.normal(ks[11], (out_channels,), jnp.float32) * 0.1
    torch_params = dict(wc=wc_t, bc=bc_t, gamma=gamma, beta=beta, mean=mean,
                        var=var, w1=w1_t, b1=b1_t, w2=w2_t, b2=b2_t,
                        w3=w3_t, b3=b3_t)

    # --- kernel-ready parameters ---
    s = gamma / jnp.sqrt(var + 1e-5)                          # BN scale
    # conv weights OIHW -> (ky, out, kx*in): row-ky merged tap layout, BN scale folded
    wc = jnp.transpose(wc_t, (2, 0, 3, 1)).reshape(3, mid, 3 * in_channels)
    wc = wc * s[None, :, None]
    shift = (beta + (bc_t - mean) * s).reshape(mid, 1)
    # Linear-1 weights in the width-padded (c, y, x<WP) flatten order, bf16
    w1 = w1_t.reshape(N1, mid, H, W)
    w1 = jnp.pad(w1, ((0, 0), (0, 0), (0, 0), (0, WP - W)))
    w1 = w1.reshape(N1, mid * HWP).astype(jnp.bfloat16)
    kernel_params = dict(wc=wc, shift=shift, w1=w1,
                         b1=b1_t.reshape(1, N1), w2=w2_t.T,
                         b2=b2_t.reshape(1, N2), w3=w3_t.T,
                         b3=b3_t.reshape(1, out_channels))
    return kernel_params, torch_params


def reference_forward(x, tp):
    """Pure-JAX reference with PyTorch semantics (inference-mode BN)."""
    hi = lax.Precision.HIGHEST
    y = lax.conv_general_dilated(x, tp["wc"], window_strides=(1, 1),
                                 padding=((1, 1), (1, 1)),
                                 dimension_numbers=("NCHW", "OIHW", "NCHW"),
                                 precision=hi)
    y = y + tp["bc"].reshape(1, -1, 1, 1)
    y = ((y - tp["mean"].reshape(1, -1, 1, 1))
         / jnp.sqrt(tp["var"].reshape(1, -1, 1, 1) + 1e-5)
         * tp["gamma"].reshape(1, -1, 1, 1) + tp["beta"].reshape(1, -1, 1, 1))
    y = jnp.maximum(y, 0.0).reshape(x.shape[0], -1)
    y = jnp.maximum(jnp.dot(y, tp["w1"].T, precision=hi) + tp["b1"], 0.0)
    y = jnp.maximum(jnp.dot(y, tp["w2"].T, precision=hi) + tp["b2"], 0.0)
    return jnp.dot(y, tp["w3"].T, precision=hi) + tp["b3"]


if __name__ == "__main__":
    in_channels, out_channels, batch = 8, 10, 2
    key = jax.random.PRNGKey(0)
    kx, kp = jax.random.split(key)
    x = jax.random.normal(kx, (batch, in_channels, H, W), jnp.float32)
    kernel_params, torch_params = init_params(kp, in_channels, out_channels)

    out = class_head_forward(x, kernel_params)
    out = jax.block_until_ready(out)

    assert out.shape == (batch, out_channels)
    assert bool(jnp.all(jnp.isfinite(out)))
    ref = reference_forward(x, torch_params)
    max_diff = float(jnp.max(jnp.abs(out - ref)))
    assert bool(jnp.allclose(out, ref, rtol=2e-2, atol=2e-2)), \
        f"mismatch vs reference, max abs diff {max_diff}"
    print("KERNEL_OK")
</pallas_src>

<mosaic_0001>
module attributes {stable_mosaic.version = 11 : i64} {
  func.func @kernel(%arg0: i32, %arg1: memref<2x8x3840xf32, #tpu.memory_space<vmem>>, %arg2: memref<3x2x24xf32, #tpu.memory_space<vmem>>, %arg3: memref<2x1xf32, #tpu.memory_space<vmem>>, %arg4: memref<30x7168xbf16, #tpu.memory_space<vmem>>, %arg5: memref<1x30xf32, #tpu.memory_space<vmem>>, %arg6: memref<30x10xf32, #tpu.memory_space<vmem>>, %arg7: memref<1x10xf32, #tpu.memory_space<vmem>>, %arg8: memref<10x10xf32, #tpu.memory_space<vmem>>, %arg9: memref<1x10xf32, #tpu.memory_space<vmem>>, %arg10: memref<2x10xf32, #tpu.memory_space<vmem>>, %arg11: memref<2x7168xbf16, #tpu.memory_space<vmem>>) attributes {dimension_semantics = [#tpu.dimension_semantics<parallel>], iteration_bounds = array<i64: 1>, scalar_prefetch = 0 : i64, scratch_operands = 1 : i64, tpu.core_type = #tpu.core_type<tc>, window_params = [{transform_indices = @transform_0, window_bounds = array<i64: 2, 8, 3840>}, {pipeline_mode = #tpu.pipeline_mode<synchronous>, transform_indices = @transform_1, window_bounds = array<i64: 3, 2, 24>}, {pipeline_mode = #tpu.pipeline_mode<synchronous>, transform_indices = @transform_2, window_bounds = array<i64: 2, 1>}, {pipeline_mode = #tpu.pipeline_mode<synchronous>, transform_indices = @transform_3, window_bounds = array<i64: 30, 7168>}, {pipeline_mode = #tpu.pipeline_mode<synchronous>, transform_indices = @transform_4, window_bounds = array<i64: 1, 30>}, {pipeline_mode = #tpu.pipeline_mode<synchronous>, transform_indices = @transform_5, window_bounds = array<i64: 30, 10>}, {pipeline_mode = #tpu.pipeline_mode<synchronous>, transform_indices = @transform_6, window_bounds = array<i64: 1, 10>}, {pipeline_mode = #tpu.pipeline_mode<synchronous>, transform_indices = @transform_7, window_bounds = array<i64: 10, 10>}, {pipeline_mode = #tpu.pipeline_mode<synchronous>, transform_indices = @transform_8, window_bounds = array<i64: 1, 10>}, {transform_indices = @transform_9, window_bounds = array<i64: 2, 10>}]} {
    %c0 = arith.constant 0 : index
    %c0_0 = arith.constant 0 : index
    %0 = vector.load %arg3[%c0, %c0_0] : memref<2x1xf32, #tpu.memory_space<vmem>>, vector<2x1xf32>
    %c0_1 = arith.constant 0 : index
    %c0_2 = arith.constant 0 : index
    %c0_3 = arith.constant 0 : index
    %1 = vector.load %arg1[%c0_1, %c0_2, %c0_3] : memref<2x8x3840xf32, #tpu.memory_space<vmem>>, vector<1x8x3584xf32>
    %2 = vector.shape_cast %1 : vector<1x8x3584xf32> to vector<8x3584xf32>
    %c0_4 = arith.constant 0 : index
    %c0_5 = arith.constant 0 : index
    %c1 = arith.constant 1 : index
    %3 = vector.load %arg1[%c0_4, %c0_5, %c1] : memref<2x8x3840xf32, #tpu.memory_space<vmem>>, vector<1x8x3584xf32>
    %4 = vector.shape_cast %3 : vector<1x8x3584xf32> to vector<8x3584xf32>
    %c0_6 = arith.constant 0 : index
    %c0_7 = arith.constant 0 : index
    %c2 = arith.constant 2 : index
    %5 = vector.load %arg1[%c0_6, %c0_7, %c2] : memref<2x8x3840xf32, #tpu.memory_space<vmem>>, vector<1x8x3584xf32>
    %6 = vector.shape_cast %5 : vector<1x8x3584xf32> to vector<8x3584xf32>
    %7 = tpu.concatenate %2, %4, %6 in 0 : vector<8x3584xf32>, vector<8x3584xf32>, vector<8x3584xf32> -> vector<24x3584xf32>
    %c0_8 = arith.constant 0 : index
    %c0_9 = arith.constant 0 : index
    %c0_10 = arith.constant 0 : index
    %8 = vector.load %arg2[%c0_8, %c0_9, %c0_10] : memref<3x2x24xf32, #tpu.memory_space<vmem>>, vector<1x2x24xf32>
    %9 = vector.shape_cast %8 : vector<1x2x24xf32> to vector<2x24xf32>
    %cst = arith.constant dense<0.000000e+00> : vector<2x3584xf32>
    %10 = tpu.matmul %9, %7, %cst {dimension_numbers = #tpu.dot_dimension_numbers<[1], [0], [0], [1], [0, 0, 1, 1], [], []>} : vector<2x24xf32>, vector<24x3584xf32>, vector<2x3584xf32> -> vector<2x3584xf32>
    %c0_11 = arith.constant 0 : index
    %c0_12 = arith.constant 0 : index
    %c64 = arith.constant 64 : index
    %11 = vector.load %arg1[%c0_11, %c0_12, %c64] : memref<2x8x3840xf32, #tpu.memory_space<vmem>>, vector<1x8x3584xf32>
    %12 = vector.shape_cast %11 : vector<1x8x3584xf32> to vector<8x3584xf32>
    %c0_13 = arith.constant 0 : index
    %c0_14 = arith.constant 0 : index
    %c65 = arith.constant 65 : index
    %13 = vector.load %arg1[%c0_13, %c0_14, %c65] : memref<2x8x3840xf32, #tpu.memory_space<vmem>>, vector<1x8x3584xf32>
    %14 = vector.shape_cast %13 : vector<1x8x3584xf32> to vector<8x3584xf32>
    %c0_15 = arith.constant 0 : index
    %c0_16 = arith.constant 0 : index
    %c66 = arith.constant 66 : index
    %15 = vector.load %arg1[%c0_15, %c0_16, %c66] : memref<2x8x3840xf32, #tpu.memory_space<vmem>>, vector<1x8x3584xf32>
    %16 = vector.shape_cast %15 : vector<1x8x3584xf32> to vector<8x3584xf32>
    %17 = tpu.concatenate %12, %14, %16 in 0 : vector<8x3584xf32>, vector<8x3584xf32>, vector<8x3584xf32> -> vector<24x3584xf32>
    %c1_17 = arith.constant 1 : index
    %c0_18 = arith.constant 0 : index
    %c0_19 = arith.constant 0 : index
    %18 = vector.load %arg2[%c1_17, %c0_18, %c0_19] : memref<3x2x24xf32, #tpu.memory_space<vmem>>, vector<1x2x24xf32>
    %19 = vector.shape_cast %18 : vector<1x2x24xf32> to vector<2x24xf32>
    %cst_20 = arith.constant dense<0.000000e+00> : vector<2x3584xf32>
    %20 = tpu.matmul %19, %17, %cst_20 {dimension_numbers = #tpu.dot_dimension_numbers<[1], [0], [0], [1], [0, 0, 1, 1], [], []>} : vector<2x24xf32>, vector<24x3584xf32>, vector<2x3584xf32> -> vector<2x3584xf32>
    %21 = arith.addf %10, %20 : vector<2x3584xf32>
    %c0_21 = arith.constant 0 : index
    %c0_22 = arith.constant 0 : index
    %c128 = arith.constant 128 : index
    %22 = vector.load %arg1[%c0_21, %c0_22, %c128] : memref<2x8x3840xf32, #tpu.memory_space<vmem>>, vector<1x8x3584xf32>
    %23 = vector.shape_cast %22 : vector<1x8x3584xf32> to vector<8x3584xf32>
    %c0_23 = arith.constant 0 : index
    %c0_24 = arith.constant 0 : index
    %c129 = arith.constant 129 : index
    %24 = vector.load %arg1[%c0_23, %c0_24, %c129] : memref<2x8x3840xf32, #tpu.memory_space<vmem>>, vector<1x8x3584xf32>
    %25 = vector.shape_cast %24 : vector<1x8x3584xf32> to vector<8x3584xf32>
    %c0_25 = arith.constant 0 : index
    %c0_26 = arith.constant 0 : index
    %c130 = arith.constant 130 : index
    %26 = vector.load %arg1[%c0_25, %c0_26, %c130] : memref<2x8x3840xf32, #tpu.memory_space<vmem>>, vector<1x8x3584xf32>
    %27 = vector.shape_cast %26 : vector<1x8x3584xf32> to vector<8x3584xf32>
    %28 = tpu.concatenate %23, %25, %27 in 0 : vector<8x3584xf32>, vector<8x3584xf32>, vector<8x3584xf32> -> vector<24x3584xf32>
    %c2_27 = arith.constant 2 : index
    %c0_28 = arith.constant 0 : index
    %c0_29 = arith.constant 0 : index
    %29 = vector.load %arg2[%c2_27, %c0_28, %c0_29] : memref<3x2x24xf32, #tpu.memory_space<vmem>>, vector<1x2x24xf32>
    %30 = vector.shape_cast %29 : vector<1x2x24xf32> to vector<2x24xf32>
    %cst_30 = arith.constant dense<0.000000e+00> : vector<2x3584xf32>
    %31 = tpu.matmul %30, %28, %cst_30 {dimension_numbers = #tpu.dot_dimension_numbers<[1], [0], [0], [1], [0, 0, 1, 1], [], []>} : vector<2x24xf32>, vector<24x3584xf32>, vector<2x3584xf32> -> vector<2x3584xf32>
    %32 = arith.addf %21, %31 : vector<2x3584xf32>
    %33 = vector.broadcast %0 : vector<2x1xf32> to vector<2x3584xf32>
    %34 = arith.addf %32, %33 : vector<2x3584xf32>
    %cst_31 = arith.constant 0.000000e+00 : f32
    %35 = vector.broadcast %cst_31 : f32 to vector<2x3584xf32>
    %36 = arith.maximumf %34, %35 : vector<2x3584xf32>
    %37 = arith.truncf %36 : vector<2x3584xf32> to vector<2x3584xbf16>
    %38 = vector.extract_strided_slice %37 {offsets = [0, 0], sizes = [1, 3584], strides = [1, 1]} : vector<2x3584xbf16> to vector<1x3584xbf16>
    %39 = vector.extract_strided_slice %37 {offsets = [1, 0], sizes = [1, 3584], strides = [1, 1]} : vector<2x3584xbf16> to vector<1x3584xbf16>
    %40 = tpu.concatenate %38, %39 in 1 : vector<1x3584xbf16>, vector<1x3584xbf16> -> vector<1x7168xbf16>
    %c0_32 = arith.constant 0 : index
    %c0_33 = arith.constant 0 : index
    %41 = vector.load %arg11[%c0_32, %c0_33] : memref<2x7168xbf16, #tpu.memory_space<vmem>>, vector<1x7168xbf16>
    tpu.vector_store %arg11[%c0_32, %c0_33], %40 {strides = array<i32>} : memref<2x7168xbf16, #tpu.memory_space<vmem>>, vector<1x7168xbf16>,
    %c1_34 = arith.constant 1 : index
    %c0_35 = arith.constant 0 : index
    %c0_36 = arith.constant 0 : index
    %42 = vector.load %arg1[%c1_34, %c0_35, %c0_36] : memref<2x8x3840xf32, #tpu.memory_space<vmem>>, vector<1x8x3584xf32>
    %43 = vector.shape_cast %42 : vector<1x8x3584xf32> to vector<8x3584xf32>
    %c1_37 = arith.constant 1 : index
    %c0_38 = arith.constant 0 : index
    %c1_39 = arith.constant 1 : index
    %44 = vector.load %arg1[%c1_37, %c0_38, %c1_39] : memref<2x8x3840xf32, #tpu.memory_space<vmem>>, vector<1x8x3584xf32>
    %45 = vector.shape_cast %44 : vector<1x8x3584xf32> to vector<8x3584xf32>
    %c1_40 = arith.constant 1 : index
    %c0_41 = arith.constant 0 : index
    %c2_42 = arith.constant 2 : index
    %46 = vector.load %arg1[%c1_40, %c0_41, %c2_42] : memref<2x8x3840xf32, #tpu.memory_space<vmem>>, vector<1x8x3584xf32>
    %47 = vector.shape_cast %46 : vector<1x8x3584xf32> to vector<8x3584xf32>
    %48 = tpu.concatenate %43, %45, %47 in 0 : vector<8x3584xf32>, vector<8x3584xf32>, vector<8x3584xf32> -> vector<24x3584xf32>
    %c0_43 = arith.constant 0 : index
    %c0_44 = arith.constant 0 : index
    %c0_45 = arith.constant 0 : index
    %49 = vector.load %arg2[%c0_43, %c0_44, %c0_45] : memref<3x2x24xf32, #tpu.memory_space<vmem>>, vector<1x2x24xf32>
    %50 = vector.shape_cast %49 : vector<1x2x24xf32> to vector<2x24xf32>
    %cst_46 = arith.constant dense<0.000000e+00> : vector<2x3584xf32>
    %51 = tpu.matmul %50, %48, %cst_46 {dimension_numbers = #tpu.dot_dimension_numbers<[1], [0], [0], [1], [0, 0, 1, 1], [], []>} : vector<2x24xf32>, vector<24x3584xf32>, vector<2x3584xf32> -> vector<2x3584xf32>
    %c1_47 = arith.constant 1 : index
    %c0_48 = arith.constant 0 : index
    %c64_49 = arith.constant 64 : index
    %52 = vector.load %arg1[%c1_47, %c0_48, %c64_49] : memref<2x8x3840xf32, #tpu.memory_space<vmem>>, vector<1x8x3584xf32>
    %53 = vector.shape_cast %52 : vector<1x8x3584xf32> to vector<8x3584xf32>
    %c1_50 = arith.constant 1 : index
    %c0_51 = arith.constant 0 : index
    %c65_52 = arith.constant 65 : index
    %54 = vector.load %arg1[%c1_50, %c0_51, %c65_52] : memref<2x8x3840xf32, #tpu.memory_space<vmem>>, vector<1x8x3584xf32>
    %55 = vector.shape_cast %54 : vector<1x8x3584xf32> to vector<8x3584xf32>
    %c1_53 = arith.constant 1 : index
    %c0_54 = arith.constant 0 : index
    %c66_55 = arith.constant 66 : index
    %56 = vector.load %arg1[%c1_53, %c0_54, %c66_55] : memref<2x8x3840xf32, #tpu.memory_space<vmem>>, vector<1x8x3584xf32>
    %57 = vector.shape_cast %56 : vector<1x8x3584xf32> to vector<8x3584xf32>
    %58 = tpu.concatenate %53, %55, %57 in 0 : vector<8x3584xf32>, vector<8x3584xf32>, vector<8x3584xf32> -> vector<24x3584xf32>
    %c1_56 = arith.constant 1 : index
    %c0_57 = arith.constant 0 : index
    %c0_58 = arith.constant 0 : index
    %59 = vector.load %arg2[%c1_56, %c0_57, %c0_58] : memref<3x2x24xf32, #tpu.memory_space<vmem>>, vector<1x2x24xf32>
    %60 = vector.shape_cast %59 : vector<1x2x24xf32> to vector<2x24xf32>
    %cst_59 = arith.constant dense<0.000000e+00> : vector<2x3584xf32>
    %61 = tpu.matmul %60, %58, %cst_59 {dimension_numbers = #tpu.dot_dimension_numbers<[1], [0], [0], [1], [0, 0, 1, 1], [], []>} : vector<2x24xf32>, vector<24x3584xf32>, vector<2x3584xf32> -> vector<2x3584xf32>
    %62 = arith.addf %51, %61 : vector<2x3584xf32>
    %c1_60 = arith.constant 1 : index
    %c0_61 = arith.constant 0 : index
    %c128_62 = arith.constant 128 : index
    %63 = vector.load %arg1[%c1_60, %c0_61, %c128_62] : memref<2x8x3840xf32, #tpu.memory_space<vmem>>, vector<1x8x3584xf32>
    %64 = vector.shape_cast %63 : vector<1x8x3584xf32> to vector<8x3584xf32>
    %c1_63 = arith.constant 1 : index
    %c0_64 = arith.constant 0 : index
    %c129_65 = arith.constant 129 : index
    %65 = vector.load %arg1[%c1_63, %c0_64, %c129_65] : memref<2x8x3840xf32, #tpu.memory_space<vmem>>, vector<1x8x3584xf32>
    %66 = vector.shape_cast %65 : vector<1x8x3584xf32> to vector<8x3584xf32>
    %c1_66 = arith.constant 1 : index
    %c0_67 = arith.constant 0 : index
    %c130_68 = arith.constant 130 : index
    %67 = vector.load %arg1[%c1_66, %c0_67, %c130_68] : memref<2x8x3840xf32, #tpu.memory_space<vmem>>, vector<1x8x3584xf32>
    %68 = vector.shape_cast %67 : vector<1x8x3584xf32> to vector<8x3584xf32>
    %69 = tpu.concatenate %64, %66, %68 in 0 : vector<8x3584xf32>, vector<8x3584xf32>, vector<8x3584xf32> -> vector<24x3584xf32>
    %c2_69 = arith.constant 2 : index
    %c0_70 = arith.constant 0 : index
    %c0_71 = arith.constant 0 : index
    %70 = vector.load %arg2[%c2_69, %c0_70, %c0_71] : memref<3x2x24xf32, #tpu.memory_space<vmem>>, vector<1x2x24xf32>
    %71 = vector.shape_cast %70 : vector<1x2x24xf32> to vector<2x24xf32>
    %cst_72 = arith.constant dense<0.000000e+00> : vector<2x3584xf32>
    %72 = tpu.matmul %71, %69, %cst_72 {dimension_numbers = #tpu.dot_dimension_numbers<[1], [0], [0], [1], [0, 0, 1, 1], [], []>} : vector<2x24xf32>, vector<24x3584xf32>, vector<2x3584xf32> -> vector<2x3584xf32>
    %73 = arith.addf %62, %72 : vector<2x3584xf32>
    %74 = vector.broadcast %0 : vector<2x1xf32> to vector<2x3584xf32>
    %75 = arith.addf %73, %74 : vector<2x3584xf32>
    %cst_73 = arith.constant 0.000000e+00 : f32
    %76 = vector.broadcast %cst_73 : f32 to vector<2x3584xf32>
    %77 = arith.maximumf %75, %76 : vector<2x3584xf32>
    %78 = arith.truncf %77 : vector<2x3584xf32> to vector<2x3584xbf16>
    %79 = vector.extract_strided_slice %78 {offsets = [0, 0], sizes = [1, 3584], strides = [1, 1]} : vector<2x3584xbf16> to vector<1x3584xbf16>
    %80 = vector.extract_strided_slice %78 {offsets = [1, 0], sizes = [1, 3584], strides = [1, 1]} : vector<2x3584xbf16> to vector<1x3584xbf16>
    %81 = tpu.concatenate %79, %80 in 1 : vector<1x3584xbf16>, vector<1x3584xbf16> -> vector<1x7168xbf16>
    %c1_74 = arith.constant 1 : index
    %c0_75 = arith.constant 0 : index
    %82 = vector.load %arg11[%c1_74, %c0_75] : memref<2x7168xbf16, #tpu.memory_space<vmem>>, vector<1x7168xbf16>
    tpu.vector_store %arg11[%c1_74, %c0_75], %81 {strides = array<i32>} : memref<2x7168xbf16, #tpu.memory_space<vmem>>, vector<1x7168xbf16>,
    %c0_76 = arith.constant 0 : index
    %c0_77 = arith.constant 0 : index
    %83 = vector.load %arg11[%c0_76, %c0_77] : memref<2x7168xbf16, #tpu.memory_space<vmem>>, vector<2x7168xbf16>
    %c0_78 = arith.constant 0 : index
    %c0_79 = arith.constant 0 : index
    %84 = vector.load %arg4[%c0_78, %c0_79] : memref<30x7168xbf16, #tpu.memory_space<vmem>>, vector<30x7168xbf16>
    %cst_80 = arith.constant dense<0.000000e+00> : vector<2x30xf32>
    %85 = tpu.matmul %83, %84, %cst_80 {dimension_numbers = #tpu.dot_dimension_numbers<[1], [1], [0], [0], [0, 0, 1, 0], [], []>} : vector<2x7168xbf16>, vector<30x7168xbf16>, vector<2x30xf32> -> vector<2x30xf32>
    %c0_81 = arith.constant 0 : index
    %c0_82 = arith.constant 0 : index
    %86 = vector.load %arg5[%c0_81, %c0_82] : memref<1x30xf32, #tpu.memory_space<vmem>>, vector<1x30xf32>
    %87 = vector.broadcast %86 : vector<1x30xf32> to vector<2x30xf32>
    %88 = arith.addf %85, %87 : vector<2x30xf32>
    %cst_83 = arith.constant 0.000000e+00 : f32
    %89 = vector.broadcast %cst_83 : f32 to vector<2x30xf32>
    %90 = arith.maximumf %88, %89 : vector<2x30xf32>
    %c0_84 = arith.constant 0 : index
    %c0_85 = arith.constant 0 : index
    %91 = vector.load %arg6[%c0_84, %c0_85] : memref<30x10xf32, #tpu.memory_space<vmem>>, vector<30x10xf32>
    %cst_86 = arith.constant dense<0.000000e+00> : vector<2x10xf32>
    %92 = tpu.matmul %90, %91, %cst_86 {dimension_numbers = #tpu.dot_dimension_numbers<[1], [0], [0], [1], [0, 0, 1, 1], [], []>} : vector<2x30xf32>, vector<30x10xf32>, vector<2x10xf32> -> vector<2x10xf32>
    %c0_87 = arith.constant 0 : index
    %c0_88 = arith.constant 0 : index
    %93 = vector.load %arg7[%c0_87, %c0_88] : memref<1x10xf32, #tpu.memory_space<vmem>>, vector<1x10xf32>
    %94 = vector.broadcast %93 : vector<1x10xf32> to vector<2x10xf32>
    %95 = arith.addf %92, %94 : vector<2x10xf32>
    %cst_89 = arith.constant 0.000000e+00 : f32
    %96 = vector.broadcast %cst_89 : f32 to vector<2x10xf32>
    %97 = arith.maximumf %95, %96 : vector<2x10xf32>
    %c0_90 = arith.constant 0 : index
    %c0_91 = arith.constant 0 : index
    %98 = vector.load %arg8[%c0_90, %c0_91] : memref<10x10xf32, #tpu.memory_space<vmem>>, vector<10x10xf32>
    %cst_92 = arith.constant dense<0.000000e+00> : vector<2x10xf32>
    %99 = tpu.matmul %97, %98, %cst_92 {dimension_numbers = #tpu.dot_dimension_numbers<[1], [0], [0], [1], [0, 0, 1, 1], [], []>} : vector<2x10xf32>, vector<10x10xf32>, vector<2x10xf32> -> vector<2x10xf32>
    %c0_93 = arith.constant 0 : index
    %c0_94 = arith.constant 0 : index
    %100 = vector.load %arg9[%c0_93, %c0_94] : memref<1x10xf32, #tpu.memory_space<vmem>>, vector<1x10xf32>
    %101 = vector.broadcast %100 : vector<1x10xf32> to vector<2x10xf32>
    %102 = arith.addf %99, %101 : vector<2x10xf32>
    %c0_95 = arith.constant 0 : index
    %c0_96 = arith.constant 0 : index
    %103 = vector.load %arg10[%c0_95, %c0_96] : memref<2x10xf32, #tpu.memory_space<vmem>>, vector<2x10xf32>
    tpu.vector_store %arg10[%c0_95, %c0_96], %102 {strides = array<i32>} : memref<2x10xf32, #tpu.memory_space<vmem>>, vector<2x10xf32>,
    return
  }
  func.func @transform_0(%arg0: i32) -> (i32, i32, i32) {
    %c0_i32 = arith.constant 0 : i32
    %c0_i32_0 = arith.constant 0 : i32
    %c0_i32_1 = arith.constant 0 : i32
    return %arg0, %c0_i32, %c0_i32_0 : i32, i32, i32
  }
  func.func @transform_1(%arg0: i32) -> (i32, i32, i32) {
    %c0_i32 = arith.constant 0 : i32
    %c0_i32_0 = arith.constant 0 : i32
    %c0_i32_1 = arith.constant 0 : i32
    %c0_i32_2 = arith.constant 0 : i32
    return %c0_i32, %c0_i32_0, %c0_i32_1 : i32, i32, i32
  }
  func.func @transform_2(%arg0: i32) -> (i32, i32) {
    %c0_i32 = arith.constant 0 : i32
    %c0_i32_0 = arith.constant 0 : i32
    %c0_i32_1 = arith.constant 0 : i32
    return %c0_i32, %c0_i32_0 : i32, i32
  }
  func.func @transform_3(%arg0: i32) -> (i32, i32) {
    %c0_i32 = arith.constant 0 : i32
    %c0_i32_0 = arith.constant 0 : i32
    %c0_i32_1 = arith.constant 0 : i32
    return %c0_i32, %c0_i32_0 : i32, i32
  }
  func.func @transform_4(%arg0: i32) -> (i32, i32) {
    %c0_i32 = arith.constant 0 : i32
    %c0_i32_0 = arith.constant 0 : i32
    %c0_i32_1 = arith.constant 0 : i32
    return %c0_i32, %c0_i32_0 : i32, i32
  }
  func.func @transform_5(%arg0: i32) -> (i32, i32) {
    %c0_i32 = arith.constant 0 : i32
    %c0_i32_0 = arith.constant 0 : i32
    %c0_i32_1 = arith.constant 0 : i32
    return %c0_i32, %c0_i32_0 : i32, i32
  }
  func.func @transform_6(%arg0: i32) -> (i32, i32) {
    %c0_i32 = arith.constant 0 : i32
    %c0_i32_0 = arith.constant 0 : i32
    %c0_i32_1 = arith.constant 0 : i32
    return %c0_i32, %c0_i32_0 : i32, i32
  }
  func.func @transform_7(%arg0: i32) -> (i32, i32) {
    %c0_i32 = arith.constant 0 : i32
    %c0_i32_0 = arith.constant 0 : i32
    %c0_i32_1 = arith.constant 0 : i32
    return %c0_i32, %c0_i32_0 : i32, i32
  }
  func.func @transform_8(%arg0: i32) -> (i32, i32) {
    %c0_i32 = arith.constant 0 : i32
    %c0_i32_0 = arith.constant 0 : i32
    %c0_i32_1 = arith.constant 0 : i32
    return %c0_i32, %c0_i32_0 : i32, i32
  }
  func.func @transform_9(%arg0: i32) -> (i32, i32) {
    %c0_i32 = arith.constant 0 : i32
    %c0_i32_0 = arith.constant 0 : i32
    return %arg0, %c0_i32 : i32, i32
  }
}

</mosaic_0001>

<llo_original>
// kernel: class_head_forward.1
$region0: #{class_head_forward.1}
  #allocation0 [shape = 'u32[]', space=smem, size = 0x4, offset = 0x4, fixed_abs, tag = 'smem constant byte address 0x4 - core index']
  #allocation1 [shape = 'u32[144,128]{1,0:T(1,128)}', space=vmem, size = 0x12000, scoped, tag = 'internal scratch']
  #allocation2 [shape = 'bf16[2,7168]{1,0:T(2,128)(2,1)}', space=vmem, size = 0x7000, scoped, tag = 'scratch operand']
  %s0 = inlined_call_operand.hbm [shape: f32[2,8,3840], index: 0, kind: input, shape index: {}]
  %s1 = inlined_call_operand.hbm [shape: f32[3,2,24], index: 1, kind: input, shape index: {}]
  %s2 = inlined_call_operand.hbm [shape: f32[2,1], index: 2, kind: input, shape index: {}]
  %s3 = inlined_call_operand.hbm [shape: bf16[30,7168], index: 3, kind: input, shape index: {}]
  %s4 = inlined_call_operand.hbm [shape: f32[1,30], index: 4, kind: input, shape index: {}]
  %s5 = inlined_call_operand.hbm [shape: f32[30,10], index: 5, kind: input, shape index: {}]
  %s6 = inlined_call_operand.hbm [shape: f32[1,10], index: 6, kind: input, shape index: {}]
  %s7 = inlined_call_operand.hbm [shape: f32[10,10], index: 7, kind: input, shape index: {}]
  %s8 = inlined_call_operand.hbm [shape: f32[1,10], index: 8, kind: input, shape index: {}]
  %s9 = inlined_call_operand.hbm [shape: f32[2,10], index: 9, kind: output, shape index: {}]
  %s10 = sld [smem:[#allocation0]]
  $region82: #{class_head_forward.1} parent=0
    _
  %s12 = ssub.s32 1, %s10
  %s13 = scalar_select 0, %s12, %s10
  $region1: #{class_head_forward.1} parent=0
    #allocation3 [shape = 'u8[245760]{0}', space=vmem, size = 0x3c000, scoped, tag = 'input window, operand 0, single buffered']
    #allocation4 [shape = 's32[1]{0}', space=sflag, size = 0x4, scoped, tag = 'scoped memory for class_head_forward.1']
    #allocation5 [shape = 's32[1]{0}', space=sflag, size = 0x4, scoped, tag = 'scoped memory for class_head_forward.1']
    #allocation6 [shape = 'u8[3072]{0}', space=vmem, size = 0xc00, scoped, tag = 'input window, operand 1, single buffered']
    #allocation7 [shape = 's32[1]{0}', space=sflag, size = 0x4, scoped, tag = 'scoped memory for class_head_forward.1']
    #allocation8 [shape = 'u8[1024]{0}', space=vmem, size = 0x400, scoped, tag = 'input window, operand 2, single buffered']
    #allocation9 [shape = 'u8[458752]{0}', space=vmem, size = 0x70000, scoped, tag = 'input window, operand 3, single buffered']
    #allocation10 [shape = 's32[1]{0}', space=sflag, size = 0x4, scoped, tag = 'scoped memory for class_head_forward.1']
    #allocation11 [shape = 'u8[512]{0}', space=vmem, size = 0x400, scoped, tag = 'input window, operand 4, single buffered']
    #allocation12 [shape = 'u8[16384]{0}', space=vmem, size = 0x4000, scoped, tag = 'input window, operand 5, single buffered']
    #allocation13 [shape = 's32[1]{0}', space=sflag, size = 0x4, scoped, tag = 'scoped memory for class_head_forward.1']
    #allocation14 [shape = 'u8[512]{0}', space=vmem, size = 0x400, scoped, tag = 'input window, operand 6, single buffered']
    #allocation15 [shape = 'u8[8192]{0}', space=vmem, size = 0x2000, scoped, tag = 'input window, operand 7, single buffered']
    #allocation16 [shape = 's32[1]{0}', space=sflag, size = 0x4, scoped, tag = 'scoped memory for class_head_forward.1']
    #allocation17 [shape = 'u8[512]{0}', space=vmem, size = 0x400, scoped, tag = 'input window, operand 8, single buffered']
    #allocation18 [shape = 'u8[1024]{0}', space=vmem, size = 0x400, scoped, tag = 'output window, operand 0, single buffered']
    %14 = vsyncpa [#allocation4], 0
    %15 = vsyncpa [#allocation7], 0
    %16 = vsyncpa [#allocation10], 0
    %17 = vsyncpa [#allocation13], 0
    %18 = vsyncpa [#allocation16], 0
    %19 = vsyncpa [#allocation5], 0
    // Predicated region
    $region2: #{class_head_forward.1} parent=1 // pred_check
      _
    $region3: #{class_head_forward.1} parent=1 // pred_check_branch
      %21 = sbr.rel (0) target = $region5
    $region4: #{class_head_forward.1} parent=1 // pred_region
      %s23 = ssub.s32 7680, 7680
      %24 = vsyncadd [#allocation4], %s23
      %s25 = sshll.u32 [#allocation3], 4
      %s26 = int_to_ptr.vmem [resolvable:$true] %s25
      %31 = dma.hbm_to_vmem [thread:$0]  %s0, 7680, %s26, [#allocation4], 3840, 3840, 240
    $region5: #{class_head_forward.1} parent=1 // pred_fallthru
      _
    // Predicated region
    $region6: #{class_head_forward.1} parent=1 // pred_check
      _
    $region7: #{class_head_forward.1} parent=1 // pred_check_branch
      %33 = sbr.rel (0) target = $region9
    $region8: #{class_head_forward.1} parent=1 // pred_region
      %s35 = ssub.s32 96, 96
      %36 = vsyncadd [#allocation7], %s35
      %s37 = sshll.u32 [#allocation6], 4
      %s38 = int_to_ptr.vmem [resolvable:$true] %s37
      %43 = dma.hbm_to_vmem [thread:$0]  %s1, 96, %s38, [#allocation7], 32, 32, 2
    $region9: #{class_head_forward.1} parent=1 // pred_fallthru
      _
    // Predicated region
    $region10: #{class_head_forward.1} parent=1 // pred_check
      _
    $region11: #{class_head_forward.1} parent=1 // pred_check_branch
      %45 = sbr.rel (0) target = $region13
    $region12: #{class_head_forward.1} parent=1 // pred_region
      %s47 = ssub.s32 32, 32
      %48 = vsyncadd [#allocation7], %s47
      %s50 = sshll.u32 [#allocation8], 4
      %s51 = int_to_ptr.vmem [resolvable:$true] %s50
      %53 = dma.hbm_to_vmem [thread:$0]  %s2, 32, %s51, [#allocation7]
    $region13: #{class_head_forward.1} parent=1 // pred_fallthru
      _
    // Predicated region
    $region14: #{class_head_forward.1} parent=1 // pred_check
      _
    $region15: #{class_head_forward.1} parent=1 // pred_check_branch
      %55 = sbr.rel (0) target = $region17
    $region16: #{class_head_forward.1} parent=1 // pred_region
      %s57 = ssub.s32 14336, 14336
      %58 = vsyncadd [#allocation10], %s57
      %s59 = sshll.u32 [#allocation9], 4
      %s60 = int_to_ptr.vmem [resolvable:$true] %s59
      %65 = dma.hbm_to_vmem [thread:$0]  %s3, 14336, %s60, [#allocation10], 3584, 3584, 224
    $region17: #{class_head_forward.1} parent=1 // pred_fallthru
      _
    // Predicated region
    $region18: #{class_head_forward.1} parent=1 // pred_check
      _
    $region19: #{class_head_forward.1} parent=1 // pred_check_branch
      %67 = sbr.rel (0) target = $region21
    $region20: #{class_head_forward.1} parent=1 // pred_region
      %s69 = ssub.s32 16, 16
      %70 = vsyncadd [#allocation10], %s69
      %s72 = sshll.u32 [#allocation11], 4
      %s73 = int_to_ptr.vmem [resolvable:$true] %s72
      %75 = dma.hbm_to_vmem [thread:$0]  %s4, 16, %s73, [#allocation10]
    $region21: #{class_head_forward.1} parent=1 // pred_fallthru
      _
    // Predicated region
    $region22: #{class_head_forward.1} parent=1 // pred_check
      _
    $region23: #{class_head_forward.1} parent=1 // pred_check_branch
      %77 = sbr.rel (0) target = $region25
    $region24: #{class_head_forward.1} parent=1 // pred_region
      %s79 = ssub.s32 512, 512
      %80 = vsyncadd [#allocation13], %s79
      %s81 = sshll.u32 [#allocation12], 4
      %s82 = int_to_ptr.vmem [resolvable:$true] %s81
      %87 = dma.hbm_to_vmem [thread:$0]  %s5, 512, %s82, [#allocation13], 128, 128, 8
    $region25: #{class_head_forward.1} parent=1 // pred_fallthru
      _
    // Predicated region
    $region26: #{class_head_forward.1} parent=1 // pred_check
      _
    $region27: #{class_head_forward.1} parent=1 // pred_check_branch
      %89 = sbr.rel (0) target = $region29
    $region28: #{class_head_forward.1} parent=1 // pred_region
      %s91 = ssub.s32 16, 16
      %92 = vsyncadd [#allocation13], %s91
      %s94 = sshll.u32 [#allocation14], 4
      %s95 = int_to_ptr.vmem [resolvable:$true] %s94
      %97 = dma.hbm_to_vmem [thread:$0]  %s6, 16, %s95, [#allocation13]
    $region29: #{class_head_forward.1} parent=1 // pred_fallthru
      _
    // Predicated region
    $region30: #{class_head_forward.1} parent=1 // pred_check
      _
    $region31: #{class_head_forward.1} parent=1 // pred_check_branch
      %99 = sbr.rel (0) target = $region33
    $region32: #{class_head_forward.1} parent=1 // pred_region
      %s101 = ssub.s32 256, 256
      %102 = vsyncadd [#allocation16], %s101
      %s103 = sshll.u32 [#allocation15], 4
      %s104 = int_to_ptr.vmem [resolvable:$true] %s103
      %109 = dma.hbm_to_vmem [thread:$0]  %s7, 256, %s104, [#allocation16], 128, 128, 8
    $region33: #{class_head_forward.1} parent=1 // pred_fallthru
      _
    // Predicated region
    $region34: #{class_head_forward.1} parent=1 // pred_check
      _
    $region35: #{class_head_forward.1} parent=1 // pred_check_branch
      %111 = sbr.rel (0) target = $region37
    $region36: #{class_head_forward.1} parent=1 // pred_region
      %s113 = ssub.s32 16, 16
      %114 = vsyncadd [#allocation16], %s113
      %s116 = sshll.u32 [#allocation17], 4
      %s117 = int_to_ptr.vmem [resolvable:$true] %s116
      %119 = dma.hbm_to_vmem [thread:$0]  %s8, 16, %s117, [#allocation16]
    $region37: #{class_head_forward.1} parent=1 // pred_fallthru
      _
    // Predicated region
    $region38: #{class_head_forward.1} parent=1 // pred_check
      _
    $region39: #{class_head_forward.1} parent=1 // pred_check_branch
      %121 = sbr.rel (0) target = $region41
    $region40: #{class_head_forward.1} parent=1 // pred_region
      %122 = dma.done [#allocation4], 7680
    $region41: #{class_head_forward.1} parent=1 // pred_fallthru
      _
    // Predicated region
    $region42: #{class_head_forward.1} parent=1 // pred_check
      _
    $region43: #{class_head_forward.1} parent=1 // pred_check_branch
      %124 = sbr.rel (0) target = $region45
    $region44: #{class_head_forward.1} parent=1 // pred_region
      %125 = dma.done [#allocation7], 96
    $region45: #{class_head_forward.1} parent=1 // pred_fallthru
      _
    // Predicated region
    $region46: #{class_head_forward.1} parent=1 // pred_check
      _
    $region47: #{class_head_forward.1} parent=1 // pred_check_branch
      %127 = sbr.rel (0) target = $region49
    $region48: #{class_head_forward.1} parent=1 // pred_region
      %128 = dma.done [#allocation7], 32
    $region49: #{class_head_forward.1} parent=1 // pred_fallthru
      _
    // Predicated region
    $region50: #{class_head_forward.1} parent=1 // pred_check
      _
    $region51: #{class_head_forward.1} parent=1 // pred_check_branch
      %130 = sbr.rel (0) target = $region53
    $region52: #{class_head_forward.1} parent=1 // pred_region
      %131 = dma.done [#allocation10], 14336
    $region53: #{class_head_forward.1} parent=1 // pred_fallthru
      _
    // Predicated region
    $region54: #{class_head_forward.1} parent=1 // pred_check
      _
    $region55: #{class_head_forward.1} parent=1 // pred_check_branch
      %133 = sbr.rel (0) target = $region57
    $region56: #{class_head_forward.1} parent=1 // pred_region
      %134 = dma.done [#allocation10], 16
    $region57: #{class_head_forward.1} parent=1 // pred_fallthru
      _
    // Predicated region
    $region58: #{class_head_forward.1} parent=1 // pred_check
      _
    $region59: #{class_head_forward.1} parent=1 // pred_check_branch
      %136 = sbr.rel (0) target = $region61
    $region60: #{class_head_forward.1} parent=1 // pred_region
      %137 = dma.done [#allocation13], 512
    $region61: #{class_head_forward.1} parent=1 // pred_fallthru
      _
    // Predicated region
    $region62: #{class_head_forward.1} parent=1 // pred_check
      _
    $region63: #{class_head_forward.1} parent=1 // pred_check_branch
      %139 = sbr.rel (0) target = $region65
    $region64: #{class_head_forward.1} parent=1 // pred_region
      %140 = dma.done [#allocation13], 16
    $region65: #{class_head_forward.1} parent=1 // pred_fallthru
      _
    // Predicated region
    $region66: #{class_head_forward.1} parent=1 // pred_check
      _
    $region67: #{class_head_forward.1} parent=1 // pred_check_branch
      %142 = sbr.rel (0) target = $region69
    $region68: #{class_head_forward.1} parent=1 // pred_region
      %143 = dma.done [#allocation16], 256
    $region69: #{class_head_forward.1} parent=1 // pred_fallthru
      _
    // Predicated region
    $region70: #{class_head_forward.1} parent=1 // pred_check
      _
    $region71: #{class_head_forward.1} parent=1 // pred_check_branch
      %145 = sbr.rel (0) target = $region73
    $region72: #{class_head_forward.1} parent=1 // pred_region
      %146 = dma.done [#allocation16], 16
    $region73: #{class_head_forward.1} parent=1 // pred_fallthru
      _
    %v148 = vld [vmem:[#allocation8] sm:$0x3]
    %v149 = vld [vmem:[#allocation3] sm:$0xff]
    %v150 = vld [vmem:[#allocation3 + $0x8] sm:$0xff]
    %v151 = vld [vmem:[#allocation3 + $0x10] sm:$0xff]
    %v152 = vld [vmem:[#allocation3 + $0x18] sm:$0xff]
    %v153 = vld [vmem:[#allocation3 + $0x20] sm:$0xff]
    %v154 = vld [vmem:[#allocation3 + $0x28] sm:$0xff]
    %v155 = vld [vmem:[#allocation3 + $0x30] sm:$0xff]
    %v156 = vld [vmem:[#allocation3 + $0x38] sm:$0xff]
    %v157 = vld [vmem:[#allocation3 + $0x40] sm:$0xff]
    %v158 = vld [vmem:[#allocation3 + $0x48] sm:$0xff]
    %v159 = vld [vmem:[#allocation3 + $0x50] sm:$0xff]
    %v160 = vld [vmem:[#allocation3 + $0x58] sm:$0xff]
    %v161 = vld [vmem:[#allocation3 + $0x60] sm:$0xff]
    %v162 = vld [vmem:[#allocation3 + $0x68] sm:$0xff]
    %v163 = vld [vmem:[#allocation3 + $0x70] sm:$0xff]
    %v164 = vld [vmem:[#allocation3 + $0x78] sm:$0xff]
    %v165 = vld [vmem:[#allocation3 + $0x80] sm:$0xff]
    %v166 = vld [vmem:[#allocation3 + $0x88] sm:$0xff]
    %v167 = vld [vmem:[#allocation3 + $0x90] sm:$0xff]
    %v168 = vld [vmem:[#allocation3 + $0x98] sm:$0xff]
    %v169 = vld [vmem:[#allocation3 + $0xa0] sm:$0xff]
    %v170 = vld [vmem:[#allocation3 + $0xa8] sm:$0xff]
    %v171 = vld [vmem:[#allocation3 + $0xb0] sm:$0xff]
    %v172 = vld [vmem:[#allocation3 + $0xb8] sm:$0xff]
    %v173 = vld [vmem:[#allocation3 + $0xc0] sm:$0xff]
    %v174 = vld [vmem:[#allocation3 + $0xc8] sm:$0xff]
    %v175 = vld [vmem:[#allocation3 + $0xd0] sm:$0xff]
    %v176 = vld [vmem:[#allocation3 + $0xd8] sm:$0xff]
    %v177 = vld [vmem:[#allocation3 + $0xe0] sm:$0xff]
    %207 = vrot.lane.b32.xlu0 %v149, 127
    %v208 = vpop.permute.xlu0 %207
    %209 = vrot.lane.b32.xlu0 %v150, 127
    %v210 = vpop.permute.xlu0 %209
    %211 = vrot.lane.b32.xlu0 %v151, 127
    %v212 = vpop.permute.xlu0 %211
    %213 = vrot.lane.b32.xlu0 %v152, 127
    %v214 = vpop.permute.xlu0 %213
    %215 = vrot.lane.b32.xlu0 %v153, 127
    %v216 = vpop.permute.xlu0 %215
    %217 = vrot.lane.b32.xlu0 %v154, 127
    %v218 = vpop.permute.xlu0 %217
    %219 = vrot.lane.b32.xlu0 %v155, 127
    %v220 = vpop.permute.xlu0 %219
    %221 = vrot.lane.b32.xlu0 %v156, 127
    %v222 = vpop.permute.xlu0 %221
    %223 = vrot.lane.b32.xlu0 %v157, 127
    %v224 = vpop.permute.xlu0 %223
    %225 = vrot.lane.b32.xlu0 %v158, 127
    %v226 = vpop.permute.xlu0 %225
    %227 = vrot.lane.b32.xlu0 %v159, 127
    %v228 = vpop.permute.xlu0 %227
    %229 = vrot.lane.b32.xlu0 %v160, 127
    %v230 = vpop.permute.xlu0 %229
    %231 = vrot.lane.b32.xlu0 %v161, 127
    %v232 = vpop.permute.xlu0 %231
    %233 = vrot.lane.b32.xlu0 %v162, 127
    %v234 = vpop.permute.xlu0 %233
    %235 = vrot.lane.b32.xlu0 %v163, 127
    %v236 = vpop.permute.xlu0 %235
    %237 = vrot.lane.b32.xlu0 %v164, 127
    %v238 = vpop.permute.xlu0 %237
    %239 = vrot.lane.b32.xlu0 %v165, 127
    %v240 = vpop.permute.xlu0 %239
    %241 = vrot.lane.b32.xlu0 %v166, 127
    %v242 = vpop.permute.xlu0 %241
    %243 = vrot.lane.b32.xlu0 %v167, 127
    %v244 = vpop.permute.xlu0 %243
    %245 = vrot.lane.b32.xlu0 %v168, 127
    %v246 = vpop.permute.xlu0 %245
    %247 = vrot.lane.b32.xlu0 %v169, 127
    %v248 = vpop.permute.xlu0 %247
    %249 = vrot.lane.b32.xlu0 %v170, 127
    %v250 = vpop.permute.xlu0 %249
    %251 = vrot.lane.b32.xlu0 %v171, 127
    %v252 = vpop.permute.xlu0 %251
    %253 = vrot.lane.b32.xlu0 %v172, 127
    %v254 = vpop.permute.xlu0 %253
    %255 = vrot.lane.b32.xlu0 %v173, 127
    %v256 = vpop.permute.xlu0 %255
    %257 = vrot.lane.b32.xlu0 %v174, 127
    %v258 = vpop.permute.xlu0 %257
    %259 = vrot.lane.b32.xlu0 %v175, 127
    %v260 = vpop.permute.xlu0 %259
    %261 = vrot.lane.b32.xlu0 %v176, 127
    %v262 = vpop.permute.xlu0 %261
    %263 = vrot.lane.b32.xlu0 %v177, 127
    %v264 = vpop.permute.xlu0 %263
    %vm265 = vcmask 1039360
    %v266 = vsel %vm265, %v208, %v210
    %v267 = vsel %vm265, %v210, %v212
    %v268 = vsel %vm265, %v212, %v214
    %v269 = vsel %vm265, %v214, %v216
    %v270 = vsel %vm265, %v216, %v218
    %v271 = vsel %vm265, %v218, %v220
    %v272 = vsel %vm265, %v220, %v222
    %v273 = vsel %vm265, %v222, %v224
    %v274 = vsel %vm265, %v224, %v226
    %v275 = vsel %vm265, %v226, %v228
    %v276 = vsel %vm265, %v228, %v230
    %v277 = vsel %vm265, %v230, %v232
    %v278 = vsel %vm265, %v232, %v234
    %v279 = vsel %vm265, %v234, %v236
    %v280 = vsel %vm265, %v236, %v238
    %v281 = vsel %vm265, %v238, %v240
    %v282 = vsel %vm265, %v240, %v242
    %v283 = vsel %vm265, %v242, %v244
    %v284 = vsel %vm265, %v244, %v246
    %v285 = vsel %vm265, %v246, %v248
    %v286 = vsel %vm265, %v248, %v250
    %v287 = vsel %vm265, %v250, %v252
    %v288 = vsel %vm265, %v252, %v254
    %v289 = vsel %vm265, %v254, %v256
    %v290 = vsel %vm265, %v256, %v258
    %v291 = vsel %vm265, %v258, %v260
    %v292 = vsel %vm265, %v260, %v262
    %v293 = vsel %vm265, %v262, %v264
    %322 = vrot.lane.b32.xlu0 %v149, 126
    %v323 = vpop.permute.xlu0 %322
    %324 = vrot.lane.b32.xlu0 %v150, 126
    %v325 = vpop.permute.xlu0 %324
    %326 = vrot.lane.b32.xlu0 %v151, 126
    %v327 = vpop.permute.xlu0 %326
    %328 = vrot.lane.b32.xlu0 %v152, 126
    %v329 = vpop.permute.xlu0 %328
    %330 = vrot.lane.b32.xlu0 %v153, 126
    %v331 = vpop.permute.xlu0 %330
    %332 = vrot.lane.b32.xlu0 %v154, 126
    %v333 = vpop.permute.xlu0 %332
    %334 = vrot.lane.b32.xlu0 %v155, 126
    %v335 = vpop.permute.xlu0 %334
    %336 = vrot.lane.b32.xlu0 %v156, 126
    %v337 = vpop.permute.xlu0 %336
    %338 = vrot.lane.b32.xlu0 %v157, 126
    %v339 = vpop.permute.xlu0 %338
    %340 = vrot.lane.b32.xlu0 %v158, 126
    %v341 = vpop.permute.xlu0 %340
    %342 = vrot.lane.b32.xlu0 %v159, 126
    %v343 = vpop.permute.xlu0 %342
    %344 = vrot.lane.b32.xlu0 %v160, 126
    %v345 = vpop.permute.xlu0 %344
    %346 = vrot.lane.b32.xlu0 %v161, 126
    %v347 = vpop.permute.xlu0 %346
    %348 = vrot.lane.b32.xlu0 %v162, 126
    %v349 = vpop.permute.xlu0 %348
    %350 = vrot.lane.b32.xlu0 %v163, 126
    %v351 = vpop.permute.xlu0 %350
    %352 = vrot.lane.b32.xlu0 %v164, 126
    %v353 = vpop.permute.xlu0 %352
    %354 = vrot.lane.b32.xlu0 %v165, 126
    %v355 = vpop.permute.xlu0 %354
    %356 = vrot.lane.b32.xlu0 %v166, 126
    %v357 = vpop.permute.xlu0 %356
    %358 = vrot.lane.b32.xlu0 %v167, 126
    %v359 = vpop.permute.xlu0 %358
    %360 = vrot.lane.b32.xlu0 %v168, 126
    %v361 = vpop.permute.xlu0 %360
    %362 = vrot.lane.b32.xlu0 %v169, 126
    %v363 = vpop.permute.xlu0 %362
    %364 = vrot.lane.b32.xlu0 %v170, 126
    %v365 = vpop.permute.xlu0 %364
    %366 = vrot.lane.b32.xlu0 %v171, 126
    %v367 = vpop.permute.xlu0 %366
    %368 = vrot.lane.b32.xlu0 %v172, 126
    %v369 = vpop.permute.xlu0 %368
    %370 = vrot.lane.b32.xlu0 %v173, 126
    %v371 = vpop.permute.xlu0 %370
    %372 = vrot.lane.b32.xlu0 %v174, 126
    %v373 = vpop.permute.xlu0 %372
    %374 = vrot.lane.b32.xlu0 %v175, 126
    %v375 = vpop.permute.xlu0 %374
    %376 = vrot.lane.b32.xlu0 %v176, 126
    %v377 = vpop.permute.xlu0 %376
    %378 = vrot.lane.b32.xlu0 %v177, 126
    %v379 = vpop.permute.xlu0 %378
    %vm380 = vcmask 1031168
    %v381 = vsel %vm380, %v323, %v325
    %v382 = vsel %vm380, %v325, %v327
    %v383 = vsel %vm380, %v327, %v329
    %v384 = vsel %vm380, %v329, %v331
    %v385 = vsel %vm380, %v331, %v333
    %v386 = vsel %vm380, %v333, %v335
    %v387 = vsel %vm380, %v335, %v337
    %v388 = vsel %vm380, %v337, %v339
    %v389 = vsel %vm380, %v339, %v341
    %v390 = vsel %vm380, %v341, %v343
    %v391 = vsel %vm380, %v343, %v345
    %v392 = vsel %vm380, %v345, %v347
    %v393 = vsel %vm380, %v347, %v349
    %v394 = vsel %vm380, %v349, %v351
    %v395 = vsel %vm380, %v351, %v353
    %v396 = vsel %vm380, %v353, %v355
    %v397 = vsel %vm380, %v355, %v357
    %v398 = vsel %vm380, %v357, %v359
    %v399 = vsel %vm380, %v359, %v361
    %v400 = vsel %vm380, %v361, %v363
    %v401 = vsel %vm380, %v363, %v365
    %v402 = vsel %vm380, %v365, %v367
    %v403 = vsel %vm380, %v367, %v369
    %v404 = vsel %vm380, %v369, %v371
    %v405 = vsel %vm380, %v371, %v373
    %v406 = vsel %vm380, %v373, %v375
    %v407 = vsel %vm380, %v375, %v377
    %v408 = vsel %vm380, %v377, %v379
    %v437 = vld [vmem:[#allocation6] sm:$0x3]
    %s438 = scalar_lea.vmem [#allocation6], 2
    %v439 = vld [vmem:[%s438] sm:$0x3]
    %440 = vrot.lane.b32.xlu0 %v149, 64
    %v441 = vpop.permute.xlu0 %440
    %442 = vrot.lane.b32.xlu0 %v150, 64
    %v443 = vpop.permute.xlu0 %442
    %444 = vrot.lane.b32.xlu0 %v151, 64
    %v445 = vpop.permute.xlu0 %444
    %446 = vrot.lane.b32.xlu0 %v152, 64
    %v447 = vpop.permute.xlu0 %446
    %448 = vrot.lane.b32.xlu0 %v153, 64
    %v449 = vpop.permute.xlu0 %448
    %450 = vrot.lane.b32.xlu0 %v154, 64
    %v451 = vpop.permute.xlu0 %450
    %452 = vrot.lane.b32.xlu0 %v155, 64
    %v453 = vpop.permute.xlu0 %452
    %454 = vrot.lane.b32.xlu0 %v156, 64
    %v455 = vpop.permute.xlu0 %454
    %456 = vrot.lane.b32.xlu0 %v157, 64
    %v457 = vpop.permute.xlu0 %456
    %458 = vrot.lane.b32.xlu0 %v158, 64
    %v459 = vpop.permute.xlu0 %458
    %460 = vrot.lane.b32.xlu0 %v159, 64
    %v461 = vpop.permute.xlu0 %460
    %462 = vrot.lane.b32.xlu0 %v160, 64
    %v463 = vpop.permute.xlu0 %462
    %464 = vrot.lane.b32.xlu0 %v161, 64
    %v465 = vpop.permute.xlu0 %464
    %466 = vrot.lane.b32.xlu0 %v162, 64
    %v467 = vpop.permute.xlu0 %466
    %468 = vrot.lane.b32.xlu0 %v163, 64
    %v469 = vpop.permute.xlu0 %468
    %470 = vrot.lane.b32.xlu0 %v164, 64
    %v471 = vpop.permute.xlu0 %470
    %472 = vrot.lane.b32.xlu0 %v165, 64
    %v473 = vpop.permute.xlu0 %472
    %474 = vrot.lane.b32.xlu0 %v166, 64
    %v475 = vpop.permute.xlu0 %474
    %476 = vrot.lane.b32.xlu0 %v167, 64
    %v477 = vpop.permute.xlu0 %476
    %478 = vrot.lane.b32.xlu0 %v168, 64
    %v479 = vpop.permute.xlu0 %478
    %480 = vrot.lane.b32.xlu0 %v169, 64
    %v481 = vpop.permute.xlu0 %480
    %482 = vrot.lane.b32.xlu0 %v170, 64
    %v483 = vpop.permute.xlu0 %482
    %484 = vrot.lane.b32.xlu0 %v171, 64
    %v485 = vpop.permute.xlu0 %484
    %486 = vrot.lane.b32.xlu0 %v172, 64
    %v487 = vpop.permute.xlu0 %486
    %488 = vrot.lane.b32.xlu0 %v173, 64
    %v489 = vpop.permute.xlu0 %488
    %490 = vrot.lane.b32.xlu0 %v174, 64
    %v491 = vpop.permute.xlu0 %490
    %492 = vrot.lane.b32.xlu0 %v175, 64
    %v493 = vpop.permute.xlu0 %492
    %494 = vrot.lane.b32.xlu0 %v176, 64
    %v495 = vpop.permute.xlu0 %494
    %496 = vrot.lane.b32.xlu0 %v177, 64
    %v497 = vpop.permute.xlu0 %496
    %498 = vrot.lane.b32.xlu0 %v266, 64
    %v499 = vpop.permute.xlu0 %498
    %500 = vrot.lane.b32.xlu0 %v267, 64
    %v501 = vpop.permute.xlu0 %500
    %502 = vrot.lane.b32.xlu0 %v268, 64
    %v503 = vpop.permute.xlu0 %502
    %504 = vrot.lane.b32.xlu0 %v269, 64
    %v505 = vpop.permute.xlu0 %504
    %506 = vrot.lane.b32.xlu0 %v270, 64
    %v507 = vpop.permute.xlu0 %506
    %508 = vrot.lane.b32.xlu0 %v271, 64
    %v509 = vpop.permute.xlu0 %508
    %510 = vrot.lane.b32.xlu0 %v272, 64
    %v511 = vpop.permute.xlu0 %510
    %512 = vrot.lane.b32.xlu0 %v273, 64
    %v513 = vpop.permute.xlu0 %512
    %514 = vrot.lane.b32.xlu0 %v274, 64
    %v515 = vpop.permute.xlu0 %514
    %516 = vrot.lane.b32.xlu0 %v275, 64
    %v517 = vpop.permute.xlu0 %516
    %518 = vrot.lane.b32.xlu0 %v276, 64
    %v519 = vpop.permute.xlu0 %518
    %520 = vrot.lane.b32.xlu0 %v277, 64
    %v521 = vpop.permute.xlu0 %520
    %522 = vrot.lane.b32.xlu0 %v278, 64
    %v523 = vpop.permute.xlu0 %522
    %524 = vrot.lane.b32.xlu0 %v279, 64
    %v525 = vpop.permute.xlu0 %524
    %526 = vrot.lane.b32.xlu0 %v280, 64
    %v527 = vpop.permute.xlu0 %526
    %528 = vrot.lane.b32.xlu0 %v281, 64
    %v529 = vpop.permute.xlu0 %528
    %530 = vrot.lane.b32.xlu0 %v282, 64
    %v531 = vpop.permute.xlu0 %530
    %532 = vrot.lane.b32.xlu0 %v283, 64
    %v533 = vpop.permute.xlu0 %532
    %534 = vrot.lane.b32.xlu0 %v284, 64
    %v535 = vpop.permute.xlu0 %534
    %536 = vrot.lane.b32.xlu0 %v285, 64
    %v537 = vpop.permute.xlu0 %536
    %538 = vrot.lane.b32.xlu0 %v286, 64
    %v539 = vpop.permute.xlu0 %538
    %540 = vrot.lane.b32.xlu0 %v287, 64
    %v541 = vpop.permute.xlu0 %540
    %542 = vrot.lane.b32.xlu0 %v288, 64
    %v543 = vpop.permute.xlu0 %542
    %544 = vrot.lane.b32.xlu0 %v289, 64
    %v545 = vpop.permute.xlu0 %544
    %546 = vrot.lane.b32.xlu0 %v290, 64
    %v547 = vpop.permute.xlu0 %546
    %548 = vrot.lane.b32.xlu0 %v291, 64
    %v549 = vpop.permute.xlu0 %548
    %550 = vrot.lane.b32.xlu0 %v292, 64
    %v551 = vpop.permute.xlu0 %550
    %552 = vrot.lane.b32.xlu0 %v293, 64
    %v553 = vpop.permute.xlu0 %552
    %554 = vrot.lane.b32.xlu0 %v264, 64
    %v555 = vpop.permute.xlu0 %554
    %556 = vrot.lane.b32.xlu0 %v381, 64
    %v557 = vpop.permute.xlu0 %556
    %558 = vrot.lane.b32.xlu0 %v382, 64
    %v559 = vpop.permute.xlu0 %558
    %560 = vrot.lane.b32.xlu0 %v383, 64
    %v561 = vpop.permute.xlu0 %560
    %562 = vrot.lane.b32.xlu0 %v384, 64
    %v563 = vpop.permute.xlu0 %562
    %564 = vrot.lane.b32.xlu0 %v385, 64
    %v565 = vpop.permute.xlu0 %564
    %566 = vrot.lane.b32.xlu0 %v386, 64
    %v567 = vpop.permute.xlu0 %566
    %568 = vrot.lane.b32.xlu0 %v387, 64
    %v569 = vpop.permute.xlu0 %568
    %570 = vrot.lane.b32.xlu0 %v388, 64
    %v571 = vpop.permute.xlu0 %570
    %572 = vrot.lane.b32.xlu0 %v389, 64
    %v573 = vpop.permute.xlu0 %572
    %574 = vrot.lane.b32.xlu0 %v390, 64
    %v575 = vpop.permute.xlu0 %574
    %576 = vrot.lane.b32.xlu0 %v391, 64
    %v577 = vpop.permute.xlu0 %576
    %578 = vrot.lane.b32.xlu0 %v392, 64
    %v579 = vpop.permute.xlu0 %578
    %580 = vrot.lane.b32.xlu0 %v393, 64
    %v581 = vpop.permute.xlu0 %580
    %582 = vrot.lane.b32.xlu0 %v394, 64
    %v583 = vpop.permute.xlu0 %582
    %584 = vrot.lane.b32.xlu0 %v395, 64
    %v585 = vpop.permute.xlu0 %584
    %586 = vrot.lane.b32.xlu0 %v396, 64
    %v587 = vpop.permute.xlu0 %586
    %588 = vrot.lane.b32.xlu0 %v397, 64
    %v589 = vpop.permute.xlu0 %588
    %590 = vrot.lane.b32.xlu0 %v398, 64
    %v591 = vpop.permute.xlu0 %590
    %592 = vrot.lane.b32.xlu0 %v399, 64
    %v593 = vpop.permute.xlu0 %592
    %594 = vrot.lane.b32.xlu0 %v400, 64
    %v595 = vpop.permute.xlu0 %594
    %596 = vrot.lane.b32.xlu0 %v401, 64
    %v597 = vpop.permute.xlu0 %596
    %598 = vrot.lane.b32.xlu0 %v402, 64
    %v599 = vpop.permute.xlu0 %598
    %600 = vrot.lane.b32.xlu0 %v403, 64
    %v601 = vpop.permute.xlu0 %600
    %602 = vrot.lane.b32.xlu0 %v404, 64
    %v603 = vpop.permute.xlu0 %602
    %604 = vrot.lane.b32.xlu0 %v405, 64
    %v605 = vpop.permute.xlu0 %604
    %606 = vrot.lane.b32.xlu0 %v406, 64
    %v607 = vpop.permute.xlu0 %606
    %608 = vrot.lane.b32.xlu0 %v407, 64
    %v609 = vpop.permute.xlu0 %608
    %610 = vrot.lane.b32.xlu0 %v408, 64
    %v611 = vpop.permute.xlu0 %610
    %612 = vrot.lane.b32.xlu0 %v379, 64
    %v613 = vpop.permute.xlu0 %612
    %vm614 = vcmask 523264
    %v615 = vsel %vm614, %v441, %v443
    %v616 = vsel %vm614, %v443, %v445
    %v617 = vsel %vm614, %v445, %v447
    %v618 = vsel %vm614, %v447, %v449
    %v619 = vsel %vm614, %v449, %v451
    %v620 = vsel %vm614, %v451, %v453
    %v621 = vsel %vm614, %v453, %v455
    %v622 = vsel %vm614, %v455, %v457
    %v623 = vsel %vm614, %v457, %v459
    %v624 = vsel %vm614, %v459, %v461
    %v625 = vsel %vm614, %v461, %v463
    %v626 = vsel %vm614, %v463, %v465
    %v627 = vsel %vm614, %v465, %v467
    %v628 = vsel %vm614, %v467, %v469
    %v629 = vsel %vm614, %v469, %v471
    %v630 = vsel %vm614, %v471, %v473
    %v631 = vsel %vm614, %v473, %v475
    %v632 = vsel %vm614, %v475, %v477
    %v633 = vsel %vm614, %v477, %v479
    %v634 = vsel %vm614, %v479, %v481
    %v635 = vsel %vm614, %v481, %v483
    %v636 = vsel %vm614, %v483, %v485
    %v637 = vsel %vm614, %v485, %v487
    %v638 = vsel %vm614, %v487, %v489
    %v639 = vsel %vm614, %v489, %v491
    %v640 = vsel %vm614, %v491, %v493
    %v641 = vsel %vm614, %v493, %v495
    %v642 = vsel %vm614, %v495, %v497
    %v643 = vsel %vm614, %v499, %v501
    %v644 = vsel %vm614, %v501, %v503
    %v645 = vsel %vm614, %v503, %v505
    %v646 = vsel %vm614, %v505, %v507
    %v647 = vsel %vm614, %v507, %v509
    %v648 = vsel %vm614, %v509, %v511
    %v649 = vsel %vm614, %v511, %v513
    %v650 = vsel %vm614, %v513, %v515
    %v651 = vsel %vm614, %v515, %v517
    %v652 = vsel %vm614, %v517, %v519
    %v653 = vsel %vm614, %v519, %v521
    %v654 = vsel %vm614, %v521, %v523
    %v655 = vsel %vm614, %v523, %v525
    %v656 = vsel %vm614, %v525, %v527
    %v657 = vsel %vm614, %v527, %v529
    %v658 = vsel %vm614, %v529, %v531
    %v659 = vsel %vm614, %v531, %v533
    %v660 = vsel %vm614, %v533, %v535
    %v661 = vsel %vm614, %v535, %v537
    %v662 = vsel %vm614, %v537, %v539
    %v663 = vsel %vm614, %v539, %v541
    %v664 = vsel %vm614, %v541, %v543
    %v665 = vsel %vm614, %v543, %v545
    %v666 = vsel %vm614, %v545, %v547
    %v667 = vsel %vm614, %v547, %v549
    %v668 = vsel %vm614, %v549, %v551
    %v669 = vsel %vm614, %v551, %v553
    %v670 = vsel %vm614, %v553, %v555
    %v671 = vsel %vm614, %v557, %v559
    %v672 = vsel %vm614, %v559, %v561
    %v673 = vsel %vm614, %v561, %v563
    %v674 = vsel %vm614, %v563, %v565
    %v675 = vsel %vm614, %v565, %v567
    %v676 = vsel %vm614, %v567, %v569
    %v677 = vsel %vm614, %v569, %v571
    %v678 = vsel %vm614, %v571, %v573
    %v679 = vsel %vm614, %v573, %v575
    %v680 = vsel %vm614, %v575, %v577
    %v681 = vsel %vm614, %v577, %v579
    %v682 = vsel %vm614, %v579, %v581
    %v683 = vsel %vm614, %v581, %v583
    %v684 = vsel %vm614, %v583, %v585
    %v685 = vsel %vm614, %v585, %v587
    %v686 = vsel %vm614, %v587, %v589
    %v687 = vsel %vm614, %v589, %v591
    %v688 = vsel %vm614, %v591, %v593
    %v689 = vsel %vm614, %v593, %v595
    %v690 = vsel %vm614, %v595, %v597
    %v691 = vsel %vm614, %v597, %v599
    %v692 = vsel %vm614, %v599, %v601
    %v693 = vsel %vm614, %v601, %v603
    %v694 = vsel %vm614, %v603, %v605
    %v695 = vsel %vm614, %v605, %v607
    %v696 = vsel %vm614, %v607, %v609
    %v697 = vsel %vm614, %v609, %v611
    %v698 = vsel %vm614, %v611, %v613
    %vm783 = vcmask 195584
    %v785 = vsel %vm783, %v439, 0
    %787 = vmatprep.subr.mxu0 %v616
    %788 = vmatpush1.msra.mxu0 %v615
    %789 = vmatprep.subr.mxu0 %v644
    %790 = vmatpush1.msra.mxu0 %v643
    %791 = vmatprep.subr.mxu0 %v672
    %792 = vmatpush1.msra.mxu0 %v671
    %793 = vmatprep.subr.mxu0 0.0
    %794 = vmatpush1.msra.mxu0 0.0
    %795 = vmatprep.subr.mxu0 0.0
    %796 = vmatpush1.msra.mxu0 0.0
    %797 = vmatprep.subr.mxu0 0.0
    %798 = vmatpush1.msra.mxu0 0.0
    %799 = vmatprep.subr.mxu0 0.0
    %800 = vmatpush1.msra.mxu0 0.0
    %801 = vmatprep.subr.mxu0 0.0
    %802 = vmatpush1.msra.mxu0 0.0
    %803 = vmatprep.subr.mxu0 0.0
    %804 = vmatpush1.msra.mxu0 0.0
    %805 = vmatprep.subr.mxu0 0.0
    %806 = vmatpush1.msra.mxu0 0.0
    %807 = vmatprep.subr.mxu0 0.0
    %808 = vmatpush1.msra.mxu0 0.0
    %809 = vmatprep.subr.mxu0 0.0
    %810 = vmatpush1.msra.mxu0 0.0
    %811 = vmatprep.subr.mxu0 0.0
    %812 = vmatpush1.msra.mxu0 0.0
    %813 = vmatprep.subr.mxu0 0.0
    %814 = vmatpush1.msra.mxu0 0.0
    %815 = vmatprep.subr.mxu0 0.0
    %816 = vmatpush1.msra.mxu0 0.0
    %817 = vmatprep.subr.mxu0 0.0
    %818 = vmatpush1.msra.mxu0 0.0
    %819 = vmatprep.subr.mxu0 0.0
    %820 = vmatpush1.msra.mxu0 0.0
    %821 = vmatprep.subr.mxu0 0.0
    %822 = vmatpush1.msra.mxu0 0.0
    %823 = vmatprep.subr.mxu0 0.0
    %824 = vmatpush1.msra.mxu0 0.0
    %825 = vmatprep.subr.mxu0 0.0
    %826 = vmatpush1.msra.mxu0 0.0
    %827 = vmatprep.subr.mxu0 0.0
    %828 = vmatpush1.msra.mxu0 0.0
    %829 = vmatprep.subr.mxu0 0.0
    %830 = vmatpush1.msra.mxu0 0.0
    %831 = vmatprep.subr.mxu0 0.0
    %832 = vmatpush1.msra.mxu0 0.0
    %833 = vmatprep.subr.mxu0 0.0
    %834 = vmatpush1.msra.mxu0 0.0
    %835 = vmatprep.subr.mxu0 0.0
    %836 = vmatpush1.msra.mxu0 0.0
    %837 = vmatprep.subr.mxu0 0.0
    %838 = vmatpush1.msra.mxu0 0.0
    %839 = vmatprep.subr.mxu0 0.0
    %840 = vmatpush1.msra.mxu0 0.0
    %841 = vmatprep.subr.mxu0 0.0
    %842 = vmatpush1.msra.mxu0 0.0
    %843 = vmatprep.subr.mxu0 0.0
    %844 = vmatpush1.msra.mxu0 0.0
    %845 = vmatprep.subr.mxu0 0.0
    %846 = vmatpush1.msra.mxu0 0.0
    %847 = vmatprep.subr.mxu0 0.0
    %848 = vmatpush1.msra.mxu0 0.0
    %849 = vmatprep.subr.mxu0 0.0
    %850 = vmatpush1.msra.mxu0 0.0
    %851 = vmatprep.mubr.f32.mxu0 0.0
    %852 = vmatmul.mubr.f32.gmra.mrb[0].mxu0 %v785
    %v853 = vpop.f32.mrb[0].mxu0
    %v854 = vadd.f32 0.0, %v853
    %v855 = vpop.f32.mrb[0].mxu0
    %v856 = vadd.f32 0.0, %v855
    %857 = vdwg.mxu0
    %858 = vmatprep.subr.mxu0 %v618
    %859 = vmatpush1.msra.mxu0 %v617
    %860 = vmatprep.subr.mxu0 %v646
    %861 = vmatpush1.msra.mxu0 %v645
    %862 = vmatprep.subr.mxu0 %v674
    %863 = vmatpush1.msra.mxu0 %v673
    %864 = vmatprep.subr.mxu0 0.0
    %865 = vmatpush1.msra.mxu0 0.0
    %866 = vmatprep.subr.mxu0 0.0
    %867 = vmatpush1.msra.mxu0 0.0
    %868 = vmatprep.subr.mxu0 0.0
    %869 = vmatpush1.msra.mxu0 0.0
    %870 = vmatprep.subr.mxu0 0.0
    %871 = vmatpush1.msra.mxu0 0.0
    %872 = vmatprep.subr.mxu0 0.0
    %873 = vmatpush1.msra.mxu0 0.0
    %874 = vmatprep.subr.mxu0 0.0
    %875 = vmatpush1.msra.mxu0 0.0
    %876 = vmatprep.subr.mxu0 0.0
    %877 = vmatpush1.msra.mxu0 0.0
    %878 = vmatprep.subr.mxu0 0.0
    %879 = vmatpush1.msra.mxu0 0.0
    %880 = vmatprep.subr.mxu0 0.0
    %881 = vmatpush1.msra.mxu0 0.0
    %882 = vmatprep.subr.mxu0 0.0
    %883 = vmatpush1.msra.mxu0 0.0
    %884 = vmatprep.subr.mxu0 0.0
    %885 = vmatpush1.msra.mxu0 0.0
    %886 = vmatprep.subr.mxu0 0.0
    %887 = vmatpush1.msra.mxu0 0.0
    %888 = vmatprep.subr.mxu0 0.0
    %889 = vmatpush1.msra.mxu0 0.0
    %890 = vmatprep.subr.mxu0 0.0
    %891 = vmatpush1.msra.mxu0 0.0
    %892 = vmatprep.subr.mxu0 0.0
    %893 = vmatpush1.msra.mxu0 0.0
    %894 = vmatprep.subr.mxu0 0.0
    %895 = vmatpush1.msra.mxu0 0.0
    %896 = vmatprep.subr.mxu0 0.0
    %897 = vmatpush1.msra.mxu0 0.0
    %898 = vmatprep.subr.mxu0 0.0
    %899 = vmatpush1.msra.mxu0 0.0
    %900 = vmatprep.subr.mxu0 0.0
    %901 = vmatpush1.msra.mxu0 0.0
    %902 = vmatprep.subr.mxu0 0.0
    %903 = vmatpush1.msra.mxu0 0.0
    %904 = vmatprep.subr.mxu0 0.0
    %905 = vmatpush1.msra.mxu0 0.0
    %906 = vmatprep.subr.mxu0 0.0
    %907 = vmatpush1.msra.mxu0 0.0
    %908 = vmatprep.subr.mxu0 0.0
    %909 = vmatpush1.msra.mxu0 0.0
    %910 = vmatprep.subr.mxu0 0.0
    %911 = vmatpush1.msra.mxu0 0.0
    %912 = vmatprep.subr.mxu0 0.0
    %913 = vmatpush1.msra.mxu0 0.0
    %914 = vmatprep.subr.mxu0 0.0
    %915 = vmatpush1.msra.mxu0 0.0
    %916 = vmatprep.subr.mxu0 0.0
    %917 = vmatpush1.msra.mxu0 0.0
    %918 = vmatprep.subr.mxu0 0.0
    %919 = vmatpush1.msra.mxu0 0.0
    %920 = vmatprep.subr.mxu0 0.0
    %921 = vmatpush1.msra.mxu0 0.0
    %922 = vmatprep.mubr.f32.mxu0 0.0
    %923 = vmatmul.mubr.f32.gmra.mrb[0].mxu0 %v785
    %v924 = vpop.f32.mrb[0].mxu0
    %v925 = vadd.f32 0.0, %v924
    %v926 = vpop.f32.mrb[0].mxu0
    %v927 = vadd.f32 0.0, %v926
    %928 = vdwg.mxu0
    %929 = vmatprep.subr.mxu0 %v620
    %930 = vmatpush1.msra.mxu0 %v619
    %931 = vmatprep.subr.mxu0 %v648
    %932 = vmatpush1.msra.mxu0 %v647
    %933 = vmatprep.subr.mxu0 %v676
    %934 = vmatpush1.msra.mxu0 %v675
    %935 = vmatprep.subr.mxu0 0.0
    %936 = vmatpush1.msra.mxu0 0.0
    %937 = vmatprep.subr.mxu0 0.0
    %938 = vmatpush1.msra.mxu0 0.0
    %939 = vmatprep.subr.mxu0 0.0
    %940 = vmatpush1.msra.mxu0 0.0
    %941 = vmatprep.subr.mxu0 0.0
    %942 = vmatpush1.msra.mxu0 0.0
    %943 = vmatprep.subr.mxu0 0.0
    %944 = vmatpush1.msra.mxu0 0.0
    %945 = vmatprep.subr.mxu0 0.0
    %946 = vmatpush1.msra.mxu0 0.0
    %947 = vmatprep.subr.mxu0 0.0
    %948 = vmatpush1.msra.mxu0 0.0
    %949 = vmatprep.subr.mxu0 0.0
    %950 = vmatpush1.msra.mxu0 0.0
    %951 = vmatprep.subr.mxu0 0.0
    %952 = vmatpush1.msra.mxu0 0.0
    %953 = vmatprep.subr.mxu0 0.0
    %954 = vmatpush1.msra.mxu0 0.0
    %955 = vmatprep.subr.mxu0 0.0
    %956 = vmatpush1.msra.mxu0 0.0
    %957 = vmatprep.subr.mxu0 0.0
    %958 = vmatpush1.msra.mxu0 0.0
    %959 = vmatprep.subr.mxu0 0.0
    %960 = vmatpush1.msra.mxu0 0.0
    %961 = vmatprep.subr.mxu0 0.0
    %962 = vmatpush1.msra.mxu0 0.0
    %963 = vmatprep.subr.mxu0 0.0
    %964 = vmatpush1.msra.mxu0 0.0
    %965 = vmatprep.subr.mxu0 0.0
    %966 = vmatpush1.msra.mxu0 0.0
    %967 = vmatprep.subr.mxu0 0.0
    %968 = vmatpush1.msra.mxu0 0.0
    %969 = vmatprep.subr.mxu0 0.0
    %970 = vmatpush1.msra.mxu0 0.0
    %971 = vmatprep.subr.mxu0 0.0
    %972 = vmatpush1.msra.mxu0 0.0
    %973 = vmatprep.subr.mxu0 0.0
    %974 = vmatpush1.msra.mxu0 0.0
    %975 = vmatprep.subr.mxu0 0.0
    %976 = vmatpush1.msra.mxu0 0.0
    %977 = vmatprep.subr.mxu0 0.0
    %978 = vmatpush1.msra.mxu0 0.0
    %979 = vmatprep.subr.mxu0 0.0
    %980 = vmatpush1.msra.mxu0 0.0
    %981 = vmatprep.subr.mxu0 0.0
    %982 = vmatpush1.msra.mxu0 0.0
    %983 = vmatprep.subr.mxu0 0.0
    %984 = vmatpush1.msra.mxu0 0.0
    %985 = vmatprep.subr.mxu0 0.0
    %986 = vmatpush1.msra.mxu0 0.0
    %987 = vmatprep.subr.mxu0 0.0
    %988 = vmatpush1.msra.mxu0 0.0
    %989 = vmatprep.subr.mxu0 0.0
    %990 = vmatpush1.msra.mxu0 0.0
    %991 = vmatprep.subr.mxu0 0.0
    %992 = vmatpush1.msra.mxu0 0.0
    %993 = vmatprep.mubr.f32.mxu0 0.0
    %994 = vmatmul.mubr.f32.gmra.mrb[0].mxu0 %v785
    %v995 = vpop.f32.mrb[0].mxu0
    %v996 = vadd.f32 0.0, %v995
    %v997 = vpop.f32.mrb[0].mxu0
    %v998 = vadd.f32 0.0, %v997
    %999 = vdwg.mxu0
    %1000 = vmatprep.subr.mxu0 %v622
    %1001 = vmatpush1.msra.mxu0 %v621
    %1002 = vmatprep.subr.mxu0 %v650
    %1003 = vmatpush1.msra.mxu0 %v649
    %1004 = vmatprep.subr.mxu0 %v678
    %1005 = vmatpush1.msra.mxu0 %v677
    %1006 = vmatprep.subr.mxu0 0.0
    %1007 = vmatpush1.msra.mxu0 0.0
    %1008 = vmatprep.subr.mxu0 0.0
    %1009 = vmatpush1.msra.mxu0 0.0
    %1010 = vmatprep.subr.mxu0 0.0
    %1011 = vmatpush1.msra.mxu0 0.0
    %1012 = vmatprep.subr.mxu0 0.0
    %1013 = vmatpush1.msra.mxu0 0.0
    %1014 = vmatprep.subr.mxu0 0.0
    %1015 = vmatpush1.msra.mxu0 0.0
    %1016 = vmatprep.subr.mxu0 0.0
    %1017 = vmatpush1.msra.mxu0 0.0
    %1018 = vmatprep.subr.mxu0 0.0
    %1019 = vmatpush1.msra.mxu0 0.0
    %1020 = vmatprep.subr.mxu0 0.0
    %1021 = vmatpush1.msra.mxu0 0.0
    %1022 = vmatprep.subr.mxu0 0.0
    %1023 = vmatpush1.msra.mxu0 0.0
    %1024 = vmatprep.subr.mxu0 0.0
    %1025 = vmatpush1.msra.mxu0 0.0
    %1026 = vmatprep.subr.mxu0 0.0
    %1027 = vmatpush1.msra.mxu0 0.0
    %1028 = vmatprep.subr.mxu0 0.0
    %1029 = vmatpush1.msra.mxu0 0.0
    %1030 = vmatprep.subr.mxu0 0.0
    %1031 = vmatpush1.msra.mxu0 0.0
    %1032 = vmatprep.subr.mxu0 0.0
    %1033 = vmatpush1.msra.mxu0 0.0
    %1034 = vmatprep.subr.mxu0 0.0
    %1035 = vmatpush1.msra.mxu0 0.0
    %1036 = vmatprep.subr.mxu0 0.0
    %1037 = vmatpush1.msra.mxu0 0.0
    %1038 = vmatprep.subr.mxu0 0.0
    %1039 = vmatpush1.msra.mxu0 0.0
    %1040 = vmatprep.subr.mxu0 0.0
    %1041 = vmatpush1.msra.mxu0 0.0
    %1042 = vmatprep.subr.mxu0 0.0
    %1043 = vmatpush1.msra.mxu0 0.0
    %1044 = vmatprep.subr.mxu0 0.0
    %1045 = vmatpush1.msra.mxu0 0.0
    %1046 = vmatprep.subr.mxu0 0.0
    %1047 = vmatpush1.msra.mxu0 0.0
    %1048 = vmatprep.subr.mxu0 0.0
    %1049 = vmatpush1.msra.mxu0 0.0
    %1050 = vmatprep.subr.mxu0 0.0
    %1051 = vmatpush1.msra.mxu0 0.0
    %1052 = vmatprep.subr.mxu0 0.0
    %1053 = vmatpush1.msra.mxu0 0.0
    %1054 = vmatprep.subr.mxu0 0.0
    %1055 = vmatpush1.msra.mxu0 0.0
    %1056 = vmatprep.subr.mxu0 0.0
    %1057 = vmatpush1.msra.mxu0 0.0
    %1058 = vmatprep.subr.mxu0 0.0
    %1059 = vmatpush1.msra.mxu0 0.0
    %1060 = vmatprep.subr.mxu0 0.0
    %1061 = vmatpush1.msra.mxu0 0.0
    %1062 = vmatprep.subr.mxu0 0.0
    %1063 = vmatpush1.msra.mxu0 0.0
    %1064 = vmatprep.mubr.f32.mxu0 0.0
    %1065 = vmatmul.mubr.f32.gmra.mrb[0].mxu0 %v785
    %v1066 = vpop.f32.mrb[0].mxu0
    %v1067 = vadd.f32 0.0, %v1066
    %v1068 = vpop.f32.mrb[0].mxu0
    %v1069 = vadd.f32 0.0, %v1068
    %1070 = vdwg.mxu0
    %1071 = vmatprep.subr.mxu0 %v624
    %1072 = vmatpush1.msra.mxu0 %v623
    %1073 = vmatprep.subr.mxu0 %v652
    %1074 = vmatpush1.msra.mxu0 %v651
    %1075 = vmatprep.subr.mxu0 %v680
    %1076 = vmatpush1.msra.mxu0 %v679
    %1077 = vmatprep.subr.mxu0 0.0
    %1078 = vmatpush1.msra.mxu0 0.0
    %1079 = vmatprep.subr.mxu0 0.0
    %1080 = vmatpush1.msra.mxu0 0.0
    %1081 = vmatprep.subr.mxu0 0.0
    %1082 = vmatpush1.msra.mxu0 0.0
    %1083 = vmatprep.subr.mxu0 0.0
    %1084 = vmatpush1.msra.mxu0 0.0
    %1085 = vmatprep.subr.mxu0 0.0
    %1086 = vmatpush1.msra.mxu0 0.0
    %1087 = vmatprep.subr.mxu0 0.0
    %1088 = vmatpush1.msra.mxu0 0.0
    %1089 = vmatprep.subr.mxu0 0.0
    %1090 = vmatpush1.msra.mxu0 0.0
    %1091 = vmatprep.subr.mxu0 0.0
    %1092 = vmatpush1.msra.mxu0 0.0
    %1093 = vmatprep.subr.mxu0 0.0
    %1094 = vmatpush1.msra.mxu0 0.0
    %1095 = vmatprep.subr.mxu0 0.0
    %1096 = vmatpush1.msra.mxu0 0.0
    %1097 = vmatprep.subr.mxu0 0.0
    %1098 = vmatpush1.msra.mxu0 0.0
    %1099 = vmatprep.subr.mxu0 0.0
    %1100 = vmatpush1.msra.mxu0 0.0
    %1101 = vmatprep.subr.mxu0 0.0
    %1102 = vmatpush1.msra.mxu0 0.0
    %1103 = vmatprep.subr.mxu0 0.0
    %1104 = vmatpush1.msra.mxu0 0.0
    %1105 = vmatprep.subr.mxu0 0.0
    %1106 = vmatpush1.msra.mxu0 0.0
    %1107 = vmatprep.subr.mxu0 0.0
    %1108 = vmatpush1.msra.mxu0 0.0
    %1109 = vmatprep.subr.mxu0 0.0
    %1110 = vmatpush1.msra.mxu0 0.0
    %1111 = vmatprep.subr.mxu0 0.0
    %1112 = vmatpush1.msra.mxu0 0.0
    %1113 = vmatprep.subr.mxu0 0.0
    %1114 = vmatpush1.msra.mxu0 0.0
    %1115 = vmatprep.subr.mxu0 0.0
    %1116 = vmatpush1.msra.mxu0 0.0
    %1117 = vmatprep.subr.mxu0 0.0
    %1118 = vmatpush1.msra.mxu0 0.0
    %1119 = vmatprep.subr.mxu0 0.0
    %1120 = vmatpush1.msra.mxu0 0.0
    %1121 = vmatprep.subr.mxu0 0.0
    %1122 = vmatpush1.msra.mxu0 0.0
    %1123 = vmatprep.subr.mxu0 0.0
    %1124 = vmatpush1.msra.mxu0 0.0
    %1125 = vmatprep.subr.mxu0 0.0
    %1126 = vmatpush1.msra.mxu0 0.0
    %1127 = vmatprep.subr.mxu0 0.0
    %1128 = vmatpush1.msra.mxu0 0.0
    %1129 = vmatprep.subr.mxu0 0.0
    %1130 = vmatpush1.msra.mxu0 0.0
    %1131 = vmatprep.subr.mxu0 0.0
    %1132 = vmatpush1.msra.mxu0 0.0
    %1133 = vmatprep.subr.mxu0 0.0
    %1134 = vmatpush1.msra.mxu0 0.0
    %1135 = vmatprep.mubr.f32.mxu0 0.0
    %1136 = vmatmul.mubr.f32.gmra.mrb[0].mxu0 %v785
    %v1137 = vpop.f32.mrb[0].mxu0
    %v1138 = vadd.f32 0.0, %v1137
    %v1139 = vpop.f32.mrb[0].mxu0
    %v1140 = vadd.f32 0.0, %v1139
    %1141 = vdwg.mxu0
    %1142 = vmatprep.subr.mxu0 %v626
    %1143 = vmatpush1.msra.mxu0 %v625
    %1144 = vmatprep.subr.mxu0 %v654
    %1145 = vmatpush1.msra.mxu0 %v653
    %1146 = vmatprep.subr.mxu0 %v682
    %1147 = vmatpush1.msra.mxu0 %v681
    %1148 = vmatprep.subr.mxu0 0.0
    %1149 = vmatpush1.msra.mxu0 0.0
    %1150 = vmatprep.subr.mxu0 0.0
    %1151 = vmatpush1.msra.mxu0 0.0
    %1152 = vmatprep.subr.mxu0 0.0
    %1153 = vmatpush1.msra.mxu0 0.0
    %1154 = vmatprep.subr.mxu0 0.0
    %1155 = vmatpush1.msra.mxu0 0.0
    %1156 = vmatprep.subr.mxu0 0.0
    %1157 = vmatpush1.msra.mxu0 0.0
    %1158 = vmatprep.subr.mxu0 0.0
    %1159 = vmatpush1.msra.mxu0 0.0
    %1160 = vmatprep.subr.mxu0 0.0
    %1161 = vmatpush1.msra.mxu0 0.0
    %1162 = vmatprep.subr.mxu0 0.0
    %1163 = vmatpush1.msra.mxu0 0.0
    %1164 = vmatprep.subr.mxu0 0.0
    %1165 = vmatpush1.msra.mxu0 0.0
    %1166 = vmatprep.subr.mxu0 0.0
    %1167 = vmatpush1.msra.mxu0 0.0
    %1168 = vmatprep.subr.mxu0 0.0
    %1169 = vmatpush1.msra.mxu0 0.0
    %1170 = vmatprep.subr.mxu0 0.0
    %1171 = vmatpush1.msra.mxu0 0.0
    %1172 = vmatprep.subr.mxu0 0.0
    %1173 = vmatpush1.msra.mxu0 0.0
    %1174 = vmatprep.subr.mxu0 0.0
    %1175 = vmatpush1.msra.mxu0 0.0
    %1176 = vmatprep.subr.mxu0 0.0
    %1177 = vmatpush1.msra.mxu0 0.0
    %1178 = vmatprep.subr.mxu0 0.0
    %1179 = vmatpush1.msra.mxu0 0.0
    %1180 = vmatprep.subr.mxu0 0.0
    %1181 = vmatpush1.msra.mxu0 0.0
    %1182 = vmatprep.subr.mxu0 0.0
    %1183 = vmatpush1.msra.mxu0 0.0
    %1184 = vmatprep.subr.mxu0 0.0
    %1185 = vmatpush1.msra.mxu0 0.0
    %1186 = vmatprep.subr.mxu0 0.0
    %1187 = vmatpush1.msra.mxu0 0.0
    %1188 = vmatprep.subr.mxu0 0.0
    %1189 = vmatpush1.msra.mxu0 0.0
    %1190 = vmatprep.subr.mxu0 0.0
    %1191 = vmatpush1.msra.mxu0 0.0
    %1192 = vmatprep.subr.mxu0 0.0
    %1193 = vmatpush1.msra.mxu0 0.0
    %1194 = vmatprep.subr.mxu0 0.0
    %1195 = vmatpush1.msra.mxu0 0.0
    %1196 = vmatprep.subr.mxu0 0.0
    %1197 = vmatpush1.msra.mxu0 0.0
    %1198 = vmatprep.subr.mxu0 0.0
    %1199 = vmatpush1.msra.mxu0 0.0
    %1200 = vmatprep.subr.mxu0 0.0
    %1201 = vmatpush1.msra.mxu0 0.0
    %1202 = vmatprep.subr.mxu0 0.0
    %1203 = vmatpush1.msra.mxu0 0.0
    %1204 = vmatprep.subr.mxu0 0.0
    %1205 = vmatpush1.msra.mxu0 0.0
    %1206 = vmatprep.mubr.f32.mxu0 0.0
    %1207 = vmatmul.mubr.f32.gmra.mrb[0].mxu0 %v785
    %v1208 = vpop.f32.mrb[0].mxu0
    %v1209 = vadd.f32 0.0, %v1208
    %v1210 = vpop.f32.mrb[0].mxu0
    %v1211 = vadd.f32 0.0, %v1210
    %1212 = vdwg.mxu0
    %1213 = vmatprep.subr.mxu0 %v628
    %1214 = vmatpush1.msra.mxu0 %v627
    %1215 = vmatprep.subr.mxu0 %v656
    %1216 = vmatpush1.msra.mxu0 %v655
    %1217 = vmatprep.subr.mxu0 %v684
    %1218 = vmatpush1.msra.mxu0 %v683
    %1219 = vmatprep.subr.mxu0 0.0
    %1220 = vmatpush1.msra.mxu0 0.0
    %1221 = vmatprep.subr.mxu0 0.0
    %1222 = vmatpush1.msra.mxu0 0.0
    %1223 = vmatprep.subr.mxu0 0.0
    %1224 = vmatpush1.msra.mxu0 0.0
    %1225 = vmatprep.subr.mxu0 0.0
    %1226 = vmatpush1.msra.mxu0 0.0
    %1227 = vmatprep.subr.mxu0 0.0
    %1228 = vmatpush1.msra.mxu0 0.0
    %1229 = vmatprep.subr.mxu0 0.0
    %1230 = vmatpush1.msra.mxu0 0.0
    %1231 = vmatprep.subr.mxu0 0.0
    %1232 = vmatpush1.msra.mxu0 0.0
    %1233 = vmatprep.subr.mxu0 0.0
    %1234 = vmatpush1.msra.mxu0 0.0
    %1235 = vmatprep.subr.mxu0 0.0
    %1236 = vmatpush1.msra.mxu0 0.0
    %1237 = vmatprep.subr.mxu0 0.0
    %1238 = vmatpush1.msra.mxu0 0.0
    %1239 = vmatprep.subr.mxu0 0.0
    %1240 = vmatpush1.msra.mxu0 0.0
    %1241 = vmatprep.subr.mxu0 0.0
    %1242 = vmatpush1.msra.mxu0 0.0
    %1243 = vmatprep.subr.mxu0 0.0
    %1244 = vmatpush1.msra.mxu0 0.0
    %1245 = vmatprep.subr.mxu0 0.0
    %1246 = vmatpush1.msra.mxu0 0.0
    %1247 = vmatprep.subr.mxu0 0.0
    %1248 = vmatpush1.msra.mxu0 0.0
    %1249 = vmatprep.subr.mxu0 0.0
    %1250 = vmatpush1.msra.mxu0 0.0
    %1251 = vmatprep.subr.mxu0 0.0
    %1252 = vmatpush1.msra.mxu0 0.0
    %1253 = vmatprep.subr.mxu0 0.0
    %1254 = vmatpush1.msra.mxu0 0.0
    %1255 = vmatprep.subr.mxu0 0.0
    %1256 = vmatpush1.msra.mxu0 0.0
    %1257 = vmatprep.subr.mxu0 0.0
    %1258 = vmatpush1.msra.mxu0 0.0
    %1259 = vmatprep.subr.mxu0 0.0
    %1260 = vmatpush1.msra.mxu0 0.0
    %1261 = vmatprep.subr.mxu0 0.0
    %1262 = vmatpush1.msra.mxu0 0.0
    %1263 = vmatprep.subr.mxu0 0.0
    %1264 = vmatpush1.msra.mxu0 0.0
    %1265 = vmatprep.subr.mxu0 0.0
    %1266 = vmatpush1.msra.mxu0 0.0
    %1267 = vmatprep.subr.mxu0 0.0
    %1268 = vmatpush1.msra.mxu0 0.0
    %1269 = vmatprep.subr.mxu0 0.0
    %1270 = vmatpush1.msra.mxu0 0.0
    %1271 = vmatprep.subr.mxu0 0.0
    %1272 = vmatpush1.msra.mxu0 0.0
    %1273 = vmatprep.subr.mxu0 0.0
    %1274 = vmatpush1.msra.mxu0 0.0
    %1275 = vmatprep.subr.mxu0 0.0
    %1276 = vmatpush1.msra.mxu0 0.0
    %1277 = vmatprep.mubr.f32.mxu0 0.0
    %1278 = vmatmul.mubr.f32.gmra.mrb[0].mxu0 %v785
    %v1279 = vpop.f32.mrb[0].mxu0
    %v1280 = vadd.f32 0.0, %v1279
    %v1281 = vpop.f32.mrb[0].mxu0
    %v1282 = vadd.f32 0.0, %v1281
    %1283 = vdwg.mxu0
    %1284 = vmatprep.subr.mxu0 %v630
    %1285 = vmatpush1.msra.mxu0 %v629
    %1286 = vmatprep.subr.mxu0 %v658
    %1287 = vmatpush1.msra.mxu0 %v657
    %1288 = vmatprep.subr.mxu0 %v686
    %1289 = vmatpush1.msra.mxu0 %v685
    %1290 = vmatprep.subr.mxu0 0.0
    %1291 = vmatpush1.msra.mxu0 0.0
    %1292 = vmatprep.subr.mxu0 0.0
    %1293 = vmatpush1.msra.mxu0 0.0
    %1294 = vmatprep.subr.mxu0 0.0
    %1295 = vmatpush1.msra.mxu0 0.0
    %1296 = vmatprep.subr.mxu0 0.0
    %1297 = vmatpush1.msra.mxu0 0.0
    %1298 = vmatprep.subr.mxu0 0.0
    %1299 = vmatpush1.msra.mxu0 0.0
    %1300 = vmatprep.subr.mxu0 0.0
    %1301 = vmatpush1.msra.mxu0 0.0
    %1302 = vmatprep.subr.mxu0 0.0
    %1303 = vmatpush1.msra.mxu0 0.0
    %1304 = vmatprep.subr.mxu0 0.0
    %1305 = vmatpush1.msra.mxu0 0.0
    %1306 = vmatprep.subr.mxu0 0.0
    %1307 = vmatpush1.msra.mxu0 0.0
    %1308 = vmatprep.subr.mxu0 0.0
    %1309 = vmatpush1.msra.mxu0 0.0
    %1310 = vmatprep.subr.mxu0 0.0
    %1311 = vmatpush1.msra.mxu0 0.0
    %1312 = vmatprep.subr.mxu0 0.0
    %1313 = vmatpush1.msra.mxu0 0.0
    %1314 = vmatprep.subr.mxu0 0.0
    %1315 = vmatpush1.msra.mxu0 0.0
    %1316 = vmatprep.subr.mxu0 0.0
    %1317 = vmatpush1.msra.mxu0 0.0
    %1318 = vmatprep.subr.mxu0 0.0
    %1319 = vmatpush1.msra.mxu0 0.0
    %1320 = vmatprep.subr.mxu0 0.0
    %1321 = vmatpush1.msra.mxu0 0.0
    %1322 = vmatprep.subr.mxu0 0.0
    %1323 = vmatpush1.msra.mxu0 0.0
    %1324 = vmatprep.subr.mxu0 0.0
    %1325 = vmatpush1.msra.mxu0 0.0
    %1326 = vmatprep.subr.mxu0 0.0
    %1327 = vmatpush1.msra.mxu0 0.0
    %1328 = vmatprep.subr.mxu0 0.0
    %1329 = vmatpush1.msra.mxu0 0.0
    %1330 = vmatprep.subr.mxu0 0.0
    %1331 = vmatpush1.msra.mxu0 0.0
    %1332 = vmatprep.subr.mxu0 0.0
    %1333 = vmatpush1.msra.mxu0 0.0
    %1334 = vmatprep.subr.mxu0 0.0
    %1335 = vmatpush1.msra.mxu0 0.0
    %1336 = vmatprep.subr.mxu0 0.0
    %1337 = vmatpush1.msra.mxu0 0.0
    %1338 = vmatprep.subr.mxu0 0.0
    %1339 = vmatpush1.msra.mxu0 0.0
    %1340 = vmatprep.subr.mxu0 0.0
    %1341 = vmatpush1.msra.mxu0 0.0
    %1342 = vmatprep.subr.mxu0 0.0
    %1343 = vmatpush1.msra.mxu0 0.0
    %1344 = vmatprep.subr.mxu0 0.0
    %1345 = vmatpush1.msra.mxu0 0.0
    %1346 = vmatprep.subr.mxu0 0.0
    %1347 = vmatpush1.msra.mxu0 0.0
    %1348 = vmatprep.mubr.f32.mxu0 0.0
    %1349 = vmatmul.mubr.f32.gmra.mrb[0].mxu0 %v785
    %v1350 = vpop.f32.mrb[0].mxu0
    %v1351 = vadd.f32 0.0, %v1350
    %v1352 = vpop.f32.mrb[0].mxu0
    %v1353 = vadd.f32 0.0, %v1352
    %1354 = vdwg.mxu0
    %1355 = vmatprep.subr.mxu0 %v632
    %1356 = vmatpush1.msra.mxu0 %v631
    %1357 = vmatprep.subr.mxu0 %v660
    %1358 = vmatpush1.msra.mxu0 %v659
    %1359 = vmatprep.subr.mxu0 %v688
    %1360 = vmatpush1.msra.mxu0 %v687
    %1361 = vmatprep.subr.mxu0 0.0
    %1362 = vmatpush1.msra.mxu0 0.0
    %1363 = vmatprep.subr.mxu0 0.0
    %1364 = vmatpush1.msra.mxu0 0.0
    %1365 = vmatprep.subr.mxu0 0.0
    %1366 = vmatpush1.msra.mxu0 0.0
    %1367 = vmatprep.subr.mxu0 0.0
    %1368 = vmatpush1.msra.mxu0 0.0
    %1369 = vmatprep.subr.mxu0 0.0
    %1370 = vmatpush1.msra.mxu0 0.0
    %1371 = vmatprep.subr.mxu0 0.0
    %1372 = vmatpush1.msra.mxu0 0.0
    %1373 = vmatprep.subr.mxu0 0.0
    %1374 = vmatpush1.msra.mxu0 0.0
    %1375 = vmatprep.subr.mxu0 0.0
    %1376 = vmatpush1.msra.mxu0 0.0
    %1377 = vmatprep.subr.mxu0 0.0
    %1378 = vmatpush1.msra.mxu0 0.0
    %1379 = vmatprep.subr.mxu0 0.0
    %1380 = vmatpush1.msra.mxu0 0.0
    %1381 = vmatprep.subr.mxu0 0.0
    %1382 = vmatpush1.msra.mxu0 0.0
    %1383 = vmatprep.subr.mxu0 0.0
    %1384 = vmatpush1.msra.mxu0 0.0
    %1385 = vmatprep.subr.mxu0 0.0
    %1386 = vmatpush1.msra.mxu0 0.0
    %1387 = vmatprep.subr.mxu0 0.0
    %1388 = vmatpush1.msra.mxu0 0.0
    %1389 = vmatprep.subr.mxu0 0.0
    %1390 = vmatpush1.msra.mxu0 0.0
    %1391 = vmatprep.subr.mxu0 0.0
    %1392 = vmatpush1.msra.mxu0 0.0
    %1393 = vmatprep.subr.mxu0 0.0
    %1394 = vmatpush1.msra.mxu0 0.0
    %1395 = vmatprep.subr.mxu0 0.0
    %1396 = vmatpush1.msra.mxu0 0.0
    %1397 = vmatprep.subr.mxu0 0.0
    %1398 = vmatpush1.msra.mxu0 0.0
    %1399 = vmatprep.subr.mxu0 0.0
    %1400 = vmatpush1.msra.mxu0 0.0
    %1401 = vmatprep.subr.mxu0 0.0
    %1402 = vmatpush1.msra.mxu0 0.0
    %1403 = vmatprep.subr.mxu0 0.0
    %1404 = vmatpush1.msra.mxu0 0.0
    %1405 = vmatprep.subr.mxu0 0.0
    %1406 = vmatpush1.msra.mxu0 0.0
    %1407 = vmatprep.subr.mxu0 0.0
    %1408 = vmatpush1.msra.mxu0 0.0
    %1409 = vmatprep.subr.mxu0 0.0
    %1410 = vmatpush1.msra.mxu0 0.0
    %1411 = vmatprep.subr.mxu0 0.0
    %1412 = vmatpush1.msra.mxu0 0.0
    %1413 = vmatprep.subr.mxu0 0.0
    %1414 = vmatpush1.msra.mxu0 0.0
    %1415 = vmatprep.subr.mxu0 0.0
    %1416 = vmatpush1.msra.mxu0 0.0
    %1417 = vmatprep.subr.mxu0 0.0
    %1418 = vmatpush1.msra.mxu0 0.0
    %1419 = vmatprep.mubr.f32.mxu0 0.0
    %1420 = vmatmul.mubr.f32.gmra.mrb[0].mxu0 %v785
    %v1421 = vpop.f32.mrb[0].mxu0
    %v1422 = vadd.f32 0.0, %v1421
    %v1423 = vpop.f32.mrb[0].mxu0
    %v1424 = vadd.f32 0.0, %v1423
    %1425 = vdwg.mxu0
    %1426 = vmatprep.subr.mxu0 %v634
    %1427 = vmatpush1.msra.mxu0 %v633
    %1428 = vmatprep.subr.mxu0 %v662
    %1429 = vmatpush1.msra.mxu0 %v661
    %1430 = vmatprep.subr.mxu0 %v690
    %1431 = vmatpush1.msra.mxu0 %v689
    %1432 = vmatprep.subr.mxu0 0.0
    %1433 = vmatpush1.msra.mxu0 0.0
    %1434 = vmatprep.subr.mxu0 0.0
    %1435 = vmatpush1.msra.mxu0 0.0
    %1436 = vmatprep.subr.mxu0 0.0
    %1437 = vmatpush1.msra.mxu0 0.0
    %1438 = vmatprep.subr.mxu0 0.0
    %1439 = vmatpush1.msra.mxu0 0.0
    %1440 = vmatprep.subr.mxu0 0.0
    %1441 = vmatpush1.msra.mxu0 0.0
    %1442 = vmatprep.subr.mxu0 0.0
    %1443 = vmatpush1.msra.mxu0 0.0
    %1444 = vmatprep.subr.mxu0 0.0
    %1445 = vmatpush1.msra.mxu0 0.0
    %1446 = vmatprep.subr.mxu0 0.0
    %1447 = vmatpush1.msra.mxu0 0.0
    %1448 = vmatprep.subr.mxu0 0.0
    %1449 = vmatpush1.msra.mxu0 0.0
    %1450 = vmatprep.subr.mxu0 0.0
    %1451 = vmatpush1.msra.mxu0 0.0
    %1452 = vmatprep.subr.mxu0 0.0
    %1453 = vmatpush1.msra.mxu0 0.0
    %1454 = vmatprep.subr.mxu0 0.0
    %1455 = vmatpush1.msra.mxu0 0.0
    %1456 = vmatprep.subr.mxu0 0.0
    %1457 = vmatpush1.msra.mxu0 0.0
    %1458 = vmatprep.subr.mxu0 0.0
    %1459 = vmatpush1.msra.mxu0 0.0
    %1460 = vmatprep.subr.mxu0 0.0
    %1461 = vmatpush1.msra.mxu0 0.0
    %1462 = vmatprep.subr.mxu0 0.0
    %1463 = vmatpush1.msra.mxu0 0.0
    %1464 = vmatprep.subr.mxu0 0.0
    %1465 = vmatpush1.msra.mxu0 0.0
    %1466 = vmatprep.subr.mxu0 0.0
    %1467 = vmatpush1.msra.mxu0 0.0
    %1468 = vmatprep.subr.mxu0 0.0
    %1469 = vmatpush1.msra.mxu0 0.0
    %1470 = vmatprep.subr.mxu0 0.0
    %1471 = vmatpush1.msra.mxu0 0.0
    %1472 = vmatprep.subr.mxu0 0.0
    %1473 = vmatpush1.msra.mxu0 0.0
    %1474 = vmatprep.subr.mxu0 0.0
    %1475 = vmatpush1.msra.mxu0 0.0
    %1476 = vmatprep.subr.mxu0 0.0
    %1477 = vmatpush1.msra.mxu0 0.0
    %1478 = vmatprep.subr.mxu0 0.0
    %1479 = vmatpush1.msra.mxu0 0.0
    %1480 = vmatprep.subr.mxu0 0.0
    %1481 = vmatpush1.msra.mxu0 0.0
    %1482 = vmatprep.subr.mxu0 0.0
    %1483 = vmatpush1.msra.mxu0 0.0
    %1484 = vmatprep.subr.mxu0 0.0
    %1485 = vmatpush1.msra.mxu0 0.0
    %1486 = vmatprep.subr.mxu0 0.0
    %1487 = vmatpush1.msra.mxu0 0.0
    %1488 = vmatprep.subr.mxu0 0.0
    %1489 = vmatpush1.msra.mxu0 0.0
    %1490 = vmatprep.mubr.f32.mxu0 0.0
    %1491 = vmatmul.mubr.f32.gmra.mrb[0].mxu0 %v785
    %v1492 = vpop.f32.mrb[0].mxu0
    %v1493 = vadd.f32 0.0, %v1492
    %v1494 = vpop.f32.mrb[0].mxu0
    %v1495 = vadd.f32 0.0, %v1494
    %1496 = vdwg.mxu0
    %1497 = vmatprep.subr.mxu0 %v636
    %1498 = vmatpush1.msra.mxu0 %v635
    %1499 = vmatprep.subr.mxu0 %v664
    %1500 = vmatpush1.msra.mxu0 %v663
    %1501 = vmatprep.subr.mxu0 %v692
    %1502 = vmatpush1.msra.mxu0 %v691
    %1503 = vmatprep.subr.mxu0 0.0
    %1504 = vmatpush1.msra.mxu0 0.0
    %1505 = vmatprep.subr.mxu0 0.0
    %1506 = vmatpush1.msra.mxu0 0.0
    %1507 = vmatprep.subr.mxu0 0.0
    %1508 = vmatpush1.msra.mxu0 0.0
    %1509 = vmatprep.subr.mxu0 0.0
    %1510 = vmatpush1.msra.mxu0 0.0
    %1511 = vmatprep.subr.mxu0 0.0
    %1512 = vmatpush1.msra.mxu0 0.0
    %1513 = vmatprep.subr.mxu0 0.0
    %1514 = vmatpush1.msra.mxu0 0.0
    %1515 = vmatprep.subr.mxu0 0.0
    %1516 = vmatpush1.msra.mxu0 0.0
    %1517 = vmatprep.subr.mxu0 0.0
    %1518 = vmatpush1.msra.mxu0 0.0
    %1519 = vmatprep.subr.mxu0 0.0
    %1520 = vmatpush1.msra.mxu0 0.0
    %1521 = vmatprep.subr.mxu0 0.0
    %1522 = vmatpush1.msra.mxu0 0.0
    %1523 = vmatprep.subr.mxu0 0.0
    %1524 = vmatpush1.msra.mxu0 0.0
    %1525 = vmatprep.subr.mxu0 0.0
    %1526 = vmatpush1.msra.mxu0 0.0
    %1527 = vmatprep.subr.mxu0 0.0
    %1528 = vmatpush1.msra.mxu0 0.0
    %1529 = vmatprep.subr.mxu0 0.0
    %1530 = vmatpush1.msra.mxu0 0.0
    %1531 = vmatprep.subr.mxu0 0.0
    %1532 = vmatpush1.msra.mxu0 0.0
    %1533 = vmatprep.subr.mxu0 0.0
    %1534 = vmatpush1.msra.mxu0 0.0
    %1535 = vmatprep.subr.mxu0 0.0
    %1536 = vmatpush1.msra.mxu0 0.0
    %1537 = vmatprep.subr.mxu0 0.0
    %1538 = vmatpush1.msra.mxu0 0.0
    %1539 = vmatprep.subr.mxu0 0.0
    %1540 = vmatpush1.msra.mxu0 0.0
    %1541 = vmatprep.subr.mxu0 0.0
    %1542 = vmatpush1.msra.mxu0 0.0
    %1543 = vmatprep.subr.mxu0 0.0
    %1544 = vmatpush1.msra.mxu0 0.0
    %1545 = vmatprep.subr.mxu0 0.0
    %1546 = vmatpush1.msra.mxu0 0.0
    %1547 = vmatprep.subr.mxu0 0.0
    %1548 = vmatpush1.msra.mxu0 0.0
    %1549 = vmatprep.subr.mxu0 0.0
    %1550 = vmatpush1.msra.mxu0 0.0
    %1551 = vmatprep.subr.mxu0 0.0
    %1552 = vmatpush1.msra.mxu0 0.0
    %1553 = vmatprep.subr.mxu0 0.0
    %1554 = vmatpush1.msra.mxu0 0.0
    %1555 = vmatprep.subr.mxu0 0.0
    %1556 = vmatpush1.msra.mxu0 0.0
    %1557 = vmatprep.subr.mxu0 0.0
    %1558 = vmatpush1.msra.mxu0 0.0
    %1559 = vmatprep.subr.mxu0 0.0
    %1560 = vmatpush1.msra.mxu0 0.0
    %1561 = vmatprep.mubr.f32.mxu0 0.0
    %1562 = vmatmul.mubr.f32.gmra.mrb[0].mxu0 %v785
    %v1563 = vpop.f32.mrb[0].mxu0
    %v1564 = vadd.f32 0.0, %v1563
    %v1565 = vpop.f32.mrb[0].mxu0
    %v1566 = vadd.f32 0.0, %v1565
    %1567 = vdwg.mxu0
    %1568 = vmatprep.subr.mxu0 %v638
    %1569 = vmatpush1.msra.mxu0 %v637
    %1570 = vmatprep.subr.mxu0 %v666
    %1571 = vmatpush1.msra.mxu0 %v665
    %1572 = vmatprep.subr.mxu0 %v694
    %1573 = vmatpush1.msra.mxu0 %v693
    %1574 = vmatprep.subr.mxu0 0.0
    %1575 = vmatpush1.msra.mxu0 0.0
    %1576 = vmatprep.subr.mxu0 0.0
    %1577 = vmatpush1.msra.mxu0 0.0
    %1578 = vmatprep.subr.mxu0 0.0
    %1579 = vmatpush1.msra.mxu0 0.0
    %1580 = vmatprep.subr.mxu0 0.0
    %1581 = vmatpush1.msra.mxu0 0.0
    %1582 = vmatprep.subr.mxu0 0.0
    %1583 = vmatpush1.msra.mxu0 0.0
    %1584 = vmatprep.subr.mxu0 0.0
    %1585 = vmatpush1.msra.mxu0 0.0
    %1586 = vmatprep.subr.mxu0 0.0
    %1587 = vmatpush1.msra.mxu0 0.0
    %1588 = vmatprep.subr.mxu0 0.0
    %1589 = vmatpush1.msra.mxu0 0.0
    %1590 = vmatprep.subr.mxu0 0.0
    %1591 = vmatpush1.msra.mxu0 0.0
    %1592 = vmatprep.subr.mxu0 0.0
    %1593 = vmatpush1.msra.mxu0 0.0
    %1594 = vmatprep.subr.mxu0 0.0
    %1595 = vmatpush1.msra.mxu0 0.0
    %1596 = vmatprep.subr.mxu0 0.0
    %1597 = vmatpush1.msra.mxu0 0.0
    %1598 = vmatprep.subr.mxu0 0.0
    %1599 = vmatpush1.msra.mxu0 0.0
    %1600 = vmatprep.subr.mxu0 0.0
    %1601 = vmatpush1.msra.mxu0 0.0
    %1602 = vmatprep.subr.mxu0 0.0
    %1603 = vmatpush1.msra.mxu0 0.0
    %1604 = vmatprep.subr.mxu0 0.0
    %1605 = vmatpush1.msra.mxu0 0.0
    %1606 = vmatprep.subr.mxu0 0.0
    %1607 = vmatpush1.msra.mxu0 0.0
    %1608 = vmatprep.subr.mxu0 0.0
    %1609 = vmatpush1.msra.mxu0 0.0
    %1610 = vmatprep.subr.mxu0 0.0
    %1611 = vmatpush1.msra.mxu0 0.0
    %1612 = vmatprep.subr.mxu0 0.0
    %1613 = vmatpush1.msra.mxu0 0.0
    %1614 = vmatprep.subr.mxu0 0.0
    %1615 = vmatpush1.msra.mxu0 0.0
    %1616 = vmatprep.subr.mxu0 0.0
    %1617 = vmatpush1.msra.mxu0 0.0
    %1618 = vmatprep.subr.mxu0 0.0
    %1619 = vmatpush1.msra.mxu0 0.0
    %1620 = vmatprep.subr.mxu0 0.0
    %1621 = vmatpush1.msra.mxu0 0.0
    %1622 = vmatprep.subr.mxu0 0.0
    %1623 = vmatpush1.msra.mxu0 0.0
    %1624 = vmatprep.subr.mxu0 0.0
    %1625 = vmatpush1.msra.mxu0 0.0
    %1626 = vmatprep.subr.mxu0 0.0
    %1627 = vmatpush1.msra.mxu0 0.0
    %1628 = vmatprep.subr.mxu0 0.0
    %1629 = vmatpush1.msra.mxu0 0.0
    %1630 = vmatprep.subr.mxu0 0.0
    %1631 = vmatpush1.msra.mxu0 0.0
    %1632 = vmatprep.mubr.f32.mxu0 0.0
    %1633 = vmatmul.mubr.f32.gmra.mrb[0].mxu0 %v785
    %v1634 = vpop.f32.mrb[0].mxu0
    %v1635 = vadd.f32 0.0, %v1634
    %v1636 = vpop.f32.mrb[0].mxu0
    %v1637 = vadd.f32 0.0, %v1636
    %1638 = vdwg.mxu0
    %1639 = vmatprep.subr.mxu0 %v640
    %1640 = vmatpush1.msra.mxu0 %v639
    %1641 = vmatprep.subr.mxu0 %v668
    %1642 = vmatpush1.msra.mxu0 %v667
    %1643 = vmatprep.subr.mxu0 %v696
    %1644 = vmatpush1.msra.mxu0 %v695
    %1645 = vmatprep.subr.mxu0 0.0
    %1646 = vmatpush1.msra.mxu0 0.0
    %1647 = vmatprep.subr.mxu0 0.0
    %1648 = vmatpush1.msra.mxu0 0.0
    %1649 = vmatprep.subr.mxu0 0.0
    %1650 = vmatpush1.msra.mxu0 0.0
    %1651 = vmatprep.subr.mxu0 0.0
    %1652 = vmatpush1.msra.mxu0 0.0
    %1653 = vmatprep.subr.mxu0 0.0
    %1654 = vmatpush1.msra.mxu0 0.0
    %1655 = vmatprep.subr.mxu0 0.0
    %1656 = vmatpush1.msra.mxu0 0.0
    %1657 = vmatprep.subr.mxu0 0.0
    %1658 = vmatpush1.msra.mxu0 0.0
    %1659 = vmatprep.subr.mxu0 0.0
    %1660 = vmatpush1.msra.mxu0 0.0
    %1661 = vmatprep.subr.mxu0 0.0
    %1662 = vmatpush1.msra.mxu0 0.0
    %1663 = vmatprep.subr.mxu0 0.0
    %1664 = vmatpush1.msra.mxu0 0.0
    %1665 = vmatprep.subr.mxu0 0.0
    %1666 = vmatpush1.msra.mxu0 0.0
    %1667 = vmatprep.subr.mxu0 0.0
    %1668 = vmatpush1.msra.mxu0 0.0
    %1669 = vmatprep.subr.mxu0 0.0
    %1670 = vmatpush1.msra.mxu0 0.0
    %1671 = vmatprep.subr.mxu0 0.0
    %1672 = vmatpush1.msra.mxu0 0.0
    %1673 = vmatprep.subr.mxu0 0.0
    %1674 = vmatpush1.msra.mxu0 0.0
    %1675 = vmatprep.subr.mxu0 0.0
    %1676 = vmatpush1.msra.mxu0 0.0
    %1677 = vmatprep.subr.mxu0 0.0
    %1678 = vmatpush1.msra.mxu0 0.0
    %1679 = vmatprep.subr.mxu0 0.0
    %1680 = vmatpush1.msra.mxu0 0.0
    %1681 = vmatprep.subr.mxu0 0.0
    %1682 = vmatpush1.msra.mxu0 0.0
    %1683 = vmatprep.subr.mxu0 0.0
    %1684 = vmatpush1.msra.mxu0 0.0
    %1685 = vmatprep.subr.mxu0 0.0
    %1686 = vmatpush1.msra.mxu0 0.0
    %1687 = vmatprep.subr.mxu0 0.0
    %1688 = vmatpush1.msra.mxu0 0.0
    %1689 = vmatprep.subr.mxu0 0.0
    %1690 = vmatpush1.msra.mxu0 0.0
    %1691 = vmatprep.subr.mxu0 0.0
    %1692 = vmatpush1.msra.mxu0 0.0
    %1693 = vmatprep.subr.mxu0 0.0
    %1694 = vmatpush1.msra.mxu0 0.0
    %1695 = vmatprep.subr.mxu0 0.0
    %1696 = vmatpush1.msra.mxu0 0.0
    %1697 = vmatprep.subr.mxu0 0.0
    %1698 = vmatpush1.msra.mxu0 0.0
    %1699 = vmatprep.subr.mxu0 0.0
    %1700 = vmatpush1.msra.mxu0 0.0
    %1701 = vmatprep.subr.mxu0 0.0
    %1702 = vmatpush1.msra.mxu0 0.0
    %1703 = vmatprep.mubr.f32.mxu0 0.0
    %1704 = vmatmul.mubr.f32.gmra.mrb[0].mxu0 %v785
    %v1705 = vpop.f32.mrb[0].mxu0
    %v1706 = vadd.f32 0.0, %v1705
    %v1707 = vpop.f32.mrb[0].mxu0
    %v1708 = vadd.f32 0.0, %v1707
    %1709 = vdwg.mxu0
    %1710 = vmatprep.subr.mxu0 %v642
    %1711 = vmatpush1.msra.mxu0 %v641
    %1712 = vmatprep.subr.mxu0 %v670
    %1713 = vmatpush1.msra.mxu0 %v669
    %1714 = vmatprep.subr.mxu0 %v698
    %1715 = vmatpush1.msra.mxu0 %v697
    %1716 = vmatprep.subr.mxu0 0.0
    %1717 = vmatpush1.msra.mxu0 0.0
    %1718 = vmatprep.subr.mxu0 0.0
    %1719 = vmatpush1.msra.mxu0 0.0
    %1720 = vmatprep.subr.mxu0 0.0
    %1721 = vmatpush1.msra.mxu0 0.0
    %1722 = vmatprep.subr.mxu0 0.0
    %1723 = vmatpush1.msra.mxu0 0.0
    %1724 = vmatprep.subr.mxu0 0.0
    %1725 = vmatpush1.msra.mxu0 0.0
    %1726 = vmatprep.subr.mxu0 0.0
    %1727 = vmatpush1.msra.mxu0 0.0
    %1728 = vmatprep.subr.mxu0 0.0
    %1729 = vmatpush1.msra.mxu0 0.0
    %1730 = vmatprep.subr.mxu0 0.0
    %1731 = vmatpush1.msra.mxu0 0.0
    %1732 = vmatprep.subr.mxu0 0.0
    %1733 = vmatpush1.msra.mxu0 0.0
    %1734 = vmatprep.subr.mxu0 0.0
    %1735 = vmatpush1.msra.mxu0 0.0
    %1736 = vmatprep.subr.mxu0 0.0
    %1737 = vmatpush1.msra.mxu0 0.0
    %1738 = vmatprep.subr.mxu0 0.0
    %1739 = vmatpush1.msra.mxu0 0.0
    %1740 = vmatprep.subr.mxu0 0.0
    %1741 = vmatpush1.msra.mxu0 0.0
    %1742 = vmatprep.subr.mxu0 0.0
    %1743 = vmatpush1.msra.mxu0 0.0
    %1744 = vmatprep.subr.mxu0 0.0
    %1745 = vmatpush1.msra.mxu0 0.0
    %1746 = vmatprep.subr.mxu0 0.0
    %1747 = vmatpush1.msra.mxu0 0.0
    %1748 = vmatprep.subr.mxu0 0.0
    %1749 = vmatpush1.msra.mxu0 0.0
    %1750 = vmatprep.subr.mxu0 0.0
    %1751 = vmatpush1.msra.mxu0 0.0
    %1752 = vmatprep.subr.mxu0 0.0
    %1753 = vmatpush1.msra.mxu0 0.0
    %1754 = vmatprep.subr.mxu0 0.0
    %1755 = vmatpush1.msra.mxu0 0.0
    %1756 = vmatprep.subr.mxu0 0.0
    %1757 = vmatpush1.msra.mxu0 0.0
    %1758 = vmatprep.subr.mxu0 0.0
    %1759 = vmatpush1.msra.mxu0 0.0
    %1760 = vmatprep.subr.mxu0 0.0
    %1761 = vmatpush1.msra.mxu0 0.0
    %1762 = vmatprep.subr.mxu0 0.0
    %1763 = vmatpush1.msra.mxu0 0.0
    %1764 = vmatprep.subr.mxu0 0.0
    %1765 = vmatpush1.msra.mxu0 0.0
    %1766 = vmatprep.subr.mxu0 0.0
    %1767 = vmatpush1.msra.mxu0 0.0
    %1768 = vmatprep.subr.mxu0 0.0
    %1769 = vmatpush1.msra.mxu0 0.0
    %1770 = vmatprep.subr.mxu0 0.0
    %1771 = vmatpush1.msra.mxu0 0.0
    %1772 = vmatprep.subr.mxu0 0.0
    %1773 = vmatpush1.msra.mxu0 0.0
    %1774 = vmatprep.mubr.f32.mxu0 0.0
    %1775 = vmatmul.mubr.f32.gmra.mrb[0].mxu0 %v785
    %v1776 = vpop.f32.mrb[0].mxu0
    %v1777 = vadd.f32 0.0, %v1776
    %v1778 = vpop.f32.mrb[0].mxu0
    %v1779 = vadd.f32 0.0, %v1778
    %1780 = vdwg.mxu0
    %v1782 = vsel %vm783, %v437, 0
    %1784 = vmatprep.subr.mxu0 %v150
    %1785 = vmatpush1.msra.mxu0 %v149
    %1786 = vmatprep.subr.mxu0 %v267
    %1787 = vmatpush1.msra.mxu0 %v266
    %1788 = vmatprep.subr.mxu0 %v382
    %1789 = vmatpush1.msra.mxu0 %v381
    %1790 = vmatprep.subr.mxu0 0.0
    %1791 = vmatpush1.msra.mxu0 0.0
    %1792 = vmatprep.subr.mxu0 0.0
    %1793 = vmatpush1.msra.mxu0 0.0
    %1794 = vmatprep.subr.mxu0 0.0
    %1795 = vmatpush1.msra.mxu0 0.0
    %1796 = vmatprep.subr.mxu0 0.0
    %1797 = vmatpush1.msra.mxu0 0.0
    %1798 = vmatprep.subr.mxu0 0.0
    %1799 = vmatpush1.msra.mxu0 0.0
    %1800 = vmatprep.subr.mxu0 0.0
    %1801 = vmatpush1.msra.mxu0 0.0
    %1802 = vmatprep.subr.mxu0 0.0
    %1803 = vmatpush1.msra.mxu0 0.0
    %1804 = vmatprep.subr.mxu0 0.0
    %1805 = vmatpush1.msra.mxu0 0.0
    %1806 = vmatprep.subr.mxu0 0.0
    %1807 = vmatpush1.msra.mxu0 0.0
    %1808 = vmatprep.subr.mxu0 0.0
    %1809 = vmatpush1.msra.mxu0 0.0
    %1810 = vmatprep.subr.mxu0 0.0
    %1811 = vmatpush1.msra.mxu0 0.0
    %1812 = vmatprep.subr.mxu0 0.0
    %1813 = vmatpush1.msra.mxu0 0.0
    %1814 = vmatprep.subr.mxu0 0.0
    %1815 = vmatpush1.msra.mxu0 0.0
    %1816 = vmatprep.subr.mxu0 0.0
    %1817 = vmatpush1.msra.mxu0 0.0
    %1818 = vmatprep.subr.mxu0 0.0
    %1819 = vmatpush1.msra.mxu0 0.0
    %1820 = vmatprep.subr.mxu0 0.0
    %1821 = vmatpush1.msra.mxu0 0.0
    %1822 = vmatprep.subr.mxu0 0.0
    %1823 = vmatpush1.msra.mxu0 0.0
    %1824 = vmatprep.subr.mxu0 0.0
    %1825 = vmatpush1.msra.mxu0 0.0
    %1826 = vmatprep.subr.mxu0 0.0
    %1827 = vmatpush1.msra.mxu0 0.0
    %1828 = vmatprep.subr.mxu0 0.0
    %1829 = vmatpush1.msra.mxu0 0.0
    %1830 = vmatprep.subr.mxu0 0.0
    %1831 = vmatpush1.msra.mxu0 0.0
    %1832 = vmatprep.subr.mxu0 0.0
    %1833 = vmatpush1.msra.mxu0 0.0
    %1834 = vmatprep.subr.mxu0 0.0
    %1835 = vmatpush1.msra.mxu0 0.0
    %1836 = vmatprep.subr.mxu0 0.0
    %1837 = vmatpush1.msra.mxu0 0.0
    %1838 = vmatprep.subr.mxu0 0.0
    %1839 = vmatpush1.msra.mxu0 0.0
    %1840 = vmatprep.subr.mxu0 0.0
    %1841 = vmatpush1.msra.mxu0 0.0
    %1842 = vmatprep.subr.mxu0 0.0
    %1843 = vmatpush1.msra.mxu0 0.0
    %1844 = vmatprep.subr.mxu0 0.0
    %1845 = vmatpush1.msra.mxu0 0.0
    %1846 = vmatprep.subr.mxu0 0.0
    %1847 = vmatpush1.msra.mxu0 0.0
    %1848 = vmatprep.mubr.f32.mxu0 0.0
    %1849 = vmatmul.mubr.f32.gmra.mrb[0].mxu0 %v1782
    %v1850 = vpop.f32.mrb[0].mxu0
    %v1851 = vadd.f32 %v854, %v1850
    %v1852 = vpop.f32.mrb[0].mxu0
    %v1853 = vadd.f32 %v856, %v1852
    %1854 = vdwg.mxu0
    %1855 = vmatprep.subr.mxu0 %v152
    %1856 = vmatpush1.msra.mxu0 %v151
    %1857 = vmatprep.subr.mxu0 %v269
    %1858 = vmatpush1.msra.mxu0 %v268
    %1859 = vmatprep.subr.mxu0 %v384
    %1860 = vmatpush1.msra.mxu0 %v383
    %1861 = vmatprep.subr.mxu0 0.0
    %1862 = vmatpush1.msra.mxu0 0.0
    %1863 = vmatprep.subr.mxu0 0.0
    %1864 = vmatpush1.msra.mxu0 0.0
    %1865 = vmatprep.subr.mxu0 0.0
    %1866 = vmatpush1.msra.mxu0 0.0
    %1867 = vmatprep.subr.mxu0 0.0
    %1868 = vmatpush1.msra.mxu0 0.0
    %1869 = vmatprep.subr.mxu0 0.0
    %1870 = vmatpush1.msra.mxu0 0.0
    %1871 = vmatprep.subr.mxu0 0.0
    %1872 = vmatpush1.msra.mxu0 0.0
    %1873 = vmatprep.subr.mxu0 0.0
    %1874 = vmatpush1.msra.mxu0 0.0
    %1875 = vmatprep.subr.mxu0 0.0
    %1876 = vmatpush1.msra.mxu0 0.0
    %1877 = vmatprep.subr.mxu0 0.0
    %1878 = vmatpush1.msra.mxu0 0.0
    %1879 = vmatprep.subr.mxu0 0.0
    %1880 = vmatpush1.msra.mxu0 0.0
    %1881 = vmatprep.subr.mxu0 0.0
    %1882 = vmatpush1.msra.mxu0 0.0
    %1883 = vmatprep.subr.mxu0 0.0
    %1884 = vmatpush1.msra.mxu0 0.0
    %1885 = vmatprep.subr.mxu0 0.0
    %1886 = vmatpush1.msra.mxu0 0.0
    %1887 = vmatprep.subr.mxu0 0.0
    %1888 = vmatpush1.msra.mxu0 0.0
    %1889 = vmatprep.subr.mxu0 0.0
    %1890 = vmatpush1.msra.mxu0 0.0
    %1891 = vmatprep.subr.mxu0 0.0
    %1892 = vmatpush1.msra.mxu0 0.0
    %1893 = vmatprep.subr.mxu0 0.0
    %1894 = vmatpush1.msra.mxu0 0.0
    %1895 = vmatprep.subr.mxu0 0.0
    %1896 = vmatpush1.msra.mxu0 0.0
    %1897 = vmatprep.subr.mxu0 0.0
    %1898 = vmatpush1.msra.mxu0 0.0
    %1899 = vmatprep.subr.mxu0 0.0
    %1900 = vmatpush1.msra.mxu0 0.0
    %1901 = vmatprep.subr.mxu0 0.0
    %1902 = vmatpush1.msra.mxu0 0.0
    %1903 = vmatprep.subr.mxu0 0.0
    %1904 = vmatpush1.msra.mxu0 0.0
    %1905 = vmatprep.subr.mxu0 0.0
    %1906 = vmatpush1.msra.mxu0 0.0
    %1907 = vmatprep.subr.mxu0 0.0
    %1908 = vmatpush1.msra.mxu0 0.0
    %1909 = vmatprep.subr.mxu0 0.0
    %1910 = vmatpush1.msra.mxu0 0.0
    %1911 = vmatprep.subr.mxu0 0.0
    %1912 = vmatpush1.msra.mxu0 0.0
    %1913 = vmatprep.subr.mxu0 0.0
    %1914 = vmatpush1.msra.mxu0 0.0
    %1915 = vmatprep.subr.mxu0 0.0
    %1916 = vmatpush1.msra.mxu0 0.0
    %1917 = vmatprep.subr.mxu0 0.0
    %1918 = vmatpush1.msra.mxu0 0.0
    %1919 = vmatprep.mubr.f32.mxu0 0.0
    %1920 = vmatmul.mubr.f32.gmra.mrb[0].mxu0 %v1782
    %v1921 = vpop.f32.mrb[0].mxu0
    %v1922 = vadd.f32 %v925, %v1921
    %v1923 = vpop.f32.mrb[0].mxu0
    %v1924 = vadd.f32 %v927, %v1923
    %1925 = vdwg.mxu0
    %1926 = vmatprep.subr.mxu0 %v154
    %1927 = vmatpush1.msra.mxu0 %v153
    %1928 = vmatprep.subr.mxu0 %v271
    %1929 = vmatpush1.msra.mxu0 %v270
    %1930 = vmatprep.subr.mxu0 %v386
    %1931 = vmatpush1.msra.mxu0 %v385
    %1932 = vmatprep.subr.mxu0 0.0
    %1933 = vmatpush1.msra.mxu0 0.0
    %1934 = vmatprep.subr.mxu0 0.0
    %1935 = vmatpush1.msra.mxu0 0.0
    %1936 = vmatprep.subr.mxu0 0.0
    %1937 = vmatpush1.msra.mxu0 0.0
    %1938 = vmatprep.subr.mxu0 0.0
    %1939 = vmatpush1.msra.mxu0 0.0
    %1940 = vmatprep.subr.mxu0 0.0
    %1941 = vmatpush1.msra.mxu0 0.0
    %1942 = vmatprep.subr.mxu0 0.0
    %1943 = vmatpush1.msra.mxu0 0.0
    %1944 = vmatprep.subr.mxu0 0.0
    %1945 = vmatpush1.msra.mxu0 0.0
    %1946 = vmatprep.subr.mxu0 0.0
    %1947 = vmatpush1.msra.mxu0 0.0
    %1948 = vmatprep.subr.mxu0 0.0
    %1949 = vmatpush1.msra.mxu0 0.0
    %1950 = vmatprep.subr.mxu0 0.0
    %1951 = vmatpush1.msra.mxu0 0.0
    %1952 = vmatprep.subr.mxu0 0.0
    %1953 = vmatpush1.msra.mxu0 0.0
    %1954 = vmatprep.subr.mxu0 0.0
    %1955 = vmatpush1.msra.mxu0 0.0
    %1956 = vmatprep.subr.mxu0 0.0
    %1957 = vmatpush1.msra.mxu0 0.0
    %1958 = vmatprep.subr.mxu0 0.0
    %1959 = vmatpush1.msra.mxu0 0.0
    %1960 = vmatprep.subr.mxu0 0.0
    %1961 = vmatpush1.msra.mxu0 0.0
    %1962 = vmatprep.subr.mxu0 0.0
    %1963 = vmatpush1.msra.mxu0 0.0
    %1964 = vmatprep.subr.mxu0 0.0
    %1965 = vmatpush1.msra.mxu0 0.0
    %1966 = vmatprep.subr.mxu0 0.0
    %1967 = vmatpush1.msra.mxu0 0.0
    %1968 = vmatprep.subr.mxu0 0.0
    %1969 = vmatpush1.msra.mxu0 0.0
    %1970 = vmatprep.subr.mxu0 0.0
    %1971 = vmatpush1.msra.mxu0 0.0
    %1972 = vmatprep.subr.mxu0 0.0
    %1973 = vmatpush1.msra.mxu0 0.0
    %1974 = vmatprep.subr.mxu0 0.0
    %1975 = vmatpush1.msra.mxu0 0.0
    %1976 = vmatprep.subr.mxu0 0.0
    %1977 = vmatpush1.msra.mxu0 0.0
    %1978 = vmatprep.subr.mxu0 0.0
    %1979 = vmatpush1.msra.mxu0 0.0
    %1980 = vmatprep.subr.mxu0 0.0
    %1981 = vmatpush1.msra.mxu0 0.0
    %1982 = vmatprep.subr.mxu0 0.0
    %1983 = vmatpush1.msra.mxu0 0.0
    %1984 = vmatprep.subr.mxu0 0.0
    %1985 = vmatpush1.msra.mxu0 0.0
    %1986 = vmatprep.subr.mxu0 0.0
    %1987 = vmatpush1.msra.mxu0 0.0
    %1988 = vmatprep.subr.mxu0 0.0
    %1989 = vmatpush1.msra.mxu0 0.0
    %1990 = vmatprep.mubr.f32.mxu0 0.0
    %1991 = vmatmul.mubr.f32.gmra.mrb[0].mxu0 %v1782
    %v1992 = vpop.f32.mrb[0].mxu0
    %v1993 = vadd.f32 %v996, %v1992
    %v1994 = vpop.f32.mrb[0].mxu0
    %v1995 = vadd.f32 %v998, %v1994
    %1996 = vdwg.mxu0
    %1997 = vmatprep.subr.mxu0 %v156
    %1998 = vmatpush1.msra.mxu0 %v155
    %1999 = vmatprep.subr.mxu0 %v273
    %2000 = vmatpush1.msra.mxu0 %v272
    %2001 = vmatprep.subr.mxu0 %v388
    %2002 = vmatpush1.msra.mxu0 %v387
    %2003 = vmatprep.subr.mxu0 0.0
    %2004 = vmatpush1.msra.mxu0 0.0
    %2005 = vmatprep.subr.mxu0 0.0
    %2006 = vmatpush1.msra.mxu0 0.0
    %2007 = vmatprep.subr.mxu0 0.0
    %2008 = vmatpush1.msra.mxu0 0.0
    %2009 = vmatprep.subr.mxu0 0.0
    %2010 = vmatpush1.msra.mxu0 0.0
    %2011 = vmatprep.subr.mxu0 0.0
    %2012 = vmatpush1.msra.mxu0 0.0
    %2013 = vmatprep.subr.mxu0 0.0
    %2014 = vmatpush1.msra.mxu0 0.0
    %2015 = vmatprep.subr.mxu0 0.0
    %2016 = vmatpush1.msra.mxu0 0.0
    %2017 = vmatprep.subr.mxu0 0.0
    %2018 = vmatpush1.msra.mxu0 0.0
    %2019 = vmatprep.subr.mxu0 0.0
    %2020 = vmatpush1.msra.mxu0 0.0
    %2021 = vmatprep.subr.mxu0 0.0
    %2022 = vmatpush1.msra.mxu0 0.0
    %2023 = vmatprep.subr.mxu0 0.0
    %2024 = vmatpush1.msra.mxu0 0.0
    %2025 = vmatprep.subr.mxu0 0.0
    %2026 = vmatpush1.msra.mxu0 0.0
    %2027 = vmatprep.subr.mxu0 0.0
    %2028 = vmatpush1.msra.mxu0 0.0
    %2029 = vmatprep.subr.mxu0 0.0
    %2030 = vmatpush1.msra.mxu0 0.0
    %2031 = vmatprep.subr.mxu0 0.0
    %2032 = vmatpush1.msra.mxu0 0.0
    %2033 = vmatprep.subr.mxu0 0.0
    %2034 = vmatpush1.msra.mxu0 0.0
    %2035 = vmatprep.subr.mxu0 0.0
    %2036 = vmatpush1.msra.mxu0 0.0
    %2037 = vmatprep.subr.mxu0 0.0
    %2038 = vmatpush1.msra.mxu0 0.0
    %2039 = vmatprep.subr.mxu0 0.0
    %2040 = vmatpush1.msra.mxu0 0.0
    %2041 = vmatprep.subr.mxu0 0.0
    %2042 = vmatpush1.msra.mxu0 0.0
    %2043 = vmatprep.subr.mxu0 0.0
    %2044 = vmatpush1.msra.mxu0 0.0
    %2045 = vmatprep.subr.mxu0 0.0
    %2046 = vmatpush1.msra.mxu0 0.0
    %2047 = vmatprep.subr.mxu0 0.0
    %2048 = vmatpush1.msra.mxu0 0.0
    %2049 = vmatprep.subr.mxu0 0.0
    %2050 = vmatpush1.msra.mxu0 0.0
    %2051 = vmatprep.subr.mxu0 0.0
    %2052 = vmatpush1.msra.mxu0 0.0
    %2053 = vmatprep.subr.mxu0 0.0
    %2054 = vmatpush1.msra.mxu0 0.0
    %2055 = vmatprep.subr.mxu0 0.0
    %2056 = vmatpush1.msra.mxu0 0.0
    %2057 = vmatprep.subr.mxu0 0.0
    %2058 = vmatpush1.msra.mxu0 0.0
    %2059 = vmatprep.subr.mxu0 0.0
    %2060 = vmatpush1.msra.mxu0 0.0
    %2061 = vmatprep.mubr.f32.mxu0 0.0
    %2062 = vmatmul.mubr.f32.gmra.mrb[0].mxu0 %v1782
    %v2063 = vpop.f32.mrb[0].mxu0
    %v2064 = vadd.f32 %v1067, %v2063
    %v2065 = vpop.f32.mrb[0].mxu0
    %v2066 = vadd.f32 %v1069, %v2065
    %2067 = vdwg.mxu0
    %2068 = vmatprep.subr.mxu0 %v158
    %2069 = vmatpush1.msra.mxu0 %v157
    %2070 = vmatprep.subr.mxu0 %v275
    %2071 = vmatpush1.msra.mxu0 %v274
    %2072 = vmatprep.subr.mxu0 %v390
    %2073 = vmatpush1.msra.mxu0 %v389
    %2074 = vmatprep.subr.mxu0 0.0
    %2075 = vmatpush1.msra.mxu0 0.0
    %2076 = vmatprep.subr.mxu0 0.0
    %2077 = vmatpush1.msra.mxu0 0.0
    %2078 = vmatprep.subr.mxu0 0.0
    %2079 = vmatpush1.msra.mxu0 0.0
    %2080 = vmatprep.subr.mxu0 0.0
    %2081 = vmatpush1.msra.mxu0 0.0
    %2082 = vmatprep.subr.mxu0 0.0
    %2083 = vmatpush1.msra.mxu0 0.0
    %2084 = vmatprep.subr.mxu0 0.0
    %2085 = vmatpush1.msra.mxu0 0.0
    %2086 = vmatprep.subr.mxu0 0.0
    %2087 = vmatpush1.msra.mxu0 0.0
    %2088 = vmatprep.subr.mxu0 0.0
    %2089 = vmatpush1.msra.mxu0 0.0
    %2090 = vmatprep.subr.mxu0 0.0
    %2091 = vmatpush1.msra.mxu0 0.0
    %2092 = vmatprep.subr.mxu0 0.0
    %2093 = vmatpush1.msra.mxu0 0.0
    %2094 = vmatprep.subr.mxu0 0.0
    %2095 = vmatpush1.msra.mxu0 0.0
    %2096 = vmatprep.subr.mxu0 0.0
    %2097 = vmatpush1.msra.mxu0 0.0
    %2098 = vmatprep.subr.mxu0 0.0
    %2099 = vmatpush1.msra.mxu0 0.0
    %2100 = vmatprep.subr.mxu0 0.0
    %2101 = vmatpush1.msra.mxu0 0.0
    %2102 = vmatprep.subr.mxu0 0.0
    %2103 = vmatpush1.msra.mxu0 0.0
    %2104 = vmatprep.subr.mxu0 0.0
    %2105 = vmatpush1.msra.mxu0 0.0
    %2106 = vmatprep.subr.mxu0 0.0
    %2107 = vmatpush1.msra.mxu0 0.0
    %2108 = vmatprep.subr.mxu0 0.0
    %2109 = vmatpush1.msra.mxu0 0.0
    %2110 = vmatprep.subr.mxu0 0.0
    %2111 = vmatpush1.msra.mxu0 0.0
    %2112 = vmatprep.subr.mxu0 0.0
    %2113 = vmatpush1.msra.mxu0 0.0
    %2114 = vmatprep.subr.mxu0 0.0
    %2115 = vmatpush1.msra.mxu0 0.0
    %2116 = vmatprep.subr.mxu0 0.0
    %2117 = vmatpush1.msra.mxu0 0.0
    %2118 = vmatprep.subr.mxu0 0.0
    %2119 = vmatpush1.msra.mxu0 0.0
    %2120 = vmatprep.subr.mxu0 0.0
    %2121 = vmatpush1.msra.mxu0 0.0
    %2122 = vmatprep.subr.mxu0 0.0
    %2123 = vmatpush1.msra.mxu0 0.0
    %2124 = vmatprep.subr.mxu0 0.0
    %2125 = vmatpush1.msra.mxu0 0.0
    %2126 = vmatprep.subr.mxu0 0.0
    %2127 = vmatpush1.msra.mxu0 0.0
    %2128 = vmatprep.subr.mxu0 0.0
    %2129 = vmatpush1.msra.mxu0 0.0
    %2130 = vmatprep.subr.mxu0 0.0
    %2131 = vmatpush1.msra.mxu0 0.0
    %2132 = vmatprep.mubr.f32.mxu0 0.0
    %2133 = vmatmul.mubr.f32.gmra.mrb[0].mxu0 %v1782
    %v2134 = vpop.f32.mrb[0].mxu0
    %v2135 = vadd.f32 %v1138, %v2134
    %v2136 = vpop.f32.mrb[0].mxu0
    %v2137 = vadd.f32 %v1140, %v2136
    %2138 = vdwg.mxu0
    %2139 = vmatprep.subr.mxu0 %v160
    %2140 = vmatpush1.msra.mxu0 %v159
    %2141 = vmatprep.subr.mxu0 %v277
    %2142 = vmatpush1.msra.mxu0 %v276
    %2143 = vmatprep.subr.mxu0 %v392
    %2144 = vmatpush1.msra.mxu0 %v391
    %2145 = vmatprep.subr.mxu0 0.0
    %2146 = vmatpush1.msra.mxu0 0.0
    %2147 = vmatprep.subr.mxu0 0.0
    %2148 = vmatpush1.msra.mxu0 0.0
    %2149 = vmatprep.subr.mxu0 0.0
    %2150 = vmatpush1.msra.mxu0 0.0
    %2151 = vmatprep.subr.mxu0 0.0
    %2152 = vmatpush1.msra.mxu0 0.0
    %2153 = vmatprep.subr.mxu0 0.0
    %2154 = vmatpush1.msra.mxu0 0.0
    %2155 = vmatprep.subr.mxu0 0.0
    %2156 = vmatpush1.msra.mxu0 0.0
    %2157 = vmatprep.subr.mxu0 0.0
    %2158 = vmatpush1.msra.mxu0 0.0
    %2159 = vmatprep.subr.mxu0 0.0
    %2160 = vmatpush1.msra.mxu0 0.0
    %2161 = vmatprep.subr.mxu0 0.0
    %2162 = vmatpush1.msra.mxu0 0.0
    %2163 = vmatprep.subr.mxu0 0.0
    %2164 = vmatpush1.msra.mxu0 0.0
    %2165 = vmatprep.subr.mxu0 0.0
    %2166 = vmatpush1.msra.mxu0 0.0
    %2167 = vmatprep.subr.mxu0 0.0
    %2168 = vmatpush1.msra.mxu0 0.0
    %2169 = vmatprep.subr.mxu0 0.0
    %2170 = vmatpush1.msra.mxu0 0.0
    %2171 = vmatprep.subr.mxu0 0.0
    %2172 = vmatpush1.msra.mxu0 0.0
    %2173 = vmatprep.subr.mxu0 0.0
    %2174 = vmatpush1.msra.mxu0 0.0
    %2175 = vmatprep.subr.mxu0 0.0
    %2176 = vmatpush1.msra.mxu0 0.0
    %2177 = vmatprep.subr.mxu0 0.0
    %2178 = vmatpush1.msra.mxu0 0.0
    %2179 = vmatprep.subr.mxu0 0.0
    %2180 = vmatpush1.msra.mxu0 0.0
    %2181 = vmatprep.subr.mxu0 0.0
    %2182 = vmatpush1.msra.mxu0 0.0
    %2183 = vmatprep.subr.mxu0 0.0
    %2184 = vmatpush1.msra.mxu0 0.0
    %2185 = vmatprep.subr.mxu0 0.0
    %2186 = vmatpush1.msra.mxu0 0.0
    %2187 = vmatprep.subr.mxu0 0.0
    %2188 = vmatpush1.msra.mxu0 0.0
    %2189 = vmatprep.subr.mxu0 0.0
    %2190 = vmatpush1.msra.mxu0 0.0
    %2191 = vmatprep.subr.mxu0 0.0
    %2192 = vmatpush1.msra.mxu0 0.0
    %2193 = vmatprep.subr.mxu0 0.0
    %2194 = vmatpush1.msra.mxu0 0.0
    %2195 = vmatprep.subr.mxu0 0.0
    %2196 = vmatpush1.msra.mxu0 0.0
    %2197 = vmatprep.subr.mxu0 0.0
    %2198 = vmatpush1.msra.mxu0 0.0
    %2199 = vmatprep.subr.mxu0 0.0
    %2200 = vmatpush1.msra.mxu0 0.0
    %2201 = vmatprep.subr.mxu0 0.0
    %2202 = vmatpush1.msra.mxu0 0.0
    %2203 = vmatprep.mubr.f32.mxu0 0.0
    %2204 = vmatmul.mubr.f32.gmra.mrb[0].mxu0 %v1782
    %v2205 = vpop.f32.mrb[0].mxu0
    %v2206 = vadd.f32 %v1209, %v2205
    %v2207 = vpop.f32.mrb[0].mxu0
    %v2208 = vadd.f32 %v1211, %v2207
    %2209 = vdwg.mxu0
    %2210 = vmatprep.subr.mxu0 %v162
    %2211 = vmatpush1.msra.mxu0 %v161
    %2212 = vmatprep.subr.mxu0 %v279
    %2213 = vmatpush1.msra.mxu0 %v278
    %2214 = vmatprep.subr.mxu0 %v394
    %2215 = vmatpush1.msra.mxu0 %v393
    %2216 = vmatprep.subr.mxu0 0.0
    %2217 = vmatpush1.msra.mxu0 0.0
    %2218 = vmatprep.subr.mxu0 0.0
    %2219 = vmatpush1.msra.mxu0 0.0
    %2220 = vmatprep.subr.mxu0 0.0
    %2221 = vmatpush1.msra.mxu0 0.0
    %2222 = vmatprep.subr.mxu0 0.0
    %2223 = vmatpush1.msra.mxu0 0.0
    %2224 = vmatprep.subr.mxu0 0.0
    %2225 = vmatpush1.msra.mxu0 0.0
    %2226 = vmatprep.subr.mxu0 0.0
    %2227 = vmatpush1.msra.mxu0 0.0
    %2228 = vmatprep.subr.mxu0 0.0
    %2229 = vmatpush1.msra.mxu0 0.0
    %2230 = vmatprep.subr.mxu0 0.0
    %2231 = vmatpush1.msra.mxu0 0.0
    %2232 = vmatprep.subr.mxu0 0.0
    %2233 = vmatpush1.msra.mxu0 0.0
    %2234 = vmatprep.subr.mxu0 0.0
    %2235 = vmatpush1.msra.mxu0 0.0
    %2236 = vmatprep.subr.mxu0 0.0
    %2237 = vmatpush1.msra.mxu0 0.0
    %2238 = vmatprep.subr.mxu0 0.0
    %2239 = vmatpush1.msra.mxu0 0.0
    %2240 = vmatprep.subr.mxu0 0.0
    %2241 = vmatpush1.msra.mxu0 0.0
    %2242 = vmatprep.subr.mxu0 0.0
    %2243 = vmatpush1.msra.mxu0 0.0
    %2244 = vmatprep.subr.mxu0 0.0
    %2245 = vmatpush1.msra.mxu0 0.0
    %2246 = vmatprep.subr.mxu0 0.0
    %2247 = vmatpush1.msra.mxu0 0.0
    %2248 = vmatprep.subr.mxu0 0.0
    %2249 = vmatpush1.msra.mxu0 0.0
    %2250 = vmatprep.subr.mxu0 0.0
    %2251 = vmatpush1.msra.mxu0 0.0
    %2252 = vmatprep.subr.mxu0 0.0
    %2253 = vmatpush1.msra.mxu0 0.0
    %2254 = vmatprep.subr.mxu0 0.0
    %2255 = vmatpush1.msra.mxu0 0.0
    %2256 = vmatprep.subr.mxu0 0.0
    %2257 = vmatpush1.msra.mxu0 0.0
    %2258 = vmatprep.subr.mxu0 0.0
    %2259 = vmatpush1.msra.mxu0 0.0
    %2260 = vmatprep.subr.mxu0 0.0
    %2261 = vmatpush1.msra.mxu0 0.0
    %2262 = vmatprep.subr.mxu0 0.0
    %2263 = vmatpush1.msra.mxu0 0.0
    %2264 = vmatprep.subr.mxu0 0.0
    %2265 = vmatpush1.msra.mxu0 0.0
    %2266 = vmatprep.subr.mxu0 0.0
    %2267 = vmatpush1.msra.mxu0 0.0
    %2268 = vmatprep.subr.mxu0 0.0
    %2269 = vmatpush1.msra.mxu0 0.0
    %2270 = vmatprep.subr.mxu0 0.0
    %2271 = vmatpush1.msra.mxu0 0.0
    %2272 = vmatprep.subr.mxu0 0.0
    %2273 = vmatpush1.msra.mxu0 0.0
    %2274 = vmatprep.mubr.f32.mxu0 0.0
    %2275 = vmatmul.mubr.f32.gmra.mrb[0].mxu0 %v1782
    %v2276 = vpop.f32.mrb[0].mxu0
    %v2277 = vadd.f32 %v1280, %v2276
    %v2278 = vpop.f32.mrb[0].mxu0
    %v2279 = vadd.f32 %v1282, %v2278
    %2280 = vdwg.mxu0
    %2281 = vmatprep.subr.mxu0 %v164
    %2282 = vmatpush1.msra.mxu0 %v163
    %2283 = vmatprep.subr.mxu0 %v281
    %2284 = vmatpush1.msra.mxu0 %v280
    %2285 = vmatprep.subr.mxu0 %v396
    %2286 = vmatpush1.msra.mxu0 %v395
    %2287 = vmatprep.subr.mxu0 0.0
    %2288 = vmatpush1.msra.mxu0 0.0
    %2289 = vmatprep.subr.mxu0 0.0
    %2290 = vmatpush1.msra.mxu0 0.0
    %2291 = vmatprep.subr.mxu0 0.0
    %2292 = vmatpush1.msra.mxu0 0.0
    %2293 = vmatprep.subr.mxu0 0.0
    %2294 = vmatpush1.msra.mxu0 0.0
    %2295 = vmatprep.subr.mxu0 0.0
    %2296 = vmatpush1.msra.mxu0 0.0
    %2297 = vmatprep.subr.mxu0 0.0
    %2298 = vmatpush1.msra.mxu0 0.0
    %2299 = vmatprep.subr.mxu0 0.0
    %2300 = vmatpush1.msra.mxu0 0.0
    %2301 = vmatprep.subr.mxu0 0.0
    %2302 = vmatpush1.msra.mxu0 0.0
    %2303 = vmatprep.subr.mxu0 0.0
    %2304 = vmatpush1.msra.mxu0 0.0
    %2305 = vmatprep.subr.mxu0 0.0
    %2306 = vmatpush1.msra.mxu0 0.0
    %2307 = vmatprep.subr.mxu0 0.0
    %2308 = vmatpush1.msra.mxu0 0.0
    %2309 = vmatprep.subr.mxu0 0.0
    %2310 = vmatpush1.msra.mxu0 0.0
    %2311 = vmatprep.subr.mxu0 0.0
    %2312 = vmatpush1.msra.mxu0 0.0
    %2313 = vmatprep.subr.mxu0 0.0
    %2314 = vmatpush1.msra.mxu0 0.0
    %2315 = vmatprep.subr.mxu0 0.0
    %2316 = vmatpush1.msra.mxu0 0.0
    %2317 = vmatprep.subr.mxu0 0.0
    %2318 = vmatpush1.msra.mxu0 0.0
    %2319 = vmatprep.subr.mxu0 0.0
    %2320 = vmatpush1.msra.mxu0 0.0
    %2321 = vmatprep.subr.mxu0 0.0
    %2322 = vmatpush1.msra.mxu0 0.0
    %2323 = vmatprep.subr.mxu0 0.0
    %2324 = vmatpush1.msra.mxu0 0.0
    %2325 = vmatprep.subr.mxu0 0.0
    %2326 = vmatpush1.msra.mxu0 0.0
    %2327 = vmatprep.subr.mxu0 0.0
    %2328 = vmatpush1.msra.mxu0 0.0
    %2329 = vmatprep.subr.mxu0 0.0
    %2330 = vmatpush1.msra.mxu0 0.0
    %2331 = vmatprep.subr.mxu0 0.0
    %2332 = vmatpush1.msra.mxu0 0.0
    %2333 = vmatprep.subr.mxu0 0.0
    %2334 = vmatpush1.msra.mxu0 0.0
    %2335 = vmatprep.subr.mxu0 0.0
    %2336 = vmatpush1.msra.mxu0 0.0
    %2337 = vmatprep.subr.mxu0 0.0
    %2338 = vmatpush1.msra.mxu0 0.0
    %2339 = vmatprep.subr.mxu0 0.0
    %2340 = vmatpush1.msra.mxu0 0.0
    %2341 = vmatprep.subr.mxu0 0.0
    %2342 = vmatpush1.msra.mxu0 0.0
    %2343 = vmatprep.subr.mxu0 0.0
    %2344 = vmatpush1.msra.mxu0 0.0
    %2345 = vmatprep.mubr.f32.mxu0 0.0
    %2346 = vmatmul.mubr.f32.gmra.mrb[0].mxu0 %v1782
    %v2347 = vpop.f32.mrb[0].mxu0
    %v2348 = vadd.f32 %v1351, %v2347
    %v2349 = vpop.f32.mrb[0].mxu0
    %v2350 = vadd.f32 %v1353, %v2349
    %2351 = vdwg.mxu0
    %2352 = vmatprep.subr.mxu0 %v166
    %2353 = vmatpush1.msra.mxu0 %v165
    %2354 = vmatprep.subr.mxu0 %v283
    %2355 = vmatpush1.msra.mxu0 %v282
    %2356 = vmatprep.subr.mxu0 %v398
    %2357 = vmatpush1.msra.mxu0 %v397
    %2358 = vmatprep.subr.mxu0 0.0
    %2359 = vmatpush1.msra.mxu0 0.0
    %2360 = vmatprep.subr.mxu0 0.0
    %2361 = vmatpush1.msra.mxu0 0.0
    %2362 = vmatprep.subr.mxu0 0.0
    %2363 = vmatpush1.msra.mxu0 0.0
    %2364 = vmatprep.subr.mxu0 0.0
    %2365 = vmatpush1.msra.mxu0 0.0
    %2366 = vmatprep.subr.mxu0 0.0
    %2367 = vmatpush1.msra.mxu0 0.0
    %2368 = vmatprep.subr.mxu0 0.0
    %2369 = vmatpush1.msra.mxu0 0.0
    %2370 = vmatprep.subr.mxu0 0.0
    %2371 = vmatpush1.msra.mxu0 0.0
    %2372 = vmatprep.subr.mxu0 0.0
    %2373 = vmatpush1.msra.mxu0 0.0
    %2374 = vmatprep.subr.mxu0 0.0
    %2375 = vmatpush1.msra.mxu0 0.0
    %2376 = vmatprep.subr.mxu0 0.0
    %2377 = vmatpush1.msra.mxu0 0.0
    %2378 = vmatprep.subr.mxu0 0.0
    %2379 = vmatpush1.msra.mxu0 0.0
    %2380 = vmatprep.subr.mxu0 0.0
    %2381 = vmatpush1.msra.mxu0 0.0
    %2382 = vmatprep.subr.mxu0 0.0
    %2383 = vmatpush1.msra.mxu0 0.0
    %2384 = vmatprep.subr.mxu0 0.0
    %2385 = vmatpush1.msra.mxu0 0.0
    %2386 = vmatprep.subr.mxu0 0.0
    %2387 = vmatpush1.msra.mxu0 0.0
    %2388 = vmatprep.subr.mxu0 0.0
    %2389 = vmatpush1.msra.mxu0 0.0
    %2390 = vmatprep.subr.mxu0 0.0
    %2391 = vmatpush1.msra.mxu0 0.0
    %2392 = vmatprep.subr.mxu0 0.0
    %2393 = vmatpush1.msra.mxu0 0.0
    %2394 = vmatprep.subr.mxu0 0.0
    %2395 = vmatpush1.msra.mxu0 0.0
    %2396 = vmatprep.subr.mxu0 0.0
    %2397 = vmatpush1.msra.mxu0 0.0
    %2398 = vmatprep.subr.mxu0 0.0
    %2399 = vmatpush1.msra.mxu0 0.0
    %2400 = vmatprep.subr.mxu0 0.0
    %2401 = vmatpush1.msra.mxu0 0.0
    %2402 = vmatprep.subr.mxu0 0.0
    %2403 = vmatpush1.msra.mxu0 0.0
    %2404 = vmatprep.subr.mxu0 0.0
    %2405 = vmatpush1.msra.mxu0 0.0
    %2406 = vmatprep.subr.mxu0 0.0
    %2407 = vmatpush1.msra.mxu0 0.0
    %2408 = vmatprep.subr.mxu0 0.0
    %2409 = vmatpush1.msra.mxu0 0.0
    %2410 = vmatprep.subr.mxu0 0.0
    %2411 = vmatpush1.msra.mxu0 0.0
    %2412 = vmatprep.subr.mxu0 0.0
    %2413 = vmatpush1.msra.mxu0 0.0
    %2414 = vmatprep.subr.mxu0 0.0
    %2415 = vmatpush1.msra.mxu0 0.0
    %2416 = vmatprep.mubr.f32.mxu0 0.0
    %2417 = vmatmul.mubr.f32.gmra.mrb[0].mxu0 %v1782
    %v2418 = vpop.f32.mrb[0].mxu0
    %v2419 = vadd.f32 %v1422, %v2418
    %v2420 = vpop.f32.mrb[0].mxu0
    %v2421 = vadd.f32 %v1424, %v2420
    %2422 = vdwg.mxu0
    %2423 = vmatprep.subr.mxu0 %v168
    %2424 = vmatpush1.msra.mxu0 %v167
    %2425 = vmatprep.subr.mxu0 %v285
    %2426 = vmatpush1.msra.mxu0 %v284
    %2427 = vmatprep.subr.mxu0 %v400
    %2428 = vmatpush1.msra.mxu0 %v399
    %2429 = vmatprep.subr.mxu0 0.0
    %2430 = vmatpush1.msra.mxu0 0.0
    %2431 = vmatprep.subr.mxu0 0.0
    %2432 = vmatpush1.msra.mxu0 0.0
    %2433 = vmatprep.subr.mxu0 0.0
    %2434 = vmatpush1.msra.mxu0 0.0
    %2435 = vmatprep.subr.mxu0 0.0
    %2436 = vmatpush1.msra.mxu0 0.0
    %2437 = vmatprep.subr.mxu0 0.0
    %2438 = vmatpush1.msra.mxu0 0.0
    %2439 = vmatprep.subr.mxu0 0.0
    %2440 = vmatpush1.msra.mxu0 0.0
    %2441 = vmatprep.subr.mxu0 0.0
    %2442 = vmatpush1.msra.mxu0 0.0
    %2443 = vmatprep.subr.mxu0 0.0
    %2444 = vmatpush1.msra.mxu0 0.0
    %2445 = vmatprep.subr.mxu0 0.0
    %2446 = vmatpush1.msra.mxu0 0.0
    %2447 = vmatprep.subr.mxu0 0.0
    %2448 = vmatpush1.msra.mxu0 0.0
    %2449 = vmatprep.subr.mxu0 0.0
    %2450 = vmatpush1.msra.mxu0 0.0
    %2451 = vmatprep.subr.mxu0 0.0
    %2452 = vmatpush1.msra.mxu0 0.0
    %2453 = vmatprep.subr.mxu0 0.0
    %2454 = vmatpush1.msra.mxu0 0.0
    %2455 = vmatprep.subr.mxu0 0.0
    %2456 = vmatpush1.msra.mxu0 0.0
    %2457 = vmatprep.subr.mxu0 0.0
    %2458 = vmatpush1.msra.mxu0 0.0
    %2459 = vmatprep.subr.mxu0 0.0
    %2460 = vmatpush1.msra.mxu0 0.0
    %2461 = vmatprep.subr.mxu0 0.0
    %2462 = vmatpush1.msra.mxu0 0.0
    %2463 = vmatprep.subr.mxu0 0.0
    %2464 = vmatpush1.msra.mxu0 0.0
    %2465 = vmatprep.subr.mxu0 0.0
    %2466 = vmatpush1.msra.mxu0 0.0
    %2467 = vmatprep.subr.mxu0 0.0
    %2468 = vmatpush1.msra.mxu0 0.0
    %2469 = vmatprep.subr.mxu0 0.0
    %2470 = vmatpush1.msra.mxu0 0.0
    %2471 = vmatprep.subr.mxu0 0.0
    %2472 = vmatpush1.msra.mxu0 0.0
    %2473 = vmatprep.subr.mxu0 0.0
    %2474 = vmatpush1.msra.mxu0 0.0
    %2475 = vmatprep.subr.mxu0 0.0
    %2476 = vmatpush1.msra.mxu0 0.0
    %2477 = vmatprep.subr.mxu0 0.0
    %2478 = vmatpush1.msra.mxu0 0.0
    %2479 = vmatprep.subr.mxu0 0.0
    %2480 = vmatpush1.msra.mxu0 0.0
    %2481 = vmatprep.subr.mxu0 0.0
    %2482 = vmatpush1.msra.mxu0 0.0
    %2483 = vmatprep.subr.mxu0 0.0
    %2484 = vmatpush1.msra.mxu0 0.0
    %2485 = vmatprep.subr.mxu0 0.0
    %2486 = vmatpush1.msra.mxu0 0.0
    %2487 = vmatprep.mubr.f32.mxu0 0.0
    %2488 = vmatmul.mubr.f32.gmra.mrb[0].mxu0 %v1782
    %v2489 = vpop.f32.mrb[0].mxu0
    %v2490 = vadd.f32 %v1493, %v2489
    %v2491 = vpop.f32.mrb[0].mxu0
    %v2492 = vadd.f32 %v1495, %v2491
    %2493 = vdwg.mxu0
    %2494 = vmatprep.subr.mxu0 %v170
    %2495 = vmatpush1.msra.mxu0 %v169
    %2496 = vmatprep.subr.mxu0 %v287
    %2497 = vmatpush1.msra.mxu0 %v286
    %2498 = vmatprep.subr.mxu0 %v402
    %2499 = vmatpush1.msra.mxu0 %v401
    %2500 = vmatprep.subr.mxu0 0.0
    %2501 = vmatpush1.msra.mxu0 0.0
    %2502 = vmatprep.subr.mxu0 0.0
    %2503 = vmatpush1.msra.mxu0 0.0
    %2504 = vmatprep.subr.mxu0 0.0
    %2505 = vmatpush1.msra.mxu0 0.0
    %2506 = vmatprep.subr.mxu0 0.0
    %2507 = vmatpush1.msra.mxu0 0.0
    %2508 = vmatprep.subr.mxu0 0.0
    %2509 = vmatpush1.msra.mxu0 0.0
    %2510 = vmatprep.subr.mxu0 0.0
    %2511 = vmatpush1.msra.mxu0 0.0
    %2512 = vmatprep.subr.mxu0 0.0
    %2513 = vmatpush1.msra.mxu0 0.0
    %2514 = vmatprep.subr.mxu0 0.0
    %2515 = vmatpush1.msra.mxu0 0.0
    %2516 = vmatprep.subr.mxu0 0.0
    %2517 = vmatpush1.msra.mxu0 0.0
    %2518 = vmatprep.subr.mxu0 0.0
    %2519 = vmatpush1.msra.mxu0 0.0
    %2520 = vmatprep.subr.mxu0 0.0
    %2521 = vmatpush1.msra.mxu0 0.0
    %2522 = vmatprep.subr.mxu0 0.0
    %2523 = vmatpush1.msra.mxu0 0.0
    %2524 = vmatprep.subr.mxu0 0.0
    %2525 = vmatpush1.msra.mxu0 0.0
    %2526 = vmatprep.subr.mxu0 0.0
    %2527 = vmatpush1.msra.mxu0 0.0
    %2528 = vmatprep.subr.mxu0 0.0
    %2529 = vmatpush1.msra.mxu0 0.0
    %2530 = vmatprep.subr.mxu0 0.0
    %2531 = vmatpush1.msra.mxu0 0.0
    %2532 = vmatprep.subr.mxu0 0.0
    %2533 = vmatpush1.msra.mxu0 0.0
    %2534 = vmatprep.subr.mxu0 0.0
    %2535 = vmatpush1.msra.mxu0 0.0
    %2536 = vmatprep.subr.mxu0 0.0
    %2537 = vmatpush1.msra.mxu0 0.0
    %2538 = vmatprep.subr.mxu0 0.0
    %2539 = vmatpush1.msra.mxu0 0.0
    %2540 = vmatprep.subr.mxu0 0.0
    %2541 = vmatpush1.msra.mxu0 0.0
    %2542 = vmatprep.subr.mxu0 0.0
    %2543 = vmatpush1.msra.mxu0 0.0
    %2544 = vmatprep.subr.mxu0 0.0
    %2545 = vmatpush1.msra.mxu0 0.0
    %2546 = vmatprep.subr.mxu0 0.0
    %2547 = vmatpush1.msra.mxu0 0.0
    %2548 = vmatprep.subr.mxu0 0.0
    %2549 = vmatpush1.msra.mxu0 0.0
    %2550 = vmatprep.subr.mxu0 0.0
    %2551 = vmatpush1.msra.mxu0 0.0
    %2552 = vmatprep.subr.mxu0 0.0
    %2553 = vmatpush1.msra.mxu0 0.0
    %2554 = vmatprep.subr.mxu0 0.0
    %2555 = vmatpush1.msra.mxu0 0.0
    %2556 = vmatprep.subr.mxu0 0.0
    %2557 = vmatpush1.msra.mxu0 0.0
    %2558 = vmatprep.mubr.f32.mxu0 0.0
    %2559 = vmatmul.mubr.f32.gmra.mrb[0].mxu0 %v1782
    %v2560 = vpop.f32.mrb[0].mxu0
    %v2561 = vadd.f32 %v1564, %v2560
    %v2562 = vpop.f32.mrb[0].mxu0
    %v2563 = vadd.f32 %v1566, %v2562
    %2564 = vdwg.mxu0
    %2565 = vmatprep.subr.mxu0 %v172
    %2566 = vmatpush1.msra.mxu0 %v171
    %2567 = vmatprep.subr.mxu0 %v289
    %2568 = vmatpush1.msra.mxu0 %v288
    %2569 = vmatprep.subr.mxu0 %v404
    %2570 = vmatpush1.msra.mxu0 %v403
    %2571 = vmatprep.subr.mxu0 0.0
    %2572 = vmatpush1.msra.mxu0 0.0
    %2573 = vmatprep.subr.mxu0 0.0
    %2574 = vmatpush1.msra.mxu0 0.0
    %2575 = vmatprep.subr.mxu0 0.0
    %2576 = vmatpush1.msra.mxu0 0.0
    %2577 = vmatprep.subr.mxu0 0.0
    %2578 = vmatpush1.msra.mxu0 0.0
    %2579 = vmatprep.subr.mxu0 0.0
    %2580 = vmatpush1.msra.mxu0 0.0
    %2581 = vmatprep.subr.mxu0 0.0
    %2582 = vmatpush1.msra.mxu0 0.0
    %2583 = vmatprep.subr.mxu0 0.0
    %2584 = vmatpush1.msra.mxu0 0.0
    %2585 = vmatprep.subr.mxu0 0.0
    %2586 = vmatpush1.msra.mxu0 0.0
    %2587 = vmatprep.subr.mxu0 0.0
    %2588 = vmatpush1.msra.mxu0 0.0
    %2589 = vmatprep.subr.mxu0 0.0
    %2590 = vmatpush1.msra.mxu0 0.0
    %2591 = vmatprep.subr.mxu0 0.0
    %2592 = vmatpush1.msra.mxu0 0.0
    %2593 = vmatprep.subr.mxu0 0.0
    %2594 = vmatpush1.msra.mxu0 0.0
    %2595 = vmatprep.subr.mxu0 0.0
    %2596 = vmatpush1.msra.mxu0 0.0
    %2597 = vmatprep.subr.mxu0 0.0
    %2598 = vmatpush1.msra.mxu0 0.0
    %2599 = vmatprep.subr.mxu0 0.0
    %2600 = vmatpush1.msra.mxu0 0.0
    %2601 = vmatprep.subr.mxu0 0.0
    %2602 = vmatpush1.msra.mxu0 0.0
    %2603 = vmatprep.subr.mxu0 0.0
    %2604 = vmatpush1.msra.mxu0 0.0
    %2605 = vmatprep.subr.mxu0 0.0
    %2606 = vmatpush1.msra.mxu0 0.0
    %2607 = vmatprep.subr.mxu0 0.0
    %2608 = vmatpush1.msra.mxu0 0.0
    %2609 = vmatprep.subr.mxu0 0.0
    %2610 = vmatpush1.msra.mxu0 0.0
    %2611 = vmatprep.subr.mxu0 0.0
    %2612 = vmatpush1.msra.mxu0 0.0
    %2613 = vmatprep.subr.mxu0 0.0
    %2614 = vmatpush1.msra.mxu0 0.0
    %2615 = vmatprep.subr.mxu0 0.0
    %2616 = vmatpush1.msra.mxu0 0.0
    %2617 = vmatprep.subr.mxu0 0.0
    %2618 = vmatpush1.msra.mxu0 0.0
    %2619 = vmatprep.subr.mxu0 0.0
    %2620 = vmatpush1.msra.mxu0 0.0
    %2621 = vmatprep.subr.mxu0 0.0
    %2622 = vmatpush1.msra.mxu0 0.0
    %2623 = vmatprep.subr.mxu0 0.0
    %2624 = vmatpush1.msra.mxu0 0.0
    %2625 = vmatprep.subr.mxu0 0.0
    %2626 = vmatpush1.msra.mxu0 0.0
    %2627 = vmatprep.subr.mxu0 0.0
    %2628 = vmatpush1.msra.mxu0 0.0
    %2629 = vmatprep.mubr.f32.mxu0 0.0
    %2630 = vmatmul.mubr.f32.gmra.mrb[0].mxu0 %v1782
    %v2631 = vpop.f32.mrb[0].mxu0
    %v2632 = vadd.f32 %v1635, %v2631
    %v2633 = vpop.f32.mrb[0].mxu0
    %v2634 = vadd.f32 %v1637, %v2633
    %2635 = vdwg.mxu0
    %2636 = vmatprep.subr.mxu0 %v174
    %2637 = vmatpush1.msra.mxu0 %v173
    %2638 = vmatprep.subr.mxu0 %v291
    %2639 = vmatpush1.msra.mxu0 %v290
    %2640 = vmatprep.subr.mxu0 %v406
    %2641 = vmatpush1.msra.mxu0 %v405
    %2642 = vmatprep.subr.mxu0 0.0
    %2643 = vmatpush1.msra.mxu0 0.0
    %2644 = vmatprep.subr.mxu0 0.0
    %2645 = vmatpush1.msra.mxu0 0.0
    %2646 = vmatprep.subr.mxu0 0.0
    %2647 = vmatpush1.msra.mxu0 0.0
    %2648 = vmatprep.subr.mxu0 0.0
    %2649 = vmatpush1.msra.mxu0 0.0
    %2650 = vmatprep.subr.mxu0 0.0
    %2651 = vmatpush1.msra.mxu0 0.0
    %2652 = vmatprep.subr.mxu0 0.0
    %2653 = vmatpush1.msra.mxu0 0.0
    %2654 = vmatprep.subr.mxu0 0.0
    %2655 = vmatpush1.msra.mxu0 0.0
    %2656 = vmatprep.subr.mxu0 0.0
    %2657 = vmatpush1.msra.mxu0 0.0
    %2658 = vmatprep.subr.mxu0 0.0
    %2659 = vmatpush1.msra.mxu0 0.0
    %2660 = vmatprep.subr.mxu0 0.0
    %2661 = vmatpush1.msra.mxu0 0.0
    %2662 = vmatprep.subr.mxu0 0.0
    %2663 = vmatpush1.msra.mxu0 0.0
    %2664 = vmatprep.subr.mxu0 0.0
    %2665 = vmatpush1.msra.mxu0 0.0
    %2666 = vmatprep.subr.mxu0 0.0
    %2667 = vmatpush1.msra.mxu0 0.0
    %2668 = vmatprep.subr.mxu0 0.0
    %2669 = vmatpush1.msra.mxu0 0.0
    %2670 = vmatprep.subr.mxu0 0.0
    %2671 = vmatpush1.msra.mxu0 0.0
    %2672 = vmatprep.subr.mxu0 0.0
    %2673 = vmatpush1.msra.mxu0 0.0
    %2674 = vmatprep.subr.mxu0 0.0
    %2675 = vmatpush1.msra.mxu0 0.0
    %2676 = vmatprep.subr.mxu0 0.0
    %2677 = vmatpush1.msra.mxu0 0.0
    %2678 = vmatprep.subr.mxu0 0.0
    %2679 = vmatpush1.msra.mxu0 0.0
    %2680 = vmatprep.subr.mxu0 0.0
    %2681 = vmatpush1.msra.mxu0 0.0
    %2682 = vmatprep.subr.mxu0 0.0
    %2683 = vmatpush1.msra.mxu0 0.0
    %2684 = vmatprep.subr.mxu0 0.0
    %2685 = vmatpush1.msra.mxu0 0.0
    %2686 = vmatprep.subr.mxu0 0.0
    %2687 = vmatpush1.msra.mxu0 0.0
    %2688 = vmatprep.subr.mxu0 0.0
    %2689 = vmatpush1.msra.mxu0 0.0
    %2690 = vmatprep.subr.mxu0 0.0
    %2691 = vmatpush1.msra.mxu0 0.0
    %2692 = vmatprep.subr.mxu0 0.0
    %2693 = vmatpush1.msra.mxu0 0.0
    %2694 = vmatprep.subr.mxu0 0.0
    %2695 = vmatpush1.msra.mxu0 0.0
    %2696 = vmatprep.subr.mxu0 0.0
    %2697 = vmatpush1.msra.mxu0 0.0
    %2698 = vmatprep.subr.mxu0 0.0
    %2699 = vmatpush1.msra.mxu0 0.0
    %2700 = vmatprep.mubr.f32.mxu0 0.0
    %2701 = vmatmul.mubr.f32.gmra.mrb[0].mxu0 %v1782
    %v2702 = vpop.f32.mrb[0].mxu0
    %v2703 = vadd.f32 %v1706, %v2702
    %v2704 = vpop.f32.mrb[0].mxu0
    %v2705 = vadd.f32 %v1708, %v2704
    %2706 = vdwg.mxu0
    %2707 = vmatprep.subr.mxu0 %v176
    %2708 = vmatpush1.msra.mxu0 %v175
    %2709 = vmatprep.subr.mxu0 %v293
    %2710 = vmatpush1.msra.mxu0 %v292
    %2711 = vmatprep.subr.mxu0 %v408
    %2712 = vmatpush1.msra.mxu0 %v407
    %2713 = vmatprep.subr.mxu0 0.0
    %2714 = vmatpush1.msra.mxu0 0.0
    %2715 = vmatprep.subr.mxu0 0.0
    %2716 = vmatpush1.msra.mxu0 0.0
    %2717 = vmatprep.subr.mxu0 0.0
    %2718 = vmatpush1.msra.mxu0 0.0
    %2719 = vmatprep.subr.mxu0 0.0
    %2720 = vmatpush1.msra.mxu0 0.0
    %2721 = vmatprep.subr.mxu0 0.0
    %2722 = vmatpush1.msra.mxu0 0.0
    %2723 = vmatprep.subr.mxu0 0.0
    %2724 = vmatpush1.msra.mxu0 0.0
    %2725 = vmatprep.subr.mxu0 0.0
    %2726 = vmatpush1.msra.mxu0 0.0
    %2727 = vmatprep.subr.mxu0 0.0
    %2728 = vmatpush1.msra.mxu0 0.0
    %2729 = vmatprep.subr.mxu0 0.0
    %2730 = vmatpush1.msra.mxu0 0.0
    %2731 = vmatprep.subr.mxu0 0.0
    %2732 = vmatpush1.msra.mxu0 0.0
    %2733 = vmatprep.subr.mxu0 0.0
    %2734 = vmatpush1.msra.mxu0 0.0
    %2735 = vmatprep.subr.mxu0 0.0
    %2736 = vmatpush1.msra.mxu0 0.0
    %2737 = vmatprep.subr.mxu0 0.0
    %2738 = vmatpush1.msra.mxu0 0.0
    %2739 = vmatprep.subr.mxu0 0.0
    %2740 = vmatpush1.msra.mxu0 0.0
    %2741 = vmatprep.subr.mxu0 0.0
    %2742 = vmatpush1.msra.mxu0 0.0
    %2743 = vmatprep.subr.mxu0 0.0
    %2744 = vmatpush1.msra.mxu0 0.0
    %2745 = vmatprep.subr.mxu0 0.0
    %2746 = vmatpush1.msra.mxu0 0.0
    %2747 = vmatprep.subr.mxu0 0.0
    %2748 = vmatpush1.msra.mxu0 0.0
    %2749 = vmatprep.subr.mxu0 0.0
    %2750 = vmatpush1.msra.mxu0 0.0
    %2751 = vmatprep.subr.mxu0 0.0
    %2752 = vmatpush1.msra.mxu0 0.0
    %2753 = vmatprep.subr.mxu0 0.0
    %2754 = vmatpush1.msra.mxu0 0.0
    %2755 = vmatprep.subr.mxu0 0.0
    %2756 = vmatpush1.msra.mxu0 0.0
    %2757 = vmatprep.subr.mxu0 0.0
    %2758 = vmatpush1.msra.mxu0 0.0
    %2759 = vmatprep.subr.mxu0 0.0
    %2760 = vmatpush1.msra.mxu0 0.0
    %2761 = vmatprep.subr.mxu0 0.0
    %2762 = vmatpush1.msra.mxu0 0.0
    %2763 = vmatprep.subr.mxu0 0.0
    %2764 = vmatpush1.msra.mxu0 0.0
    %2765 = vmatprep.subr.mxu0 0.0
    %2766 = vmatpush1.msra.mxu0 0.0
    %2767 = vmatprep.subr.mxu0 0.0
    %2768 = vmatpush1.msra.mxu0 0.0
    %2769 = vmatprep.subr.mxu0 0.0
    %2770 = vmatpush1.msra.mxu0 0.0
    %2771 = vmatprep.mubr.f32.mxu0 0.0
    %2772 = vmatmul.mubr.f32.gmra.mrb[0].mxu0 %v1782
    %v2773 = vpop.f32.mrb[0].mxu0
    %v2774 = vadd.f32 %v1777, %v2773
    %v2775 = vpop.f32.mrb[0].mxu0
    %v2776 = vadd.f32 %v1779, %v2775
    %2777 = vdwg.mxu0
    %v2778 = vld [vmem:[#allocation3 + $0x8] sm:$0xff]
    %v2779 = vld [vmem:[#allocation3 + $0x10] sm:$0xff]
    %v2780 = vld [vmem:[#allocation3 + $0x18] sm:$0xff]
    %v2781 = vld [vmem:[#allocation3 + $0x20] sm:$0xff]
    %v2782 = vld [vmem:[#allocation3 + $0x28] sm:$0xff]
    %v2783 = vld [vmem:[#allocation3 + $0x30] sm:$0xff]
    %v2784 = vld [vmem:[#allocation3 + $0x38] sm:$0xff]
    %v2785 = vld [vmem:[#allocation3 + $0x40] sm:$0xff]
    %v2786 = vld [vmem:[#allocation3 + $0x48] sm:$0xff]
    %v2787 = vld [vmem:[#allocation3 + $0x50] sm:$0xff]
    %v2788 = vld [vmem:[#allocation3 + $0x58] sm:$0xff]
    %v2789 = vld [vmem:[#allocation3 + $0x60] sm:$0xff]
    %v2790 = vld [vmem:[#allocation3 + $0x68] sm:$0xff]
    %v2791 = vld [vmem:[#allocation3 + $0x70] sm:$0xff]
    %v2792 = vld [vmem:[#allocation3 + $0x78] sm:$0xff]
    %v2793 = vld [vmem:[#allocation3 + $0x80] sm:$0xff]
    %v2794 = vld [vmem:[#allocation3 + $0x88] sm:$0xff]
    %v2795 = vld [vmem:[#allocation3 + $0x90] sm:$0xff]
    %v2796 = vld [vmem:[#allocation3 + $0x98] sm:$0xff]
    %v2797 = vld [vmem:[#allocation3 + $0xa0] sm:$0xff]
    %v2798 = vld [vmem:[#allocation3 + $0xa8] sm:$0xff]
    %v2799 = vld [vmem:[#allocation3 + $0xb0] sm:$0xff]
    %v2800 = vld [vmem:[#allocation3 + $0xb8] sm:$0xff]
    %v2801 = vld [vmem:[#allocation3 + $0xc0] sm:$0xff]
    %v2802 = vld [vmem:[#allocation3 + $0xc8] sm:$0xff]
    %v2803 = vld [vmem:[#allocation3 + $0xd0] sm:$0xff]
    %v2804 = vld [vmem:[#allocation3 + $0xd8] sm:$0xff]
    %v2805 = vld [vmem:[#allocation3 + $0xe0] sm:$0xff]
    %v2806 = vld [vmem:[#allocation3 + $0xe8] sm:$0xff]
    %2836 = vrot.lane.b32.xlu0 %v2778, 127
    %v2837 = vpop.permute.xlu0 %2836
    %2838 = vrot.lane.b32.xlu0 %v2779, 127
    %v2839 = vpop.permute.xlu0 %2838
    %2840 = vrot.lane.b32.xlu0 %v2780, 127
    %v2841 = vpop.permute.xlu0 %2840
    %2842 = vrot.lane.b32.xlu0 %v2781, 127
    %v2843 = vpop.permute.xlu0 %2842
    %2844 = vrot.lane.b32.xlu0 %v2782, 127
    %v2845 = vpop.permute.xlu0 %2844
    %2846 = vrot.lane.b32.xlu0 %v2783, 127
    %v2847 = vpop.permute.xlu0 %2846
    %2848 = vrot.lane.b32.xlu0 %v2784, 127
    %v2849 = vpop.permute.xlu0 %2848
    %2850 = vrot.lane.b32.xlu0 %v2785, 127
    %v2851 = vpop.permute.xlu0 %2850
    %2852 = vrot.lane.b32.xlu0 %v2786, 127
    %v2853 = vpop.permute.xlu0 %2852
    %2854 = vrot.lane.b32.xlu0 %v2787, 127
    %v2855 = vpop.permute.xlu0 %2854
    %2856 = vrot.lane.b32.xlu0 %v2788, 127
    %v2857 = vpop.permute.xlu0 %2856
    %2858 = vrot.lane.b32.xlu0 %v2789, 127
    %v2859 = vpop.permute.xlu0 %2858
    %2860 = vrot.lane.b32.xlu0 %v2790, 127
    %v2861 = vpop.permute.xlu0 %2860
    %2862 = vrot.lane.b32.xlu0 %v2791, 127
    %v2863 = vpop.permute.xlu0 %2862
    %2864 = vrot.lane.b32.xlu0 %v2792, 127
    %v2865 = vpop.permute.xlu0 %2864
    %2866 = vrot.lane.b32.xlu0 %v2793, 127
    %v2867 = vpop.permute.xlu0 %2866
    %2868 = vrot.lane.b32.xlu0 %v2794, 127
    %v2869 = vpop.permute.xlu0 %2868
    %2870 = vrot.lane.b32.xlu0 %v2795, 127
    %v2871 = vpop.permute.xlu0 %2870
    %2872 = vrot.lane.b32.xlu0 %v2796, 127
    %v2873 = vpop.permute.xlu0 %2872
    %2874 = vrot.lane.b32.xlu0 %v2797, 127
    %v2875 = vpop.permute.xlu0 %2874
    %2876 = vrot.lane.b32.xlu0 %v2798, 127
    %v2877 = vpop.permute.xlu0 %2876
    %2878 = vrot.lane.b32.xlu0 %v2799, 127
    %v2879 = vpop.permute.xlu0 %2878
    %2880 = vrot.lane.b32.xlu0 %v2800, 127
    %v2881 = vpop.permute.xlu0 %2880
    %2882 = vrot.lane.b32.xlu0 %v2801, 127
    %v2883 = vpop.permute.xlu0 %2882
    %2884 = vrot.lane.b32.xlu0 %v2802, 127
    %v2885 = vpop.permute.xlu0 %2884
    %2886 = vrot.lane.b32.xlu0 %v2803, 127
    %v2887 = vpop.permute.xlu0 %2886
    %2888 = vrot.lane.b32.xlu0 %v2804, 127
    %v2889 = vpop.permute.xlu0 %2888
    %2890 = vrot.lane.b32.xlu0 %v2805, 127
    %v2891 = vpop.permute.xlu0 %2890
    %2892 = vrot.lane.b32.xlu0 %v2806, 127
    %v2893 = vpop.permute.xlu0 %2892
    %v2894 = vsel %vm265, %v2837, %v2839
    %v2895 = vsel %vm265, %v2839, %v2841
    %v2896 = vsel %vm265, %v2841, %v2843
    %v2897 = vsel %vm265, %v2843, %v2845
    %v2898 = vsel %vm265, %v2845, %v2847
    %v2899 = vsel %vm265, %v2847, %v2849
    %v2900 = vsel %vm265, %v2849, %v2851
    %v2901 = vsel %vm265, %v2851, %v2853
    %v2902 = vsel %vm265, %v2853, %v2855
    %v2903 = vsel %vm265, %v2855, %v2857
    %v2904 = vsel %vm265, %v2857, %v2859
    %v2905 = vsel %vm265, %v2859, %v2861
    %v2906 = vsel %vm265, %v2861, %v2863
    %v2907 = vsel %vm265, %v2863, %v2865
    %v2908 = vsel %vm265, %v2865, %v2867
    %v2909 = vsel %vm265, %v2867, %v2869
    %v2910 = vsel %vm265, %v2869, %v2871
    %v2911 = vsel %vm265, %v2871, %v2873
    %v2912 = vsel %vm265, %v2873, %v2875
    %v2913 = vsel %vm265, %v2875, %v2877
    %v2914 = vsel %vm265, %v2877, %v2879
    %v2915 = vsel %vm265, %v2879, %v2881
    %v2916 = vsel %vm265, %v2881, %v2883
    %v2917 = vsel %vm265, %v2883, %v2885
    %v2918 = vsel %vm265, %v2885, %v2887
    %v2919 = vsel %vm265, %v2887, %v2889
    %v2920 = vsel %vm265, %v2889, %v2891
    %v2921 = vsel %vm265, %v2891, %v2893
    %2950 = vrot.lane.b32.xlu0 %v2778, 126
    %v2951 = vpop.permute.xlu0 %2950
    %2952 = vrot.lane.b32.xlu0 %v2779, 126
    %v2953 = vpop.permute.xlu0 %2952
    %2954 = vrot.lane.b32.xlu0 %v2780, 126
    %v2955 = vpop.permute.xlu0 %2954
    %2956 = vrot.lane.b32.xlu0 %v2781, 126
    %v2957 = vpop.permute.xlu0 %2956
    %2958 = vrot.lane.b32.xlu0 %v2782, 126
    %v2959 = vpop.permute.xlu0 %2958
    %2960 = vrot.lane.b32.xlu0 %v2783, 126
    %v2961 = vpop.permute.xlu0 %2960
    %2962 = vrot.lane.b32.xlu0 %v2784, 126
    %v2963 = vpop.permute.xlu0 %2962
    %2964 = vrot.lane.b32.xlu0 %v2785, 126
    %v2965 = vpop.permute.xlu0 %2964
    %2966 = vrot.lane.b32.xlu0 %v2786, 126
    %v2967 = vpop.permute.xlu0 %2966
    %2968 = vrot.lane.b32.xlu0 %v2787, 126
    %v2969 = vpop.permute.xlu0 %2968
    %2970 = vrot.lane.b32.xlu0 %v2788, 126
    %v2971 = vpop.permute.xlu0 %2970
    %2972 = vrot.lane.b32.xlu0 %v2789, 126
    %v2973 = vpop.permute.xlu0 %2972
    %2974 = vrot.lane.b32.xlu0 %v2790, 126
    %v2975 = vpop.permute.xlu0 %2974
    %2976 = vrot.lane.b32.xlu0 %v2791, 126
    %v2977 = vpop.permute.xlu0 %2976
    %2978 = vrot.lane.b32.xlu0 %v2792, 126
    %v2979 = vpop.permute.xlu0 %2978
    %2980 = vrot.lane.b32.xlu0 %v2793, 126
    %v2981 = vpop.permute.xlu0 %2980
    %2982 = vrot.lane.b32.xlu0 %v2794, 126
    %v2983 = vpop.permute.xlu0 %2982
    %2984 = vrot.lane.b32.xlu0 %v2795, 126
    %v2985 = vpop.permute.xlu0 %2984
    %2986 = vrot.lane.b32.xlu0 %v2796, 126
    %v2987 = vpop.permute.xlu0 %2986
    %2988 = vrot.lane.b32.xlu0 %v2797, 126
    %v2989 = vpop.permute.xlu0 %2988
    %2990 = vrot.lane.b32.xlu0 %v2798, 126
    %v2991 = vpop.permute.xlu0 %2990
    %2992 = vrot.lane.b32.xlu0 %v2799, 126
    %v2993 = vpop.permute.xlu0 %2992
    %2994 = vrot.lane.b32.xlu0 %v2800, 126
    %v2995 = vpop.permute.xlu0 %2994
    %2996 = vrot.lane.b32.xlu0 %v2801, 126
    %v2997 = vpop.permute.xlu0 %2996
    %2998 = vrot.lane.b32.xlu0 %v2802, 126
    %v2999 = vpop.permute.xlu0 %2998
    %3000 = vrot.lane.b32.xlu0 %v2803, 126
    %v3001 = vpop.permute.xlu0 %3000
    %3002 = vrot.lane.b32.xlu0 %v2804, 126
    %v3003 = vpop.permute.xlu0 %3002
    %3004 = vrot.lane.b32.xlu0 %v2805, 126
    %v3005 = vpop.permute.xlu0 %3004
    %3006 = vrot.lane.b32.xlu0 %v2806, 126
    %v3007 = vpop.permute.xlu0 %3006
    %v3008 = vsel %vm380, %v2951, %v2953
    %v3009 = vsel %vm380, %v2953, %v2955
    %v3010 = vsel %vm380, %v2955, %v2957
    %v3011 = vsel %vm380, %v2957, %v2959
    %v3012 = vsel %vm380, %v2959, %v2961
    %v3013 = vsel %vm380, %v2961, %v2963
    %v3014 = vsel %vm380, %v2963, %v2965
    %v3015 = vsel %vm380, %v2965, %v2967
    %v3016 = vsel %vm380, %v2967, %v2969
    %v3017 = vsel %vm380, %v2969, %v2971
    %v3018 = vsel %vm380, %v2971, %v2973
    %v3019 = vsel %vm380, %v2973, %v2975
    %v3020 = vsel %vm380, %v2975, %v2977
    %v3021 = vsel %vm380, %v2977, %v2979
    %v3022 = vsel %vm380, %v2979, %v2981
    %v3023 = vsel %vm380, %v2981, %v2983
    %v3024 = vsel %vm380, %v2983, %v2985
    %v3025 = vsel %vm380, %v2985, %v2987
    %v3026 = vsel %vm380, %v2987, %v2989
    %v3027 = vsel %vm380, %v2989, %v2991
    %v3028 = vsel %vm380, %v2991, %v2993
    %v3029 = vsel %vm380, %v2993, %v2995
    %v3030 = vsel %vm380, %v2995, %v2997
    %v3031 = vsel %vm380, %v2997, %v2999
    %v3032 = vsel %vm380, %v2999, %v3001
    %v3033 = vsel %vm380, %v3001, %v3003
    %v3034 = vsel %vm380, %v3003, %v3005
    %v3035 = vsel %vm380, %v3005, %v3007
    %s3064 = scalar_lea.vmem [#allocation6], 4
    %v3065 = vld [vmem:[%s3064] sm:$0x3]
    %v3067 = vsel %vm783, %v3065, 0
    %3069 = vmatprep.subr.mxu0 %v151
    %3070 = vmatpush1.msra.mxu0 %v150
    %3071 = vmatprep.subr.mxu0 %v2895
    %3072 = vmatpush1.msra.mxu0 %v2894
    %3073 = vmatprep.subr.mxu0 %v3009
    %3074 = vmatpush1.msra.mxu0 %v3008
    %3075 = vmatprep.subr.mxu0 0.0
    %3076 = vmatpush1.msra.mxu0 0.0
    %3077 = vmatprep.subr.mxu0 0.0
    %3078 = vmatpush1.msra.mxu0 0.0
    %3079 = vmatprep.subr.mxu0 0.0
    %3080 = vmatpush1.msra.mxu0 0.0
    %3081 = vmatprep.subr.mxu0 0.0
    %3082 = vmatpush1.msra.mxu0 0.0
    %3083 = vmatprep.subr.mxu0 0.0
    %3084 = vmatpush1.msra.mxu0 0.0
    %3085 = vmatprep.subr.mxu0 0.0
    %3086 = vmatpush1.msra.mxu0 0.0
    %3087 = vmatprep.subr.mxu0 0.0
    %3088 = vmatpush1.msra.mxu0 0.0
    %3089 = vmatprep.subr.mxu0 0.0
    %3090 = vmatpush1.msra.mxu0 0.0
    %3091 = vmatprep.subr.mxu0 0.0
    %3092 = vmatpush1.msra.mxu0 0.0
    %3093 = vmatprep.subr.mxu0 0.0
    %3094 = vmatpush1.msra.mxu0 0.0
    %3095 = vmatprep.subr.mxu0 0.0
    %3096 = vmatpush1.msra.mxu0 0.0
    %3097 = vmatprep.subr.mxu0 0.0
    %3098 = vmatpush1.msra.mxu0 0.0
    %3099 = vmatprep.subr.mxu0 0.0
    %3100 = vmatpush1.msra.mxu0 0.0
    %3101 = vmatprep.subr.mxu0 0.0
    %3102 = vmatpush1.msra.mxu0 0.0
    %3103 = vmatprep.subr.mxu0 0.0
    %3104 = vmatpush1.msra.mxu0 0.0
    %3105 = vmatprep.subr.mxu0 0.0
    %3106 = vmatpush1.msra.mxu0 0.0
    %3107 = vmatprep.subr.mxu0 0.0
    %3108 = vmatpush1.msra.mxu0 0.0
    %3109 = vmatprep.subr.mxu0 0.0
    %3110 = vmatpush1.msra.mxu0 0.0
    %3111 = vmatprep.subr.mxu0 0.0
    %3112 = vmatpush1.msra.mxu0 0.0
    %3113 = vmatprep.subr.mxu0 0.0
    %3114 = vmatpush1.msra.mxu0 0.0
    %3115 = vmatprep.subr.mxu0 0.0
    %3116 = vmatpush1.msra.mxu0 0.0
    %3117 = vmatprep.subr.mxu0 0.0
    %3118 = vmatpush1.msra.mxu0 0.0
    %3119 = vmatprep.subr.mxu0 0.0
    %3120 = vmatpush1.msra.mxu0 0.0
    %3121 = vmatprep.subr.mxu0 0.0
    %3122 = vmatpush1.msra.mxu0 0.0
    %3123 = vmatprep.subr.mxu0 0.0
    %3124 = vmatpush1.msra.mxu0 0.0
    %3125 = vmatprep.subr.mxu0 0.0
    %3126 = vmatpush1.msra.mxu0 0.0
    %3127 = vmatprep.subr.mxu0 0.0
    %3128 = vmatpush1.msra.mxu0 0.0
    %3129 = vmatprep.subr.mxu0 0.0
    %3130 = vmatpush1.msra.mxu0 0.0
    %3131 = vmatprep.subr.mxu0 0.0
    %3132 = vmatpush1.msra.mxu0 0.0
    %3133 = vmatprep.mubr.f32.mxu0 0.0
    %3134 = vmatmul.mubr.f32.gmra.mrb[0].mxu0 %v3067
    %v3135 = vpop.f32.mrb[0].mxu0
    %v3136 = vadd.f32 0.0, %v3135
    %v3137 = vpop.f32.mrb[0].mxu0
    %v3138 = vadd.f32 0.0, %v3137
    %3139 = vdwg.mxu0
    %3140 = vmatprep.subr.mxu0 %v153
    %3141 = vmatpush1.msra.mxu0 %v152
    %3142 = vmatprep.subr.mxu0 %v2897
    %3143 = vmatpush1.msra.mxu0 %v2896
    %3144 = vmatprep.subr.mxu0 %v3011
    %3145 = vmatpush1.msra.mxu0 %v3010
    %3146 = vmatprep.subr.mxu0 0.0
    %3147 = vmatpush1.msra.mxu0 0.0
    %3148 = vmatprep.subr.mxu0 0.0
    %3149 = vmatpush1.msra.mxu0 0.0
    %3150 = vmatprep.subr.mxu0 0.0
    %3151 = vmatpush1.msra.mxu0 0.0
    %3152 = vmatprep.subr.mxu0 0.0
    %3153 = vmatpush1.msra.mxu0 0.0
    %3154 = vmatprep.subr.mxu0 0.0
    %3155 = vmatpush1.msra.mxu0 0.0
    %3156 = vmatprep.subr.mxu0 0.0
    %3157 = vmatpush1.msra.mxu0 0.0
    %3158 = vmatprep.subr.mxu0 0.0
    %3159 = vmatpush1.msra.mxu0 0.0
    %3160 = vmatprep.subr.mxu0 0.0
    %3161 = vmatpush1.msra.mxu0 0.0
    %3162 = vmatprep.subr.mxu0 0.0
    %3163 = vmatpush1.msra.mxu0 0.0
    %3164 = vmatprep.subr.mxu0 0.0
    %3165 = vmatpush1.msra.mxu0 0.0
    %3166 = vmatprep.subr.mxu0 0.0
    %3167 = vmatpush1.msra.mxu0 0.0
    %3168 = vmatprep.subr.mxu0 0.0
    %3169 = vmatpush1.msra.mxu0 0.0
    %3170 = vmatprep.subr.mxu0 0.0
    %3171 = vmatpush1.msra.mxu0 0.0
    %3172 = vmatprep.subr.mxu0 0.0
    %3173 = vmatpush1.msra.mxu0 0.0
    %3174 = vmatprep.subr.mxu0 0.0
    %3175 = vmatpush1.msra.mxu0 0.0
    %3176 = vmatprep.subr.mxu0 0.0
    %3177 = vmatpush1.msra.mxu0 0.0
    %3178 = vmatprep.subr.mxu0 0.0
    %3179 = vmatpush1.msra.mxu0 0.0
    %3180 = vmatprep.subr.mxu0 0.0
    %3181 = vmatpush1.msra.mxu0 0.0
    %3182 = vmatprep.subr.mxu0 0.0
    %3183 = vmatpush1.msra.mxu0 0.0
    %3184 = vmatprep.subr.mxu0 0.0
    %3185 = vmatpush1.msra.mxu0 0.0
    %3186 = vmatprep.subr.mxu0 0.0
    %3187 = vmatpush1.msra.mxu0 0.0
    %3188 = vmatprep.subr.mxu0 0.0
    %3189 = vmatpush1.msra.mxu0 0.0
    %3190 = vmatprep.subr.mxu0 0.0
    %3191 = vmatpush1.msra.mxu0 0.0
    %3192 = vmatprep.subr.mxu0 0.0
    %3193 = vmatpush1.msra.mxu0 0.0
    %3194 = vmatprep.subr.mxu0 0.0
    %3195 = vmatpush1.msra.mxu0 0.0
    %3196 = vmatprep.subr.mxu0 0.0
    %3197 = vmatpush1.msra.mxu0 0.0
    %3198 = vmatprep.subr.mxu0 0.0
    %3199 = vmatpush1.msra.mxu0 0.0
    %3200 = vmatprep.subr.mxu0 0.0
    %3201 = vmatpush1.msra.mxu0 0.0
    %3202 = vmatprep.subr.mxu0 0.0
    %3203 = vmatpush1.msra.mxu0 0.0
    %3204 = vmatprep.mubr.f32.mxu0 0.0
    %3205 = vmatmul.mubr.f32.gmra.mrb[0].mxu0 %v3067
    %v3206 = vpop.f32.mrb[0].mxu0
    %v3207 = vadd.f32 0.0, %v3206
    %v3208 = vpop.f32.mrb[0].mxu0
    %v3209 = vadd.f32 0.0, %v3208
    %3210 = vdwg.mxu0
    %3211 = vmatprep.subr.mxu0 %v155
    %3212 = vmatpush1.msra.mxu0 %v154
    %3213 = vmatprep.subr.mxu0 %v2899
    %3214 = vmatpush1.msra.mxu0 %v2898
    %3215 = vmatprep.subr.mxu0 %v3013
    %3216 = vmatpush1.msra.mxu0 %v3012
    %3217 = vmatprep.subr.mxu0 0.0
    %3218 = vmatpush1.msra.mxu0 0.0
    %3219 = vmatprep.subr.mxu0 0.0
    %3220 = vmatpush1.msra.mxu0 0.0
    %3221 = vmatprep.subr.mxu0 0.0
    %3222 = vmatpush1.msra.mxu0 0.0
    %3223 = vmatprep.subr.mxu0 0.0
    %3224 = vmatpush1.msra.mxu0 0.0
    %3225 = vmatprep.subr.mxu0 0.0
    %3226 = vmatpush1.msra.mxu0 0.0
    %3227 = vmatprep.subr.mxu0 0.0
    %3228 = vmatpush1.msra.mxu0 0.0
    %3229 = vmatprep.subr.mxu0 0.0
    %3230 = vmatpush1.msra.mxu0 0.0
    %3231 = vmatprep.subr.mxu0 0.0
    %3232 = vmatpush1.msra.mxu0 0.0
    %3233 = vmatprep.subr.mxu0 0.0
    %3234 = vmatpush1.msra.mxu0 0.0
    %3235 = vmatprep.subr.mxu0 0.0
    %3236 = vmatpush1.msra.mxu0 0.0
    %3237 = vmatprep.subr.mxu0 0.0
    %3238 = vmatpush1.msra.mxu0 0.0
    %3239 = vmatprep.subr.mxu0 0.0
    %3240 = vmatpush1.msra.mxu0 0.0
    %3241 = vmatprep.subr.mxu0 0.0
    %3242 = vmatpush1.msra.mxu0 0.0
    %3243 = vmatprep.subr.mxu0 0.0
    %3244 = vmatpush1.msra.mxu0 0.0
    %3245 = vmatprep.subr.mxu0 0.0
    %3246 = vmatpush1.msra.mxu0 0.0
    %3247 = vmatprep.subr.mxu0 0.0
    %3248 = vmatpush1.msra.mxu0 0.0
    %3249 = vmatprep.subr.mxu0 0.0
    %3250 = vmatpush1.msra.mxu0 0.0
    %3251 = vmatprep.subr.mxu0 0.0
    %3252 = vmatpush1.msra.mxu0 0.0
    %3253 = vmatprep.subr.mxu0 0.0
    %3254 = vmatpush1.msra.mxu0 0.0
    %3255 = vmatprep.subr.mxu0 0.0
    %3256 = vmatpush1.msra.mxu0 0.0
    %3257 = vmatprep.subr.mxu0 0.0
    %3258 = vmatpush1.msra.mxu0 0.0
    %3259 = vmatprep.subr.mxu0 0.0
    %3260 = vmatpush1.msra.mxu0 0.0
    %3261 = vmatprep.subr.mxu0 0.0
    %3262 = vmatpush1.msra.mxu0 0.0
    %3263 = vmatprep.subr.mxu0 0.0
    %3264 = vmatpush1.msra.mxu0 0.0
    %3265 = vmatprep.subr.mxu0 0.0
    %3266 = vmatpush1.msra.mxu0 0.0
    %3267 = vmatprep.subr.mxu0 0.0
    %3268 = vmatpush1.msra.mxu0 0.0
    %3269 = vmatprep.subr.mxu0 0.0
    %3270 = vmatpush1.msra.mxu0 0.0
    %3271 = vmatprep.subr.mxu0 0.0
    %3272 = vmatpush1.msra.mxu0 0.0
    %3273 = vmatprep.subr.mxu0 0.0
    %3274 = vmatpush1.msra.mxu0 0.0
    %3275 = vmatprep.mubr.f32.mxu0 0.0
    %3276 = vmatmul.mubr.f32.gmra.mrb[0].mxu0 %v3067
    %v3277 = vpop.f32.mrb[0].mxu0
    %v3278 = vadd.f32 0.0, %v3277
    %v3279 = vpop.f32.mrb[0].mxu0
    %v3280 = vadd.f32 0.0, %v3279
    %3281 = vdwg.mxu0
    %3282 = vmatprep.subr.mxu0 %v157
    %3283 = vmatpush1.msra.mxu0 %v156
    %3284 = vmatprep.subr.mxu0 %v2901
    %3285 = vmatpush1.msra.mxu0 %v2900
    %3286 = vmatprep.subr.mxu0 %v3015
    %3287 = vmatpush1.msra.mxu0 %v3014
    %3288 = vmatprep.subr.mxu0 0.0
    %3289 = vmatpush1.msra.mxu0 0.0
    %3290 = vmatprep.subr.mxu0 0.0
    %3291 = vmatpush1.msra.mxu0 0.0
    %3292 = vmatprep.subr.mxu0 0.0
    %3293 = vmatpush1.msra.mxu0 0.0
    %3294 = vmatprep.subr.mxu0 0.0
    %3295 = vmatpush1.msra.mxu0 0.0
    %3296 = vmatprep.subr.mxu0 0.0
    %3297 = vmatpush1.msra.mxu0 0.0
    %3298 = vmatprep.subr.mxu0 0.0
    %3299 = vmatpush1.msra.mxu0 0.0
    %3300 = vmatprep.subr.mxu0 0.0
    %3301 = vmatpush1.msra.mxu0 0.0
    %3302 = vmatprep.subr.mxu0 0.0
    %3303 = vmatpush1.msra.mxu0 0.0
    %3304 = vmatprep.subr.mxu0 0.0
    %3305 = vmatpush1.msra.mxu0 0.0
    %3306 = vmatprep.subr.mxu0 0.0
    %3307 = vmatpush1.msra.mxu0 0.0
    %3308 = vmatprep.subr.mxu0 0.0
    %3309 = vmatpush1.msra.mxu0 0.0
    %3310 = vmatprep.subr.mxu0 0.0
    %3311 = vmatpush1.msra.mxu0 0.0
    %3312 = vmatprep.subr.mxu0 0.0
    %3313 = vmatpush1.msra.mxu0 0.0
    %3314 = vmatprep.subr.mxu0 0.0
    %3315 = vmatpush1.msra.mxu0 0.0
    %3316 = vmatprep.subr.mxu0 0.0
    %3317 = vmatpush1.msra.mxu0 0.0
    %3318 = vmatprep.subr.mxu0 0.0
    %3319 = vmatpush1.msra.mxu0 0.0
    %3320 = vmatprep.subr.mxu0 0.0
    %3321 = vmatpush1.msra.mxu0 0.0
    %3322 = vmatprep.subr.mxu0 0.0
    %3323 = vmatpush1.msra.mxu0 0.0
    %3324 = vmatprep.subr.mxu0 0.0
    %3325 = vmatpush1.msra.mxu0 0.0
    %3326 = vmatprep.subr.mxu0 0.0
    %3327 = vmatpush1.msra.mxu0 0.0
    %3328 = vmatprep.subr.mxu0 0.0
    %3329 = vmatpush1.msra.mxu0 0.0
    %3330 = vmatprep.subr.mxu0 0.0
    %3331 = vmatpush1.msra.mxu0 0.0
    %3332 = vmatprep.subr.mxu0 0.0
    %3333 = vmatpush1.msra.mxu0 0.0
    %3334 = vmatprep.subr.mxu0 0.0
    %3335 = vmatpush1.msra.mxu0 0.0
    %3336 = vmatprep.subr.mxu0 0.0
    %3337 = vmatpush1.msra.mxu0 0.0
    %3338 = vmatprep.subr.mxu0 0.0
    %3339 = vmatpush1.msra.mxu0 0.0
    %3340 = vmatprep.subr.mxu0 0.0
    %3341 = vmatpush1.msra.mxu0 0.0
    %3342 = vmatprep.subr.mxu0 0.0
    %3343 = vmatpush1.msra.mxu0 0.0
    %3344 = vmatprep.subr.mxu0 0.0
    %3345 = vmatpush1.msra.mxu0 0.0
    %3346 = vmatprep.mubr.f32.mxu0 0.0
    %3347 = vmatmul.mubr.f32.gmra.mrb[0].mxu0 %v3067
    %v3348 = vpop.f32.mrb[0].mxu0
    %v3349 = vadd.f32 0.0, %v3348
    %v3350 = vpop.f32.mrb[0].mxu0
    %v3351 = vadd.f32 0.0, %v3350
    %3352 = vdwg.mxu0
    %3353 = vmatprep.subr.mxu0 %v159
    %3354 = vmatpush1.msra.mxu0 %v158
    %3355 = vmatprep.subr.mxu0 %v2903
    %3356 = vmatpush1.msra.mxu0 %v2902
    %3357 = vmatprep.subr.mxu0 %v3017
    %3358 = vmatpush1.msra.mxu0 %v3016
    %3359 = vmatprep.subr.mxu0 0.0
    %3360 = vmatpush1.msra.mxu0 0.0
    %3361 = vmatprep.subr.mxu0 0.0
    %3362 = vmatpush1.msra.mxu0 0.0
    %3363 = vmatprep.subr.mxu0 0.0
    %3364 = vmatpush1.msra.mxu0 0.0
    %3365 = vmatprep.subr.mxu0 0.0
    %3366 = vmatpush1.msra.mxu0 0.0
    %3367 = vmatprep.subr.mxu0 0.0
    %3368 = vmatpush1.msra.mxu0 0.0
    %3369 = vmatprep.subr.mxu0 0.0
    %3370 = vmatpush1.msra.mxu0 0.0
    %3371 = vmatprep.subr.mxu0 0.0
    %3372 = vmatpush1.msra.mxu0 0.0
    %3373 = vmatprep.subr.mxu0 0.0
    %3374 = vmatpush1.msra.mxu0 0.0
    %3375 = vmatprep.subr.mxu0 0.0
    %3376 = vmatpush1.msra.mxu0 0.0
    %3377 = vmatprep.subr.mxu0 0.0
    %3378 = vmatpush1.msra.mxu0 0.0
    %3379 = vmatprep.subr.mxu0 0.0
    %3380 = vmatpush1.msra.mxu0 0.0
    %3381 = vmatprep.subr.mxu0 0.0
    %3382 = vmatpush1.msra.mxu0 0.0
    %3383 = vmatprep.subr.mxu0 0.0
    %3384 = vmatpush1.msra.mxu0 0.0
    %3385 = vmatprep.subr.mxu0 0.0
    %3386 = vmatpush1.msra.mxu0 0.0
    %3387 = vmatprep.subr.mxu0 0.0
    %3388 = vmatpush1.msra.mxu0 0.0
    %3389 = vmatprep.subr.mxu0 0.0
    %3390 = vmatpush1.msra.mxu0 0.0
    %3391 = vmatprep.subr.mxu0 0.0
    %3392 = vmatpush1.msra.mxu0 0.0
    %3393 = vmatprep.subr.mxu0 0.0
    %3394 = vmatpush1.msra.mxu0 0.0
    %3395 = vmatprep.subr.mxu0 0.0
    %3396 = vmatpush1.msra.mxu0 0.0
    %3397 = vmatprep.subr.mxu0 0.0
    %3398 = vmatpush1.msra.mxu0 0.0
    %3399 = vmatprep.subr.mxu0 0.0
    %3400 = vmatpush1.msra.mxu0 0.0
    %3401 = vmatprep.subr.mxu0 0.0
    %3402 = vmatpush1.msra.mxu0 0.0
    %3403 = vmatprep.subr.mxu0 0.0
    %3404 = vmatpush1.msra.mxu0 0.0
    %3405 = vmatprep.subr.mxu0 0.0
    %3406 = vmatpush1.msra.mxu0 0.0
    %3407 = vmatprep.subr.mxu0 0.0
    %3408 = vmatpush1.msra.mxu0 0.0
    %3409 = vmatprep.subr.mxu0 0.0
    %3410 = vmatpush1.msra.mxu0 0.0
    %3411 = vmatprep.subr.mxu0 0.0
    %3412 = vmatpush1.msra.mxu0 0.0
    %3413 = vmatprep.subr.mxu0 0.0
    %3414 = vmatpush1.msra.mxu0 0.0
    %3415 = vmatprep.subr.mxu0 0.0
    %3416 = vmatpush1.msra.mxu0 0.0
    %3417 = vmatprep.mubr.f32.mxu0 0.0
    %3418 = vmatmul.mubr.f32.gmra.mrb[0].mxu0 %v3067
    %v3419 = vpop.f32.mrb[0].mxu0
    %v3420 = vadd.f32 0.0, %v3419
    %v3421 = vpop.f32.mrb[0].mxu0
    %v3422 = vadd.f32 0.0, %v3421
    %3423 = vdwg.mxu0
    %3424 = vmatprep.subr.mxu0 %v161
    %3425 = vmatpush1.msra.mxu0 %v160
    %3426 = vmatprep.subr.mxu0 %v2905
    %3427 = vmatpush1.msra.mxu0 %v2904
    %3428 = vmatprep.subr.mxu0 %v3019
    %3429 = vmatpush1.msra.mxu0 %v3018
    %3430 = vmatprep.subr.mxu0 0.0
    %3431 = vmatpush1.msra.mxu0 0.0
    %3432 = vmatprep.subr.mxu0 0.0
    %3433 = vmatpush1.msra.mxu0 0.0
    %3434 = vmatprep.subr.mxu0 0.0
    %3435 = vmatpush1.msra.mxu0 0.0
    %3436 = vmatprep.subr.mxu0 0.0
    %3437 = vmatpush1.msra.mxu0 0.0
    %3438 = vmatprep.subr.mxu0 0.0
    %3439 = vmatpush1.msra.mxu0 0.0
    %3440 = vmatprep.subr.mxu0 0.0
    %3441 = vmatpush1.msra.mxu0 0.0
    %3442 = vmatprep.subr.mxu0 0.0
    %3443 = vmatpush1.msra.mxu0 0.0
    %3444 = vmatprep.subr.mxu0 0.0
    %3445 = vmatpush1.msra.mxu0 0.0
    %3446 = vmatprep.subr.mxu0 0.0
    %3447 = vmatpush1.msra.mxu0 0.0
    %3448 = vmatprep.subr.mxu0 0.0
    %3449 = vmatpush1.msra.mxu0 0.0
    %3450 = vmatprep.subr.mxu0 0.0
    %3451 = vmatpush1.msra.mxu0 0.0
    %3452 = vmatprep.subr.mxu0 0.0
    %3453 = vmatpush1.msra.mxu0 0.0
    %3454 = vmatprep.subr.mxu0 0.0
    %3455 = vmatpush1.msra.mxu0 0.0
    %3456 = vmatprep.subr.mxu0 0.0
    %3457 = vmatpush1.msra.mxu0 0.0
    %3458 = vmatprep.subr.mxu0 0.0
    %3459 = vmatpush1.msra.mxu0 0.0
    %3460 = vmatprep.subr.mxu0 0.0
    %3461 = vmatpush1.msra.mxu0 0.0
    %3462 = vmatprep.subr.mxu0 0.0
    %3463 = vmatpush1.msra.mxu0 0.0
    %3464 = vmatprep.subr.mxu0 0.0
    %3465 = vmatpush1.msra.mxu0 0.0
    %3466 = vmatprep.subr.mxu0 0.0
    %3467 = vmatpush1.msra.mxu0 0.0
    %3468 = vmatprep.subr.mxu0 0.0
    %3469 = vmatpush1.msra.mxu0 0.0
    %3470 = vmatprep.subr.mxu0 0.0
    %3471 = vmatpush1.msra.mxu0 0.0
    %3472 = vmatprep.subr.mxu0 0.0
    %3473 = vmatpush1.msra.mxu0 0.0
    %3474 = vmatprep.subr.mxu0 0.0
    %3475 = vmatpush1.msra.mxu0 0.0
    %3476 = vmatprep.subr.mxu0 0.0
    %3477 = vmatpush1.msra.mxu0 0.0
    %3478 = vmatprep.subr.mxu0 0.0
    %3479 = vmatpush1.msra.mxu0 0.0
    %3480 = vmatprep.subr.mxu0 0.0
    %3481 = vmatpush1.msra.mxu0 0.0
    %3482 = vmatprep.subr.mxu0 0.0
    %3483 = vmatpush1.msra.mxu0 0.0
    %3484 = vmatprep.subr.mxu0 0.0
    %3485 = vmatpush1.msra.mxu0 0.0
    %3486 = vmatprep.subr.mxu0 0.0
    %3487 = vmatpush1.msra.mxu0 0.0
    %3488 = vmatprep.mubr.f32.mxu0 0.0
    %3489 = vmatmul.mubr.f32.gmra.mrb[0].mxu0 %v3067
    %v3490 = vpop.f32.mrb[0].mxu0
    %v3491 = vadd.f32 0.0, %v3490
    %v3492 = vpop.f32.mrb[0].mxu0
    %v3493 = vadd.f32 0.0, %v3492
    %3494 = vdwg.mxu0
    %3495 = vmatprep.subr.mxu0 %v163
    %3496 = vmatpush1.msra.mxu0 %v162
    %3497 = vmatprep.subr.mxu0 %v2907
    %3498 = vmatpush1.msra.mxu0 %v2906
    %3499 = vmatprep.subr.mxu0 %v3021
    %3500 = vmatpush1.msra.mxu0 %v3020
    %3501 = vmatprep.subr.mxu0 0.0
    %3502 = vmatpush1.msra.mxu0 0.0
    %3503 = vmatprep.subr.mxu0 0.0
    %3504 = vmatpush1.msra.mxu0 0.0
    %3505 = vmatprep.subr.mxu0 0.0
    %3506 = vmatpush1.msra.mxu0 0.0
    %3507 = vmatprep.subr.mxu0 0.0
    %3508 = vmatpush1.msra.mxu0 0.0
    %3509 = vmatprep.subr.mxu0 0.0
    %3510 = vmatpush1.msra.mxu0 0.0
    %3511 = vmatprep.subr.mxu0 0.0
    %3512 = vmatpush1.msra.mxu0 0.0
    %3513 = vmatprep.subr.mxu0 0.0
    %3514 = vmatpush1.msra.mxu0 0.0
    %3515 = vmatprep.subr.mxu0 0.0
    %3516 = vmatpush1.msra.mxu0 0.0
    %3517 = vmatprep.subr.mxu0 0.0
    %3518 = vmatpush1.msra.mxu0 0.0
    %3519 = vmatprep.subr.mxu0 0.0
    %3520 = vmatpush1.msra.mxu0 0.0
    %3521 = vmatprep.subr.mxu0 0.0
    %3522 = vmatpush1.msra.mxu0 0.0
    %3523 = vmatprep.subr.mxu0 0.0
    %3524 = vmatpush1.msra.mxu0 0.0
    %3525 = vmatprep.subr.mxu0 0.0
    %3526 = vmatpush1.msra.mxu0 0.0
    %3527 = vmatprep.subr.mxu0 0.0
    %3528 = vmatpush1.msra.mxu0 0.0
    %3529 = vmatprep.subr.mxu0 0.0
    %3530 = vmatpush1.msra.mxu0 0.0
    %3531 = vmatprep.subr.mxu0 0.0
    %3532 = vmatpush1.msra.mxu0 0.0
    %3533 = vmatprep.subr.mxu0 0.0
    %3534 = vmatpush1.msra.mxu0 0.0
    %3535 = vmatprep.subr.mxu0 0.0
    %3536 = vmatpush1.msra.mxu0 0.0
    %3537 = vmatprep.subr.mxu0 0.0
    %3538 = vmatpush1.msra.mxu0 0.0
    %3539 = vmatprep.subr.mxu0 0.0
    %3540 = vmatpush1.msra.mxu0 0.0
    %3541 = vmatprep.subr.mxu0 0.0
    %3542 = vmatpush1.msra.mxu0 0.0
    %3543 = vmatprep.subr.mxu0 0.0
    %3544 = vmatpush1.msra.mxu0 0.0
    %3545 = vmatprep.subr.mxu0 0.0
    %3546 = vmatpush1.msra.mxu0 0.0
    %3547 = vmatprep.subr.mxu0 0.0
    %3548 = vmatpush1.msra.mxu0 0.0
    %3549 = vmatprep.subr.mxu0 0.0
    %3550 = vmatpush1.msra.mxu0 0.0
    %3551 = vmatprep.subr.mxu0 0.0
    %3552 = vmatpush1.msra.mxu0 0.0
    %3553 = vmatprep.subr.mxu0 0.0
    %3554 = vmatpush1.msra.mxu0 0.0
    %3555 = vmatprep.subr.mxu0 0.0
    %3556 = vmatpush1.msra.mxu0 0.0
    %3557 = vmatprep.subr.mxu0 0.0
    %3558 = vmatpush1.msra.mxu0 0.0
    %3559 = vmatprep.mubr.f32.mxu0 0.0
    %3560 = vmatmul.mubr.f32.gmra.mrb[0].mxu0 %v3067
    %v3561 = vpop.f32.mrb[0].mxu0
    %v3562 = vadd.f32 0.0, %v3561
    %v3563 = vpop.f32.mrb[0].mxu0
    %v3564 = vadd.f32 0.0, %v3563
    %3565 = vdwg.mxu0
    %3566 = vmatprep.subr.mxu0 %v165
    %3567 = vmatpush1.msra.mxu0 %v164
    %3568 = vmatprep.subr.mxu0 %v2909
    %3569 = vmatpush1.msra.mxu0 %v2908
    %3570 = vmatprep.subr.mxu0 %v3023
    %3571 = vmatpush1.msra.mxu0 %v3022
    %3572 = vmatprep.subr.mxu0 0.0
    %3573 = vmatpush1.msra.mxu0 0.0
    %3574 = vmatprep.subr.mxu0 0.0
    %3575 = vmatpush1.msra.mxu0 0.0
    %3576 = vmatprep.subr.mxu0 0.0
    %3577 = vmatpush1.msra.mxu0 0.0
    %3578 = vmatprep.subr.mxu0 0.0
    %3579 = vmatpush1.msra.mxu0 0.0
    %3580 = vmatprep.subr.mxu0 0.0
    %3581 = vmatpush1.msra.mxu0 0.0
    %3582 = vmatprep.subr.mxu0 0.0
    %3583 = vmatpush1.msra.mxu0 0.0
    %3584 = vmatprep.subr.mxu0 0.0
    %3585 = vmatpush1.msra.mxu0 0.0
    %3586 = vmatprep.subr.mxu0 0.0
    %3587 = vmatpush1.msra.mxu0 0.0
    %3588 = vmatprep.subr.mxu0 0.0
    %3589 = vmatpush1.msra.mxu0 0.0
    %3590 = vmatprep.subr.mxu0 0.0
    %3591 = vmatpush1.msra.mxu0 0.0
    %3592 = vmatprep.subr.mxu0 0.0
    %3593 = vmatpush1.msra.mxu0 0.0
    %3594 = vmatprep.subr.mxu0 0.0
    %3595 = vmatpush1.msra.mxu0 0.0
    %3596 = vmatprep.subr.mxu0 0.0
    %3597 = vmatpush1.msra.mxu0 0.0
    %3598 = vmatprep.subr.mxu0 0.0
    %3599 = vmatpush1.msra.mxu0 0.0
    %3600 = vmatprep.subr.mxu0 0.0
    %3601 = vmatpush1.msra.mxu0 0.0
    %3602 = vmatprep.subr.mxu0 0.0
    %3603 = vmatpush1.msra.mxu0 0.0
    %3604 = vmatprep.subr.mxu0 0.0
    %3605 = vmatpush1.msra.mxu0 0.0
    %3606 = vmatprep.subr.mxu0 0.0
    %3607 = vmatpush1.msra.mxu0 0.0
    %3608 = vmatprep.subr.mxu0 0.0
    %3609 = vmatpush1.msra.mxu0 0.0
    %3610 = vmatprep.subr.mxu0 0.0
    %3611 = vmatpush1.msra.mxu0 0.0
    %3612 = vmatprep.subr.mxu0 0.0
    %3613 = vmatpush1.msra.mxu0 0.0
    %3614 = vmatprep.subr.mxu0 0.0
    %3615 = vmatpush1.msra.mxu0 0.0
    %3616 = vmatprep.subr.mxu0 0.0
    %3617 = vmatpush1.msra.mxu0 0.0
    %3618 = vmatprep.subr.mxu0 0.0
    %3619 = vmatpush1.msra.mxu0 0.0
    %3620 = vmatprep.subr.mxu0 0.0
    %3621 = vmatpush1.msra.mxu0 0.0
    %3622 = vmatprep.subr.mxu0 0.0
    %3623 = vmatpush1.msra.mxu0 0.0
    %3624 = vmatprep.subr.mxu0 0.0
    %3625 = vmatpush1.msra.mxu0 0.0
    %3626 = vmatprep.subr.mxu0 0.0
    %3627 = vmatpush1.msra.mxu0 0.0
    %3628 = vmatprep.subr.mxu0 0.0
    %3629 = vmatpush1.msra.mxu0 0.0
    %3630 = vmatprep.mubr.f32.mxu0 0.0
    %3631 = vmatmul.mubr.f32.gmra.mrb[0].mxu0 %v3067
    %v3632 = vpop.f32.mrb[0].mxu0
    %v3633 = vadd.f32 0.0, %v3632
    %v3634 = vpop.f32.mrb[0].mxu0
    %v3635 = vadd.f32 0.0, %v3634
    %3636 = vdwg.mxu0
    %3637 = vmatprep.subr.mxu0 %v167
    %3638 = vmatpush1.msra.mxu0 %v166
    %3639 = vmatprep.subr.mxu0 %v2911
    %3640 = vmatpush1.msra.mxu0 %v2910
    %3641 = vmatprep.subr.mxu0 %v3025
    %3642 = vmatpush1.msra.mxu0 %v3024
    %3643 = vmatprep.subr.mxu0 0.0
    %3644 = vmatpush1.msra.mxu0 0.0
    %3645 = vmatprep.subr.mxu0 0.0
    %3646 = vmatpush1.msra.mxu0 0.0
    %3647 = vmatprep.subr.mxu0 0.0
    %3648 = vmatpush1.msra.mxu0 0.0
    %3649 = vmatprep.subr.mxu0 0.0
    %3650 = vmatpush1.msra.mxu0 0.0
    %3651 = vmatprep.subr.mxu0 0.0
    %3652 = vmatpush1.msra.mxu0 0.0
    %3653 = vmatprep.subr.mxu0 0.0
    %3654 = vmatpush1.msra.mxu0 0.0
    %3655 = vmatprep.subr.mxu0 0.0
    %3656 = vmatpush1.msra.mxu0 0.0
    %3657 = vmatprep.subr.mxu0 0.0
    %3658 = vmatpush1.msra.mxu0 0.0
    %3659 = vmatprep.subr.mxu0 0.0
    %3660 = vmatpush1.msra.mxu0 0.0
    %3661 = vmatprep.subr.mxu0 0.0
    %3662 = vmatpush1.msra.mxu0 0.0
    %3663 = vmatprep.subr.mxu0 0.0
    %3664 = vmatpush1.msra.mxu0 0.0
    %3665 = vmatprep.subr.mxu0 0.0
    %3666 = vmatpush1.msra.mxu0 0.0
    %3667 = vmatprep.subr.mxu0 0.0
    %3668 = vmatpush1.msra.mxu0 0.0
    %3669 = vmatprep.subr.mxu0 0.0
    %3670 = vmatpush1.msra.mxu0 0.0
    %3671 = vmatprep.subr.mxu0 0.0
    %3672 = vmatpush1.msra.mxu0 0.0
    %3673 = vmatprep.subr.mxu0 0.0
    %3674 = vmatpush1.msra.mxu0 0.0
    %3675 = vmatprep.subr.mxu0 0.0
    %3676 = vmatpush1.msra.mxu0 0.0
    %3677 = vmatprep.subr.mxu0 0.0
    %3678 = vmatpush1.msra.mxu0 0.0
    %3679 = vmatprep.subr.mxu0 0.0
    %3680 = vmatpush1.msra.mxu0 0.0
    %3681 = vmatprep.subr.mxu0 0.0
    %3682 = vmatpush1.msra.mxu0 0.0
    %3683 = vmatprep.subr.mxu0 0.0
    %3684 = vmatpush1.msra.mxu0 0.0
    %3685 = vmatprep.subr.mxu0 0.0
    %3686 = vmatpush1.msra.mxu0 0.0
    %3687 = vmatprep.subr.mxu0 0.0
    %3688 = vmatpush1.msra.mxu0 0.0
    %3689 = vmatprep.subr.mxu0 0.0
    %3690 = vmatpush1.msra.mxu0 0.0
    %3691 = vmatprep.subr.mxu0 0.0
    %3692 = vmatpush1.msra.mxu0 0.0
    %3693 = vmatprep.subr.mxu0 0.0
    %3694 = vmatpush1.msra.mxu0 0.0
    %3695 = vmatprep.subr.mxu0 0.0
    %3696 = vmatpush1.msra.mxu0 0.0
    %3697 = vmatprep.subr.mxu0 0.0
    %3698 = vmatpush1.msra.mxu0 0.0
    %3699 = vmatprep.subr.mxu0 0.0
    %3700 = vmatpush1.msra.mxu0 0.0
    %3701 = vmatprep.mubr.f32.mxu0 0.0
    %3702 = vmatmul.mubr.f32.gmra.mrb[0].mxu0 %v3067
    %v3703 = vpop.f32.mrb[0].mxu0
    %v3704 = vadd.f32 0.0, %v3703
    %v3705 = vpop.f32.mrb[0].mxu0
    %v3706 = vadd.f32 0.0, %v3705
    %3707 = vdwg.mxu0
    %3708 = vmatprep.subr.mxu0 %v169
    %3709 = vmatpush1.msra.mxu0 %v168
    %3710 = vmatprep.subr.mxu0 %v2913
    %3711 = vmatpush1.msra.mxu0 %v2912
    %3712 = vmatprep.subr.mxu0 %v3027
    %3713 = vmatpush1.msra.mxu0 %v3026
    %3714 = vmatprep.subr.mxu0 0.0
    %3715 = vmatpush1.msra.mxu0 0.0
    %3716 = vmatprep.subr.mxu0 0.0
    %3717 = vmatpush1.msra.mxu0 0.0
    %3718 = vmatprep.subr.mxu0 0.0
    %3719 = vmatpush1.msra.mxu0 0.0
    %3720 = vmatprep.subr.mxu0 0.0
    %3721 = vmatpush1.msra.mxu0 0.0
    %3722 = vmatprep.subr.mxu0 0.0
    %3723 = vmatpush1.msra.mxu0 0.0
    %3724 = vmatprep.subr.mxu0 0.0
    %3725 = vmatpush1.msra.mxu0 0.0
    %3726 = vmatprep.subr.mxu0 0.0
    %3727 = vmatpush1.msra.mxu0 0.0
    %3728 = vmatprep.subr.mxu0 0.0
    %3729 = vmatpush1.msra.mxu0 0.0
    %3730 = vmatprep.subr.mxu0 0.0
    %3731 = vmatpush1.msra.mxu0 0.0
    %3732 = vmatprep.subr.mxu0 0.0
    %3733 = vmatpush1.msra.mxu0 0.0
    %3734 = vmatprep.subr.mxu0 0.0
    %3735 = vmatpush1.msra.mxu0 0.0
    %3736 = vmatprep.subr.mxu0 0.0
    %3737 = vmatpush1.msra.mxu0 0.0
    %3738 = vmatprep.subr.mxu0 0.0
    %3739 = vmatpush1.msra.mxu0 0.0
    %3740 = vmatprep.subr.mxu0 0.0
    %3741 = vmatpush1.msra.mxu0 0.0
    %3742 = vmatprep.subr.mxu0 0.0
    %3743 = vmatpush1.msra.mxu0 0.0
    %3744 = vmatprep.subr.mxu0 0.0
    %3745 = vmatpush1.msra.mxu0 0.0
    %3746 = vmatprep.subr.mxu0 0.0
    %3747 = vmatpush1.msra.mxu0 0.0
    %3748 = vmatprep.subr.mxu0 0.0
    %3749 = vmatpush1.msra.mxu0 0.0
    %3750 = vmatprep.subr.mxu0 0.0
    %3751 = vmatpush1.msra.mxu0 0.0
    %3752 = vmatprep.subr.mxu0 0.0
    %3753 = vmatpush1.msra.mxu0 0.0
    %3754 = vmatprep.subr.mxu0 0.0
    %3755 = vmatpush1.msra.mxu0 0.0
    %3756 = vmatprep.subr.mxu0 0.0
    %3757 = vmatpush1.msra.mxu0 0.0
    %3758 = vmatprep.subr.mxu0 0.0
    %3759 = vmatpush1.msra.mxu0 0.0
    %3760 = vmatprep.subr.mxu0 0.0
    %3761 = vmatpush1.msra.mxu0 0.0
    %3762 = vmatprep.subr.mxu0 0.0
    %3763 = vmatpush1.msra.mxu0 0.0
    %3764 = vmatprep.subr.mxu0 0.0
    %3765 = vmatpush1.msra.mxu0 0.0
    %3766 = vmatprep.subr.mxu0 0.0
    %3767 = vmatpush1.msra.mxu0 0.0
    %3768 = vmatprep.subr.mxu0 0.0
    %3769 = vmatpush1.msra.mxu0 0.0
    %3770 = vmatprep.subr.mxu0 0.0
    %3771 = vmatpush1.msra.mxu0 0.0
    %3772 = vmatprep.mubr.f32.mxu0 0.0
    %3773 = vmatmul.mubr.f32.gmra.mrb[0].mxu0 %v3067
    %v3774 = vpop.f32.mrb[0].mxu0
    %v3775 = vadd.f32 0.0, %v3774
    %v3776 = vpop.f32.mrb[0].mxu0
    %v3777 = vadd.f32 0.0, %v3776
    %3778 = vdwg.mxu0
    %3779 = vmatprep.subr.mxu0 %v171
    %3780 = vmatpush1.msra.mxu0 %v170
    %3781 = vmatprep.subr.mxu0 %v2915
    %3782 = vmatpush1.msra.mxu0 %v2914
    %3783 = vmatprep.subr.mxu0 %v3029
    %3784 = vmatpush1.msra.mxu0 %v3028
    %3785 = vmatprep.subr.mxu0 0.0
    %3786 = vmatpush1.msra.mxu0 0.0
    %3787 = vmatprep.subr.mxu0 0.0
    %3788 = vmatpush1.msra.mxu0 0.0
    %3789 = vmatprep.subr.mxu0 0.0
    %3790 = vmatpush1.msra.mxu0 0.0
    %3791 = vmatprep.subr.mxu0 0.0
    %3792 = vmatpush1.msra.mxu0 0.0
    %3793 = vmatprep.subr.mxu0 0.0
    %3794 = vmatpush1.msra.mxu0 0.0
    %3795 = vmatprep.subr.mxu0 0.0
    %3796 = vmatpush1.msra.mxu0 0.0
    %3797 = vmatprep.subr.mxu0 0.0
    %3798 = vmatpush1.msra.mxu0 0.0
    %3799 = vmatprep.subr.mxu0 0.0
    %3800 = vmatpush1.msra.mxu0 0.0
    %3801 = vmatprep.subr.mxu0 0.0
    %3802 = vmatpush1.msra.mxu0 0.0
    %3803 = vmatprep.subr.mxu0 0.0
    %3804 = vmatpush1.msra.mxu0 0.0
    %3805 = vmatprep.subr.mxu0 0.0
    %3806 = vmatpush1.msra.mxu0 0.0
    %3807 = vmatprep.subr.mxu0 0.0
    %3808 = vmatpush1.msra.mxu0 0.0
    %3809 = vmatprep.subr.mxu0 0.0
    %3810 = vmatpush1.msra.mxu0 0.0
    %3811 = vmatprep.subr.mxu0 0.0
    %3812 = vmatpush1.msra.mxu0 0.0
    %3813 = vmatprep.subr.mxu0 0.0
    %3814 = vmatpush1.msra.mxu0 0.0
    %3815 = vmatprep.subr.mxu0 0.0
    %3816 = vmatpush1.msra.mxu0 0.0
    %3817 = vmatprep.subr.mxu0 0.0
    %3818 = vmatpush1.msra.mxu0 0.0
    %3819 = vmatprep.subr.mxu0 0.0
    %3820 = vmatpush1.msra.mxu0 0.0
    %3821 = vmatprep.subr.mxu0 0.0
    %3822 = vmatpush1.msra.mxu0 0.0
    %3823 = vmatprep.subr.mxu0 0.0
    %3824 = vmatpush1.msra.mxu0 0.0
    %3825 = vmatprep.subr.mxu0 0.0
    %3826 = vmatpush1.msra.mxu0 0.0
    %3827 = vmatprep.subr.mxu0 0.0
    %3828 = vmatpush1.msra.mxu0 0.0
    %3829 = vmatprep.subr.mxu0 0.0
    %3830 = vmatpush1.msra.mxu0 0.0
    %3831 = vmatprep.subr.mxu0 0.0
    %3832 = vmatpush1.msra.mxu0 0.0
    %3833 = vmatprep.subr.mxu0 0.0
    %3834 = vmatpush1.msra.mxu0 0.0
    %3835 = vmatprep.subr.mxu0 0.0
    %3836 = vmatpush1.msra.mxu0 0.0
    %3837 = vmatprep.subr.mxu0 0.0
    %3838 = vmatpush1.msra.mxu0 0.0
    %3839 = vmatprep.subr.mxu0 0.0
    %3840 = vmatpush1.msra.mxu0 0.0
    %3841 = vmatprep.subr.mxu0 0.0
    %3842 = vmatpush1.msra.mxu0 0.0
    %3843 = vmatprep.mubr.f32.mxu0 0.0
    %3844 = vmatmul.mubr.f32.gmra.mrb[0].mxu0 %v3067
    %v3845 = vpop.f32.mrb[0].mxu0
    %v3846 = vadd.f32 0.0, %v3845
    %v3847 = vpop.f32.mrb[0].mxu0
    %v3848 = vadd.f32 0.0, %v3847
    %3849 = vdwg.mxu0
    %3850 = vmatprep.subr.mxu0 %v173
    %3851 = vmatpush1.msra.mxu0 %v172
    %3852 = vmatprep.subr.mxu0 %v2917
    %3853 = vmatpush1.msra.mxu0 %v2916
    %3854 = vmatprep.subr.mxu0 %v3031
    %3855 = vmatpush1.msra.mxu0 %v3030
    %3856 = vmatprep.subr.mxu0 0.0
    %3857 = vmatpush1.msra.mxu0 0.0
    %3858 = vmatprep.subr.mxu0 0.0
    %3859 = vmatpush1.msra.mxu0 0.0
    %3860 = vmatprep.subr.mxu0 0.0
    %3861 = vmatpush1.msra.mxu0 0.0
    %3862 = vmatprep.subr.mxu0 0.0
    %3863 = vmatpush1.msra.mxu0 0.0
    %3864 = vmatprep.subr.mxu0 0.0
    %3865 = vmatpush1.msra.mxu0 0.0
    %3866 = vmatprep.subr.mxu0 0.0
    %3867 = vmatpush1.msra.mxu0 0.0
    %3868 = vmatprep.subr.mxu0 0.0
    %3869 = vmatpush1.msra.mxu0 0.0
    %3870 = vmatprep.subr.mxu0 0.0
    %3871 = vmatpush1.msra.mxu0 0.0
    %3872 = vmatprep.subr.mxu0 0.0
    %3873 = vmatpush1.msra.mxu0 0.0
    %3874 = vmatprep.subr.mxu0 0.0
    %3875 = vmatpush1.msra.mxu0 0.0
    %3876 = vmatprep.subr.mxu0 0.0
    %3877 = vmatpush1.msra.mxu0 0.0
    %3878 = vmatprep.subr.mxu0 0.0
    %3879 = vmatpush1.msra.mxu0 0.0
    %3880 = vmatprep.subr.mxu0 0.0
    %3881 = vmatpush1.msra.mxu0 0.0
    %3882 = vmatprep.subr.mxu0 0.0
    %3883 = vmatpush1.msra.mxu0 0.0
    %3884 = vmatprep.subr.mxu0 0.0
    %3885 = vmatpush1.msra.mxu0 0.0
    %3886 = vmatprep.subr.mxu0 0.0
    %3887 = vmatpush1.msra.mxu0 0.0
    %3888 = vmatprep.subr.mxu0 0.0
    %3889 = vmatpush1.msra.mxu0 0.0
    %3890 = vmatprep.subr.mxu0 0.0
    %3891 = vmatpush1.msra.mxu0 0.0
    %3892 = vmatprep.subr.mxu0 0.0
    %3893 = vmatpush1.msra.mxu0 0.0
    %3894 = vmatprep.subr.mxu0 0.0
    %3895 = vmatpush1.msra.mxu0 0.0
    %3896 = vmatprep.subr.mxu0 0.0
    %3897 = vmatpush1.msra.mxu0 0.0
    %3898 = vmatprep.subr.mxu0 0.0
    %3899 = vmatpush1.msra.mxu0 0.0
    %3900 = vmatprep.subr.mxu0 0.0
    %3901 = vmatpush1.msra.mxu0 0.0
    %3902 = vmatprep.subr.mxu0 0.0
    %3903 = vmatpush1.msra.mxu0 0.0
    %3904 = vmatprep.subr.mxu0 0.0
    %3905 = vmatpush1.msra.mxu0 0.0
    %3906 = vmatprep.subr.mxu0 0.0
    %3907 = vmatpush1.msra.mxu0 0.0
    %3908 = vmatprep.subr.mxu0 0.0
    %3909 = vmatpush1.msra.mxu0 0.0
    %3910 = vmatprep.subr.mxu0 0.0
    %3911 = vmatpush1.msra.mxu0 0.0
    %3912 = vmatprep.subr.mxu0 0.0
    %3913 = vmatpush1.msra.mxu0 0.0
    %3914 = vmatprep.mubr.f32.mxu0 0.0
    %3915 = vmatmul.mubr.f32.gmra.mrb[0].mxu0 %v3067
    %v3916 = vpop.f32.mrb[0].mxu0
    %v3917 = vadd.f32 0.0, %v3916
    %v3918 = vpop.f32.mrb[0].mxu0
    %v3919 = vadd.f32 0.0, %v3918
    %3920 = vdwg.mxu0
    %3921 = vmatprep.subr.mxu0 %v175
    %3922 = vmatpush1.msra.mxu0 %v174
    %3923 = vmatprep.subr.mxu0 %v2919
    %3924 = vmatpush1.msra.mxu0 %v2918
    %3925 = vmatprep.subr.mxu0 %v3033
    %3926 = vmatpush1.msra.mxu0 %v3032
    %3927 = vmatprep.subr.mxu0 0.0
    %3928 = vmatpush1.msra.mxu0 0.0
    %3929 = vmatprep.subr.mxu0 0.0
    %3930 = vmatpush1.msra.mxu0 0.0
    %3931 = vmatprep.subr.mxu0 0.0
    %3932 = vmatpush1.msra.mxu0 0.0
    %3933 = vmatprep.subr.mxu0 0.0
    %3934 = vmatpush1.msra.mxu0 0.0
    %3935 = vmatprep.subr.mxu0 0.0
    %3936 = vmatpush1.msra.mxu0 0.0
    %3937 = vmatprep.subr.mxu0 0.0
    %3938 = vmatpush1.msra.mxu0 0.0
    %3939 = vmatprep.subr.mxu0 0.0
    %3940 = vmatpush1.msra.mxu0 0.0
    %3941 = vmatprep.subr.mxu0 0.0
    %3942 = vmatpush1.msra.mxu0 0.0
    %3943 = vmatprep.subr.mxu0 0.0
    %3944 = vmatpush1.msra.mxu0 0.0
    %3945 = vmatprep.subr.mxu0 0.0
    %3946 = vmatpush1.msra.mxu0 0.0
    %3947 = vmatprep.subr.mxu0 0.0
    %3948 = vmatpush1.msra.mxu0 0.0
    %3949 = vmatprep.subr.mxu0 0.0
    %3950 = vmatpush1.msra.mxu0 0.0
    %3951 = vmatprep.subr.mxu0 0.0
    %3952 = vmatpush1.msra.mxu0 0.0
    %3953 = vmatprep.subr.mxu0 0.0
    %3954 = vmatpush1.msra.mxu0 0.0
    %3955 = vmatprep.subr.mxu0 0.0
    %3956 = vmatpush1.msra.mxu0 0.0
    %3957 = vmatprep.subr.mxu0 0.0
    %3958 = vmatpush1.msra.mxu0 0.0
    %3959 = vmatprep.subr.mxu0 0.0
    %3960 = vmatpush1.msra.mxu0 0.0
    %3961 = vmatprep.subr.mxu0 0.0
    %3962 = vmatpush1.msra.mxu0 0.0
    %3963 = vmatprep.subr.mxu0 0.0
    %3964 = vmatpush1.msra.mxu0 0.0
    %3965 = vmatprep.subr.mxu0 0.0
    %3966 = vmatpush1.msra.mxu0 0.0
    %3967 = vmatprep.subr.mxu0 0.0
    %3968 = vmatpush1.msra.mxu0 0.0
    %3969 = vmatprep.subr.mxu0 0.0
    %3970 = vmatpush1.msra.mxu0 0.0
    %3971 = vmatprep.subr.mxu0 0.0
    %3972 = vmatpush1.msra.mxu0 0.0
    %3973 = vmatprep.subr.mxu0 0.0
    %3974 = vmatpush1.msra.mxu0 0.0
    %3975 = vmatprep.subr.mxu0 0.0
    %3976 = vmatpush1.msra.mxu0 0.0
    %3977 = vmatprep.subr.mxu0 0.0
    %3978 = vmatpush1.msra.mxu0 0.0
    %3979 = vmatprep.subr.mxu0 0.0
    %3980 = vmatpush1.msra.mxu0 0.0
    %3981 = vmatprep.subr.mxu0 0.0
    %3982 = vmatpush1.msra.mxu0 0.0
    %3983 = vmatprep.subr.mxu0 0.0
    %3984 = vmatpush1.msra.mxu0 0.0
    %3985 = vmatprep.mubr.f32.mxu0 0.0
    %3986 = vmatmul.mubr.f32.gmra.mrb[0].mxu0 %v3067
    %v3987 = vpop.f32.mrb[0].mxu0
    %v3988 = vadd.f32 0.0, %v3987
    %v3989 = vpop.f32.mrb[0].mxu0
    %v3990 = vadd.f32 0.0, %v3989
    %3991 = vdwg.mxu0
    %3992 = vmatprep.subr.mxu0 %v177
    %3993 = vmatpush1.msra.mxu0 %v176
    %3994 = vmatprep.subr.mxu0 %v2921
    %3995 = vmatpush1.msra.mxu0 %v2920
    %3996 = vmatprep.subr.mxu0 %v3035
    %3997 = vmatpush1.msra.mxu0 %v3034
    %3998 = vmatprep.subr.mxu0 0.0
    %3999 = vmatpush1.msra.mxu0 0.0
    %4000 = vmatprep.subr.mxu0 0.0
    %4001 = vmatpush1.msra.mxu0 0.0
    %4002 = vmatprep.subr.mxu0 0.0
    %4003 = vmatpush1.msra.mxu0 0.0
    %4004 = vmatprep.subr.mxu0 0.0
    %4005 = vmatpush1.msra.mxu0 0.0
    %4006 = vmatprep.subr.mxu0 0.0
    %4007 = vmatpush1.msra.mxu0 0.0
    %4008 = vmatprep.subr.mxu0 0.0
    %4009 = vmatpush1.msra.mxu0 0.0
    %4010 = vmatprep.subr.mxu0 0.0
    %4011 = vmatpush1.msra.mxu0 0.0
    %4012 = vmatprep.subr.mxu0 0.0
    %4013 = vmatpush1.msra.mxu0 0.0
    %4014 = vmatprep.subr.mxu0 0.0
    %4015 = vmatpush1.msra.mxu0 0.0
    %4016 = vmatprep.subr.mxu0 0.0
    %4017 = vmatpush1.msra.mxu0 0.0
    %4018 = vmatprep.subr.mxu0 0.0
    %4019 = vmatpush1.msra.mxu0 0.0
    %4020 = vmatprep.subr.mxu0 0.0
    %4021 = vmatpush1.msra.mxu0 0.0
    %4022 = vmatprep.subr.mxu0 0.0
    %4023 = vmatpush1.msra.mxu0 0.0
    %4024 = vmatprep.subr.mxu0 0.0
    %4025 = vmatpush1.msra.mxu0 0.0
    %4026 = vmatprep.subr.mxu0 0.0
    %4027 = vmatpush1.msra.mxu0 0.0
    %4028 = vmatprep.subr.mxu0 0.0
    %4029 = vmatpush1.msra.mxu0 0.0
    %4030 = vmatprep.subr.mxu0 0.0
    %4031 = vmatpush1.msra.mxu0 0.0
    %4032 = vmatprep.subr.mxu0 0.0
    %4033 = vmatpush1.msra.mxu0 0.0
    %4034 = vmatprep.subr.mxu0 0.0
    %4035 = vmatpush1.msra.mxu0 0.0
    %4036 = vmatprep.subr.mxu0 0.0
    %4037 = vmatpush1.msra.mxu0 0.0
    %4038 = vmatprep.subr.mxu0 0.0
    %4039 = vmatpush1.msra.mxu0 0.0
    %4040 = vmatprep.subr.mxu0 0.0
    %4041 = vmatpush1.msra.mxu0 0.0
    %4042 = vmatprep.subr.mxu0 0.0
    %4043 = vmatpush1.msra.mxu0 0.0
    %4044 = vmatprep.subr.mxu0 0.0
    %4045 = vmatpush1.msra.mxu0 0.0
    %4046 = vmatprep.subr.mxu0 0.0
    %4047 = vmatpush1.msra.mxu0 0.0
    %4048 = vmatprep.subr.mxu0 0.0
    %4049 = vmatpush1.msra.mxu0 0.0
    %4050 = vmatprep.subr.mxu0 0.0
    %4051 = vmatpush1.msra.mxu0 0.0
    %4052 = vmatprep.subr.mxu0 0.0
    %4053 = vmatpush1.msra.mxu0 0.0
    %4054 = vmatprep.subr.mxu0 0.0
    %4055 = vmatpush1.msra.mxu0 0.0
    %4056 = vmatprep.mubr.f32.mxu0 0.0
    %4057 = vmatmul.mubr.f32.gmra.mrb[0].mxu0 %v3067
    %v4058 = vpop.f32.mrb[0].mxu0
    %v4059 = vadd.f32 0.0, %v4058
    %v4060 = vpop.f32.mrb[0].mxu0
    %v4061 = vadd.f32 0.0, %v4060
    %4062 = vdwg.mxu0
    %v4063 = vadd.f32 %v1851, %v3136
    %v4064 = vadd.f32 %v1853, %v3138
    %v4065 = vadd.f32 %v1922, %v3207
    %v4066 = vadd.f32 %v1924, %v3209
    %v4067 = vadd.f32 %v1993, %v3278
    %v4068 = vadd.f32 %v1995, %v3280
    %v4069 = vadd.f32 %v2064, %v3349
    %v4070 = vadd.f32 %v2066, %v3351
    %v4071 = vadd.f32 %v2135, %v3420
    %v4072 = vadd.f32 %v2137, %v3422
    %v4073 = vadd.f32 %v2206, %v3491
    %v4074 = vadd.f32 %v2208, %v3493
    %v4075 = vadd.f32 %v2277, %v3562
    %v4076 = vadd.f32 %v2279, %v3564
    %v4077 = vadd.f32 %v2348, %v3633
    %v4078 = vadd.f32 %v2350, %v3635
    %v4079 = vadd.f32 %v2419, %v3704
    %v4080 = vadd.f32 %v2421, %v3706
    %v4081 = vadd.f32 %v2490, %v3775
    %v4082 = vadd.f32 %v2492, %v3777
    %v4083 = vadd.f32 %v2561, %v3846
    %v4084 = vadd.f32 %v2563, %v3848
    %v4085 = vadd.f32 %v2632, %v3917
    %v4086 = vadd.f32 %v2634, %v3919
    %v4087 = vadd.f32 %v2703, %v3988
    %v4088 = vadd.f32 %v2705, %v3990
    %v4089 = vadd.f32 %v2774, %v4059
    %v4090 = vadd.f32 %v2776, %v4061
    %4092 = vset.pattern.permute.xlu0 0
    %4093 = vperm.xlu0 %4092, %v148
    %v4094 = vpop.permute.xlu0 %4093
    %v4096 = vadd.f32 %v4063, %v4094
    %v4097 = vadd.f32 %v4064, %v4094
    %v4098 = vadd.f32 %v4065, %v4094
    %v4099 = vadd.f32 %v4066, %v4094
    %v4100 = vadd.f32 %v4067, %v4094
    %v4101 = vadd.f32 %v4068, %v4094
    %v4102 = vadd.f32 %v4069, %v4094
    %v4103 = vadd.f32 %v4070, %v4094
    %v4104 = vadd.f32 %v4071, %v4094
    %v4105 = vadd.f32 %v4072, %v4094
    %v4106 = vadd.f32 %v4073, %v4094
    %v4107 = vadd.f32 %v4074, %v4094
    %v4108 = vadd.f32 %v4075, %v4094
    %v4109 = vadd.f32 %v4076, %v4094
    %v4110 = vadd.f32 %v4077, %v4094
    %v4111 = vadd.f32 %v4078, %v4094
    %v4112 = vadd.f32 %v4079, %v4094
    %v4113 = vadd.f32 %v4080, %v4094
    %v4114 = vadd.f32 %v4081, %v4094
    %v4115 = vadd.f32 %v4082, %v4094
    %v4116 = vadd.f32 %v4083, %v4094
    %v4117 = vadd.f32 %v4084, %v4094
    %v4118 = vadd.f32 %v4085, %v4094
    %v4119 = vadd.f32 %v4086, %v4094
    %v4120 = vadd.f32 %v4087, %v4094
    %v4121 = vadd.f32 %v4088, %v4094
    %v4122 = vadd.f32 %v4089, %v4094
    %v4123 = vadd.f32 %v4090, %v4094
    %v4124 = vmax.f32 %v4096, 0.0
    %v4125 = vmax.f32 %v4097, 0.0
    %v4126 = vmax.f32 %v4098, 0.0
    %v4127 = vmax.f32 %v4099, 0.0
    %v4128 = vmax.f32 %v4100, 0.0
    %v4129 = vmax.f32 %v4101, 0.0
    %v4130 = vmax.f32 %v4102, 0.0
    %v4131 = vmax.f32 %v4103, 0.0
    %v4132 = vmax.f32 %v4104, 0.0
    %v4133 = vmax.f32 %v4105, 0.0
    %v4134 = vmax.f32 %v4106, 0.0
    %v4135 = vmax.f32 %v4107, 0.0
    %v4136 = vmax.f32 %v4108, 0.0
    %v4137 = vmax.f32 %v4109, 0.0
    %v4138 = vmax.f32 %v4110, 0.0
    %v4139 = vmax.f32 %v4111, 0.0
    %v4140 = vmax.f32 %v4112, 0.0
    %v4141 = vmax.f32 %v4113, 0.0
    %v4142 = vmax.f32 %v4114, 0.0
    %v4143 = vmax.f32 %v4115, 0.0
    %v4144 = vmax.f32 %v4116, 0.0
    %v4145 = vmax.f32 %v4117, 0.0
    %v4146 = vmax.f32 %v4118, 0.0
    %v4147 = vmax.f32 %v4119, 0.0
    %v4148 = vmax.f32 %v4120, 0.0
    %v4149 = vmax.f32 %v4121, 0.0
    %v4150 = vmax.f32 %v4122, 0.0
    %v4151 = vmax.f32 %v4123, 0.0
    %v4152 = vpack.c.bf16 %v4124, %v4124
    %v4153 = vpack.c.bf16 %v4125, %v4125
    %v4154 = vpack.c.bf16 %v4126, %v4126
    %v4155 = vpack.c.bf16 %v4127, %v4127
    %v4156 = vpack.c.bf16 %v4128, %v4128
    %v4157 = vpack.c.bf16 %v4129, %v4129
    %v4158 = vpack.c.bf16 %v4130, %v4130
    %v4159 = vpack.c.bf16 %v4131, %v4131
    %v4160 = vpack.c.bf16 %v4132, %v4132
    %v4161 = vpack.c.bf16 %v4133, %v4133
    %v4162 = vpack.c.bf16 %v4134, %v4134
    %v4163 = vpack.c.bf16 %v4135, %v4135
    %v4164 = vpack.c.bf16 %v4136, %v4136
    %v4165 = vpack.c.bf16 %v4137, %v4137
    %v4166 = vpack.c.bf16 %v4138, %v4138
    %v4167 = vpack.c.bf16 %v4139, %v4139
    %v4168 = vpack.c.bf16 %v4140, %v4140
    %v4169 = vpack.c.bf16 %v4141, %v4141
    %v4170 = vpack.c.bf16 %v4142, %v4142
    %v4171 = vpack.c.bf16 %v4143, %v4143
    %v4172 = vpack.c.bf16 %v4144, %v4144
    %v4173 = vpack.c.bf16 %v4145, %v4145
    %v4174 = vpack.c.bf16 %v4146, %v4146
    %v4175 = vpack.c.bf16 %v4147, %v4147
    %v4176 = vpack.c.bf16 %v4148, %v4148
    %v4177 = vpack.c.bf16 %v4149, %v4149
    %v4178 = vpack.c.bf16 %v4150, %v4150
    %v4179 = vpack.c.bf16 %v4151, %v4151
    %v4181 = vshrl.u32 %v4152, 16
    %v4184 = vshrl.u32 %v4153, 16
    %v4187 = vshrl.u32 %v4154, 16
    %v4190 = vshrl.u32 %v4155, 16
    %v4193 = vshrl.u32 %v4156, 16
    %v4196 = vshrl.u32 %v4157, 16
    %v4199 = vshrl.u32 %v4158, 16
    %v4202 = vshrl.u32 %v4159, 16
    %v4205 = vshrl.u32 %v4160, 16
    %v4208 = vshrl.u32 %v4161, 16
    %v4211 = vshrl.u32 %v4162, 16
    %v4214 = vshrl.u32 %v4163, 16
    %v4217 = vshrl.u32 %v4164, 16
    %v4220 = vshrl.u32 %v4165, 16
    %v4223 = vshrl.u32 %v4166, 16
    %v4226 = vshrl.u32 %v4167, 16
    %v4229 = vshrl.u32 %v4168, 16
    %v4232 = vshrl.u32 %v4169, 16
    %v4235 = vshrl.u32 %v4170, 16
    %v4238 = vshrl.u32 %v4171, 16
    %v4241 = vshrl.u32 %v4172, 16
    %v4244 = vshrl.u32 %v4173, 16
    %v4247 = vshrl.u32 %v4174, 16
    %v4250 = vshrl.u32 %v4175, 16
    %v4253 = vshrl.u32 %v4176, 16
    %v4256 = vshrl.u32 %v4177, 16
    %v4259 = vshrl.u32 %v4178, 16
    %v4262 = vshrl.u32 %v4179, 16
    %v4292 = vcombine.low %v4152, %v4153
    %v4293 = vcombine.low %v4154, %v4155
    %v4294 = vcombine.low %v4156, %v4157
    %v4295 = vcombine.low %v4158, %v4159
    %v4297 = vunpack.c.l.s4 1966171168
    %v4298 = vunpack.c.0.s8 %v4297
    %v4299 = vlaneseq
    %v4300 = vshrl.u32 %v4299, 7
    %v4301 = vsub.s32 %v4298, %v4300
    %v4302 = vrot.slane %v4292, %v4301
    %v4304 = vunpack.c.l.s4 1966171168
    %v4305 = vunpack.c.0.s8 %v4304
    %v4306 = vlaneseq
    %v4307 = vshrl.u32 %v4306, 7
    %v4308 = vsub.s32 %v4305, %v4307
    %v4309 = vrot.slane %v4293, %v4308
    %v4311 = vunpack.c.l.s4 1966171168
    %v4312 = vunpack.c.0.s8 %v4311
    %v4313 = vlaneseq
    %v4314 = vshrl.u32 %v4313, 7
    %v4315 = vsub.s32 %v4312, %v4314
    %v4316 = vrot.slane %v4294, %v4315
    %v4318 = vunpack.c.l.s4 1966171168
    %v4319 = vunpack.c.0.s8 %v4318
    %v4320 = vlaneseq
    %v4321 = vshrl.u32 %v4320, 7
    %v4322 = vsub.s32 %v4319, %v4321
    %v4323 = vrot.slane %v4295, %v4322
    %v4324 = vcombine.low %v4302, %v4309
    %v4325 = vcombine.low %v4316, %v4323
    %v4327 = vunpack.c.l.s4 1966171168
    %v4328 = vunpack.c.0.s8 %v4327
    %v4329 = vlaneseq
    %v4330 = vshrl.u32 %v4329, 7
    %v4331 = vsub.s32 %v4328, %v4330
    %v4332 = vrot.slane %v4324, %v4331
    %v4334 = vunpack.c.l.s4 1966171168
    %v4335 = vunpack.c.0.s8 %v4334
    %v4336 = vlaneseq
    %v4337 = vshrl.u32 %v4336, 7
    %v4338 = vsub.s32 %v4335, %v4337
    %v4339 = vrot.slane %v4325, %v4338
    %v4340 = vcombine.low %v4332, %v4339
    %v4341 = vcombine.low %v4160, %v4161
    %v4342 = vcombine.low %v4162, %v4163
    %v4343 = vcombine.low %v4164, %v4165
    %v4344 = vcombine.low %v4166, %v4167
    %v4346 = vunpack.c.l.s4 1966171168
    %v4347 = vunpack.c.0.s8 %v4346
    %v4348 = vlaneseq
    %v4349 = vshrl.u32 %v4348, 7
    %v4350 = vsub.s32 %v4347, %v4349
    %v4351 = vrot.slane %v4341, %v4350
    %v4353 = vunpack.c.l.s4 1966171168
    %v4354 = vunpack.c.0.s8 %v4353
    %v4355 = vlaneseq
    %v4356 = vshrl.u32 %v4355, 7
    %v4357 = vsub.s32 %v4354, %v4356
    %v4358 = vrot.slane %v4342, %v4357
    %v4360 = vunpack.c.l.s4 1966171168
    %v4361 = vunpack.c.0.s8 %v4360
    %v4362 = vlaneseq
    %v4363 = vshrl.u32 %v4362, 7
    %v4364 = vsub.s32 %v4361, %v4363
    %v4365 = vrot.slane %v4343, %v4364
    %v4367 = vunpack.c.l.s4 1966171168
    %v4368 = vunpack.c.0.s8 %v4367
    %v4369 = vlaneseq
    %v4370 = vshrl.u32 %v4369, 7
    %v4371 = vsub.s32 %v4368, %v4370
    %v4372 = vrot.slane %v4344, %v4371
    %v4373 = vcombine.low %v4351, %v4358
    %v4374 = vcombine.low %v4365, %v4372
    %v4376 = vunpack.c.l.s4 1966171168
    %v4377 = vunpack.c.0.s8 %v4376
    %v4378 = vlaneseq
    %v4379 = vshrl.u32 %v4378, 7
    %v4380 = vsub.s32 %v4377, %v4379
    %v4381 = vrot.slane %v4373, %v4380
    %v4383 = vunpack.c.l.s4 1966171168
    %v4384 = vunpack.c.0.s8 %v4383
    %v4385 = vlaneseq
    %v4386 = vshrl.u32 %v4385, 7
    %v4387 = vsub.s32 %v4384, %v4386
    %v4388 = vrot.slane %v4374, %v4387
    %v4389 = vcombine.low %v4381, %v4388
    %v4390 = vcombine.low %v4168, %v4169
    %v4391 = vcombine.low %v4170, %v4171
    %v4392 = vcombine.low %v4172, %v4173
    %v4393 = vcombine.low %v4174, %v4175
    %v4395 = vunpack.c.l.s4 1966171168
    %v4396 = vunpack.c.0.s8 %v4395
    %v4397 = vlaneseq
    %v4398 = vshrl.u32 %v4397, 7
    %v4399 = vsub.s32 %v4396, %v4398
    %v4400 = vrot.slane %v4390, %v4399
    %v4402 = vunpack.c.l.s4 1966171168
    %v4403 = vunpack.c.0.s8 %v4402
    %v4404 = vlaneseq
    %v4405 = vshrl.u32 %v4404, 7
    %v4406 = vsub.s32 %v4403, %v4405
    %v4407 = vrot.slane %v4391, %v4406
    %v4409 = vunpack.c.l.s4 1966171168
    %v4410 = vunpack.c.0.s8 %v4409
    %v4411 = vlaneseq
    %v4412 = vshrl.u32 %v4411, 7
    %v4413 = vsub.s32 %v4410, %v4412
    %v4414 = vrot.slane %v4392, %v4413
    %v4416 = vunpack.c.l.s4 1966171168
    %v4417 = vunpack.c.0.s8 %v4416
    %v4418 = vlaneseq
    %v4419 = vshrl.u32 %v4418, 7
    %v4420 = vsub.s32 %v4417, %v4419
    %v4421 = vrot.slane %v4393, %v4420
    %v4422 = vcombine.low %v4400, %v4407
    %v4423 = vcombine.low %v4414, %v4421
    %v4425 = vunpack.c.l.s4 1966171168
    %v4426 = vunpack.c.0.s8 %v4425
    %v4427 = vlaneseq
    %v4428 = vshrl.u32 %v4427, 7
    %v4429 = vsub.s32 %v4426, %v4428
    %v4430 = vrot.slane %v4422, %v4429
    %v4432 = vunpack.c.l.s4 1966171168
    %v4433 = vunpack.c.0.s8 %v4432
    %v4434 = vlaneseq
    %v4435 = vshrl.u32 %v4434, 7
    %v4436 = vsub.s32 %v4433, %v4435
    %v4437 = vrot.slane %v4423, %v4436
    %v4438 = vcombine.low %v4430, %v4437
    %v4439 = vcombine.low %v4176, %v4177
    %v4440 = vcombine.low %v4178, %v4179
    %v4441 = vcombine.low %v4181, %v4184
    %v4442 = vcombine.low %v4187, %v4190
    %v4444 = vunpack.c.l.s4 1966171168
    %v4445 = vunpack.c.0.s8 %v4444
    %v4446 = vlaneseq
    %v4447 = vshrl.u32 %v4446, 7
    %v4448 = vsub.s32 %v4445, %v4447
    %v4449 = vrot.slane %v4439, %v4448
    %v4451 = vunpack.c.l.s4 1966171168
    %v4452 = vunpack.c.0.s8 %v4451
    %v4453 = vlaneseq
    %v4454 = vshrl.u32 %v4453, 7
    %v4455 = vsub.s32 %v4452, %v4454
    %v4456 = vrot.slane %v4440, %v4455
    %v4458 = vunpack.c.l.s4 1966171168
    %v4459 = vunpack.c.0.s8 %v4458
    %v4460 = vlaneseq
    %v4461 = vshrl.u32 %v4460, 7
    %v4462 = vsub.s32 %v4459, %v4461
    %v4463 = vrot.slane %v4441, %v4462
    %v4465 = vunpack.c.l.s4 1966171168
    %v4466 = vunpack.c.0.s8 %v4465
    %v4467 = vlaneseq
    %v4468 = vshrl.u32 %v4467, 7
    %v4469 = vsub.s32 %v4466, %v4468
    %v4470 = vrot.slane %v4442, %v4469
    %v4471 = vcombine.low %v4449, %v4456
    %v4472 = vcombine.low %v4463, %v4470
    %v4474 = vunpack.c.l.s4 1966171168
    %v4475 = vunpack.c.0.s8 %v4474
    %v4476 = vlaneseq
    %v4477 = vshrl.u32 %v4476, 7
    %v4478 = vsub.s32 %v4475, %v4477
    %v4479 = vrot.slane %v4471, %v4478
    %v4481 = vunpack.c.l.s4 1966171168
    %v4482 = vunpack.c.0.s8 %v4481
    %v4483 = vlaneseq
    %v4484 = vshrl.u32 %v4483, 7
    %v4485 = vsub.s32 %v4482, %v4484
    %v4486 = vrot.slane %v4472, %v4485
    %v4487 = vcombine.low %v4479, %v4486
    %v4488 = vcombine.low %v4193, %v4196
    %v4489 = vcombine.low %v4199, %v4202
    %v4490 = vcombine.low %v4205, %v4208
    %v4491 = vcombine.low %v4211, %v4214
    %v4493 = vunpack.c.l.s4 1966171168
    %v4494 = vunpack.c.0.s8 %v4493
    %v4495 = vlaneseq
    %v4496 = vshrl.u32 %v4495, 7
    %v4497 = vsub.s32 %v4494, %v4496
    %v4498 = vrot.slane %v4488, %v4497
    %v4500 = vunpack.c.l.s4 1966171168
    %v4501 = vunpack.c.0.s8 %v4500
    %v4502 = vlaneseq
    %v4503 = vshrl.u32 %v4502, 7
    %v4504 = vsub.s32 %v4501, %v4503
    %v4505 = vrot.slane %v4489, %v4504
    %v4507 = vunpack.c.l.s4 1966171168
    %v4508 = vunpack.c.0.s8 %v4507
    %v4509 = vlaneseq
    %v4510 = vshrl.u32 %v4509, 7
    %v4511 = vsub.s32 %v4508, %v4510
    %v4512 = vrot.slane %v4490, %v4511
    %v4514 = vunpack.c.l.s4 1966171168
    %v4515 = vunpack.c.0.s8 %v4514
    %v4516 = vlaneseq
    %v4517 = vshrl.u32 %v4516, 7
    %v4518 = vsub.s32 %v4515, %v4517
    %v4519 = vrot.slane %v4491, %v4518
    %v4520 = vcombine.low %v4498, %v4505
    %v4521 = vcombine.low %v4512, %v4519
    %v4523 = vunpack.c.l.s4 1966171168
    %v4524 = vunpack.c.0.s8 %v4523
    %v4525 = vlaneseq
    %v4526 = vshrl.u32 %v4525, 7
    %v4527 = vsub.s32 %v4524, %v4526
    %v4528 = vrot.slane %v4520, %v4527
    %v4530 = vunpack.c.l.s4 1966171168
    %v4531 = vunpack.c.0.s8 %v4530
    %v4532 = vlaneseq
    %v4533 = vshrl.u32 %v4532, 7
    %v4534 = vsub.s32 %v4531, %v4533
    %v4535 = vrot.slane %v4521, %v4534
    %v4536 = vcombine.low %v4528, %v4535
    %v4537 = vcombine.low %v4217, %v4220
    %v4538 = vcombine.low %v4223, %v4226
    %v4539 = vcombine.low %v4229, %v4232
    %v4540 = vcombine.low %v4235, %v4238
    %v4542 = vunpack.c.l.s4 1966171168
    %v4543 = vunpack.c.0.s8 %v4542
    %v4544 = vlaneseq
    %v4545 = vshrl.u32 %v4544, 7
    %v4546 = vsub.s32 %v4543, %v4545
    %v4547 = vrot.slane %v4537, %v4546
    %v4549 = vunpack.c.l.s4 1966171168
    %v4550 = vunpack.c.0.s8 %v4549
    %v4551 = vlaneseq
    %v4552 = vshrl.u32 %v4551, 7
    %v4553 = vsub.s32 %v4550, %v4552
    %v4554 = vrot.slane %v4538, %v4553
    %v4556 = vunpack.c.l.s4 1966171168
    %v4557 = vunpack.c.0.s8 %v4556
    %v4558 = vlaneseq
    %v4559 = vshrl.u32 %v4558, 7
    %v4560 = vsub.s32 %v4557, %v4559
    %v4561 = vrot.slane %v4539, %v4560
    %v4563 = vunpack.c.l.s4 1966171168
    %v4564 = vunpack.c.0.s8 %v4563
    %v4565 = vlaneseq
    %v4566 = vshrl.u32 %v4565, 7
    %v4567 = vsub.s32 %v4564, %v4566
    %v4568 = vrot.slane %v4540, %v4567
    %v4569 = vcombine.low %v4547, %v4554
    %v4570 = vcombine.low %v4561, %v4568
    %v4572 = vunpack.c.l.s4 1966171168
    %v4573 = vunpack.c.0.s8 %v4572
    %v4574 = vlaneseq
    %v4575 = vshrl.u32 %v4574, 7
    %v4576 = vsub.s32 %v4573, %v4575
    %v4577 = vrot.slane %v4569, %v4576
    %v4579 = vunpack.c.l.s4 1966171168
    %v4580 = vunpack.c.0.s8 %v4579
    %v4581 = vlaneseq
    %v4582 = vshrl.u32 %v4581, 7
    %v4583 = vsub.s32 %v4580, %v4582
    %v4584 = vrot.slane %v4570, %v4583
    %v4585 = vcombine.low %v4577, %v4584
    %v4586 = vcombine.low %v4241, %v4244
    %v4587 = vcombine.low %v4247, %v4250
    %v4588 = vcombine.low %v4253, %v4256
    %v4589 = vcombine.low %v4259, %v4262
    %v4591 = vunpack.c.l.s4 1966171168
    %v4592 = vunpack.c.0.s8 %v4591
    %v4593 = vlaneseq
    %v4594 = vshrl.u32 %v4593, 7
    %v4595 = vsub.s32 %v4592, %v4594
    %v4596 = vrot.slane %v4586, %v4595
    %v4598 = vunpack.c.l.s4 1966171168
    %v4599 = vunpack.c.0.s8 %v4598
    %v4600 = vlaneseq
    %v4601 = vshrl.u32 %v4600, 7
    %v4602 = vsub.s32 %v4599, %v4601
    %v4603 = vrot.slane %v4587, %v4602
    %v4605 = vunpack.c.l.s4 1966171168
    %v4606 = vunpack.c.0.s8 %v4605
    %v4607 = vlaneseq
    %v4608 = vshrl.u32 %v4607, 7
    %v4609 = vsub.s32 %v4606, %v4608
    %v4610 = vrot.slane %v4588, %v4609
    %v4612 = vunpack.c.l.s4 1966171168
    %v4613 = vunpack.c.0.s8 %v4612
    %v4614 = vlaneseq
    %v4615 = vshrl.u32 %v4614, 7
    %v4616 = vsub.s32 %v4613, %v4615
    %v4617 = vrot.slane %v4589, %v4616
    %v4618 = vcombine.low %v4596, %v4603
    %v4619 = vcombine.low %v4610, %v4617
    %v4621 = vunpack.c.l.s4 1966171168
    %v4622 = vunpack.c.0.s8 %v4621
    %v4623 = vlaneseq
    %v4624 = vshrl.u32 %v4623, 7
    %v4625 = vsub.s32 %v4622, %v4624
    %v4626 = vrot.slane %v4618, %v4625
    %v4628 = vunpack.c.l.s4 1966171168
    %v4629 = vunpack.c.0.s8 %v4628
    %v4630 = vlaneseq
    %v4631 = vshrl.u32 %v4630, 7
    %v4632 = vsub.s32 %v4629, %v4631
    %v4633 = vrot.slane %v4619, %v4632
    %v4634 = vcombine.low %v4626, %v4633
    %vm4642 = vcmask 1040384
    %vm4643 = vsmask.f32 256
    %vm4644 = vmand %vm4642, %vm4643
    %vm4645 = vcmask 1041409
    %vm4646 = vsmask.f32 1280
    %vm4647 = vmand %vm4645, %vm4646
    %vm4648 = vmor %vm4647, %vm4644
    %vm4649 = vcmask 1042434
    %vm4650 = vsmask.f32 2304
    %vm4651 = vmand %vm4649, %vm4650
    %vm4652 = vmor %vm4651, %vm4648
    %vm4653 = vcmask 1043459
    %vm4654 = vsmask.f32 3328
    %vm4655 = vmand %vm4653, %vm4654
    %vm4656 = vmor %vm4655, %vm4652
    %vm4657 = vcmask 1044484
    %vm4658 = vsmask.f32 4352
    %vm4659 = vmand %vm4657, %vm4658
    %vm4660 = vmor %vm4659, %vm4656
    %vm4661 = vcmask 1045509
    %vm4662 = vsmask.f32 5376
    %vm4663 = vmand %vm4661, %vm4662
    %vm4664 = vmor %vm4663, %vm4660
    %vm4665 = vcmask 1046534
    %vm4666 = vsmask.f32 6400
    %vm4667 = vmand %vm4665, %vm4666
    %vm4668 = vmor %vm4667, %vm4664
    %vm4669 = vcmask 1047559
    %vm4670 = vsmask.f32 7424
    %vm4671 = vmand %vm4669, %vm4670
    %vm4672 = vmor %vm4671, %vm4668
    %v4673 = vld [vmem:[#allocation2] sm:$0xff]
    %v4674 = vsel %vm4672, %v4340, %v4673
    %4675 = vst [vmem:[#allocation2] sm:$0xff] %v4674
    %v4676 = vld [vmem:[#allocation2 + $0x8] sm:$0xff]
    %v4677 = vsel %vm4672, %v4389, %v4676
    %4678 = vst [vmem:[#allocation2 + $0x8] sm:$0xff] %v4677
    %v4679 = vld [vmem:[#allocation2 + $0x10] sm:$0xff]
    %v4680 = vsel %vm4672, %v4438, %v4679
    %4681 = vst [vmem:[#allocation2 + $0x10] sm:$0xff] %v4680
    %v4682 = vld [vmem:[#allocation2 + $0x18] sm:$0xff]
    %v4683 = vsel %vm4672, %v4487, %v4682
    %4684 = vst [vmem:[#allocation2 + $0x18] sm:$0xff] %v4683
    %v4685 = vld [vmem:[#allocation2 + $0x20] sm:$0xff]
    %v4686 = vsel %vm4672, %v4536, %v4685
    %4687 = vst [vmem:[#allocation2 + $0x20] sm:$0xff] %v4686
    %v4688 = vld [vmem:[#allocation2 + $0x28] sm:$0xff]
    %v4689 = vsel %vm4672, %v4585, %v4688
    %4690 = vst [vmem:[#allocation2 + $0x28] sm:$0xff] %v4689
    %v4691 = vld [vmem:[#allocation2 + $0x30] sm:$0xff]
    %v4692 = vsel %vm4672, %v4634, %v4691
    %4693 = vst [vmem:[#allocation2 + $0x30] sm:$0xff] %v4692
    %s4694 = scalar_lea.vmem [#allocation3], 240
    %v4695 = vld [vmem:[%s4694] sm:$0xff]
    %v4696 = vld [vmem:[%s4694 + $0x8] sm:$0xff]
    %v4697 = vld [vmem:[%s4694 + $0x10] sm:$0xff]
    %v4698 = vld [vmem:[%s4694 + $0x18] sm:$0xff]
    %v4699 = vld [vmem:[%s4694 + $0x20] sm:$0xff]
    %v4700 = vld [vmem:[%s4694 + $0x28] sm:$0xff]
    %v4701 = vld [vmem:[%s4694 + $0x30] sm:$0xff]
    %v4702 = vld [vmem:[%s4694 + $0x38] sm:$0xff]
    %v4703 = vld [vmem:[%s4694 + $0x40] sm:$0xff]
    %v4704 = vld [vmem:[%s4694 + $0x48] sm:$0xff]
    %v4705 = vld [vmem:[%s4694 + $0x50] sm:$0xff]
    %v4706 = vld [vmem:[%s4694 + $0x58] sm:$0xff]
    %v4707 = vld [vmem:[%s4694 + $0x60] sm:$0xff]
    %v4708 = vld [vmem:[%s4694 + $0x68] sm:$0xff]
    %v4709 = vld [vmem:[%s4694 + $0x70] sm:$0xff]
    %v4710 = vld [vmem:[%s4694 + $0x78] sm:$0xff]
    %v4711 = vld [vmem:[%s4694 + $0x80] sm:$0xff]
    %v4712 = vld [vmem:[%s4694 + $0x88] sm:$0xff]
    %v4713 = vld [vmem:[%s4694 + $0x90] sm:$0xff]
    %v4714 = vld [vmem:[%s4694 + $0x98] sm:$0xff]
    %v4715 = vld [vmem:[%s4694 + $0xa0] sm:$0xff]
    %v4716 = vld [vmem:[%s4694 + $0xa8] sm:$0xff]
    %v4717 = vld [vmem:[%s4694 + $0xb0] sm:$0xff]
    %v4718 = vld [vmem:[%s4694 + $0xb8] sm:$0xff]
    %v4719 = vld [vmem:[%s4694 + $0xc0] sm:$0xff]
    %v4720 = vld [vmem:[%s4694 + $0xc8] sm:$0xff]
    %v4721 = vld [vmem:[%s4694 + $0xd0] sm:$0xff]
    %v4722 = vld [vmem:[%s4694 + $0xd8] sm:$0xff]
    %v4723 = vld [vmem:[%s4694 + $0xe0] sm:$0xff]
    %4753 = vrot.lane.b32.xlu0 %v4695, 127
    %v4754 = vpop.permute.xlu0 %4753
    %4755 = vrot.lane.b32.xlu0 %v4696, 127
    %v4756 = vpop.permute.xlu0 %4755
    %4757 = vrot.lane.b32.xlu0 %v4697, 127
    %v4758 = vpop.permute.xlu0 %4757
    %4759 = vrot.lane.b32.xlu0 %v4698, 127
    %v4760 = vpop.permute.xlu0 %4759
    %4761 = vrot.lane.b32.xlu0 %v4699, 127
    %v4762 = vpop.permute.xlu0 %4761
    %4763 = vrot.lane.b32.xlu0 %v4700, 127
    %v4764 = vpop.permute.xlu0 %4763
    %4765 = vrot.lane.b32.xlu0 %v4701, 127
    %v4766 = vpop.permute.xlu0 %4765
    %4767 = vrot.lane.b32.xlu0 %v4702, 127
    %v4768 = vpop.permute.xlu0 %4767
    %4769 = vrot.lane.b32.xlu0 %v4703, 127
    %v4770 = vpop.permute.xlu0 %4769
    %4771 = vrot.lane.b32.xlu0 %v4704, 127
    %v4772 = vpop.permute.xlu0 %4771
    %4773 = vrot.lane.b32.xlu0 %v4705, 127
    %v4774 = vpop.permute.xlu0 %4773
    %4775 = vrot.lane.b32.xlu0 %v4706, 127
    %v4776 = vpop.permute.xlu0 %4775
    %4777 = vrot.lane.b32.xlu0 %v4707, 127
    %v4778 = vpop.permute.xlu0 %4777
    %4779 = vrot.lane.b32.xlu0 %v4708, 127
    %v4780 = vpop.permute.xlu0 %4779
    %4781 = vrot.lane.b32.xlu0 %v4709, 127
    %v4782 = vpop.permute.xlu0 %4781
    %4783 = vrot.lane.b32.xlu0 %v4710, 127
    %v4784 = vpop.permute.xlu0 %4783
    %4785 = vrot.lane.b32.xlu0 %v4711, 127
    %v4786 = vpop.permute.xlu0 %4785
    %4787 = vrot.lane.b32.xlu0 %v4712, 127
    %v4788 = vpop.permute.xlu0 %4787
    %4789 = vrot.lane.b32.xlu0 %v4713, 127
    %v4790 = vpop.permute.xlu0 %4789
    %4791 = vrot.lane.b32.xlu0 %v4714, 127
    %v4792 = vpop.permute.xlu0 %4791
    %4793 = vrot.lane.b32.xlu0 %v4715, 127
    %v4794 = vpop.permute.xlu0 %4793
    %4795 = vrot.lane.b32.xlu0 %v4716, 127
    %v4796 = vpop.permute.xlu0 %4795
    %4797 = vrot.lane.b32.xlu0 %v4717, 127
    %v4798 = vpop.permute.xlu0 %4797
    %4799 = vrot.lane.b32.xlu0 %v4718, 127
    %v4800 = vpop.permute.xlu0 %4799
    %4801 = vrot.lane.b32.xlu0 %v4719, 127
    %v4802 = vpop.permute.xlu0 %4801
    %4803 = vrot.lane.b32.xlu0 %v4720, 127
    %v4804 = vpop.permute.xlu0 %4803
    %4805 = vrot.lane.b32.xlu0 %v4721, 127
    %v4806 = vpop.permute.xlu0 %4805
    %4807 = vrot.lane.b32.xlu0 %v4722, 127
    %v4808 = vpop.permute.xlu0 %4807
    %4809 = vrot.lane.b32.xlu0 %v4723, 127
    %v4810 = vpop.permute.xlu0 %4809
    %v4811 = vsel %vm265, %v4754, %v4756
    %v4812 = vsel %vm265, %v4756, %v4758
    %v4813 = vsel %vm265, %v4758, %v4760
    %v4814 = vsel %vm265, %v4760, %v4762
    %v4815 = vsel %vm265, %v4762, %v4764
    %v4816 = vsel %vm265, %v4764, %v4766
    %v4817 = vsel %vm265, %v4766, %v4768
    %v4818 = vsel %vm265, %v4768, %v4770
    %v4819 = vsel %vm265, %v4770, %v4772
    %v4820 = vsel %vm265, %v4772, %v4774
    %v4821 = vsel %vm265, %v4774, %v4776
    %v4822 = vsel %vm265, %v4776, %v4778
    %v4823 = vsel %vm265, %v4778, %v4780
    %v4824 = vsel %vm265, %v4780, %v4782
    %v4825 = vsel %vm265, %v4782, %v4784
    %v4826 = vsel %vm265, %v4784, %v4786
    %v4827 = vsel %vm265, %v4786, %v4788
    %v4828 = vsel %vm265, %v4788, %v4790
    %v4829 = vsel %vm265, %v4790, %v4792
    %v4830 = vsel %vm265, %v4792, %v4794
    %v4831 = vsel %vm265, %v4794, %v4796
    %v4832 = vsel %vm265, %v4796, %v4798
    %v4833 = vsel %vm265, %v4798, %v4800
    %v4834 = vsel %vm265, %v4800, %v4802
    %v4835 = vsel %vm265, %v4802, %v4804
    %v4836 = vsel %vm265, %v4804, %v4806
    %v4837 = vsel %vm265, %v4806, %v4808
    %v4838 = vsel %vm265, %v4808, %v4810
    %4867 = vrot.lane.b32.xlu0 %v4695, 126
    %v4868 = vpop.permute.xlu0 %4867
    %4869 = vrot.lane.b32.xlu0 %v4696, 126
    %v4870 = vpop.permute.xlu0 %4869
    %4871 = vrot.lane.b32.xlu0 %v4697, 126
    %v4872 = vpop.permute.xlu0 %4871
    %4873 = vrot.lane.b32.xlu0 %v4698, 126
    %v4874 = vpop.permute.xlu0 %4873
    %4875 = vrot.lane.b32.xlu0 %v4699, 126
    %v4876 = vpop.permute.xlu0 %4875
    %4877 = vrot.lane.b32.xlu0 %v4700, 126
    %v4878 = vpop.permute.xlu0 %4877
    %4879 = vrot.lane.b32.xlu0 %v4701, 126
    %v4880 = vpop.permute.xlu0 %4879
    %4881 = vrot.lane.b32.xlu0 %v4702, 126
    %v4882 = vpop.permute.xlu0 %4881
    %4883 = vrot.lane.b32.xlu0 %v4703, 126
    %v4884 = vpop.permute.xlu0 %4883
    %4885 = vrot.lane.b32.xlu0 %v4704, 126
    %v4886 = vpop.permute.xlu0 %4885
    %4887 = vrot.lane.b32.xlu0 %v4705, 126
    %v4888 = vpop.permute.xlu0 %4887
    %4889 = vrot.lane.b32.xlu0 %v4706, 126
    %v4890 = vpop.permute.xlu0 %4889
    %4891 = vrot.lane.b32.xlu0 %v4707, 126
    %v4892 = vpop.permute.xlu0 %4891
    %4893 = vrot.lane.b32.xlu0 %v4708, 126
    %v4894 = vpop.permute.xlu0 %4893
    %4895 = vrot.lane.b32.xlu0 %v4709, 126
    %v4896 = vpop.permute.xlu0 %4895
    %4897 = vrot.lane.b32.xlu0 %v4710, 126
    %v4898 = vpop.permute.xlu0 %4897
    %4899 = vrot.lane.b32.xlu0 %v4711, 126
    %v4900 = vpop.permute.xlu0 %4899
    %4901 = vrot.lane.b32.xlu0 %v4712, 126
    %v4902 = vpop.permute.xlu0 %4901
    %4903 = vrot.lane.b32.xlu0 %v4713, 126
    %v4904 = vpop.permute.xlu0 %4903
    %4905 = vrot.lane.b32.xlu0 %v4714, 126
    %v4906 = vpop.permute.xlu0 %4905
    %4907 = vrot.lane.b32.xlu0 %v4715, 126
    %v4908 = vpop.permute.xlu0 %4907
    %4909 = vrot.lane.b32.xlu0 %v4716, 126
    %v4910 = vpop.permute.xlu0 %4909
    %4911 = vrot.lane.b32.xlu0 %v4717, 126
    %v4912 = vpop.permute.xlu0 %4911
    %4913 = vrot.lane.b32.xlu0 %v4718, 126
    %v4914 = vpop.permute.xlu0 %4913
    %4915 = vrot.lane.b32.xlu0 %v4719, 126
    %v4916 = vpop.permute.xlu0 %4915
    %4917 = vrot.lane.b32.xlu0 %v4720, 126
    %v4918 = vpop.permute.xlu0 %4917
    %4919 = vrot.lane.b32.xlu0 %v4721, 126
    %v4920 = vpop.permute.xlu0 %4919
    %4921 = vrot.lane.b32.xlu0 %v4722, 126
    %v4922 = vpop.permute.xlu0 %4921
    %4923 = vrot.lane.b32.xlu0 %v4723, 126
    %v4924 = vpop.permute.xlu0 %4923
    %v4925 = vsel %vm380, %v4868, %v4870
    %v4926 = vsel %vm380, %v4870, %v4872
    %v4927 = vsel %vm380, %v4872, %v4874
    %v4928 = vsel %vm380, %v4874, %v4876
    %v4929 = vsel %vm380, %v4876, %v4878
    %v4930 = vsel %vm380, %v4878, %v4880
    %v4931 = vsel %vm380, %v4880, %v4882
    %v4932 = vsel %vm380, %v4882, %v4884
    %v4933 = vsel %vm380, %v4884, %v4886
    %v4934 = vsel %vm380, %v4886, %v4888
    %v4935 = vsel %vm380, %v4888, %v4890
    %v4936 = vsel %vm380, %v4890, %v4892
    %v4937 = vsel %vm380, %v4892, %v4894
    %v4938 = vsel %vm380, %v4894, %v4896
    %v4939 = vsel %vm380, %v4896, %v4898
    %v4940 = vsel %vm380, %v4898, %v4900
    %v4941 = vsel %vm380, %v4900, %v4902
    %v4942 = vsel %vm380, %v4902, %v4904
    %v4943 = vsel %vm380, %v4904, %v4906
    %v4944 = vsel %vm380, %v4906, %v4908
    %v4945 = vsel %vm380, %v4908, %v4910
    %v4946 = vsel %vm380, %v4910, %v4912
    %v4947 = vsel %vm380, %v4912, %v4914
    %v4948 = vsel %vm380, %v4914, %v4916
    %v4949 = vsel %vm380, %v4916, %v4918
    %v4950 = vsel %vm380, %v4918, %v4920
    %v4951 = vsel %vm380, %v4920, %v4922
    %v4952 = vsel %vm380, %v4922, %v4924
    %v4981 = vld [vmem:[#allocation6] sm:$0x3]
    %v4982 = vld [vmem:[%s438] sm:$0x3]
    %4983 = vrot.lane.b32.xlu0 %v4695, 64
    %v4984 = vpop.permute.xlu0 %4983
    %4985 = vrot.lane.b32.xlu0 %v4696, 64
    %v4986 = vpop.permute.xlu0 %4985
    %4987 = vrot.lane.b32.xlu0 %v4697, 64
    %v4988 = vpop.permute.xlu0 %4987
    %4989 = vrot.lane.b32.xlu0 %v4698, 64
    %v4990 = vpop.permute.xlu0 %4989
    %4991 = vrot.lane.b32.xlu0 %v4699, 64
    %v4992 = vpop.permute.xlu0 %4991
    %4993 = vrot.lane.b32.xlu0 %v4700, 64
    %v4994 = vpop.permute.xlu0 %4993
    %4995 = vrot.lane.b32.xlu0 %v4701, 64
    %v4996 = vpop.permute.xlu0 %4995
    %4997 = vrot.lane.b32.xlu0 %v4702, 64
    %v4998 = vpop.permute.xlu0 %4997
    %4999 = vrot.lane.b32.xlu0 %v4703, 64
    %v5000 = vpop.permute.xlu0 %4999
    %5001 = vrot.lane.b32.xlu0 %v4704, 64
    %v5002 = vpop.permute.xlu0 %5001
    %5003 = vrot.lane.b32.xlu0 %v4705, 64
    %v5004 = vpop.permute.xlu0 %5003
    %5005 = vrot.lane.b32.xlu0 %v4706, 64
    %v5006 = vpop.permute.xlu0 %5005
    %5007 = vrot.lane.b32.xlu0 %v4707, 64
    %v5008 = vpop.permute.xlu0 %5007
    %5009 = vrot.lane.b32.xlu0 %v4708, 64
    %v5010 = vpop.permute.xlu0 %5009
    %5011 = vrot.lane.b32.xlu0 %v4709, 64
    %v5012 = vpop.permute.xlu0 %5011
    %5013 = vrot.lane.b32.xlu0 %v4710, 64
    %v5014 = vpop.permute.xlu0 %5013
    %5015 = vrot.lane.b32.xlu0 %v4711, 64
    %v5016 = vpop.permute.xlu0 %5015
    %5017 = vrot.lane.b32.xlu0 %v4712, 64
    %v5018 = vpop.permute.xlu0 %5017
    %5019 = vrot.lane.b32.xlu0 %v4713, 64
    %v5020 = vpop.permute.xlu0 %5019
    %5021 = vrot.lane.b32.xlu0 %v4714, 64
    %v5022 = vpop.permute.xlu0 %5021
    %5023 = vrot.lane.b32.xlu0 %v4715, 64
    %v5024 = vpop.permute.xlu0 %5023
    %5025 = vrot.lane.b32.xlu0 %v4716, 64
    %v5026 = vpop.permute.xlu0 %5025
    %5027 = vrot.lane.b32.xlu0 %v4717, 64
    %v5028 = vpop.permute.xlu0 %5027
    %5029 = vrot.lane.b32.xlu0 %v4718, 64
    %v5030 = vpop.permute.xlu0 %5029
    %5031 = vrot.lane.b32.xlu0 %v4719, 64
    %v5032 = vpop.permute.xlu0 %5031
    %5033 = vrot.lane.b32.xlu0 %v4720, 64
    %v5034 = vpop.permute.xlu0 %5033
    %5035 = vrot.lane.b32.xlu0 %v4721, 64
    %v5036 = vpop.permute.xlu0 %5035
    %5037 = vrot.lane.b32.xlu0 %v4722, 64
    %v5038 = vpop.permute.xlu0 %5037
    %5039 = vrot.lane.b32.xlu0 %v4723, 64
    %v5040 = vpop.permute.xlu0 %5039
    %5041 = vrot.lane.b32.xlu0 %v4811, 64
    %v5042 = vpop.permute.xlu0 %5041
    %5043 = vrot.lane.b32.xlu0 %v4812, 64
    %v5044 = vpop.permute.xlu0 %5043
    %5045 = vrot.lane.b32.xlu0 %v4813, 64
    %v5046 = vpop.permute.xlu0 %5045
    %5047 = vrot.lane.b32.xlu0 %v4814, 64
    %v5048 = vpop.permute.xlu0 %5047
    %5049 = vrot.lane.b32.xlu0 %v4815, 64
    %v5050 = vpop.permute.xlu0 %5049
    %5051 = vrot.lane.b32.xlu0 %v4816, 64
    %v5052 = vpop.permute.xlu0 %5051
    %5053 = vrot.lane.b32.xlu0 %v4817, 64
    %v5054 = vpop.permute.xlu0 %5053
    %5055 = vrot.lane.b32.xlu0 %v4818, 64
    %v5056 = vpop.permute.xlu0 %5055
    %5057 = vrot.lane.b32.xlu0 %v4819, 64
    %v5058 = vpop.permute.xlu0 %5057
    %5059 = vrot.lane.b32.xlu0 %v4820, 64
    %v5060 = vpop.permute.xlu0 %5059
    %5061 = vrot.lane.b32.xlu0 %v4821, 64
    %v5062 = vpop.permute.xlu0 %5061
    %5063 = vrot.lane.b32.xlu0 %v4822, 64
    %v5064 = vpop.permute.xlu0 %5063
    %5065 = vrot.lane.b32.xlu0 %v4823, 64
    %v5066 = vpop.permute.xlu0 %5065
    %5067 = vrot.lane.b32.xlu0 %v4824, 64
    %v5068 = vpop.permute.xlu0 %5067
    %5069 = vrot.lane.b32.xlu0 %v4825, 64
    %v5070 = vpop.permute.xlu0 %5069
    %5071 = vrot.lane.b32.xlu0 %v4826, 64
    %v5072 = vpop.permute.xlu0 %5071
    %5073 = vrot.lane.b32.xlu0 %v4827, 64
    %v5074 = vpop.permute.xlu0 %5073
    %5075 = vrot.lane.b32.xlu0 %v4828, 64
    %v5076 = vpop.permute.xlu0 %5075
    %5077 = vrot.lane.b32.xlu0 %v4829, 64
    %v5078 = vpop.permute.xlu0 %5077
    %5079 = vrot.lane.b32.xlu0 %v4830, 64
    %v5080 = vpop.permute.xlu0 %5079
    %5081 = vrot.lane.b32.xlu0 %v4831, 64
    %v5082 = vpop.permute.xlu0 %5081
    %5083 = vrot.lane.b32.xlu0 %v4832, 64
    %v5084 = vpop.permute.xlu0 %5083
    %5085 = vrot.lane.b32.xlu0 %v4833, 64
    %v5086 = vpop.permute.xlu0 %5085
    %5087 = vrot.lane.b32.xlu0 %v4834, 64
    %v5088 = vpop.permute.xlu0 %5087
    %5089 = vrot.lane.b32.xlu0 %v4835, 64
    %v5090 = vpop.permute.xlu0 %5089
    %5091 = vrot.lane.b32.xlu0 %v4836, 64
    %v5092 = vpop.permute.xlu0 %5091
    %5093 = vrot.lane.b32.xlu0 %v4837, 64
    %v5094 = vpop.permute.xlu0 %5093
    %5095 = vrot.lane.b32.xlu0 %v4838, 64
    %v5096 = vpop.permute.xlu0 %5095
    %5097 = vrot.lane.b32.xlu0 %v4810, 64
    %v5098 = vpop.permute.xlu0 %5097
    %5099 = vrot.lane.b32.xlu0 %v4925, 64
    %v5100 = vpop.permute.xlu0 %5099
    %5101 = vrot.lane.b32.xlu0 %v4926, 64
    %v5102 = vpop.permute.xlu0 %5101
    %5103 = vrot.lane.b32.xlu0 %v4927, 64
    %v5104 = vpop.permute.xlu0 %5103
    %5105 = vrot.lane.b32.xlu0 %v4928, 64
    %v5106 = vpop.permute.xlu0 %5105
    %5107 = vrot.lane.b32.xlu0 %v4929, 64
    %v5108 = vpop.permute.xlu0 %5107
    %5109 = vrot.lane.b32.xlu0 %v4930, 64
    %v5110 = vpop.permute.xlu0 %5109
    %5111 = vrot.lane.b32.xlu0 %v4931, 64
    %v5112 = vpop.permute.xlu0 %5111
    %5113 = vrot.lane.b32.xlu0 %v4932, 64
    %v5114 = vpop.permute.xlu0 %5113
    %5115 = vrot.lane.b32.xlu0 %v4933, 64
    %v5116 = vpop.permute.xlu0 %5115
    %5117 = vrot.lane.b32.xlu0 %v4934, 64
    %v5118 = vpop.permute.xlu0 %5117
    %5119 = vrot.lane.b32.xlu0 %v4935, 64
    %v5120 = vpop.permute.xlu0 %5119
    %5121 = vrot.lane.b32.xlu0 %v4936, 64
    %v5122 = vpop.permute.xlu0 %5121
    %5123 = vrot.lane.b32.xlu0 %v4937, 64
    %v5124 = vpop.permute.xlu0 %5123
    %5125 = vrot.lane.b32.xlu0 %v4938, 64
    %v5126 = vpop.permute.xlu0 %5125
    %5127 = vrot.lane.b32.xlu0 %v4939, 64
    %v5128 = vpop.permute.xlu0 %5127
    %5129 = vrot.lane.b32.xlu0 %v4940, 64
    %v5130 = vpop.permute.xlu0 %5129
    %5131 = vrot.lane.b32.xlu0 %v4941, 64
    %v5132 = vpop.permute.xlu0 %5131
    %5133 = vrot.lane.b32.xlu0 %v4942, 64
    %v5134 = vpop.permute.xlu0 %5133
    %5135 = vrot.lane.b32.xlu0 %v4943, 64
    %v5136 = vpop.permute.xlu0 %5135
    %5137 = vrot.lane.b32.xlu0 %v4944, 64
    %v5138 = vpop.permute.xlu0 %5137
    %5139 = vrot.lane.b32.xlu0 %v4945, 64
    %v5140 = vpop.permute.xlu0 %5139
    %5141 = vrot.lane.b32.xlu0 %v4946, 64
    %v5142 = vpop.permute.xlu0 %5141
    %5143 = vrot.lane.b32.xlu0 %v4947, 64
    %v5144 = vpop.permute.xlu0 %5143
    %5145 = vrot.lane.b32.xlu0 %v4948, 64
    %v5146 = vpop.permute.xlu0 %5145
    %5147 = vrot.lane.b32.xlu0 %v4949, 64
    %v5148 = vpop.permute.xlu0 %5147
    %5149 = vrot.lane.b32.xlu0 %v4950, 64
    %v5150 = vpop.permute.xlu0 %5149
    %5151 = vrot.lane.b32.xlu0 %v4951, 64
    %v5152 = vpop.permute.xlu0 %5151
    %5153 = vrot.lane.b32.xlu0 %v4952, 64
    %v5154 = vpop.permute.xlu0 %5153
    %5155 = vrot.lane.b32.xlu0 %v4924, 64
    %v5156 = vpop.permute.xlu0 %5155
    %v5157 = vsel %vm614, %v4984, %v4986
    %v5158 = vsel %vm614, %v4986, %v4988
    %v5159 = vsel %vm614, %v4988, %v4990
    %v5160 = vsel %vm614, %v4990, %v4992
    %v5161 = vsel %vm614, %v4992, %v4994
    %v5162 = vsel %vm614, %v4994, %v4996
    %v5163 = vsel %vm614, %v4996, %v4998
    %v5164 = vsel %vm614, %v4998, %v5000
    %v5165 = vsel %vm614, %v5000, %v5002
    %v5166 = vsel %vm614, %v5002, %v5004
    %v5167 = vsel %vm614, %v5004, %v5006
    %v5168 = vsel %vm614, %v5006, %v5008
    %v5169 = vsel %vm614, %v5008, %v5010
    %v5170 = vsel %vm614, %v5010, %v5012
    %v5171 = vsel %vm614, %v5012, %v5014
    %v5172 = vsel %vm614, %v5014, %v5016
    %v5173 = vsel %vm614, %v5016, %v5018
    %v5174 = vsel %vm614, %v5018, %v5020
    %v5175 = vsel %vm614, %v5020, %v5022
    %v5176 = vsel %vm614, %v5022, %v5024
    %v5177 = vsel %vm614, %v5024, %v5026
    %v5178 = vsel %vm614, %v5026, %v5028
    %v5179 = vsel %vm614, %v5028, %v5030
    %v5180 = vsel %vm614, %v5030, %v5032
    %v5181 = vsel %vm614, %v5032, %v5034
    %v5182 = vsel %vm614, %v5034, %v5036
    %v5183 = vsel %vm614, %v5036, %v5038
    %v5184 = vsel %vm614, %v5038, %v5040
    %v5185 = vsel %vm614, %v5042, %v5044
    %v5186 = vsel %vm614, %v5044, %v5046
    %v5187 = vsel %vm614, %v5046, %v5048
    %v5188 = vsel %vm614, %v5048, %v5050
    %v5189 = vsel %vm614, %v5050, %v5052
    %v5190 = vsel %vm614, %v5052, %v5054
    %v5191 = vsel %vm614, %v5054, %v5056
    %v5192 = vsel %vm614, %v5056, %v5058
    %v5193 = vsel %vm614, %v5058, %v5060
    %v5194 = vsel %vm614, %v5060, %v5062
    %v5195 = vsel %vm614, %v5062, %v5064
    %v5196 = vsel %vm614, %v5064, %v5066
    %v5197 = vsel %vm614, %v5066, %v5068
    %v5198 = vsel %vm614, %v5068, %v5070
    %v5199 = vsel %vm614, %v5070, %v5072
    %v5200 = vsel %vm614, %v5072, %v5074
    %v5201 = vsel %vm614, %v5074, %v5076
    %v5202 = vsel %vm614, %v5076, %v5078
    %v5203 = vsel %vm614, %v5078, %v5080
    %v5204 = vsel %vm614, %v5080, %v5082
    %v5205 = vsel %vm614, %v5082, %v5084
    %v5206 = vsel %vm614, %v5084, %v5086
    %v5207 = vsel %vm614, %v5086, %v5088
    %v5208 = vsel %vm614, %v5088, %v5090
    %v5209 = vsel %vm614, %v5090, %v5092
    %v5210 = vsel %vm614, %v5092, %v5094
    %v5211 = vsel %vm614, %v5094, %v5096
    %v5212 = vsel %vm614, %v5096, %v5098
    %v5213 = vsel %vm614, %v5100, %v5102
    %v5214 = vsel %vm614, %v5102, %v5104
    %v5215 = vsel %vm614, %v5104, %v5106
    %v5216 = vsel %vm614, %v5106, %v5108
    %v5217 = vsel %vm614, %v5108, %v5110
    %v5218 = vsel %vm614, %v5110, %v5112
    %v5219 = vsel %vm614, %v5112, %v5114
    %v5220 = vsel %vm614, %v5114, %v5116
    %v5221 = vsel %vm614, %v5116, %v5118
    %v5222 = vsel %vm614, %v5118, %v5120
    %v5223 = vsel %vm614, %v5120, %v5122
    %v5224 = vsel %vm614, %v5122, %v5124
    %v5225 = vsel %vm614, %v5124, %v5126
    %v5226 = vsel %vm614, %v5126, %v5128
    %v5227 = vsel %vm614, %v5128, %v5130
    %v5228 = vsel %vm614, %v5130, %v5132
    %v5229 = vsel %vm614, %v5132, %v5134
    %v5230 = vsel %vm614, %v5134, %v5136
    %v5231 = vsel %vm614, %v5136, %v5138
    %v5232 = vsel %vm614, %v5138, %v5140
    %v5233 = vsel %vm614, %v5140, %v5142
    %v5234 = vsel %vm614, %v5142, %v5144
    %v5235 = vsel %vm614, %v5144, %v5146
    %v5236 = vsel %vm614, %v5146, %v5148
    %v5237 = vsel %vm614, %v5148, %v5150
    %v5238 = vsel %vm614, %v5150, %v5152
    %v5239 = vsel %vm614, %v5152, %v5154
    %v5240 = vsel %vm614, %v5154, %v5156
    %v5326 = vsel %vm783, %v4982, 0
    %5328 = vmatprep.subr.mxu0 %v5158
    %5329 = vmatpush1.msra.mxu0 %v5157
    %5330 = vmatprep.subr.mxu0 %v5186
    %5331 = vmatpush1.msra.mxu0 %v5185
    %5332 = vmatprep.subr.mxu0 %v5214
    %5333 = vmatpush1.msra.mxu0 %v5213
    %5334 = vmatprep.subr.mxu0 0.0
    %5335 = vmatpush1.msra.mxu0 0.0
    %5336 = vmatprep.subr.mxu0 0.0
    %5337 = vmatpush1.msra.mxu0 0.0
    %5338 = vmatprep.subr.mxu0 0.0
    %5339 = vmatpush1.msra.mxu0 0.0
    %5340 = vmatprep.subr.mxu0 0.0
    %5341 = vmatpush1.msra.mxu0 0.0
    %5342 = vmatprep.subr.mxu0 0.0
    %5343 = vmatpush1.msra.mxu0 0.0
    %5344 = vmatprep.subr.mxu0 0.0
    %5345 = vmatpush1.msra.mxu0 0.0
    %5346 = vmatprep.subr.mxu0 0.0
    %5347 = vmatpush1.msra.mxu0 0.0
    %5348 = vmatprep.subr.mxu0 0.0
    %5349 = vmatpush1.msra.mxu0 0.0
    %5350 = vmatprep.subr.mxu0 0.0
    %5351 = vmatpush1.msra.mxu0 0.0
    %5352 = vmatprep.subr.mxu0 0.0
    %5353 = vmatpush1.msra.mxu0 0.0
    %5354 = vmatprep.subr.mxu0 0.0
    %5355 = vmatpush1.msra.mxu0 0.0
    %5356 = vmatprep.subr.mxu0 0.0
    %5357 = vmatpush1.msra.mxu0 0.0
    %5358 = vmatprep.subr.mxu0 0.0
    %5359 = vmatpush1.msra.mxu0 0.0
    %5360 = vmatprep.subr.mxu0 0.0
    %5361 = vmatpush1.msra.mxu0 0.0
    %5362 = vmatprep.subr.mxu0 0.0
    %5363 = vmatpush1.msra.mxu0 0.0
    %5364 = vmatprep.subr.mxu0 0.0
    %5365 = vmatpush1.msra.mxu0 0.0
    %5366 = vmatprep.subr.mxu0 0.0
    %5367 = vmatpush1.msra.mxu0 0.0
    %5368 = vmatprep.subr.mxu0 0.0
    %5369 = vmatpush1.msra.mxu0 0.0
    %5370 = vmatprep.subr.mxu0 0.0
    %5371 = vmatpush1.msra.mxu0 0.0
    %5372 = vmatprep.subr.mxu0 0.0
    %5373 = vmatpush1.msra.mxu0 0.0
    %5374 = vmatprep.subr.mxu0 0.0
    %5375 = vmatpush1.msra.mxu0 0.0
    %5376 = vmatprep.subr.mxu0 0.0
    %5377 = vmatpush1.msra.mxu0 0.0
    %5378 = vmatprep.subr.mxu0 0.0
    %5379 = vmatpush1.msra.mxu0 0.0
    %5380 = vmatprep.subr.mxu0 0.0
    %5381 = vmatpush1.msra.mxu0 0.0
    %5382 = vmatprep.subr.mxu0 0.0
    %5383 = vmatpush1.msra.mxu0 0.0
    %5384 = vmatprep.subr.mxu0 0.0
    %5385 = vmatpush1.msra.mxu0 0.0
    %5386 = vmatprep.subr.mxu0 0.0
    %5387 = vmatpush1.msra.mxu0 0.0
    %5388 = vmatprep.subr.mxu0 0.0
    %5389 = vmatpush1.msra.mxu0 0.0
    %5390 = vmatprep.subr.mxu0 0.0
    %5391 = vmatpush1.msra.mxu0 0.0
    %5392 = vmatprep.mubr.f32.mxu0 0.0
    %5393 = vmatmul.mubr.f32.gmra.mrb[0].mxu0 %v5326
    %v5394 = vpop.f32.mrb[0].mxu0
    %v5395 = vadd.f32 0.0, %v5394
    %v5396 = vpop.f32.mrb[0].mxu0
    %v5397 = vadd.f32 0.0, %v5396
    %5398 = vdwg.mxu0
    %5399 = vmatprep.subr.mxu0 %v5160
    %5400 = vmatpush1.msra.mxu0 %v5159
    %5401 = vmatprep.subr.mxu0 %v5188
    %5402 = vmatpush1.msra.mxu0 %v5187
    %5403 = vmatprep.subr.mxu0 %v5216
    %5404 = vmatpush1.msra.mxu0 %v5215
    %5405 = vmatprep.subr.mxu0 0.0
    %5406 = vmatpush1.msra.mxu0 0.0
    %5407 = vmatprep.subr.mxu0 0.0
    %5408 = vmatpush1.msra.mxu0 0.0
    %5409 = vmatprep.subr.mxu0 0.0
    %5410 = vmatpush1.msra.mxu0 0.0
    %5411 = vmatprep.subr.mxu0 0.0
    %5412 = vmatpush1.msra.mxu0 0.0
    %5413 = vmatprep.subr.mxu0 0.0
    %5414 = vmatpush1.msra.mxu0 0.0
    %5415 = vmatprep.subr.mxu0 0.0
    %5416 = vmatpush1.msra.mxu0 0.0
    %5417 = vmatprep.subr.mxu0 0.0
    %5418 = vmatpush1.msra.mxu0 0.0
    %5419 = vmatprep.subr.mxu0 0.0
    %5420 = vmatpush1.msra.mxu0 0.0
    %5421 = vmatprep.subr.mxu0 0.0
    %5422 = vmatpush1.msra.mxu0 0.0
    %5423 = vmatprep.subr.mxu0 0.0
    %5424 = vmatpush1.msra.mxu0 0.0
    %5425 = vmatprep.subr.mxu0 0.0
    %5426 = vmatpush1.msra.mxu0 0.0
    %5427 = vmatprep.subr.mxu0 0.0
    %5428 = vmatpush1.msra.mxu0 0.0
    %5429 = vmatprep.subr.mxu0 0.0
    %5430 = vmatpush1.msra.mxu0 0.0
    %5431 = vmatprep.subr.mxu0 0.0
    %5432 = vmatpush1.msra.mxu0 0.0
    %5433 = vmatprep.subr.mxu0 0.0
    %5434 = vmatpush1.msra.mxu0 0.0
    %5435 = vmatprep.subr.mxu0 0.0
    %5436 = vmatpush1.msra.mxu0 0.0
    %5437 = vmatprep.subr.mxu0 0.0
    %5438 = vmatpush1.msra.mxu0 0.0
    %5439 = vmatprep.subr.mxu0 0.0
    %5440 = vmatpush1.msra.mxu0 0.0
    %5441 = vmatprep.subr.mxu0 0.0
    %5442 = vmatpush1.msra.mxu0 0.0
    %5443 = vmatprep.subr.mxu0 0.0
    %5444 = vmatpush1.msra.mxu0 0.0
    %5445 = vmatprep.subr.mxu0 0.0
    %5446 = vmatpush1.msra.mxu0 0.0
    %5447 = vmatprep.subr.mxu0 0.0
    %5448 = vmatpush1.msra.mxu0 0.0
    %5449 = vmatprep.subr.mxu0 0.0
    %5450 = vmatpush1.msra.mxu0 0.0
    %5451 = vmatprep.subr.mxu0 0.0
    %5452 = vmatpush1.msra.mxu0 0.0
    %5453 = vmatprep.subr.mxu0 0.0
    %5454 = vmatpush1.msra.mxu0 0.0
    %5455 = vmatprep.subr.mxu0 0.0
    %5456 = vmatpush1.msra.mxu0 0.0
    %5457 = vmatprep.subr.mxu0 0.0
    %5458 = vmatpush1.msra.mxu0 0.0
    %5459 = vmatprep.subr.mxu0 0.0
    %5460 = vmatpush1.msra.mxu0 0.0
    %5461 = vmatprep.subr.mxu0 0.0
    %5462 = vmatpush1.msra.mxu0 0.0
    %5463 = vmatprep.mubr.f32.mxu0 0.0
    %5464 = vmatmul.mubr.f32.gmra.mrb[0].mxu0 %v5326
    %v5465 = vpop.f32.mrb[0].mxu0
    %v5466 = vadd.f32 0.0, %v5465
    %v5467 = vpop.f32.mrb[0].mxu0
    %v5468 = vadd.f32 0.0, %v5467
    %5469 = vdwg.mxu0
    %5470 = vmatprep.subr.mxu0 %v5162
    %5471 = vmatpush1.msra.mxu0 %v5161
    %5472 = vmatprep.subr.mxu0 %v5190
    %5473 = vmatpush1.msra.mxu0 %v5189
    %5474 = vmatprep.subr.mxu0 %v5218
    %5475 = vmatpush1.msra.mxu0 %v5217
    %5476 = vmatprep.subr.mxu0 0.0
    %5477 = vmatpush1.msra.mxu0 0.0
    %5478 = vmatprep.subr.mxu0 0.0
    %5479 = vmatpush1.msra.mxu0 0.0
    %5480 = vmatprep.subr.mxu0 0.0
    %5481 = vmatpush1.msra.mxu0 0.0
    %5482 = vmatprep.subr.mxu0 0.0
    %5483 = vmatpush1.msra.mxu0 0.0
    %5484 = vmatprep.subr.mxu0 0.0
    %5485 = vmatpush1.msra.mxu0 0.0
    %5486 = vmatprep.subr.mxu0 0.0
    %5487 = vmatpush1.msra.mxu0 0.0
    %5488 = vmatprep.subr.mxu0 0.0
    %5489 = vmatpush1.msra.mxu0 0.0
    %5490 = vmatprep.subr.mxu0 0.0
    %5491 = vmatpush1.msra.mxu0 0.0
    %5492 = vmatprep.subr.mxu0 0.0
    %5493 = vmatpush1.msra.mxu0 0.0
    %5494 = vmatprep.subr.mxu0 0.0
    %5495 = vmatpush1.msra.mxu0 0.0
    %5496 = vmatprep.subr.mxu0 0.0
    %5497 = vmatpush1.msra.mxu0 0.0
    %5498 = vmatprep.subr.mxu0 0.0
    %5499 = vmatpush1.msra.mxu0 0.0
    %5500 = vmatprep.subr.mxu0 0.0
    %5501 = vmatpush1.msra.mxu0 0.0
    %5502 = vmatprep.subr.mxu0 0.0
    %5503 = vmatpush1.msra.mxu0 0.0
    %5504 = vmatprep.subr.mxu0 0.0
    %5505 = vmatpush1.msra.mxu0 0.0
    %5506 = vmatprep.subr.mxu0 0.0
    %5507 = vmatpush1.msra.mxu0 0.0
    %5508 = vmatprep.subr.mxu0 0.0
    %5509 = vmatpush1.msra.mxu0 0.0
    %5510 = vmatprep.subr.mxu0 0.0
    %5511 = vmatpush1.msra.mxu0 0.0
    %5512 = vmatprep.subr.mxu0 0.0
    %5513 = vmatpush1.msra.mxu0 0.0
    %5514 = vmatprep.subr.mxu0 0.0
    %5515 = vmatpush1.msra.mxu0 0.0
    %5516 = vmatprep.subr.mxu0 0.0
    %5517 = vmatpush1.msra.mxu0 0.0
    %5518 = vmatprep.subr.mxu0 0.0
    %5519 = vmatpush1.msra.mxu0 0.0
    %5520 = vmatprep.subr.mxu0 0.0
    %5521 = vmatpush1.msra.mxu0 0.0
    %5522 = vmatprep.subr.mxu0 0.0
    %5523 = vmatpush1.msra.mxu0 0.0
    %5524 = vmatprep.subr.mxu0 0.0
    %5525 = vmatpush1.msra.mxu0 0.0
    %5526 = vmatprep.subr.mxu0 0.0
    %5527 = vmatpush1.msra.mxu0 0.0
    %5528 = vmatprep.subr.mxu0 0.0
    %5529 = vmatpush1.msra.mxu0 0.0
    %5530 = vmatprep.subr.mxu0 0.0
    %5531 = vmatpush1.msra.mxu0 0.0
    %5532 = vmatprep.subr.mxu0 0.0
    %5533 = vmatpush1.msra.mxu0 0.0
    %5534 = vmatprep.mubr.f32.mxu0 0.0
    %5535 = vmatmul.mubr.f32.gmra.mrb[0].mxu0 %v5326
    %v5536 = vpop.f32.mrb[0].mxu0
    %v5537 = vadd.f32 0.0, %v5536
    %v5538 = vpop.f32.mrb[0].mxu0
    %v5539 = vadd.f32 0.0, %v5538
    %5540 = vdwg.mxu0
    %5541 = vmatprep.subr.mxu0 %v5164
    %5542 = vmatpush1.msra.mxu0 %v5163
    %5543 = vmatprep.subr.mxu0 %v5192
    %5544 = vmatpush1.msra.mxu0 %v5191
    %5545 = vmatprep.subr.mxu0 %v5220
    %5546 = vmatpush1.msra.mxu0 %v5219
    %5547 = vmatprep.subr.mxu0 0.0
    %5548 = vmatpush1.msra.mxu0 0.0
    %5549 = vmatprep.subr.mxu0 0.0
    %5550 = vmatpush1.msra.mxu0 0.0
    %5551 = vmatprep.subr.mxu0 0.0
    %5552 = vmatpush1.msra.mxu0 0.0
    %5553 = vmatprep.subr.mxu0 0.0
    %5554 = vmatpush1.msra.mxu0 0.0
    %5555 = vmatprep.subr.mxu0 0.0
    %5556 = vmatpush1.msra.mxu0 0.0
    %5557 = vmatprep.subr.mxu0 0.0
    %5558 = vmatpush1.msra.mxu0 0.0
    %5559 = vmatprep.subr.mxu0 0.0
    %5560 = vmatpush1.msra.mxu0 0.0
    %5561 = vmatprep.subr.mxu0 0.0
    %5562 = vmatpush1.msra.mxu0 0.0
    %5563 = vmatprep.subr.mxu0 0.0
    %5564 = vmatpush1.msra.mxu0 0.0
    %5565 = vmatprep.subr.mxu0 0.0
    %5566 = vmatpush1.msra.mxu0 0.0
    %5567 = vmatprep.subr.mxu0 0.0
    %5568 = vmatpush1.msra.mxu0 0.0
    %5569 = vmatprep.subr.mxu0 0.0
    %5570 = vmatpush1.msra.mxu0 0.0
    %5571 = vmatprep.subr.mxu0 0.0
    %5572 = vmatpush1.msra.mxu0 0.0
    %5573 = vmatprep.subr.mxu0 0.0
    %5574 = vmatpush1.msra.mxu0 0.0
    %5575 = vmatprep.subr.mxu0 0.0
    %5576 = vmatpush1.msra.mxu0 0.0
    %5577 = vmatprep.subr.mxu0 0.0
    %5578 = vmatpush1.msra.mxu0 0.0
    %5579 = vmatprep.subr.mxu0 0.0
    %5580 = vmatpush1.msra.mxu0 0.0
    %5581 = vmatprep.subr.mxu0 0.0
    %5582 = vmatpush1.msra.mxu0 0.0
    %5583 = vmatprep.subr.mxu0 0.0
    %5584 = vmatpush1.msra.mxu0 0.0
    %5585 = vmatprep.subr.mxu0 0.0
    %5586 = vmatpush1.msra.mxu0 0.0
    %5587 = vmatprep.subr.mxu0 0.0
    %5588 = vmatpush1.msra.mxu0 0.0
    %5589 = vmatprep.subr.mxu0 0.0
    %5590 = vmatpush1.msra.mxu0 0.0
    %5591 = vmatprep.subr.mxu0 0.0
    %5592 = vmatpush1.msra.mxu0 0.0
    %5593 = vmatprep.subr.mxu0 0.0
    %5594 = vmatpush1.msra.mxu0 0.0
    %5595 = vmatprep.subr.mxu0 0.0
    %5596 = vmatpush1.msra.mxu0 0.0
    %5597 = vmatprep.subr.mxu0 0.0
    %5598 = vmatpush1.msra.mxu0 0.0
    %5599 = vmatprep.subr.mxu0 0.0
    %5600 = vmatpush1.msra.mxu0 0.0
    %5601 = vmatprep.subr.mxu0 0.0
    %5602 = vmatpush1.msra.mxu0 0.0
    %5603 = vmatprep.subr.mxu0 0.0
    %5604 = vmatpush1.msra.mxu0 0.0
    %5605 = vmatprep.mubr.f32.mxu0 0.0
    %5606 = vmatmul.mubr.f32.gmra.mrb[0].mxu0 %v5326
    %v5607 = vpop.f32.mrb[0].mxu0
    %v5608 = vadd.f32 0.0, %v5607
    %v5609 = vpop.f32.mrb[0].mxu0
    %v5610 = vadd.f32 0.0, %v5609
    %5611 = vdwg.mxu0
    %5612 = vmatprep.subr.mxu0 %v5166
    %5613 = vmatpush1.msra.mxu0 %v5165
    %5614 = vmatprep.subr.mxu0 %v5194
    %5615 = vmatpush1.msra.mxu0 %v5193
    %5616 = vmatprep.subr.mxu0 %v5222
    %5617 = vmatpush1.msra.mxu0 %v5221
    %5618 = vmatprep.subr.mxu0 0.0
    %5619 = vmatpush1.msra.mxu0 0.0
    %5620 = vmatprep.subr.mxu0 0.0
    %5621 = vmatpush1.msra.mxu0 0.0
    %5622 = vmatprep.subr.mxu0 0.0
    %5623 = vmatpush1.msra.mxu0 0.0
    %5624 = vmatprep.subr.mxu0 0.0
    %5625 = vmatpush1.msra.mxu0 0.0
    %5626 = vmatprep.subr.mxu0 0.0
    %5627 = vmatpush1.msra.mxu0 0.0
    %5628 = vmatprep.subr.mxu0 0.0
    %5629 = vmatpush1.msra.mxu0 0.0
    %5630 = vmatprep.subr.mxu0 0.0
    %5631 = vmatpush1.msra.mxu0 0.0
    %5632 = vmatprep.subr.mxu0 0.0
    %5633 = vmatpush1.msra.mxu0 0.0
    %5634 = vmatprep.subr.mxu0 0.0
    %5635 = vmatpush1.msra.mxu0 0.0
    %5636 = vmatprep.subr.mxu0 0.0
    %5637 = vmatpush1.msra.mxu0 0.0
    %5638 = vmatprep.subr.mxu0 0.0
    %5639 = vmatpush1.msra.mxu0 0.0
    %5640 = vmatprep.subr.mxu0 0.0
    %5641 = vmatpush1.msra.mxu0 0.0
    %5642 = vmatprep.subr.mxu0 0.0
    %5643 = vmatpush1.msra.mxu0 0.0
    %5644 = vmatprep.subr.mxu0 0.0
    %5645 = vmatpush1.msra.mxu0 0.0
    %5646 = vmatprep.subr.mxu0 0.0
    %5647 = vmatpush1.msra.mxu0 0.0
    %5648 = vmatprep.subr.mxu0 0.0
    %5649 = vmatpush1.msra.mxu0 0.0
    %5650 = vmatprep.subr.mxu0 0.0
    %5651 = vmatpush1.msra.mxu0 0.0
    %5652 = vmatprep.subr.mxu0 0.0
    %5653 = vmatpush1.msra.mxu0 0.0
    %5654 = vmatprep.subr.mxu0 0.0
    %5655 = vmatpush1.msra.mxu0 0.0
    %5656 = vmatprep.subr.mxu0 0.0
    %5657 = vmatpush1.msra.mxu0 0.0
    %5658 = vmatprep.subr.mxu0 0.0
    %5659 = vmatpush1.msra.mxu0 0.0
    %5660 = vmatprep.subr.mxu0 0.0
    %5661 = vmatpush1.msra.mxu0 0.0
    %5662 = vmatprep.subr.mxu0 0.0
    %5663 = vmatpush1.msra.mxu0 0.0
    %5664 = vmatprep.subr.mxu0 0.0
    %5665 = vmatpush1.msra.mxu0 0.0
    %5666 = vmatprep.subr.mxu0 0.0
    %5667 = vmatpush1.msra.mxu0 0.0
    %5668 = vmatprep.subr.mxu0 0.0
    %5669 = vmatpush1.msra.mxu0 0.0
    %5670 = vmatprep.subr.mxu0 0.0
    %5671 = vmatpush1.msra.mxu0 0.0
    %5672 = vmatprep.subr.mxu0 0.0
    %5673 = vmatpush1.msra.mxu0 0.0
    %5674 = vmatprep.subr.mxu0 0.0
    %5675 = vmatpush1.msra.mxu0 0.0
    %5676 = vmatprep.mubr.f32.mxu0 0.0
    %5677 = vmatmul.mubr.f32.gmra.mrb[0].mxu0 %v5326
    %v5678 = vpop.f32.mrb[0].mxu0
    %v5679 = vadd.f32 0.0, %v5678
    %v5680 = vpop.f32.mrb[0].mxu0
    %v5681 = vadd.f32 0.0, %v5680
    %5682 = vdwg.mxu0
    %5683 = vmatprep.subr.mxu0 %v5168
    %5684 = vmatpush1.msra.mxu0 %v5167
    %5685 = vmatprep.subr.mxu0 %v5196
    %5686 = vmatpush1.msra.mxu0 %v5195
    %5687 = vmatprep.subr.mxu0 %v5224
    %5688 = vmatpush1.msra.mxu0 %v5223
    %5689 = vmatprep.subr.mxu0 0.0
    %5690 = vmatpush1.msra.mxu0 0.0
    %5691 = vmatprep.subr.mxu0 0.0
    %5692 = vmatpush1.msra.mxu0 0.0
    %5693 = vmatprep.subr.mxu0 0.0
    %5694 = vmatpush1.msra.mxu0 0.0
    %5695 = vmatprep.subr.mxu0 0.0
    %5696 = vmatpush1.msra.mxu0 0.0
    %5697 = vmatprep.subr.mxu0 0.0
    %5698 = vmatpush1.msra.mxu0 0.0
    %5699 = vmatprep.subr.mxu0 0.0
    %5700 = vmatpush1.msra.mxu0 0.0
    %5701 = vmatprep.subr.mxu0 0.0
    %5702 = vmatpush1.msra.mxu0 0.0
    %5703 = vmatprep.subr.mxu0 0.0
    %5704 = vmatpush1.msra.mxu0 0.0
    %5705 = vmatprep.subr.mxu0 0.0
    %5706 = vmatpush1.msra.mxu0 0.0
    %5707 = vmatprep.subr.mxu0 0.0
    %5708 = vmatpush1.msra.mxu0 0.0
    %5709 = vmatprep.subr.mxu0 0.0
    %5710 = vmatpush1.msra.mxu0 0.0
    %5711 = vmatprep.subr.mxu0 0.0
    %5712 = vmatpush1.msra.mxu0 0.0
    %5713 = vmatprep.subr.mxu0 0.0
    %5714 = vmatpush1.msra.mxu0 0.0
    %5715 = vmatprep.subr.mxu0 0.0
    %5716 = vmatpush1.msra.mxu0 0.0
    %5717 = vmatprep.subr.mxu0 0.0
    %5718 = vmatpush1.msra.mxu0 0.0
    %5719 = vmatprep.subr.mxu0 0.0
    %5720 = vmatpush1.msra.mxu0 0.0
    %5721 = vmatprep.subr.mxu0 0.0
    %5722 = vmatpush1.msra.mxu0 0.0
    %5723 = vmatprep.subr.mxu0 0.0
    %5724 = vmatpush1.msra.mxu0 0.0
    %5725 = vmatprep.subr.mxu0 0.0
    %5726 = vmatpush1.msra.mxu0 0.0
    %5727 = vmatprep.subr.mxu0 0.0
    %5728 = vmatpush1.msra.mxu0 0.0
    %5729 = vmatprep.subr.mxu0 0.0
    %5730 = vmatpush1.msra.mxu0 0.0
    %5731 = vmatprep.subr.mxu0 0.0
    %5732 = vmatpush1.msra.mxu0 0.0
    %5733 = vmatprep.subr.mxu0 0.0
    %5734 = vmatpush1.msra.mxu0 0.0
    %5735 = vmatprep.subr.mxu0 0.0
    %5736 = vmatpush1.msra.mxu0 0.0
    %5737 = vmatprep.subr.mxu0 0.0
    %5738 = vmatpush1.msra.mxu0 0.0
    %5739 = vmatprep.subr.mxu0 0.0
    %5740 = vmatpush1.msra.mxu0 0.0
    %5741 = vmatprep.subr.mxu0 0.0
    %5742 = vmatpush1.msra.mxu0 0.0
    %5743 = vmatprep.subr.mxu0 0.0
    %5744 = vmatpush1.msra.mxu0 0.0
    %5745 = vmatprep.subr.mxu0 0.0
    %5746 = vmatpush1.msra.mxu0 0.0
    %5747 = vmatprep.mubr.f32.mxu0 0.0
    %5748 = vmatmul.mubr.f32.gmra.mrb[0].mxu0 %v5326
    %v5749 = vpop.f32.mrb[0].mxu0
    %v5750 = vadd.f32 0.0, %v5749
    %v5751 = vpop.f32.mrb[0].mxu0
    %v5752 = vadd.f32 0.0, %v5751
    %5753 = vdwg.mxu0
    %5754 = vmatprep.subr.mxu0 %v5170
    %5755 = vmatpush1.msra.mxu0 %v5169
    %5756 = vmatprep.subr.mxu0 %v5198
    %5757 = vmatpush1.msra.mxu0 %v5197
    %5758 = vmatprep.subr.mxu0 %v5226
    %5759 = vmatpush1.msra.mxu0 %v5225
    %5760 = vmatprep.subr.mxu0 0.0
    %5761 = vmatpush1.msra.mxu0 0.0
    %5762 = vmatprep.subr.mxu0 0.0
    %5763 = vmatpush1.msra.mxu0 0.0
    %5764 = vmatprep.subr.mxu0 0.0
    %5765 = vmatpush1.msra.mxu0 0.0
    %5766 = vmatprep.subr.mxu0 0.0
    %5767 = vmatpush1.msra.mxu0 0.0
    %5768 = vmatprep.subr.mxu0 0.0
    %5769 = vmatpush1.msra.mxu0 0.0
    %5770 = vmatprep.subr.mxu0 0.0
    %5771 = vmatpush1.msra.mxu0 0.0
    %5772 = vmatprep.subr.mxu0 0.0
    %5773 = vmatpush1.msra.mxu0 0.0
    %5774 = vmatprep.subr.mxu0 0.0
    %5775 = vmatpush1.msra.mxu0 0.0
    %5776 = vmatprep.subr.mxu0 0.0
    %5777 = vmatpush1.msra.mxu0 0.0
    %5778 = vmatprep.subr.mxu0 0.0
    %5779 = vmatpush1.msra.mxu0 0.0
    %5780 = vmatprep.subr.mxu0 0.0
    %5781 = vmatpush1.msra.mxu0 0.0
    %5782 = vmatprep.subr.mxu0 0.0
    %5783 = vmatpush1.msra.mxu0 0.0
    %5784 = vmatprep.subr.mxu0 0.0
    %5785 = vmatpush1.msra.mxu0 0.0
    %5786 = vmatprep.subr.mxu0 0.0
    %5787 = vmatpush1.msra.mxu0 0.0
    %5788 = vmatprep.subr.mxu0 0.0
    %5789 = vmatpush1.msra.mxu0 0.0
    %5790 = vmatprep.subr.mxu0 0.0
    %5791 = vmatpush1.msra.mxu0 0.0
    %5792 = vmatprep.subr.mxu0 0.0
    %5793 = vmatpush1.msra.mxu0 0.0
    %5794 = vmatprep.subr.mxu0 0.0
    %5795 = vmatpush1.msra.mxu0 0.0
    %5796 = vmatprep.subr.mxu0 0.0
    %5797 = vmatpush1.msra.mxu0 0.0
    %5798 = vmatprep.subr.mxu0 0.0
    %5799 = vmatpush1.msra.mxu0 0.0
    %5800 = vmatprep.subr.mxu0 0.0
    %5801 = vmatpush1.msra.mxu0 0.0
    %5802 = vmatprep.subr.mxu0 0.0
    %5803 = vmatpush1.msra.mxu0 0.0
    %5804 = vmatprep.subr.mxu0 0.0
    %5805 = vmatpush1.msra.mxu0 0.0
    %5806 = vmatprep.subr.mxu0 0.0
    %5807 = vmatpush1.msra.mxu0 0.0
    %5808 = vmatprep.subr.mxu0 0.0
    %5809 = vmatpush1.msra.mxu0 0.0
    %5810 = vmatprep.subr.mxu0 0.0
    %5811 = vmatpush1.msra.mxu0 0.0
    %5812 = vmatprep.subr.mxu0 0.0
    %5813 = vmatpush1.msra.mxu0 0.0
    %5814 = vmatprep.subr.mxu0 0.0
    %5815 = vmatpush1.msra.mxu0 0.0
    %5816 = vmatprep.subr.mxu0 0.0
    %5817 = vmatpush1.msra.mxu0 0.0
    %5818 = vmatprep.mubr.f32.mxu0 0.0
    %5819 = vmatmul.mubr.f32.gmra.mrb[0].mxu0 %v5326
    %v5820 = vpop.f32.mrb[0].mxu0
    %v5821 = vadd.f32 0.0, %v5820
    %v5822 = vpop.f32.mrb[0].mxu0
    %v5823 = vadd.f32 0.0, %v5822
    %5824 = vdwg.mxu0
    %5825 = vmatprep.subr.mxu0 %v5172
    %5826 = vmatpush1.msra.mxu0 %v5171
    %5827 = vmatprep.subr.mxu0 %v5200
    %5828 = vmatpush1.msra.mxu0 %v5199
    %5829 = vmatprep.subr.mxu0 %v5228
    %5830 = vmatpush1.msra.mxu0 %v5227
    %5831 = vmatprep.subr.mxu0 0.0
    %5832 = vmatpush1.msra.mxu0 0.0
    %5833 = vmatprep.subr.mxu0 0.0
    %5834 = vmatpush1.msra.mxu0 0.0
    %5835 = vmatprep.subr.mxu0 0.0
    %5836 = vmatpush1.msra.mxu0 0.0
    %5837 = vmatprep.subr.mxu0 0.0
    %5838 = vmatpush1.msra.mxu0 0.0
    %5839 = vmatprep.subr.mxu0 0.0
    %5840 = vmatpush1.msra.mxu0 0.0
    %5841 = vmatprep.subr.mxu0 0.0
    %5842 = vmatpush1.msra.mxu0 0.0
    %5843 = vmatprep.subr.mxu0 0.0
    %5844 = vmatpush1.msra.mxu0 0.0
    %5845 = vmatprep.subr.mxu0 0.0
    %5846 = vmatpush1.msra.mxu0 0.0
    %5847 = vmatprep.subr.mxu0 0.0
    %5848 = vmatpush1.msra.mxu0 0.0
    %5849 = vmatprep.subr.mxu0 0.0
    %5850 = vmatpush1.msra.mxu0 0.0
    %5851 = vmatprep.subr.mxu0 0.0
    %5852 = vmatpush1.msra.mxu0 0.0
    %5853 = vmatprep.subr.mxu0 0.0
    %5854 = vmatpush1.msra.mxu0 0.0
    %5855 = vmatprep.subr.mxu0 0.0
    %5856 = vmatpush1.msra.mxu0 0.0
    %5857 = vmatprep.subr.mxu0 0.0
    %5858 = vmatpush1.msra.mxu0 0.0
    %5859 = vmatprep.subr.mxu0 0.0
    %5860 = vmatpush1.msra.mxu0 0.0
    %5861 = vmatprep.subr.mxu0 0.0
    %5862 = vmatpush1.msra.mxu0 0.0
    %5863 = vmatprep.subr.mxu0 0.0
    %5864 = vmatpush1.msra.mxu0 0.0
    %5865 = vmatprep.subr.mxu0 0.0
    %5866 = vmatpush1.msra.mxu0 0.0
    %5867 = vmatprep.subr.mxu0 0.0
    %5868 = vmatpush1.msra.mxu0 0.0
    %5869 = vmatprep.subr.mxu0 0.0
    %5870 = vmatpush1.msra.mxu0 0.0
    %5871 = vmatprep.subr.mxu0 0.0
    %5872 = vmatpush1.msra.mxu0 0.0
    %5873 = vmatprep.subr.mxu0 0.0
    %5874 = vmatpush1.msra.mxu0 0.0
    %5875 = vmatprep.subr.mxu0 0.0
    %5876 = vmatpush1.msra.mxu0 0.0
    %5877 = vmatprep.subr.mxu0 0.0
    %5878 = vmatpush1.msra.mxu0 0.0
    %5879 = vmatprep.subr.mxu0 0.0
    %5880 = vmatpush1.msra.mxu0 0.0
    %5881 = vmatprep.subr.mxu0 0.0
    %5882 = vmatpush1.msra.mxu0 0.0
    %5883 = vmatprep.subr.mxu0 0.0
    %5884 = vmatpush1.msra.mxu0 0.0
    %5885 = vmatprep.subr.mxu0 0.0
    %5886 = vmatpush1.msra.mxu0 0.0
    %5887 = vmatprep.subr.mxu0 0.0
    %5888 = vmatpush1.msra.mxu0 0.0
    %5889 = vmatprep.mubr.f32.mxu0 0.0
    %5890 = vmatmul.mubr.f32.gmra.mrb[0].mxu0 %v5326
    %v5891 = vpop.f32.mrb[0].mxu0
    %v5892 = vadd.f32 0.0, %v5891
    %v5893 = vpop.f32.mrb[0].mxu0
    %v5894 = vadd.f32 0.0, %v5893
    %5895 = vdwg.mxu0
    %5896 = vmatprep.subr.mxu0 %v5174
    %5897 = vmatpush1.msra.mxu0 %v5173
    %5898 = vmatprep.subr.mxu0 %v5202
    %5899 = vmatpush1.msra.mxu0 %v5201
    %5900 = vmatprep.subr.mxu0 %v5230
    %5901 = vmatpush1.msra.mxu0 %v5229
    %5902 = vmatprep.subr.mxu0 0.0
    %5903 = vmatpush1.msra.mxu0 0.0
    %5904 = vmatprep.subr.mxu0 0.0
    %5905 = vmatpush1.msra.mxu0 0.0
    %5906 = vmatprep.subr.mxu0 0.0
    %5907 = vmatpush1.msra.mxu0 0.0
    %5908 = vmatprep.subr.mxu0 0.0
    %5909 = vmatpush1.msra.mxu0 0.0
    %5910 = vmatprep.subr.mxu0 0.0
    %5911 = vmatpush1.msra.mxu0 0.0
    %5912 = vmatprep.subr.mxu0 0.0
    %5913 = vmatpush1.msra.mxu0 0.0
    %5914 = vmatprep.subr.mxu0 0.0
    %5915 = vmatpush1.msra.mxu0 0.0
    %5916 = vmatprep.subr.mxu0 0.0
    %5917 = vmatpush1.msra.mxu0 0.0
    %5918 = vmatprep.subr.mxu0 0.0
    %5919 = vmatpush1.msra.mxu0 0.0
    %5920 = vmatprep.subr.mxu0 0.0
    %5921 = vmatpush1.msra.mxu0 0.0
    %5922 = vmatprep.subr.mxu0 0.0
    %5923 = vmatpush1.msra.mxu0 0.0
    %5924 = vmatprep.subr.mxu0 0.0
    %5925 = vmatpush1.msra.mxu0 0.0
    %5926 = vmatprep.subr.mxu0 0.0
    %5927 = vmatpush1.msra.mxu0 0.0
    %5928 = vmatprep.subr.mxu0 0.0
    %5929 = vmatpush1.msra.mxu0 0.0
    %5930 = vmatprep.subr.mxu0 0.0
    %5931 = vmatpush1.msra.mxu0 0.0
    %5932 = vmatprep.subr.mxu0 0.0
    %5933 = vmatpush1.msra.mxu0 0.0
    %5934 = vmatprep.subr.mxu0 0.0
    %5935 = vmatpush1.msra.mxu0 0.0
    %5936 = vmatprep.subr.mxu0 0.0
    %5937 = vmatpush1.msra.mxu0 0.0
    %5938 = vmatprep.subr.mxu0 0.0
    %5939 = vmatpush1.msra.mxu0 0.0
    %5940 = vmatprep.subr.mxu0 0.0
    %5941 = vmatpush1.msra.mxu0 0.0
    %5942 = vmatprep.subr.mxu0 0.0
    %5943 = vmatpush1.msra.mxu0 0.0
    %5944 = vmatprep.subr.mxu0 0.0
    %5945 = vmatpush1.msra.mxu0 0.0
    %5946 = vmatprep.subr.mxu0 0.0
    %5947 = vmatpush1.msra.mxu0 0.0
    %5948 = vmatprep.subr.mxu0 0.0
    %5949 = vmatpush1.msra.mxu0 0.0
    %5950 = vmatprep.subr.mxu0 0.0
    %5951 = vmatpush1.msra.mxu0 0.0
    %5952 = vmatprep.subr.mxu0 0.0
    %5953 = vmatpush1.msra.mxu0 0.0
    %5954 = vmatprep.subr.mxu0 0.0
    %5955 = vmatpush1.msra.mxu0 0.0
    %5956 = vmatprep.subr.mxu0 0.0
    %5957 = vmatpush1.msra.mxu0 0.0
    %5958 = vmatprep.subr.mxu0 0.0
    %5959 = vmatpush1.msra.mxu0 0.0
    %5960 = vmatprep.mubr.f32.mxu0 0.0
    %5961 = vmatmul.mubr.f32.gmra.mrb[0].mxu0 %v5326
    %v5962 = vpop.f32.mrb[0].mxu0
    %v5963 = vadd.f32 0.0, %v5962
    %v5964 = vpop.f32.mrb[0].mxu0
    %v5965 = vadd.f32 0.0, %v5964
    %5966 = vdwg.mxu0
    %5967 = vmatprep.subr.mxu0 %v5176
    %5968 = vmatpush1.msra.mxu0 %v5175
    %5969 = vmatprep.subr.mxu0 %v5204
    %5970 = vmatpush1.msra.mxu0 %v5203
    %5971 = vmatprep.subr.mxu0 %v5232
    %5972 = vmatpush1.msra.mxu0 %v5231
    %5973 = vmatprep.subr.mxu0 0.0
    %5974 = vmatpush1.msra.mxu0 0.0
    %5975 = vmatprep.subr.mxu0 0.0
    %5976 = vmatpush1.msra.mxu0 0.0
    %5977 = vmatprep.subr.mxu0 0.0
    %5978 = vmatpush1.msra.mxu0 0.0
    %5979 = vmatprep.subr.mxu0 0.0
    %5980 = vmatpush1.msra.mxu0 0.0
    %5981 = vmatprep.subr.mxu0 0.0
    %5982 = vmatpush1.msra.mxu0 0.0
    %5983 = vmatprep.subr.mxu0 0.0
    %5984 = vmatpush1.msra.mxu0 0.0
    %5985 = vmatprep.subr.mxu0 0.0
    %5986 = vmatpush1.msra.mxu0 0.0
    %5987 = vmatprep.subr.mxu0 0.0
    %5988 = vmatpush1.msra.mxu0 0.0
    %5989 = vmatprep.subr.mxu0 0.0
    %5990 = vmatpush1.msra.mxu0 0.0
    %5991 = vmatprep.subr.mxu0 0.0
    %5992 = vmatpush1.msra.mxu0 0.0
    %5993 = vmatprep.subr.mxu0 0.0
    %5994 = vmatpush1.msra.mxu0 0.0
    %5995 = vmatprep.subr.mxu0 0.0
    %5996 = vmatpush1.msra.mxu0 0.0
    %5997 = vmatprep.subr.mxu0 0.0
    %5998 = vmatpush1.msra.mxu0 0.0
    %5999 = vmatprep.subr.mxu0 0.0
    %6000 = vmatpush1.msra.mxu0 0.0
    %6001 = vmatprep.subr.mxu0 0.0
    %6002 = vmatpush1.msra.mxu0 0.0
    %6003 = vmatprep.subr.mxu0 0.0
    %6004 = vmatpush1.msra.mxu0 0.0
    %6005 = vmatprep.subr.mxu0 0.0
    %6006 = vmatpush1.msra.mxu0 0.0
    %6007 = vmatprep.subr.mxu0 0.0
    %6008 = vmatpush1.msra.mxu0 0.0
    %6009 = vmatprep.subr.mxu0 0.0
    %6010 = vmatpush1.msra.mxu0 0.0
    %6011 = vmatprep.subr.mxu0 0.0
    %6012 = vmatpush1.msra.mxu0 0.0
    %6013 = vmatprep.subr.mxu0 0.0
    %6014 = vmatpush1.msra.mxu0 0.0
    %6015 = vmatprep.subr.mxu0 0.0
    %6016 = vmatpush1.msra.mxu0 0.0
    %6017 = vmatprep.subr.mxu0 0.0
    %6018 = vmatpush1.msra.mxu0 0.0
    %6019 = vmatprep.subr.mxu0 0.0
    %6020 = vmatpush1.msra.mxu0 0.0
    %6021 = vmatprep.subr.mxu0 0.0
    %6022 = vmatpush1.msra.mxu0 0.0
    %6023 = vmatprep.subr.mxu0 0.0
    %6024 = vmatpush1.msra.mxu0 0.0
    %6025 = vmatprep.subr.mxu0 0.0
    %6026 = vmatpush1.msra.mxu0 0.0
    %6027 = vmatprep.subr.mxu0 0.0
    %6028 = vmatpush1.msra.mxu0 0.0
    %6029 = vmatprep.subr.mxu0 0.0
    %6030 = vmatpush1.msra.mxu0 0.0
    %6031 = vmatprep.mubr.f32.mxu0 0.0
    %6032 = vmatmul.mubr.f32.gmra.mrb[0].mxu0 %v5326
    %v6033 = vpop.f32.mrb[0].mxu0
    %v6034 = vadd.f32 0.0, %v6033
    %v6035 = vpop.f32.mrb[0].mxu0
    %v6036 = vadd.f32 0.0, %v6035
    %6037 = vdwg.mxu0
    %6038 = vmatprep.subr.mxu0 %v5178
    %6039 = vmatpush1.msra.mxu0 %v5177
    %6040 = vmatprep.subr.mxu0 %v5206
    %6041 = vmatpush1.msra.mxu0 %v5205
    %6042 = vmatprep.subr.mxu0 %v5234
    %6043 = vmatpush1.msra.mxu0 %v5233
    %6044 = vmatprep.subr.mxu0 0.0
    %6045 = vmatpush1.msra.mxu0 0.0
    %6046 = vmatprep.subr.mxu0 0.0
    %6047 = vmatpush1.msra.mxu0 0.0
    %6048 = vmatprep.subr.mxu0 0.0
    %6049 = vmatpush1.msra.mxu0 0.0
    %6050 = vmatprep.subr.mxu0 0.0
    %6051 = vmatpush1.msra.mxu0 0.0
    %6052 = vmatprep.subr.mxu0 0.0
    %6053 = vmatpush1.msra.mxu0 0.0
    %6054 = vmatprep.subr.mxu0 0.0
    %6055 = vmatpush1.msra.mxu0 0.0
    %6056 = vmatprep.subr.mxu0 0.0
    %6057 = vmatpush1.msra.mxu0 0.0
    %6058 = vmatprep.subr.mxu0 0.0
    %6059 = vmatpush1.msra.mxu0 0.0
    %6060 = vmatprep.subr.mxu0 0.0
    %6061 = vmatpush1.msra.mxu0 0.0
    %6062 = vmatprep.subr.mxu0 0.0
    %6063 = vmatpush1.msra.mxu0 0.0
    %6064 = vmatprep.subr.mxu0 0.0
    %6065 = vmatpush1.msra.mxu0 0.0
    %6066 = vmatprep.subr.mxu0 0.0
    %6067 = vmatpush1.msra.mxu0 0.0
    %6068 = vmatprep.subr.mxu0 0.0
    %6069 = vmatpush1.msra.mxu0 0.0
    %6070 = vmatprep.subr.mxu0 0.0
    %6071 = vmatpush1.msra.mxu0 0.0
    %6072 = vmatprep.subr.mxu0 0.0
    %6073 = vmatpush1.msra.mxu0 0.0
    %6074 = vmatprep.subr.mxu0 0.0
    %6075 = vmatpush1.msra.mxu0 0.0
    %6076 = vmatprep.subr.mxu0 0.0
    %6077 = vmatpush1.msra.mxu0 0.0
    %6078 = vmatprep.subr.mxu0 0.0
    %6079 = vmatpush1.msra.mxu0 0.0
    %6080 = vmatprep.subr.mxu0 0.0
    %6081 = vmatpush1.msra.mxu0 0.0
    %6082 = vmatprep.subr.mxu0 0.0
    %6083 = vmatpush1.msra.mxu0 0.0
    %6084 = vmatprep.subr.mxu0 0.0
    %6085 = vmatpush1.msra.mxu0 0.0
    %6086 = vmatprep.subr.mxu0 0.0
    %6087 = vmatpush1.msra.mxu0 0.0
    %6088 = vmatprep.subr.mxu0 0.0
    %6089 = vmatpush1.msra.mxu0 0.0
    %6090 = vmatprep.subr.mxu0 0.0
    %6091 = vmatpush1.msra.mxu0 0.0
    %6092 = vmatprep.subr.mxu0 0.0
    %6093 = vmatpush1.msra.mxu0 0.0
    %6094 = vmatprep.subr.mxu0 0.0
    %6095 = vmatpush1.msra.mxu0 0.0
    %6096 = vmatprep.subr.mxu0 0.0
    %6097 = vmatpush1.msra.mxu0 0.0
    %6098 = vmatprep.subr.mxu0 0.0
    %6099 = vmatpush1.msra.mxu0 0.0
    %6100 = vmatprep.subr.mxu0 0.0
    %6101 = vmatpush1.msra.mxu0 0.0
    %6102 = vmatprep.mubr.f32.mxu0 0.0
    %6103 = vmatmul.mubr.f32.gmra.mrb[0].mxu0 %v5326
    %v6104 = vpop.f32.mrb[0].mxu0
    %v6105 = vadd.f32 0.0, %v6104
    %v6106 = vpop.f32.mrb[0].mxu0
    %v6107 = vadd.f32 0.0, %v6106
    %6108 = vdwg.mxu0
    %6109 = vmatprep.subr.mxu0 %v5180
    %6110 = vmatpush1.msra.mxu0 %v5179
    %6111 = vmatprep.subr.mxu0 %v5208
    %6112 = vmatpush1.msra.mxu0 %v5207
    %6113 = vmatprep.subr.mxu0 %v5236
    %6114 = vmatpush1.msra.mxu0 %v5235
    %6115 = vmatprep.subr.mxu0 0.0
    %6116 = vmatpush1.msra.mxu0 0.0
    %6117 = vmatprep.subr.mxu0 0.0
    %6118 = vmatpush1.msra.mxu0 0.0
    %6119 = vmatprep.subr.mxu0 0.0
    %6120 = vmatpush1.msra.mxu0 0.0
    %6121 = vmatprep.subr.mxu0 0.0
    %6122 = vmatpush1.msra.mxu0 0.0
    %6123 = vmatprep.subr.mxu0 0.0
    %6124 = vmatpush1.msra.mxu0 0.0
    %6125 = vmatprep.subr.mxu0 0.0
    %6126 = vmatpush1.msra.mxu0 0.0
    %6127 = vmatprep.subr.mxu0 0.0
    %6128 = vmatpush1.msra.mxu0 0.0
    %6129 = vmatprep.subr.mxu0 0.0
    %6130 = vmatpush1.msra.mxu0 0.0
    %6131 = vmatprep.subr.mxu0 0.0
    %6132 = vmatpush1.msra.mxu0 0.0
    %6133 = vmatprep.subr.mxu0 0.0
    %6134 = vmatpush1.msra.mxu0 0.0
    %6135 = vmatprep.subr.mxu0 0.0
    %6136 = vmatpush1.msra.mxu0 0.0
    %6137 = vmatprep.subr.mxu0 0.0
    %6138 = vmatpush1.msra.mxu0 0.0
    %6139 = vmatprep.subr.mxu0 0.0
    %6140 = vmatpush1.msra.mxu0 0.0
    %6141 = vmatprep.subr.mxu0 0.0
    %6142 = vmatpush1.msra.mxu0 0.0
    %6143 = vmatprep.subr.mxu0 0.0
    %6144 = vmatpush1.msra.mxu0 0.0
    %6145 = vmatprep.subr.mxu0 0.0
    %6146 = vmatpush1.msra.mxu0 0.0
    %6147 = vmatprep.subr.mxu0 0.0
    %6148 = vmatpush1.msra.mxu0 0.0
    %6149 = vmatprep.subr.mxu0 0.0
    %6150 = vmatpush1.msra.mxu0 0.0
    %6151 = vmatprep.subr.mxu0 0.0
    %6152 = vmatpush1.msra.mxu0 0.0
    %6153 = vmatprep.subr.mxu0 0.0
    %6154 = vmatpush1.msra.mxu0 0.0
    %6155 = vmatprep.subr.mxu0 0.0
    %6156 = vmatpush1.msra.mxu0 0.0
    %6157 = vmatprep.subr.mxu0 0.0
    %6158 = vmatpush1.msra.mxu0 0.0
    %6159 = vmatprep.subr.mxu0 0.0
    %6160 = vmatpush1.msra.mxu0 0.0
    %6161 = vmatprep.subr.mxu0 0.0
    %6162 = vmatpush1.msra.mxu0 0.0
    %6163 = vmatprep.subr.mxu0 0.0
    %6164 = vmatpush1.msra.mxu0 0.0
    %6165 = vmatprep.subr.mxu0 0.0
    %6166 = vmatpush1.msra.mxu0 0.0
    %6167 = vmatprep.subr.mxu0 0.0
    %6168 = vmatpush1.msra.mxu0 0.0
    %6169 = vmatprep.subr.mxu0 0.0
    %6170 = vmatpush1.msra.mxu0 0.0
    %6171 = vmatprep.subr.mxu0 0.0
    %6172 = vmatpush1.msra.mxu0 0.0
    %6173 = vmatprep.mubr.f32.mxu0 0.0
    %6174 = vmatmul.mubr.f32.gmra.mrb[0].mxu0 %v5326
    %v6175 = vpop.f32.mrb[0].mxu0
    %v6176 = vadd.f32 0.0, %v6175
    %v6177 = vpop.f32.mrb[0].mxu0
    %v6178 = vadd.f32 0.0, %v6177
    %6179 = vdwg.mxu0
    %6180 = vmatprep.subr.mxu0 %v5182
    %6181 = vmatpush1.msra.mxu0 %v5181
    %6182 = vmatprep.subr.mxu0 %v5210
    %6183 = vmatpush1.msra.mxu0 %v5209
    %6184 = vmatprep.subr.mxu0 %v5238
    %6185 = vmatpush1.msra.mxu0 %v5237
    %6186 = vmatprep.subr.mxu0 0.0
    %6187 = vmatpush1.msra.mxu0 0.0
    %6188 = vmatprep.subr.mxu0 0.0
    %6189 = vmatpush1.msra.mxu0 0.0
    %6190 = vmatprep.subr.mxu0 0.0
    %6191 = vmatpush1.msra.mxu0 0.0
    %6192 = vmatprep.subr.mxu0 0.0
    %6193 = vmatpush1.msra.mxu0 0.0
    %6194 = vmatprep.subr.mxu0 0.0
    %6195 = vmatpush1.msra.mxu0 0.0
    %6196 = vmatprep.subr.mxu0 0.0
    %6197 = vmatpush1.msra.mxu0 0.0
    %6198 = vmatprep.subr.mxu0 0.0
    %6199 = vmatpush1.msra.mxu0 0.0
    %6200 = vmatprep.subr.mxu0 0.0
    %6201 = vmatpush1.msra.mxu0 0.0
    %6202 = vmatprep.subr.mxu0 0.0
    %6203 = vmatpush1.msra.mxu0 0.0
    %6204 = vmatprep.subr.mxu0 0.0
    %6205 = vmatpush1.msra.mxu0 0.0
    %6206 = vmatprep.subr.mxu0 0.0
    %6207 = vmatpush1.msra.mxu0 0.0
    %6208 = vmatprep.subr.mxu0 0.0
    %6209 = vmatpush1.msra.mxu0 0.0
    %6210 = vmatprep.subr.mxu0 0.0
    %6211 = vmatpush1.msra.mxu0 0.0
    %6212 = vmatprep.subr.mxu0 0.0
    %6213 = vmatpush1.msra.mxu0 0.0
    %6214 = vmatprep.subr.mxu0 0.0
    %6215 = vmatpush1.msra.mxu0 0.0
    %6216 = vmatprep.subr.mxu0 0.0
    %6217 = vmatpush1.msra.mxu0 0.0
    %6218 = vmatprep.subr.mxu0 0.0
    %6219 = vmatpush1.msra.mxu0 0.0
    %6220 = vmatprep.subr.mxu0 0.0
    %6221 = vmatpush1.msra.mxu0 0.0
    %6222 = vmatprep.subr.mxu0 0.0
    %6223 = vmatpush1.msra.mxu0 0.0
    %6224 = vmatprep.subr.mxu0 0.0
    %6225 = vmatpush1.msra.mxu0 0.0
    %6226 = vmatprep.subr.mxu0 0.0
    %6227 = vmatpush1.msra.mxu0 0.0
    %6228 = vmatprep.subr.mxu0 0.0
    %6229 = vmatpush1.msra.mxu0 0.0
    %6230 = vmatprep.subr.mxu0 0.0
    %6231 = vmatpush1.msra.mxu0 0.0
    %6232 = vmatprep.subr.mxu0 0.0
    %6233 = vmatpush1.msra.mxu0 0.0
    %6234 = vmatprep.subr.mxu0 0.0
    %6235 = vmatpush1.msra.mxu0 0.0
    %6236 = vmatprep.subr.mxu0 0.0
    %6237 = vmatpush1.msra.mxu0 0.0
    %6238 = vmatprep.subr.mxu0 0.0
    %6239 = vmatpush1.msra.mxu0 0.0
    %6240 = vmatprep.subr.mxu0 0.0
    %6241 = vmatpush1.msra.mxu0 0.0
    %6242 = vmatprep.subr.mxu0 0.0
    %6243 = vmatpush1.msra.mxu0 0.0
    %6244 = vmatprep.mubr.f32.mxu0 0.0
    %6245 = vmatmul.mubr.f32.gmra.mrb[0].mxu0 %v5326
    %v6246 = vpop.f32.mrb[0].mxu0
    %v6247 = vadd.f32 0.0, %v6246
    %v6248 = vpop.f32.mrb[0].mxu0
    %v6249 = vadd.f32 0.0, %v6248
    %6250 = vdwg.mxu0
    %6251 = vmatprep.subr.mxu0 %v5184
    %6252 = vmatpush1.msra.mxu0 %v5183
    %6253 = vmatprep.subr.mxu0 %v5212
    %6254 = vmatpush1.msra.mxu0 %v5211
    %6255 = vmatprep.subr.mxu0 %v5240
    %6256 = vmatpush1.msra.mxu0 %v5239
    %6257 = vmatprep.subr.mxu0 0.0
    %6258 = vmatpush1.msra.mxu0 0.0
    %6259 = vmatprep.subr.mxu0 0.0
    %6260 = vmatpush1.msra.mxu0 0.0
    %6261 = vmatprep.subr.mxu0 0.0
    %6262 = vmatpush1.msra.mxu0 0.0
    %6263 = vmatprep.subr.mxu0 0.0
    %6264 = vmatpush1.msra.mxu0 0.0
    %6265 = vmatprep.subr.mxu0 0.0
    %6266 = vmatpush1.msra.mxu0 0.0
    %6267 = vmatprep.subr.mxu0 0.0
    %6268 = vmatpush1.msra.mxu0 0.0
    %6269 = vmatprep.subr.mxu0 0.0
    %6270 = vmatpush1.msra.mxu0 0.0
    %6271 = vmatprep.subr.mxu0 0.0
    %6272 = vmatpush1.msra.mxu0 0.0
    %6273 = vmatprep.subr.mxu0 0.0
    %6274 = vmatpush1.msra.mxu0 0.0
    %6275 = vmatprep.subr.mxu0 0.0
    %6276 = vmatpush1.msra.mxu0 0.0
    %6277 = vmatprep.subr.mxu0 0.0
    %6278 = vmatpush1.msra.mxu0 0.0
    %6279 = vmatprep.subr.mxu0 0.0
    %6280 = vmatpush1.msra.mxu0 0.0
    %6281 = vmatprep.subr.mxu0 0.0
    %6282 = vmatpush1.msra.mxu0 0.0
    %6283 = vmatprep.subr.mxu0 0.0
    %6284 = vmatpush1.msra.mxu0 0.0
    %6285 = vmatprep.subr.mxu0 0.0
    %6286 = vmatpush1.msra.mxu0 0.0
    %6287 = vmatprep.subr.mxu0 0.0
    %6288 = vmatpush1.msra.mxu0 0.0
    %6289 = vmatprep.subr.mxu0 0.0
    %6290 = vmatpush1.msra.mxu0 0.0
    %6291 = vmatprep.subr.mxu0 0.0
    %6292 = vmatpush1.msra.mxu0 0.0
    %6293 = vmatprep.subr.mxu0 0.0
    %6294 = vmatpush1.msra.mxu0 0.0
    %6295 = vmatprep.subr.mxu0 0.0
    %6296 = vmatpush1.msra.mxu0 0.0
    %6297 = vmatprep.subr.mxu0 0.0
    %6298 = vmatpush1.msra.mxu0 0.0
    %6299 = vmatprep.subr.mxu0 0.0
    %6300 = vmatpush1.msra.mxu0 0.0
    %6301 = vmatprep.subr.mxu0 0.0
    %6302 = vmatpush1.msra.mxu0 0.0
    %6303 = vmatprep.subr.mxu0 0.0
    %6304 = vmatpush1.msra.mxu0 0.0
    %6305 = vmatprep.subr.mxu0 0.0
    %6306 = vmatpush1.msra.mxu0 0.0
    %6307 = vmatprep.subr.mxu0 0.0
    %6308 = vmatpush1.msra.mxu0 0.0
    %6309 = vmatprep.subr.mxu0 0.0
    %6310 = vmatpush1.msra.mxu0 0.0
    %6311 = vmatprep.subr.mxu0 0.0
    %6312 = vmatpush1.msra.mxu0 0.0
    %6313 = vmatprep.subr.mxu0 0.0
    %6314 = vmatpush1.msra.mxu0 0.0
    %6315 = vmatprep.mubr.f32.mxu0 0.0
    %6316 = vmatmul.mubr.f32.gmra.mrb[0].mxu0 %v5326
    %v6317 = vpop.f32.mrb[0].mxu0
    %v6318 = vadd.f32 0.0, %v6317
    %v6319 = vpop.f32.mrb[0].mxu0
    %v6320 = vadd.f32 0.0, %v6319
    %6321 = vdwg.mxu0
    %v6323 = vsel %vm783, %v4981, 0
    %6325 = vmatprep.subr.mxu0 %v4696
    %6326 = vmatpush1.msra.mxu0 %v4695
    %6327 = vmatprep.subr.mxu0 %v4812
    %6328 = vmatpush1.msra.mxu0 %v4811
    %6329 = vmatprep.subr.mxu0 %v4926
    %6330 = vmatpush1.msra.mxu0 %v4925
    %6331 = vmatprep.subr.mxu0 0.0
    %6332 = vmatpush1.msra.mxu0 0.0
    %6333 = vmatprep.subr.mxu0 0.0
    %6334 = vmatpush1.msra.mxu0 0.0
    %6335 = vmatprep.subr.mxu0 0.0
    %6336 = vmatpush1.msra.mxu0 0.0
    %6337 = vmatprep.subr.mxu0 0.0
    %6338 = vmatpush1.msra.mxu0 0.0
    %6339 = vmatprep.subr.mxu0 0.0
    %6340 = vmatpush1.msra.mxu0 0.0
    %6341 = vmatprep.subr.mxu0 0.0
    %6342 = vmatpush1.msra.mxu0 0.0
    %6343 = vmatprep.subr.mxu0 0.0
    %6344 = vmatpush1.msra.mxu0 0.0
    %6345 = vmatprep.subr.mxu0 0.0
    %6346 = vmatpush1.msra.mxu0 0.0
    %6347 = vmatprep.subr.mxu0 0.0
    %6348 = vmatpush1.msra.mxu0 0.0
    %6349 = vmatprep.subr.mxu0 0.0
    %6350 = vmatpush1.msra.mxu0 0.0
    %6351 = vmatprep.subr.mxu0 0.0
    %6352 = vmatpush1.msra.mxu0 0.0
    %6353 = vmatprep.subr.mxu0 0.0
    %6354 = vmatpush1.msra.mxu0 0.0
    %6355 = vmatprep.subr.mxu0 0.0
    %6356 = vmatpush1.msra.mxu0 0.0
    %6357 = vmatprep.subr.mxu0 0.0
    %6358 = vmatpush1.msra.mxu0 0.0
    %6359 = vmatprep.subr.mxu0 0.0
    %6360 = vmatpush1.msra.mxu0 0.0
    %6361 = vmatprep.subr.mxu0 0.0
    %6362 = vmatpush1.msra.mxu0 0.0
    %6363 = vmatprep.subr.mxu0 0.0
    %6364 = vmatpush1.msra.mxu0 0.0
    %6365 = vmatprep.subr.mxu0 0.0
    %6366 = vmatpush1.msra.mxu0 0.0
    %6367 = vmatprep.subr.mxu0 0.0
    %6368 = vmatpush1.msra.mxu0 0.0
    %6369 = vmatprep.subr.mxu0 0.0
    %6370 = vmatpush1.msra.mxu0 0.0
    %6371 = vmatprep.subr.mxu0 0.0
    %6372 = vmatpush1.msra.mxu0 0.0
    %6373 = vmatprep.subr.mxu0 0.0
    %6374 = vmatpush1.msra.mxu0 0.0
    %6375 = vmatprep.subr.mxu0 0.0
    %6376 = vmatpush1.msra.mxu0 0.0
    %6377 = vmatprep.subr.mxu0 0.0
    %6378 = vmatpush1.msra.mxu0 0.0
    %6379 = vmatprep.subr.mxu0 0.0
    %6380 = vmatpush1.msra.mxu0 0.0
    %6381 = vmatprep.subr.mxu0 0.0
    %6382 = vmatpush1.msra.mxu0 0.0
    %6383 = vmatprep.subr.mxu0 0.0
    %6384 = vmatpush1.msra.mxu0 0.0
    %6385 = vmatprep.subr.mxu0 0.0
    %6386 = vmatpush1.msra.mxu0 0.0
    %6387 = vmatprep.subr.mxu0 0.0
    %6388 = vmatpush1.msra.mxu0 0.0
    %6389 = vmatprep.mubr.f32.mxu0 0.0
    %6390 = vmatmul.mubr.f32.gmra.mrb[0].mxu0 %v6323
    %v6391 = vpop.f32.mrb[0].mxu0
    %v6392 = vadd.f32 %v5395, %v6391
    %v6393 = vpop.f32.mrb[0].mxu0
    %v6394 = vadd.f32 %v5397, %v6393
    %6395 = vdwg.mxu0
    %6396 = vmatprep.subr.mxu0 %v4698
    %6397 = vmatpush1.msra.mxu0 %v4697
    %6398 = vmatprep.subr.mxu0 %v4814
    %6399 = vmatpush1.msra.mxu0 %v4813
    %6400 = vmatprep.subr.mxu0 %v4928
    %6401 = vmatpush1.msra.mxu0 %v4927
    %6402 = vmatprep.subr.mxu0 0.0
    %6403 = vmatpush1.msra.mxu0 0.0
    %6404 = vmatprep.subr.mxu0 0.0
    %6405 = vmatpush1.msra.mxu0 0.0
    %6406 = vmatprep.subr.mxu0 0.0
    %6407 = vmatpush1.msra.mxu0 0.0
    %6408 = vmatprep.subr.mxu0 0.0
    %6409 = vmatpush1.msra.mxu0 0.0
    %6410 = vmatprep.subr.mxu0 0.0
    %6411 = vmatpush1.msra.mxu0 0.0
    %6412 = vmatprep.subr.mxu0 0.0
    %6413 = vmatpush1.msra.mxu0 0.0
    %6414 = vmatprep.subr.mxu0 0.0
    %6415 = vmatpush1.msra.mxu0 0.0
    %6416 = vmatprep.subr.mxu0 0.0
    %6417 = vmatpush1.msra.mxu0 0.0
    %6418 = vmatprep.subr.mxu0 0.0
    %6419 = vmatpush1.msra.mxu0 0.0
    %6420 = vmatprep.subr.mxu0 0.0
    %6421 = vmatpush1.msra.mxu0 0.0
    %6422 = vmatprep.subr.mxu0 0.0
    %6423 = vmatpush1.msra.mxu0 0.0
    %6424 = vmatprep.subr.mxu0 0.0
    %6425 = vmatpush1.msra.mxu0 0.0
    %6426 = vmatprep.subr.mxu0 0.0
    %6427 = vmatpush1.msra.mxu0 0.0
    %6428 = vmatprep.subr.mxu0 0.0
    %6429 = vmatpush1.msra.mxu0 0.0
    %6430 = vmatprep.subr.mxu0 0.0
    %6431 = vmatpush1.msra.mxu0 0.0
    %6432 = vmatprep.subr.mxu0 0.0
    %6433 = vmatpush1.msra.mxu0 0.0
    %6434 = vmatprep.subr.mxu0 0.0
    %6435 = vmatpush1.msra.mxu0 0.0
    %6436 = vmatprep.subr.mxu0 0.0
    %6437 = vmatpush1.msra.mxu0 0.0
    %6438 = vmatprep.subr.mxu0 0.0
    %6439 = vmatpush1.msra.mxu0 0.0
    %6440 = vmatprep.subr.mxu0 0.0
    %6441 = vmatpush1.msra.mxu0 0.0
    %6442 = vmatprep.subr.mxu0 0.0
    %6443 = vmatpush1.msra.mxu0 0.0
    %6444 = vmatprep.subr.mxu0 0.0
    %6445 = vmatpush1.msra.mxu0 0.0
    %6446 = vmatprep.subr.mxu0 0.0
    %6447 = vmatpush1.msra.mxu0 0.0
    %6448 = vmatprep.subr.mxu0 0.0
    %6449 = vmatpush1.msra.mxu0 0.0
    %6450 = vmatprep.subr.mxu0 0.0
    %6451 = vmatpush1.msra.mxu0 0.0
    %6452 = vmatprep.subr.mxu0 0.0
    %6453 = vmatpush1.msra.mxu0 0.0
    %6454 = vmatprep.subr.mxu0 0.0
    %6455 = vmatpush1.msra.mxu0 0.0
    %6456 = vmatprep.subr.mxu0 0.0
    %6457 = vmatpush1.msra.mxu0 0.0
    %6458 = vmatprep.subr.mxu0 0.0
    %6459 = vmatpush1.msra.mxu0 0.0
    %6460 = vmatprep.mubr.f32.mxu0 0.0
    %6461 = vmatmul.mubr.f32.gmra.mrb[0].mxu0 %v6323
    %v6462 = vpop.f32.mrb[0].mxu0
    %v6463 = vadd.f32 %v5466, %v6462
    %v6464 = vpop.f32.mrb[0].mxu0
    %v6465 = vadd.f32 %v5468, %v6464
    %6466 = vdwg.mxu0
    %6467 = vmatprep.subr.mxu0 %v4700
    %6468 = vmatpush1.msra.mxu0 %v4699
    %6469 = vmatprep.subr.mxu0 %v4816
    %6470 = vmatpush1.msra.mxu0 %v4815
    %6471 = vmatprep.subr.mxu0 %v4930
    %6472 = vmatpush1.msra.mxu0 %v4929
    %6473 = vmatprep.subr.mxu0 0.0
    %6474 = vmatpush1.msra.mxu0 0.0
    %6475 = vmatprep.subr.mxu0 0.0
    %6476 = vmatpush1.msra.mxu0 0.0
    %6477 = vmatprep.subr.mxu0 0.0
    %6478 = vmatpush1.msra.mxu0 0.0
    %6479 = vmatprep.subr.mxu0 0.0
    %6480 = vmatpush1.msra.mxu0 0.0
    %6481 = vmatprep.subr.mxu0 0.0
    %6482 = vmatpush1.msra.mxu0 0.0
    %6483 = vmatprep.subr.mxu0 0.0
    %6484 = vmatpush1.msra.mxu0 0.0
    %6485 = vmatprep.subr.mxu0 0.0
    %6486 = vmatpush1.msra.mxu0 0.0
    %6487 = vmatprep.subr.mxu0 0.0
    %6488 = vmatpush1.msra.mxu0 0.0
    %6489 = vmatprep.subr.mxu0 0.0
    %6490 = vmatpush1.msra.mxu0 0.0
    %6491 = vmatprep.subr.mxu0 0.0
    %6492 = vmatpush1.msra.mxu0 0.0
    %6493 = vmatprep.subr.mxu0 0.0
    %6494 = vmatpush1.msra.mxu0 0.0
    %6495 = vmatprep.subr.mxu0 0.0
    %6496 = vmatpush1.msra.mxu0 0.0
    %6497 = vmatprep.subr.mxu0 0.0
    %6498 = vmatpush1.msra.mxu0 0.0
    %6499 = vmatprep.subr.mxu0 0.0
    %6500 = vmatpush1.msra.mxu0 0.0
    %6501 = vmatprep.subr.mxu0 0.0
    %6502 = vmatpush1.msra.mxu0 0.0
    %6503 = vmatprep.subr.mxu0 0.0
    %6504 = vmatpush1.msra.mxu0 0.0
    %6505 = vmatprep.subr.mxu0 0.0
    %6506 = vmatpush1.msra.mxu0 0.0
    %6507 = vmatprep.subr.mxu0 0.0
    %6508 = vmatpush1.msra.mxu0 0.0
    %6509 = vmatprep.subr.mxu0 0.0
    %6510 = vmatpush1.msra.mxu0 0.0
    %6511 = vmatprep.subr.mxu0 0.0
    %6512 = vmatpush1.msra.mxu0 0.0
    %6513 = vmatprep.subr.mxu0 0.0
    %6514 = vmatpush1.msra.mxu0 0.0
    %6515 = vmatprep.subr.mxu0 0.0
    %6516 = vmatpush1.msra.mxu0 0.0
    %6517 = vmatprep.subr.mxu0 0.0
    %6518 = vmatpush1.msra.mxu0 0.0
    %6519 = vmatprep.subr.mxu0 0.0
    %6520 = vmatpush1.msra.mxu0 0.0
    %6521 = vmatprep.subr.mxu0 0.0
    %6522 = vmatpush1.msra.mxu0 0.0
    %6523 = vmatprep.subr.mxu0 0.0
    %6524 = vmatpush1.msra.mxu0 0.0
    %6525 = vmatprep.subr.mxu0 0.0
    %6526 = vmatpush1.msra.mxu0 0.0
    %6527 = vmatprep.subr.mxu0 0.0
    %6528 = vmatpush1.msra.mxu0 0.0
    %6529 = vmatprep.subr.mxu0 0.0
    %6530 = vmatpush1.msra.mxu0 0.0
    %6531 = vmatprep.mubr.f32.mxu0 0.0
    %6532 = vmatmul.mubr.f32.gmra.mrb[0].mxu0 %v6323
    %v6533 = vpop.f32.mrb[0].mxu0
    %v6534 = vadd.f32 %v5537, %v6533
    %v6535 = vpop.f32.mrb[0].mxu0
    %v6536 = vadd.f32 %v5539, %v6535
    %6537 = vdwg.mxu0
    %6538 = vmatprep.subr.mxu0 %v4702
    %6539 = vmatpush1.msra.mxu0 %v4701
    %6540 = vmatprep.subr.mxu0 %v4818
    %6541 = vmatpush1.msra.mxu0 %v4817
    %6542 = vmatprep.subr.mxu0 %v4932
    %6543 = vmatpush1.msra.mxu0 %v4931
    %6544 = vmatprep.subr.mxu0 0.0
    %6545 = vmatpush1.msra.mxu0 0.0
    %6546 = vmatprep.subr.mxu0 0.0
    %6547 = vmatpush1.msra.mxu0 0.0
    %6548 = vmatprep.subr.mxu0 0.0
    %6549 = vmatpush1.msra.mxu0 0.0
    %6550 = vmatprep.subr.mxu0 0.0
    %6551 = vmatpush1.msra.mxu0 0.0
    %6552 = vmatprep.subr.mxu0 0.0
    %6553 = vmatpush1.msra.mxu0 0.0
    %6554 = vmatprep.subr.mxu0 0.0
    %6555 = vmatpush1.msra.mxu0 0.0
    %6556 = vmatprep.subr.mxu0 0.0
    %6557 = vmatpush1.msra.mxu0 0.0
    %6558 = vmatprep.subr.mxu0 0.0
    %6559 = vmatpush1.msra.mxu0 0.0
    %6560 = vmatprep.subr.mxu0 0.0
    %6561 = vmatpush1.msra.mxu0 0.0
    %6562 = vmatprep.subr.mxu0 0.0
    %6563 = vmatpush1.msra.mxu0 0.0
    %6564 = vmatprep.subr.mxu0 0.0
    %6565 = vmatpush1.msra.mxu0 0.0
    %6566 = vmatprep.subr.mxu0 0.0
    %6567 = vmatpush1.msra.mxu0 0.0
    %6568 = vmatprep.subr.mxu0 0.0
    %6569 = vmatpush1.msra.mxu0 0.0
    %6570 = vmatprep.subr.mxu0 0.0
    %6571 = vmatpush1.msra.mxu0 0.0
    %6572 = vmatprep.subr.mxu0 0.0
    %6573 = vmatpush1.msra.mxu0 0.0
    %6574 = vmatprep.subr.mxu0 0.0
    %6575 = vmatpush1.msra.mxu0 0.0
    %6576 = vmatprep.subr.mxu0 0.0
    %6577 = vmatpush1.msra.mxu0 0.0
    %6578 = vmatprep.subr.mxu0 0.0
    %6579 = vmatpush1.msra.mxu0 0.0
    %6580 = vmatprep.subr.mxu0 0.0
    %6581 = vmatpush1.msra.mxu0 0.0
    %6582 = vmatprep.subr.mxu0 0.0
    %6583 = vmatpush1.msra.mxu0 0.0
    %6584 = vmatprep.subr.mxu0 0.0
    %6585 = vmatpush1.msra.mxu0 0.0
    %6586 = vmatprep.subr.mxu0 0.0
    %6587 = vmatpush1.msra.mxu0 0.0
    %6588 = vmatprep.subr.mxu0 0.0
    %6589 = vmatpush1.msra.mxu0 0.0
    %6590 = vmatprep.subr.mxu0 0.0
    %6591 = vmatpush1.msra.mxu0 0.0
    %6592 = vmatprep.subr.mxu0 0.0
    %6593 = vmatpush1.msra.mxu0 0.0
    %6594 = vmatprep.subr.mxu0 0.0
    %6595 = vmatpush1.msra.mxu0 0.0
    %6596 = vmatprep.subr.mxu0 0.0
    %6597 = vmatpush1.msra.mxu0 0.0
    %6598 = vmatprep.subr.mxu0 0.0
    %6599 = vmatpush1.msra.mxu0 0.0
    %6600 = vmatprep.subr.mxu0 0.0
    %6601 = vmatpush1.msra.mxu0 0.0
    %6602 = vmatprep.mubr.f32.mxu0 0.0
    %6603 = vmatmul.mubr.f32.gmra.mrb[0].mxu0 %v6323
    %v6604 = vpop.f32.mrb[0].mxu0
    %v6605 = vadd.f32 %v5608, %v6604
    %v6606 = vpop.f32.mrb[0].mxu0
    %v6607 = vadd.f32 %v5610, %v6606
    %6608 = vdwg.mxu0
    %6609 = vmatprep.subr.mxu0 %v4704
    %6610 = vmatpush1.msra.mxu0 %v4703
    %6611 = vmatprep.subr.mxu0 %v4820
    %6612 = vmatpush1.msra.mxu0 %v4819
    %6613 = vmatprep.subr.mxu0 %v4934
    %6614 = vmatpush1.msra.mxu0 %v4933
    %6615 = vmatprep.subr.mxu0 0.0
    %6616 = vmatpush1.msra.mxu0 0.0
    %6617 = vmatprep.subr.mxu0 0.0
    %6618 = vmatpush1.msra.mxu0 0.0
    %6619 = vmatprep.subr.mxu0 0.0
    %6620 = vmatpush1.msra.mxu0 0.0
    %6621 = vmatprep.subr.mxu0 0.0
    %6622 = vmatpush1.msra.mxu0 0.0
    %6623 = vmatprep.subr.mxu0 0.0
    %6624 = vmatpush1.msra.mxu0 0.0
    %6625 = vmatprep.subr.mxu0 0.0
    %6626 = vmatpush1.msra.mxu0 0.0
    %6627 = vmatprep.subr.mxu0 0.0
    %6628 = vmatpush1.msra.mxu0 0.0
    %6629 = vmatprep.subr.mxu0 0.0
    %6630 = vmatpush1.msra.mxu0 0.0
    %6631 = vmatprep.subr.mxu0 0.0
    %6632 = vmatpush1.msra.mxu0 0.0
    %6633 = vmatprep.subr.mxu0 0.0
    %6634 = vmatpush1.msra.mxu0 0.0
    %6635 = vmatprep.subr.mxu0 0.0
    %6636 = vmatpush1.msra.mxu0 0.0
    %6637 = vmatprep.subr.mxu0 0.0
    %6638 = vmatpush1.msra.mxu0 0.0
    %6639 = vmatprep.subr.mxu0 0.0
    %6640 = vmatpush1.msra.mxu0 0.0
    %6641 = vmatprep.subr.mxu0 0.0
    %6642 = vmatpush1.msra.mxu0 0.0
    %6643 = vmatprep.subr.mxu0 0.0
    %6644 = vmatpush1.msra.mxu0 0.0
    %6645 = vmatprep.subr.mxu0 0.0
    %6646 = vmatpush1.msra.mxu0 0.0
    %6647 = vmatprep.subr.mxu0 0.0
    %6648 = vmatpush1.msra.mxu0 0.0
    %6649 = vmatprep.subr.mxu0 0.0
    %6650 = vmatpush1.msra.mxu0 0.0
    %6651 = vmatprep.subr.mxu0 0.0
    %6652 = vmatpush1.msra.mxu0 0.0
    %6653 = vmatprep.subr.mxu0 0.0
    %6654 = vmatpush1.msra.mxu0 0.0
    %6655 = vmatprep.subr.mxu0 0.0
    %6656 = vmatpush1.msra.mxu0 0.0
    %6657 = vmatprep.subr.mxu0 0.0
    %6658 = vmatpush1.msra.mxu0 0.0
    %6659 = vmatprep.subr.mxu0 0.0
    %6660 = vmatpush1.msra.mxu0 0.0
    %6661 = vmatprep.subr.mxu0 0.0
    %6662 = vmatpush1.msra.mxu0 0.0
    %6663 = vmatprep.subr.mxu0 0.0
    %6664 = vmatpush1.msra.mxu0 0.0
    %6665 = vmatprep.subr.mxu0 0.0
    %6666 = vmatpush1.msra.mxu0 0.0
    %6667 = vmatprep.subr.mxu0 0.0
    %6668 = vmatpush1.msra.mxu0 0.0
    %6669 = vmatprep.subr.mxu0 0.0
    %6670 = vmatpush1.msra.mxu0 0.0
    %6671 = vmatprep.subr.mxu0 0.0
    %6672 = vmatpush1.msra.mxu0 0.0
    %6673 = vmatprep.mubr.f32.mxu0 0.0
    %6674 = vmatmul.mubr.f32.gmra.mrb[0].mxu0 %v6323
    %v6675 = vpop.f32.mrb[0].mxu0
    %v6676 = vadd.f32 %v5679, %v6675
    %v6677 = vpop.f32.mrb[0].mxu0
    %v6678 = vadd.f32 %v5681, %v6677
    %6679 = vdwg.mxu0
    %6680 = vmatprep.subr.mxu0 %v4706
    %6681 = vmatpush1.msra.mxu0 %v4705
    %6682 = vmatprep.subr.mxu0 %v4822
    %6683 = vmatpush1.msra.mxu0 %v4821
    %6684 = vmatprep.subr.mxu0 %v4936
    %6685 = vmatpush1.msra.mxu0 %v4935
    %6686 = vmatprep.subr.mxu0 0.0
    %6687 = vmatpush1.msra.mxu0 0.0
    %6688 = vmatprep.subr.mxu0 0.0
    %6689 = vmatpush1.msra.mxu0 0.0
    %6690 = vmatprep.subr.mxu0 0.0
    %6691 = vmatpush1.msra.mxu0 0.0
    %6692 = vmatprep.subr.mxu0 0.0
    %6693 = vmatpush1.msra.mxu0 0.0
    %6694 = vmatprep.subr.mxu0 0.0
    %6695 = vmatpush1.msra.mxu0 0.0
    %6696 = vmatprep.subr.mxu0 0.0
    %6697 = vmatpush1.msra.mxu0 0.0
    %6698 = vmatprep.subr.mxu0 0.0
    %6699 = vmatpush1.msra.mxu0 0.0
    %6700 = vmatprep.subr.mxu0 0.0
    %6701 = vmatpush1.msra.mxu0 0.0
    %6702 = vmatprep.subr.mxu0 0.0
    %6703 = vmatpush1.msra.mxu0 0.0
    %6704 = vmatprep.subr.mxu0 0.0
    %6705 = vmatpush1.msra.mxu0 0.0
    %6706 = vmatprep.subr.mxu0 0.0
    %6707 = vmatpush1.msra.mxu0 0.0
    %6708 = vmatprep.subr.mxu0 0.0
    %6709 = vmatpush1.msra.mxu0 0.0
    %6710 = vmatprep.subr.mxu0 0.0
    %6711 = vmatpush1.msra.mxu0 0.0
    %6712 = vmatprep.subr.mxu0 0.0
    %6713 = vmatpush1.msra.mxu0 0.0
    %6714 = vmatprep.subr.mxu0 0.0
    %6715 = vmatpush1.msra.mxu0 0.0
    %6716 = vmatprep.subr.mxu0 0.0
    %6717 = vmatpush1.msra.mxu0 0.0
    %6718 = vmatprep.subr.mxu0 0.0
    %6719 = vmatpush1.msra.mxu0 0.0
    %6720 = vmatprep.subr.mxu0 0.0
    %6721 = vmatpush1.msra.mxu0 0.0
    %6722 = vmatprep.subr.mxu0 0.0
    %6723 = vmatpush1.msra.mxu0 0.0
    %6724 = vmatprep.subr.mxu0 0.0
    %6725 = vmatpush1.msra.mxu0 0.0
    %6726 = vmatprep.subr.mxu0 0.0
    %6727 = vmatpush1.msra.mxu0 0.0
    %6728 = vmatprep.subr.mxu0 0.0
    %6729 = vmatpush1.msra.mxu0 0.0
    %6730 = vmatprep.subr.mxu0 0.0
    %6731 = vmatpush1.msra.mxu0 0.0
    %6732 = vmatprep.subr.mxu0 0.0
    %6733 = vmatpush1.msra.mxu0 0.0
    %6734 = vmatprep.subr.mxu0 0.0
    %6735 = vmatpush1.msra.mxu0 0.0
    %6736 = vmatprep.subr.mxu0 0.0
    %6737 = vmatpush1.msra.mxu0 0.0
    %6738 = vmatprep.subr.mxu0 0.0
    %6739 = vmatpush1.msra.mxu0 0.0
    %6740 = vmatprep.subr.mxu0 0.0
    %6741 = vmatpush1.msra.mxu0 0.0
    %6742 = vmatprep.subr.mxu0 0.0
    %6743 = vmatpush1.msra.mxu0 0.0
    %6744 = vmatprep.mubr.f32.mxu0 0.0
    %6745 = vmatmul.mubr.f32.gmra.mrb[0].mxu0 %v6323
    %v6746 = vpop.f32.mrb[0].mxu0
    %v6747 = vadd.f32 %v5750, %v6746
    %v6748 = vpop.f32.mrb[0].mxu0
    %v6749 = vadd.f32 %v5752, %v6748
    %6750 = vdwg.mxu0
    %6751 = vmatprep.subr.mxu0 %v4708
    %6752 = vmatpush1.msra.mxu0 %v4707
    %6753 = vmatprep.subr.mxu0 %v4824
    %6754 = vmatpush1.msra.mxu0 %v4823
    %6755 = vmatprep.subr.mxu0 %v4938
    %6756 = vmatpush1.msra.mxu0 %v4937
    %6757 = vmatprep.subr.mxu0 0.0
    %6758 = vmatpush1.msra.mxu0 0.0
    %6759 = vmatprep.subr.mxu0 0.0
    %6760 = vmatpush1.msra.mxu0 0.0
    %6761 = vmatprep.subr.mxu0 0.0
    %6762 = vmatpush1.msra.mxu0 0.0
    %6763 = vmatprep.subr.mxu0 0.0
    %6764 = vmatpush1.msra.mxu0 0.0
    %6765 = vmatprep.subr.mxu0 0.0
    %6766 = vmatpush1.msra.mxu0 0.0
    %6767 = vmatprep.subr.mxu0 0.0
    %6768 = vmatpush1.msra.mxu0 0.0
    %6769 = vmatprep.subr.mxu0 0.0
    %6770 = vmatpush1.msra.mxu0 0.0
    %6771 = vmatprep.subr.mxu0 0.0
    %6772 = vmatpush1.msra.mxu0 0.0
    %6773 = vmatprep.subr.mxu0 0.0
    %6774 = vmatpush1.msra.mxu0 0.0
    %6775 = vmatprep.subr.mxu0 0.0
    %6776 = vmatpush1.msra.mxu0 0.0
    %6777 = vmatprep.subr.mxu0 0.0
    %6778 = vmatpush1.msra.mxu0 0.0
    %6779 = vmatprep.subr.mxu0 0.0
    %6780 = vmatpush1.msra.mxu0 0.0
    %6781 = vmatprep.subr.mxu0 0.0
    %6782 = vmatpush1.msra.mxu0 0.0
    %6783 = vmatprep.subr.mxu0 0.0
    %6784 = vmatpush1.msra.mxu0 0.0
    %6785 = vmatprep.subr.mxu0 0.0
    %6786 = vmatpush1.msra.mxu0 0.0
    %6787 = vmatprep.subr.mxu0 0.0
    %6788 = vmatpush1.msra.mxu0 0.0
    %6789 = vmatprep.subr.mxu0 0.0
    %6790 = vmatpush1.msra.mxu0 0.0
    %6791 = vmatprep.subr.mxu0 0.0
    %6792 = vmatpush1.msra.mxu0 0.0
    %6793 = vmatprep.subr.mxu0 0.0
    %6794 = vmatpush1.msra.mxu0 0.0
    %6795 = vmatprep.subr.mxu0 0.0
    %6796 = vmatpush1.msra.mxu0 0.0
    %6797 = vmatprep.subr.mxu0 0.0
    %6798 = vmatpush1.msra.mxu0 0.0
    %6799 = vmatprep.subr.mxu0 0.0
    %6800 = vmatpush1.msra.mxu0 0.0
    %6801 = vmatprep.subr.mxu0 0.0
    %6802 = vmatpush1.msra.mxu0 0.0
    %6803 = vmatprep.subr.mxu0 0.0
    %6804 = vmatpush1.msra.mxu0 0.0
    %6805 = vmatprep.subr.mxu0 0.0
    %6806 = vmatpush1.msra.mxu0 0.0
    %6807 = vmatprep.subr.mxu0 0.0
    %6808 = vmatpush1.msra.mxu0 0.0
    %6809 = vmatprep.subr.mxu0 0.0
    %6810 = vmatpush1.msra.mxu0 0.0
    %6811 = vmatprep.subr.mxu0 0.0
    %6812 = vmatpush1.msra.mxu0 0.0
    %6813 = vmatprep.subr.mxu0 0.0
    %6814 = vmatpush1.msra.mxu0 0.0
    %6815 = vmatprep.mubr.f32.mxu0 0.0
    %6816 = vmatmul.mubr.f32.gmra.mrb[0].mxu0 %v6323
    %v6817 = vpop.f32.mrb[0].mxu0
    %v6818 = vadd.f32 %v5821, %v6817
    %v6819 = vpop.f32.mrb[0].mxu0
    %v6820 = vadd.f32 %v5823, %v6819
    %6821 = vdwg.mxu0
    %6822 = vmatprep.subr.mxu0 %v4710
    %6823 = vmatpush1.msra.mxu0 %v4709
    %6824 = vmatprep.subr.mxu0 %v4826
    %6825 = vmatpush1.msra.mxu0 %v4825
    %6826 = vmatprep.subr.mxu0 %v4940
    %6827 = vmatpush1.msra.mxu0 %v4939
    %6828 = vmatprep.subr.mxu0 0.0
    %6829 = vmatpush1.msra.mxu0 0.0
    %6830 = vmatprep.subr.mxu0 0.0
    %6831 = vmatpush1.msra.mxu0 0.0
    %6832 = vmatprep.subr.mxu0 0.0
    %6833 = vmatpush1.msra.mxu0 0.0
    %6834 = vmatprep.subr.mxu0 0.0
    %6835 = vmatpush1.msra.mxu0 0.0
    %6836 = vmatprep.subr.mxu0 0.0
    %6837 = vmatpush1.msra.mxu0 0.0
    %6838 = vmatprep.subr.mxu0 0.0
    %6839 = vmatpush1.msra.mxu0 0.0
    %6840 = vmatprep.subr.mxu0 0.0
    %6841 = vmatpush1.msra.mxu0 0.0
    %6842 = vmatprep.subr.mxu0 0.0
    %6843 = vmatpush1.msra.mxu0 0.0
    %6844 = vmatprep.subr.mxu0 0.0
    %6845 = vmatpush1.msra.mxu0 0.0
    %6846 = vmatprep.subr.mxu0 0.0
    %6847 = vmatpush1.msra.mxu0 0.0
    %6848 = vmatprep.subr.mxu0 0.0
    %6849 = vmatpush1.msra.mxu0 0.0
    %6850 = vmatprep.subr.mxu0 0.0
    %6851 = vmatpush1.msra.mxu0 0.0
    %6852 = vmatprep.subr.mxu0 0.0
    %6853 = vmatpush1.msra.mxu0 0.0
    %6854 = vmatprep.subr.mxu0 0.0
    %6855 = vmatpush1.msra.mxu0 0.0
    %6856 = vmatprep.subr.mxu0 0.0
    %6857 = vmatpush1.msra.mxu0 0.0
    %6858 = vmatprep.subr.mxu0 0.0
    %6859 = vmatpush1.msra.mxu0 0.0
    %6860 = vmatprep.subr.mxu0 0.0
    %6861 = vmatpush1.msra.mxu0 0.0
    %6862 = vmatprep.subr.mxu0 0.0
    %6863 = vmatpush1.msra.mxu0 0.0
    %6864 = vmatprep.subr.mxu0 0.0
    %6865 = vmatpush1.msra.mxu0 0.0
    %6866 = vmatprep.subr.mxu0 0.0
    %6867 = vmatpush1.msra.mxu0 0.0
    %6868 = vmatprep.subr.mxu0 0.0
    %6869 = vmatpush1.msra.mxu0 0.0
    %6870 = vmatprep.subr.mxu0 0.0
    %6871 = vmatpush1.msra.mxu0 0.0
    %6872 = vmatprep.subr.mxu0 0.0
    %6873 = vmatpush1.msra.mxu0 0.0
    %6874 = vmatprep.subr.mxu0 0.0
    %6875 = vmatpush1.msra.mxu0 0.0
    %6876 = vmatprep.subr.mxu0 0.0
    %6877 = vmatpush1.msra.mxu0 0.0
    %6878 = vmatprep.subr.mxu0 0.0
    %6879 = vmatpush1.msra.mxu0 0.0
    %6880 = vmatprep.subr.mxu0 0.0
    %6881 = vmatpush1.msra.mxu0 0.0
    %6882 = vmatprep.subr.mxu0 0.0
    %6883 = vmatpush1.msra.mxu0 0.0
    %6884 = vmatprep.subr.mxu0 0.0
    %6885 = vmatpush1.msra.mxu0 0.0
    %6886 = vmatprep.mubr.f32.mxu0 0.0
    %6887 = vmatmul.mubr.f32.gmra.mrb[0].mxu0 %v6323
    %v6888 = vpop.f32.mrb[0].mxu0
    %v6889 = vadd.f32 %v5892, %v6888
    %v6890 = vpop.f32.mrb[0].mxu0
    %v6891 = vadd.f32 %v5894, %v6890
    %6892 = vdwg.mxu0
    %6893 = vmatprep.subr.mxu0 %v4712
    %6894 = vmatpush1.msra.mxu0 %v4711
    %6895 = vmatprep.subr.mxu0 %v4828
    %6896 = vmatpush1.msra.mxu0 %v4827
    %6897 = vmatprep.subr.mxu0 %v4942
    %6898 = vmatpush1.msra.mxu0 %v4941
    %6899 = vmatprep.subr.mxu0 0.0
    %6900 = vmatpush1.msra.mxu0 0.0
    %6901 = vmatprep.subr.mxu0 0.0
    %6902 = vmatpush1.msra.mxu0 0.0
    %6903 = vmatprep.subr.mxu0 0.0
    %6904 = vmatpush1.msra.mxu0 0.0
    %6905 = vmatprep.subr.mxu0 0.0
    %6906 = vmatpush1.msra.mxu0 0.0
    %6907 = vmatprep.subr.mxu0 0.0
    %6908 = vmatpush1.msra.mxu0 0.0
    %6909 = vmatprep.subr.mxu0 0.0
    %6910 = vmatpush1.msra.mxu0 0.0
    %6911 = vmatprep.subr.mxu0 0.0
    %6912 = vmatpush1.msra.mxu0 0.0
    %6913 = vmatprep.subr.mxu0 0.0
    %6914 = vmatpush1.msra.mxu0 0.0
    %6915 = vmatprep.subr.mxu0 0.0
    %6916 = vmatpush1.msra.mxu0 0.0
    %6917 = vmatprep.subr.mxu0 0.0
    %6918 = vmatpush1.msra.mxu0 0.0
    %6919 = vmatprep.subr.mxu0 0.0
    %6920 = vmatpush1.msra.mxu0 0.0
    %6921 = vmatprep.subr.mxu0 0.0
    %6922 = vmatpush1.msra.mxu0 0.0
    %6923 = vmatprep.subr.mxu0 0.0
    %6924 = vmatpush1.msra.mxu0 0.0
    %6925 = vmatprep.subr.mxu0 0.0
    %6926 = vmatpush1.msra.mxu0 0.0
    %6927 = vmatprep.subr.mxu0 0.0
    %6928 = vmatpush1.msra.mxu0 0.0
    %6929 = vmatprep.subr.mxu0 0.0
    %6930 = vmatpush1.msra.mxu0 0.0
    %6931 = vmatprep.subr.mxu0 0.0
    %6932 = vmatpush1.msra.mxu0 0.0
    %6933 = vmatprep.subr.mxu0 0.0
    %6934 = vmatpush1.msra.mxu0 0.0
    %6935 = vmatprep.subr.mxu0 0.0
    %6936 = vmatpush1.msra.mxu0 0.0
    %6937 = vmatprep.subr.mxu0 0.0
    %6938 = vmatpush1.msra.mxu0 0.0
    %6939 = vmatprep.subr.mxu0 0.0
    %6940 = vmatpush1.msra.mxu0 0.0
    %6941 = vmatprep.subr.mxu0 0.0
    %6942 = vmatpush1.msra.mxu0 0.0
    %6943 = vmatprep.subr.mxu0 0.0
    %6944 = vmatpush1.msra.mxu0 0.0
    %6945 = vmatprep.subr.mxu0 0.0
    %6946 = vmatpush1.msra.mxu0 0.0
    %6947 = vmatprep.subr.mxu0 0.0
    %6948 = vmatpush1.msra.mxu0 0.0
    %6949 = vmatprep.subr.mxu0 0.0
    %6950 = vmatpush1.msra.mxu0 0.0
    %6951 = vmatprep.subr.mxu0 0.0
    %6952 = vmatpush1.msra.mxu0 0.0
    %6953 = vmatprep.subr.mxu0 0.0
    %6954 = vmatpush1.msra.mxu0 0.0
    %6955 = vmatprep.subr.mxu0 0.0
    %6956 = vmatpush1.msra.mxu0 0.0
    %6957 = vmatprep.mubr.f32.mxu0 0.0
    %6958 = vmatmul.mubr.f32.gmra.mrb[0].mxu0 %v6323
    %v6959 = vpop.f32.mrb[0].mxu0
    %v6960 = vadd.f32 %v5963, %v6959
    %v6961 = vpop.f32.mrb[0].mxu0
    %v6962 = vadd.f32 %v5965, %v6961
    %6963 = vdwg.mxu0
    %6964 = vmatprep.subr.mxu0 %v4714
    %6965 = vmatpush1.msra.mxu0 %v4713
    %6966 = vmatprep.subr.mxu0 %v4830
    %6967 = vmatpush1.msra.mxu0 %v4829
    %6968 = vmatprep.subr.mxu0 %v4944
    %6969 = vmatpush1.msra.mxu0 %v4943
    %6970 = vmatprep.subr.mxu0 0.0
    %6971 = vmatpush1.msra.mxu0 0.0
    %6972 = vmatprep.subr.mxu0 0.0
    %6973 = vmatpush1.msra.mxu0 0.0
    %6974 = vmatprep.subr.mxu0 0.0
    %6975 = vmatpush1.msra.mxu0 0.0
    %6976 = vmatprep.subr.mxu0 0.0
    %6977 = vmatpush1.msra.mxu0 0.0
    %6978 = vmatprep.subr.mxu0 0.0
    %6979 = vmatpush1.msra.mxu0 0.0
    %6980 = vmatprep.subr.mxu0 0.0
    %6981 = vmatpush1.msra.mxu0 0.0
    %6982 = vmatprep.subr.mxu0 0.0
    %6983 = vmatpush1.msra.mxu0 0.0
    %6984 = vmatprep.subr.mxu0 0.0
    %6985 = vmatpush1.msra.mxu0 0.0
    %6986 = vmatprep.subr.mxu0 0.0
    %6987 = vmatpush1.msra.mxu0 0.0
    %6988 = vmatprep.subr.mxu0 0.0
    %6989 = vmatpush1.msra.mxu0 0.0
    %6990 = vmatprep.subr.mxu0 0.0
    %6991 = vmatpush1.msra.mxu0 0.0
    %6992 = vmatprep.subr.mxu0 0.0
    %6993 = vmatpush1.msra.mxu0 0.0
    %6994 = vmatprep.subr.mxu0 0.0
    %6995 = vmatpush1.msra.mxu0 0.0
    %6996 = vmatprep.subr.mxu0 0.0
    %6997 = vmatpush1.msra.mxu0 0.0
    %6998 = vmatprep.subr.mxu0 0.0
    %6999 = vmatpush1.msra.mxu0 0.0
    %7000 = vmatprep.subr.mxu0 0.0
    %7001 = vmatpush1.msra.mxu0 0.0
    %7002 = vmatprep.subr.mxu0 0.0
    %7003 = vmatpush1.msra.mxu0 0.0
    %7004 = vmatprep.subr.mxu0 0.0
    %7005 = vmatpush1.msra.mxu0 0.0
    %7006 = vmatprep.subr.mxu0 0.0
    %7007 = vmatpush1.msra.mxu0 0.0
    %7008 = vmatprep.subr.mxu0 0.0
    %7009 = vmatpush1.msra.mxu0 0.0
    %7010 = vmatprep.subr.mxu0 0.0
    %7011 = vmatpush1.msra.mxu0 0.0
    %7012 = vmatprep.subr.mxu0 0.0
    %7013 = vmatpush1.msra.mxu0 0.0
    %7014 = vmatprep.subr.mxu0 0.0
    %7015 = vmatpush1.msra.mxu0 0.0
    %7016 = vmatprep.subr.mxu0 0.0
    %7017 = vmatpush1.msra.mxu0 0.0
    %7018 = vmatprep.subr.mxu0 0.0
    %7019 = vmatpush1.msra.mxu0 0.0
    %7020 = vmatprep.subr.mxu0 0.0
    %7021 = vmatpush1.msra.mxu0 0.0
    %7022 = vmatprep.subr.mxu0 0.0
    %7023 = vmatpush1.msra.mxu0 0.0
    %7024 = vmatprep.subr.mxu0 0.0
    %7025 = vmatpush1.msra.mxu0 0.0
    %7026 = vmatprep.subr.mxu0 0.0
    %7027 = vmatpush1.msra.mxu0 0.0
    %7028 = vmatprep.mubr.f32.mxu0 0.0
    %7029 = vmatmul.mubr.f32.gmra.mrb[0].mxu0 %v6323
    %v7030 = vpop.f32.mrb[0].mxu0
    %v7031 = vadd.f32 %v6034, %v7030
    %v7032 = vpop.f32.mrb[0].mxu0
    %v7033 = vadd.f32 %v6036, %v7032
    %7034 = vdwg.mxu0
    %7035 = vmatprep.subr.mxu0 %v4716
    %7036 = vmatpush1.msra.mxu0 %v4715
    %7037 = vmatprep.subr.mxu0 %v4832
    %7038 = vmatpush1.msra.mxu0 %v4831
    %7039 = vmatprep.subr.mxu0 %v4946
    %7040 = vmatpush1.msra.mxu0 %v4945
    %7041 = vmatprep.subr.mxu0 0.0
    %7042 = vmatpush1.msra.mxu0 0.0
    %7043 = vmatprep.subr.mxu0 0.0
    %7044 = vmatpush1.msra.mxu0 0.0
    %7045 = vmatprep.subr.mxu0 0.0
    %7046 = vmatpush1.msra.mxu0 0.0
    %7047 = vmatprep.subr.mxu0 0.0
    %7048 = vmatpush1.msra.mxu0 0.0
    %7049 = vmatprep.subr.mxu0 0.0
    %7050 = vmatpush1.msra.mxu0 0.0
    %7051 = vmatprep.subr.mxu0 0.0
    %7052 = vmatpush1.msra.mxu0 0.0
    %7053 = vmatprep.subr.mxu0 0.0
    %7054 = vmatpush1.msra.mxu0 0.0
    %7055 = vmatprep.subr.mxu0 0.0
    %7056 = vmatpush1.msra.mxu0 0.0
    %7057 = vmatprep.subr.mxu0 0.0
    %7058 = vmatpush1.msra.mxu0 0.0
    %7059 = vmatprep.subr.mxu0 0.0
    %7060 = vmatpush1.msra.mxu0 0.0
    %7061 = vmatprep.subr.mxu0 0.0
    %7062 = vmatpush1.msra.mxu0 0.0
    %7063 = vmatprep.subr.mxu0 0.0
    %7064 = vmatpush1.msra.mxu0 0.0
    %7065 = vmatprep.subr.mxu0 0.0
    %7066 = vmatpush1.msra.mxu0 0.0
    %7067 = vmatprep.subr.mxu0 0.0
    %7068 = vmatpush1.msra.mxu0 0.0
    %7069 = vmatprep.subr.mxu0 0.0
    %7070 = vmatpush1.msra.mxu0 0.0
    %7071 = vmatprep.subr.mxu0 0.0
    %7072 = vmatpush1.msra.mxu0 0.0
    %7073 = vmatprep.subr.mxu0 0.0
    %7074 = vmatpush1.msra.mxu0 0.0
    %7075 = vmatprep.subr.mxu0 0.0
    %7076 = vmatpush1.msra.mxu0 0.0
    %7077 = vmatprep.subr.mxu0 0.0
    %7078 = vmatpush1.msra.mxu0 0.0
    %7079 = vmatprep.subr.mxu0 0.0
    %7080 = vmatpush1.msra.mxu0 0.0
    %7081 = vmatprep.subr.mxu0 0.0
    %7082 = vmatpush1.msra.mxu0 0.0
    %7083 = vmatprep.subr.mxu0 0.0
    %7084 = vmatpush1.msra.mxu0 0.0
    %7085 = vmatprep.subr.mxu0 0.0
    %7086 = vmatpush1.msra.mxu0 0.0
    %7087 = vmatprep.subr.mxu0 0.0
    %7088 = vmatpush1.msra.mxu0 0.0
    %7089 = vmatprep.subr.mxu0 0.0
    %7090 = vmatpush1.msra.mxu0 0.0
    %7091 = vmatprep.subr.mxu0 0.0
    %7092 = vmatpush1.msra.mxu0 0.0
    %7093 = vmatprep.subr.mxu0 0.0
    %7094 = vmatpush1.msra.mxu0 0.0
    %7095 = vmatprep.subr.mxu0 0.0
    %7096 = vmatpush1.msra.mxu0 0.0
    %7097 = vmatprep.subr.mxu0 0.0
    %7098 = vmatpush1.msra.mxu0 0.0
    %7099 = vmatprep.mubr.f32.mxu0 0.0
    %7100 = vmatmul.mubr.f32.gmra.mrb[0].mxu0 %v6323
    %v7101 = vpop.f32.mrb[0].mxu0
    %v7102 = vadd.f32 %v6105, %v7101
    %v7103 = vpop.f32.mrb[0].mxu0
    %v7104 = vadd.f32 %v6107, %v7103
    %7105 = vdwg.mxu0
    %7106 = vmatprep.subr.mxu0 %v4718
    %7107 = vmatpush1.msra.mxu0 %v4717
    %7108 = vmatprep.subr.mxu0 %v4834
    %7109 = vmatpush1.msra.mxu0 %v4833
    %7110 = vmatprep.subr.mxu0 %v4948
    %7111 = vmatpush1.msra.mxu0 %v4947
    %7112 = vmatprep.subr.mxu0 0.0
    %7113 = vmatpush1.msra.mxu0 0.0
    %7114 = vmatprep.subr.mxu0 0.0
    %7115 = vmatpush1.msra.mxu0 0.0
    %7116 = vmatprep.subr.mxu0 0.0
    %7117 = vmatpush1.msra.mxu0 0.0
    %7118 = vmatprep.subr.mxu0 0.0
    %7119 = vmatpush1.msra.mxu0 0.0
    %7120 = vmatprep.subr.mxu0 0.0
    %7121 = vmatpush1.msra.mxu0 0.0
    %7122 = vmatprep.subr.mxu0 0.0
    %7123 = vmatpush1.msra.mxu0 0.0
    %7124 = vmatprep.subr.mxu0 0.0
    %7125 = vmatpush1.msra.mxu0 0.0
    %7126 = vmatprep.subr.mxu0 0.0
    %7127 = vmatpush1.msra.mxu0 0.0
    %7128 = vmatprep.subr.mxu0 0.0
    %7129 = vmatpush1.msra.mxu0 0.0
    %7130 = vmatprep.subr.mxu0 0.0
    %7131 = vmatpush1.msra.mxu0 0.0
    %7132 = vmatprep.subr.mxu0 0.0
    %7133 = vmatpush1.msra.mxu0 0.0
    %7134 = vmatprep.subr.mxu0 0.0
    %7135 = vmatpush1.msra.mxu0 0.0
    %7136 = vmatprep.subr.mxu0 0.0
    %7137 = vmatpush1.msra.mxu0 0.0
    %7138 = vmatprep.subr.mxu0 0.0
    %7139 = vmatpush1.msra.mxu0 0.0
    %7140 = vmatprep.subr.mxu0 0.0
    %7141 = vmatpush1.msra.mxu0 0.0
    %7142 = vmatprep.subr.mxu0 0.0
    %7143 = vmatpush1.msra.mxu0 0.0
    %7144 = vmatprep.subr.mxu0 0.0
    %7145 = vmatpush1.msra.mxu0 0.0
    %7146 = vmatprep.subr.mxu0 0.0
    %7147 = vmatpush1.msra.mxu0 0.0
    %7148 = vmatprep.subr.mxu0 0.0
    %7149 = vmatpush1.msra.mxu0 0.0
    %7150 = vmatprep.subr.mxu0 0.0
    %7151 = vmatpush1.msra.mxu0 0.0
    %7152 = vmatprep.subr.mxu0 0.0
    %7153 = vmatpush1.msra.mxu0 0.0
    %7154 = vmatprep.subr.mxu0 0.0
    %7155 = vmatpush1.msra.mxu0 0.0
    %7156 = vmatprep.subr.mxu0 0.0
    %7157 = vmatpush1.msra.mxu0 0.0
    %7158 = vmatprep.subr.mxu0 0.0
    %7159 = vmatpush1.msra.mxu0 0.0
    %7160 = vmatprep.subr.mxu0 0.0
    %7161 = vmatpush1.msra.mxu0 0.0
    %7162 = vmatprep.subr.mxu0 0.0
    %7163 = vmatpush1.msra.mxu0 0.0
    %7164 = vmatprep.subr.mxu0 0.0
    %7165 = vmatpush1.msra.mxu0 0.0
    %7166 = vmatprep.subr.mxu0 0.0
    %7167 = vmatpush1.msra.mxu0 0.0
    %7168 = vmatprep.subr.mxu0 0.0
    %7169 = vmatpush1.msra.mxu0 0.0
    %7170 = vmatprep.mubr.f32.mxu0 0.0
    %7171 = vmatmul.mubr.f32.gmra.mrb[0].mxu0 %v6323
    %v7172 = vpop.f32.mrb[0].mxu0
    %v7173 = vadd.f32 %v6176, %v7172
    %v7174 = vpop.f32.mrb[0].mxu0
    %v7175 = vadd.f32 %v6178, %v7174
    %7176 = vdwg.mxu0
    %7177 = vmatprep.subr.mxu0 %v4720
    %7178 = vmatpush1.msra.mxu0 %v4719
    %7179 = vmatprep.subr.mxu0 %v4836
    %7180 = vmatpush1.msra.mxu0 %v4835
    %7181 = vmatprep.subr.mxu0 %v4950
    %7182 = vmatpush1.msra.mxu0 %v4949
    %7183 = vmatprep.subr.mxu0 0.0
    %7184 = vmatpush1.msra.mxu0 0.0
    %7185 = vmatprep.subr.mxu0 0.0
    %7186 = vmatpush1.msra.mxu0 0.0
    %7187 = vmatprep.subr.mxu0 0.0
    %7188 = vmatpush1.msra.mxu0 0.0
    %7189 = vmatprep.subr.mxu0 0.0
    %7190 = vmatpush1.msra.mxu0 0.0
    %7191 = vmatprep.subr.mxu0 0.0
    %7192 = vmatpush1.msra.mxu0 0.0
    %7193 = vmatprep.subr.mxu0 0.0
    %7194 = vmatpush1.msra.mxu0 0.0
    %7195 = vmatprep.subr.mxu0 0.0
    %7196 = vmatpush1.msra.mxu0 0.0
    %7197 = vmatprep.subr.mxu0 0.0
    %7198 = vmatpush1.msra.mxu0 0.0
    %7199 = vmatprep.subr.mxu0 0.0
    %7200 = vmatpush1.msra.mxu0 0.0
    %7201 = vmatprep.subr.mxu0 0.0
    %7202 = vmatpush1.msra.mxu0 0.0
    %7203 = vmatprep.subr.mxu0 0.0
    %7204 = vmatpush1.msra.mxu0 0.0
    %7205 = vmatprep.subr.mxu0 0.0
    %7206 = vmatpush1.msra.mxu0 0.0
    %7207 = vmatprep.subr.mxu0 0.0
    %7208 = vmatpush1.msra.mxu0 0.0
    %7209 = vmatprep.subr.mxu0 0.0
    %7210 = vmatpush1.msra.mxu0 0.0
    %7211 = vmatprep.subr.mxu0 0.0
    %7212 = vmatpush1.msra.mxu0 0.0
    %7213 = vmatprep.subr.mxu0 0.0
    %7214 = vmatpush1.msra.mxu0 0.0
    %7215 = vmatprep.subr.mxu0 0.0
    %7216 = vmatpush1.msra.mxu0 0.0
    %7217 = vmatprep.subr.mxu0 0.0
    %7218 = vmatpush1.msra.mxu0 0.0
    %7219 = vmatprep.subr.mxu0 0.0
    %7220 = vmatpush1.msra.mxu0 0.0
    %7221 = vmatprep.subr.mxu0 0.0
    %7222 = vmatpush1.msra.mxu0 0.0
    %7223 = vmatprep.subr.mxu0 0.0
    %7224 = vmatpush1.msra.mxu0 0.0
    %7225 = vmatprep.subr.mxu0 0.0
    %7226 = vmatpush1.msra.mxu0 0.0
    %7227 = vmatprep.subr.mxu0 0.0
    %7228 = vmatpush1.msra.mxu0 0.0
    %7229 = vmatprep.subr.mxu0 0.0
    %7230 = vmatpush1.msra.mxu0 0.0
    %7231 = vmatprep.subr.mxu0 0.0
    %7232 = vmatpush1.msra.mxu0 0.0
    %7233 = vmatprep.subr.mxu0 0.0
    %7234 = vmatpush1.msra.mxu0 0.0
    %7235 = vmatprep.subr.mxu0 0.0
    %7236 = vmatpush1.msra.mxu0 0.0
    %7237 = vmatprep.subr.mxu0 0.0
    %7238 = vmatpush1.msra.mxu0 0.0
    %7239 = vmatprep.subr.mxu0 0.0
    %7240 = vmatpush1.msra.mxu0 0.0
    %7241 = vmatprep.mubr.f32.mxu0 0.0
    %7242 = vmatmul.mubr.f32.gmra.mrb[0].mxu0 %v6323
    %v7243 = vpop.f32.mrb[0].mxu0
    %v7244 = vadd.f32 %v6247, %v7243
    %v7245 = vpop.f32.mrb[0].mxu0
    %v7246 = vadd.f32 %v6249, %v7245
    %7247 = vdwg.mxu0
    %7248 = vmatprep.subr.mxu0 %v4722
    %7249 = vmatpush1.msra.mxu0 %v4721
    %7250 = vmatprep.subr.mxu0 %v4838
    %7251 = vmatpush1.msra.mxu0 %v4837
    %7252 = vmatprep.subr.mxu0 %v4952
    %7253 = vmatpush1.msra.mxu0 %v4951
    %7254 = vmatprep.subr.mxu0 0.0
    %7255 = vmatpush1.msra.mxu0 0.0
    %7256 = vmatprep.subr.mxu0 0.0
    %7257 = vmatpush1.msra.mxu0 0.0
    %7258 = vmatprep.subr.mxu0 0.0
    %7259 = vmatpush1.msra.mxu0 0.0
    %7260 = vmatprep.subr.mxu0 0.0
    %7261 = vmatpush1.msra.mxu0 0.0
    %7262 = vmatprep.subr.mxu0 0.0
    %7263 = vmatpush1.msra.mxu0 0.0
    %7264 = vmatprep.subr.mxu0 0.0
    %7265 = vmatpush1.msra.mxu0 0.0
    %7266 = vmatprep.subr.mxu0 0.0
    %7267 = vmatpush1.msra.mxu0 0.0
    %7268 = vmatprep.subr.mxu0 0.0
    %7269 = vmatpush1.msra.mxu0 0.0
    %7270 = vmatprep.subr.mxu0 0.0
    %7271 = vmatpush1.msra.mxu0 0.0
    %7272 = vmatprep.subr.mxu0 0.0
    %7273 = vmatpush1.msra.mxu0 0.0
    %7274 = vmatprep.subr.mxu0 0.0
    %7275 = vmatpush1.msra.mxu0 0.0
    %7276 = vmatprep.subr.mxu0 0.0
    %7277 = vmatpush1.msra.mxu0 0.0
    %7278 = vmatprep.subr.mxu0 0.0
    %7279 = vmatpush1.msra.mxu0 0.0
    %7280 = vmatprep.subr.mxu0 0.0
    %7281 = vmatpush1.msra.mxu0 0.0
    %7282 = vmatprep.subr.mxu0 0.0
    %7283 = vmatpush1.msra.mxu0 0.0
    %7284 = vmatprep.subr.mxu0 0.0
    %7285 = vmatpush1.msra.mxu0 0.0
    %7286 = vmatprep.subr.mxu0 0.0
    %7287 = vmatpush1.msra.mxu0 0.0
    %7288 = vmatprep.subr.mxu0 0.0
    %7289 = vmatpush1.msra.mxu0 0.0
    %7290 = vmatprep.subr.mxu0 0.0
    %7291 = vmatpush1.msra.mxu0 0.0
    %7292 = vmatprep.subr.mxu0 0.0
    %7293 = vmatpush1.msra.mxu0 0.0
    %7294 = vmatprep.subr.mxu0 0.0
    %7295 = vmatpush1.msra.mxu0 0.0
    %7296 = vmatprep.subr.mxu0 0.0
    %7297 = vmatpush1.msra.mxu0 0.0
    %7298 = vmatprep.subr.mxu0 0.0
    %7299 = vmatpush1.msra.mxu0 0.0
    %7300 = vmatprep.subr.mxu0 0.0
    %7301 = vmatpush1.msra.mxu0 0.0
    %7302 = vmatprep.subr.mxu0 0.0
    %7303 = vmatpush1.msra.mxu0 0.0
    %7304 = vmatprep.subr.mxu0 0.0
    %7305 = vmatpush1.msra.mxu0 0.0
    %7306 = vmatprep.subr.mxu0 0.0
    %7307 = vmatpush1.msra.mxu0 0.0
    %7308 = vmatprep.subr.mxu0 0.0
    %7309 = vmatpush1.msra.mxu0 0.0
    %7310 = vmatprep.subr.mxu0 0.0
    %7311 = vmatpush1.msra.mxu0 0.0
    %7312 = vmatprep.mubr.f32.mxu0 0.0
    %7313 = vmatmul.mubr.f32.gmra.mrb[0].mxu0 %v6323
    %v7314 = vpop.f32.mrb[0].mxu0
    %v7315 = vadd.f32 %v6318, %v7314
    %v7316 = vpop.f32.mrb[0].mxu0
    %v7317 = vadd.f32 %v6320, %v7316
    %7318 = vdwg.mxu0
    %v7319 = vld [vmem:[%s4694 + $0x8] sm:$0xff]
    %v7320 = vld [vmem:[%s4694 + $0x10] sm:$0xff]
    %v7321 = vld [vmem:[%s4694 + $0x18] sm:$0xff]
    %v7322 = vld [vmem:[%s4694 + $0x20] sm:$0xff]
    %v7323 = vld [vmem:[%s4694 + $0x28] sm:$0xff]
    %v7324 = vld [vmem:[%s4694 + $0x30] sm:$0xff]
    %v7325 = vld [vmem:[%s4694 + $0x38] sm:$0xff]
    %v7326 = vld [vmem:[%s4694 + $0x40] sm:$0xff]
    %v7327 = vld [vmem:[%s4694 + $0x48] sm:$0xff]
    %v7328 = vld [vmem:[%s4694 + $0x50] sm:$0xff]
    %v7329 = vld [vmem:[%s4694 + $0x58] sm:$0xff]
    %v7330 = vld [vmem:[%s4694 + $0x60] sm:$0xff]
    %v7331 = vld [vmem:[%s4694 + $0x68] sm:$0xff]
    %v7332 = vld [vmem:[%s4694 + $0x70] sm:$0xff]
    %v7333 = vld [vmem:[%s4694 + $0x78] sm:$0xff]
    %v7334 = vld [vmem:[%s4694 + $0x80] sm:$0xff]
    %v7335 = vld [vmem:[%s4694 + $0x88] sm:$0xff]
    %v7336 = vld [vmem:[%s4694 + $0x90] sm:$0xff]
    %v7337 = vld [vmem:[%s4694 + $0x98] sm:$0xff]
    %v7338 = vld [vmem:[%s4694 + $0xa0] sm:$0xff]
    %v7339 = vld [vmem:[%s4694 + $0xa8] sm:$0xff]
    %v7340 = vld [vmem:[%s4694 + $0xb0] sm:$0xff]
    %v7341 = vld [vmem:[%s4694 + $0xb8] sm:$0xff]
    %v7342 = vld [vmem:[%s4694 + $0xc0] sm:$0xff]
    %v7343 = vld [vmem:[%s4694 + $0xc8] sm:$0xff]
    %v7344 = vld [vmem:[%s4694 + $0xd0] sm:$0xff]
    %v7345 = vld [vmem:[%s4694 + $0xd8] sm:$0xff]
    %v7346 = vld [vmem:[%s4694 + $0xe0] sm:$0xff]
    %v7347 = vld [vmem:[%s4694 + $0xe8] sm:$0xff]
    %7377 = vrot.lane.b32.xlu0 %v7319, 127
    %v7378 = vpop.permute.xlu0 %7377
    %7379 = vrot.lane.b32.xlu0 %v7320, 127
    %v7380 = vpop.permute.xlu0 %7379
    %7381 = vrot.lane.b32.xlu0 %v7321, 127
    %v7382 = vpop.permute.xlu0 %7381
    %7383 = vrot.lane.b32.xlu0 %v7322, 127
    %v7384 = vpop.permute.xlu0 %7383
    %7385 = vrot.lane.b32.xlu0 %v7323, 127
    %v7386 = vpop.permute.xlu0 %7385
    %7387 = vrot.lane.b32.xlu0 %v7324, 127
    %v7388 = vpop.permute.xlu0 %7387
    %7389 = vrot.lane.b32.xlu0 %v7325, 127
    %v7390 = vpop.permute.xlu0 %7389
    %7391 = vrot.lane.b32.xlu0 %v7326, 127
    %v7392 = vpop.permute.xlu0 %7391
    %7393 = vrot.lane.b32.xlu0 %v7327, 127
    %v7394 = vpop.permute.xlu0 %7393
    %7395 = vrot.lane.b32.xlu0 %v7328, 127
    %v7396 = vpop.permute.xlu0 %7395
    %7397 = vrot.lane.b32.xlu0 %v7329, 127
    %v7398 = vpop.permute.xlu0 %7397
    %7399 = vrot.lane.b32.xlu0 %v7330, 127
    %v7400 = vpop.permute.xlu0 %7399
    %7401 = vrot.lane.b32.xlu0 %v7331, 127
    %v7402 = vpop.permute.xlu0 %7401
    %7403 = vrot.lane.b32.xlu0 %v7332, 127
    %v7404 = vpop.permute.xlu0 %7403
    %7405 = vrot.lane.b32.xlu0 %v7333, 127
    %v7406 = vpop.permute.xlu0 %7405
    %7407 = vrot.lane.b32.xlu0 %v7334, 127
    %v7408 = vpop.permute.xlu0 %7407
    %7409 = vrot.lane.b32.xlu0 %v7335, 127
    %v7410 = vpop.permute.xlu0 %7409
    %7411 = vrot.lane.b32.xlu0 %v7336, 127
    %v7412 = vpop.permute.xlu0 %7411
    %7413 = vrot.lane.b32.xlu0 %v7337, 127
    %v7414 = vpop.permute.xlu0 %7413
    %7415 = vrot.lane.b32.xlu0 %v7338, 127
    %v7416 = vpop.permute.xlu0 %7415
    %7417 = vrot.lane.b32.xlu0 %v7339, 127
    %v7418 = vpop.permute.xlu0 %7417
    %7419 = vrot.lane.b32.xlu0 %v7340, 127
    %v7420 = vpop.permute.xlu0 %7419
    %7421 = vrot.lane.b32.xlu0 %v7341, 127
    %v7422 = vpop.permute.xlu0 %7421
    %7423 = vrot.lane.b32.xlu0 %v7342, 127
    %v7424 = vpop.permute.xlu0 %7423
    %7425 = vrot.lane.b32.xlu0 %v7343, 127
    %v7426 = vpop.permute.xlu0 %7425
    %7427 = vrot.lane.b32.xlu0 %v7344, 127
    %v7428 = vpop.permute.xlu0 %7427
    %7429 = vrot.lane.b32.xlu0 %v7345, 127
    %v7430 = vpop.permute.xlu0 %7429
    %7431 = vrot.lane.b32.xlu0 %v7346, 127
    %v7432 = vpop.permute.xlu0 %7431
    %7433 = vrot.lane.b32.xlu0 %v7347, 127
    %v7434 = vpop.permute.xlu0 %7433
    %v7435 = vsel %vm265, %v7378, %v7380
    %v7436 = vsel %vm265, %v7380, %v7382
    %v7437 = vsel %vm265, %v7382, %v7384
    %v7438 = vsel %vm265, %v7384, %v7386
    %v7439 = vsel %vm265, %v7386, %v7388
    %v7440 = vsel %vm265, %v7388, %v7390
    %v7441 = vsel %vm265, %v7390, %v7392
    %v7442 = vsel %vm265, %v7392, %v7394
    %v7443 = vsel %vm265, %v7394, %v7396
    %v7444 = vsel %vm265, %v7396, %v7398
    %v7445 = vsel %vm265, %v7398, %v7400
    %v7446 = vsel %vm265, %v7400, %v7402
    %v7447 = vsel %vm265, %v7402, %v7404
    %v7448 = vsel %vm265, %v7404, %v7406
    %v7449 = vsel %vm265, %v7406, %v7408
    %v7450 = vsel %vm265, %v7408, %v7410
    %v7451 = vsel %vm265, %v7410, %v7412
    %v7452 = vsel %vm265, %v7412, %v7414
    %v7453 = vsel %vm265, %v7414, %v7416
    %v7454 = vsel %vm265, %v7416, %v7418
    %v7455 = vsel %vm265, %v7418, %v7420
    %v7456 = vsel %vm265, %v7420, %v7422
    %v7457 = vsel %vm265, %v7422, %v7424
    %v7458 = vsel %vm265, %v7424, %v7426
    %v7459 = vsel %vm265, %v7426, %v7428
    %v7460 = vsel %vm265, %v7428, %v7430
    %v7461 = vsel %vm265, %v7430, %v7432
    %v7462 = vsel %vm265, %v7432, %v7434
    %7491 = vrot.lane.b32.xlu0 %v7319, 126
    %v7492 = vpop.permute.xlu0 %7491
    %7493 = vrot.lane.b32.xlu0 %v7320, 126
    %v7494 = vpop.permute.xlu0 %7493
    %7495 = vrot.lane.b32.xlu0 %v7321, 126
    %v7496 = vpop.permute.xlu0 %7495
    %7497 = vrot.lane.b32.xlu0 %v7322, 126
    %v7498 = vpop.permute.xlu0 %7497
    %7499 = vrot.lane.b32.xlu0 %v7323, 126
    %v7500 = vpop.permute.xlu0 %7499
    %7501 = vrot.lane.b32.xlu0 %v7324, 126
    %v7502 = vpop.permute.xlu0 %7501
    %7503 = vrot.lane.b32.xlu0 %v7325, 126
    %v7504 = vpop.permute.xlu0 %7503
    %7505 = vrot.lane.b32.xlu0 %v7326, 126
    %v7506 = vpop.permute.xlu0 %7505
    %7507 = vrot.lane.b32.xlu0 %v7327, 126
    %v7508 = vpop.permute.xlu0 %7507
    %7509 = vrot.lane.b32.xlu0 %v7328, 126
    %v7510 = vpop.permute.xlu0 %7509
    %7511 = vrot.lane.b32.xlu0 %v7329, 126
    %v7512 = vpop.permute.xlu0 %7511
    %7513 = vrot.lane.b32.xlu0 %v7330, 126
    %v7514 = vpop.permute.xlu0 %7513
    %7515 = vrot.lane.b32.xlu0 %v7331, 126
    %v7516 = vpop.permute.xlu0 %7515
    %7517 = vrot.lane.b32.xlu0 %v7332, 126
    %v7518 = vpop.permute.xlu0 %7517
    %7519 = vrot.lane.b32.xlu0 %v7333, 126
    %v7520 = vpop.permute.xlu0 %7519
    %7521 = vrot.lane.b32.xlu0 %v7334, 126
    %v7522 = vpop.permute.xlu0 %7521
    %7523 = vrot.lane.b32.xlu0 %v7335, 126
    %v7524 = vpop.permute.xlu0 %7523
    %7525 = vrot.lane.b32.xlu0 %v7336, 126
    %v7526 = vpop.permute.xlu0 %7525
    %7527 = vrot.lane.b32.xlu0 %v7337, 126
    %v7528 = vpop.permute.xlu0 %7527
    %7529 = vrot.lane.b32.xlu0 %v7338, 126
    %v7530 = vpop.permute.xlu0 %7529
    %7531 = vrot.lane.b32.xlu0 %v7339, 126
    %v7532 = vpop.permute.xlu0 %7531
    %7533 = vrot.lane.b32.xlu0 %v7340, 126
    %v7534 = vpop.permute.xlu0 %7533
    %7535 = vrot.lane.b32.xlu0 %v7341, 126
    %v7536 = vpop.permute.xlu0 %7535
    %7537 = vrot.lane.b32.xlu0 %v7342, 126
    %v7538 = vpop.permute.xlu0 %7537
    %7539 = vrot.lane.b32.xlu0 %v7343, 126
    %v7540 = vpop.permute.xlu0 %7539
    %7541 = vrot.lane.b32.xlu0 %v7344, 126
    %v7542 = vpop.permute.xlu0 %7541
    %7543 = vrot.lane.b32.xlu0 %v7345, 126
    %v7544 = vpop.permute.xlu0 %7543
    %7545 = vrot.lane.b32.xlu0 %v7346, 126
    %v7546 = vpop.permute.xlu0 %7545
    %7547 = vrot.lane.b32.xlu0 %v7347, 126
    %v7548 = vpop.permute.xlu0 %7547
    %v7549 = vsel %vm380, %v7492, %v7494
    %v7550 = vsel %vm380, %v7494, %v7496
    %v7551 = vsel %vm380, %v7496, %v7498
    %v7552 = vsel %vm380, %v7498, %v7500
    %v7553 = vsel %vm380, %v7500, %v7502
    %v7554 = vsel %vm380, %v7502, %v7504
    %v7555 = vsel %vm380, %v7504, %v7506
    %v7556 = vsel %vm380, %v7506, %v7508
    %v7557 = vsel %vm380, %v7508, %v7510
    %v7558 = vsel %vm380, %v7510, %v7512
    %v7559 = vsel %vm380, %v7512, %v7514
    %v7560 = vsel %vm380, %v7514, %v7516
    %v7561 = vsel %vm380, %v7516, %v7518
    %v7562 = vsel %vm380, %v7518, %v7520
    %v7563 = vsel %vm380, %v7520, %v7522
    %v7564 = vsel %vm380, %v7522, %v7524
    %v7565 = vsel %vm380, %v7524, %v7526
    %v7566 = vsel %vm380, %v7526, %v7528
    %v7567 = vsel %vm380, %v7528, %v7530
    %v7568 = vsel %vm380, %v7530, %v7532
    %v7569 = vsel %vm380, %v7532, %v7534
    %v7570 = vsel %vm380, %v7534, %v7536
    %v7571 = vsel %vm380, %v7536, %v7538
    %v7572 = vsel %vm380, %v7538, %v7540
    %v7573 = vsel %vm380, %v7540, %v7542
    %v7574 = vsel %vm380, %v7542, %v7544
    %v7575 = vsel %vm380, %v7544, %v7546
    %v7576 = vsel %vm380, %v7546, %v7548
    %v7605 = vld [vmem:[%s3064] sm:$0x3]
    %v7607 = vsel %vm783, %v7605, 0
    %7609 = vmatprep.subr.mxu0 %v4697
    %7610 = vmatpush1.msra.mxu0 %v4696
    %7611 = vmatprep.subr.mxu0 %v7436
    %7612 = vmatpush1.msra.mxu0 %v7435
    %7613 = vmatprep.subr.mxu0 %v7550
    %7614 = vmatpush1.msra.mxu0 %v7549
    %7615 = vmatprep.subr.mxu0 0.0
    %7616 = vmatpush1.msra.mxu0 0.0
    %7617 = vmatprep.subr.mxu0 0.0
    %7618 = vmatpush1.msra.mxu0 0.0
    %7619 = vmatprep.subr.mxu0 0.0
    %7620 = vmatpush1.msra.mxu0 0.0
    %7621 = vmatprep.subr.mxu0 0.0
    %7622 = vmatpush1.msra.mxu0 0.0
    %7623 = vmatprep.subr.mxu0 0.0
    %7624 = vmatpush1.msra.mxu0 0.0
    %7625 = vmatprep.subr.mxu0 0.0
    %7626 = vmatpush1.msra.mxu0 0.0
    %7627 = vmatprep.subr.mxu0 0.0
    %7628 = vmatpush1.msra.mxu0 0.0
    %7629 = vmatprep.subr.mxu0 0.0
    %7630 = vmatpush1.msra.mxu0 0.0
    %7631 = vmatprep.subr.mxu0 0.0
    %7632 = vmatpush1.msra.mxu0 0.0
    %7633 = vmatprep.subr.mxu0 0.0
    %7634 = vmatpush1.msra.mxu0 0.0
    %7635 = vmatprep.subr.mxu0 0.0
    %7636 = vmatpush1.msra.mxu0 0.0
    %7637 = vmatprep.subr.mxu0 0.0
    %7638 = vmatpush1.msra.mxu0 0.0
    %7639 = vmatprep.subr.mxu0 0.0
    %7640 = vmatpush1.msra.mxu0 0.0
    %7641 = vmatprep.subr.mxu0 0.0
    %7642 = vmatpush1.msra.mxu0 0.0
    %7643 = vmatprep.subr.mxu0 0.0
    %7644 = vmatpush1.msra.mxu0 0.0
    %7645 = vmatprep.subr.mxu0 0.0
    %7646 = vmatpush1.msra.mxu0 0.0
    %7647 = vmatprep.subr.mxu0 0.0
    %7648 = vmatpush1.msra.mxu0 0.0
    %7649 = vmatprep.subr.mxu0 0.0
    %7650 = vmatpush1.msra.mxu0 0.0
    %7651 = vmatprep.subr.mxu0 0.0
    %7652 = vmatpush1.msra.mxu0 0.0
    %7653 = vmatprep.subr.mxu0 0.0
    %7654 = vmatpush1.msra.mxu0 0.0
    %7655 = vmatprep.subr.mxu0 0.0
    %7656 = vmatpush1.msra.mxu0 0.0
    %7657 = vmatprep.subr.mxu0 0.0
    %7658 = vmatpush1.msra.mxu0 0.0
    %7659 = vmatprep.subr.mxu0 0.0
    %7660 = vmatpush1.msra.mxu0 0.0
    %7661 = vmatprep.subr.mxu0 0.0
    %7662 = vmatpush1.msra.mxu0 0.0
    %7663 = vmatprep.subr.mxu0 0.0
    %7664 = vmatpush1.msra.mxu0 0.0
    %7665 = vmatprep.subr.mxu0 0.0
    %7666 = vmatpush1.msra.mxu0 0.0
    %7667 = vmatprep.subr.mxu0 0.0
    %7668 = vmatpush1.msra.mxu0 0.0
    %7669 = vmatprep.subr.mxu0 0.0
    %7670 = vmatpush1.msra.mxu0 0.0
    %7671 = vmatprep.subr.mxu0 0.0
    %7672 = vmatpush1.msra.mxu0 0.0
    %7673 = vmatprep.mubr.f32.mxu0 0.0
    %7674 = vmatmul.mubr.f32.gmra.mrb[0].mxu0 %v7607
    %v7675 = vpop.f32.mrb[0].mxu0
    %v7676 = vadd.f32 0.0, %v7675
    %v7677 = vpop.f32.mrb[0].mxu0
    %v7678 = vadd.f32 0.0, %v7677
    %7679 = vdwg.mxu0
    %7680 = vmatprep.subr.mxu0 %v4699
    %7681 = vmatpush1.msra.mxu0 %v4698
    %7682 = vmatprep.subr.mxu0 %v7438
    %7683 = vmatpush1.msra.mxu0 %v7437
    %7684 = vmatprep.subr.mxu0 %v7552
    %7685 = vmatpush1.msra.mxu0 %v7551
    %7686 = vmatprep.subr.mxu0 0.0
    %7687 = vmatpush1.msra.mxu0 0.0
    %7688 = vmatprep.subr.mxu0 0.0
    %7689 = vmatpush1.msra.mxu0 0.0
    %7690 = vmatprep.subr.mxu0 0.0
    %7691 = vmatpush1.msra.mxu0 0.0
    %7692 = vmatprep.subr.mxu0 0.0
    %7693 = vmatpush1.msra.mxu0 0.0
    %7694 = vmatprep.subr.mxu0 0.0
    %7695 = vmatpush1.msra.mxu0 0.0
    %7696 = vmatprep.subr.mxu0 0.0
    %7697 = vmatpush1.msra.mxu0 0.0
    %7698 = vmatprep.subr.mxu0 0.0
    %7699 = vmatpush1.msra.mxu0 0.0
    %7700 = vmatprep.subr.mxu0 0.0
    %7701 = vmatpush1.msra.mxu0 0.0
    %7702 = vmatprep.subr.mxu0 0.0
    %7703 = vmatpush1.msra.mxu0 0.0
    %7704 = vmatprep.subr.mxu0 0.0
    %7705 = vmatpush1.msra.mxu0 0.0
    %7706 = vmatprep.subr.mxu0 0.0
    %7707 = vmatpush1.msra.mxu0 0.0
    %7708 = vmatprep.subr.mxu0 0.0
    %7709 = vmatpush1.msra.mxu0 0.0
    %7710 = vmatprep.subr.mxu0 0.0
    %7711 = vmatpush1.msra.mxu0 0.0
    %7712 = vmatprep.subr.mxu0 0.0
    %7713 = vmatpush1.msra.mxu0 0.0
    %7714 = vmatprep.subr.mxu0 0.0
    %7715 = vmatpush1.msra.mxu0 0.0
    %7716 = vmatprep.subr.mxu0 0.0
    %7717 = vmatpush1.msra.mxu0 0.0
    %7718 = vmatprep.subr.mxu0 0.0
    %7719 = vmatpush1.msra.mxu0 0.0
    %7720 = vmatprep.subr.mxu0 0.0
    %7721 = vmatpush1.msra.mxu0 0.0
    %7722 = vmatprep.subr.mxu0 0.0
    %7723 = vmatpush1.msra.mxu0 0.0
    %7724 = vmatprep.subr.mxu0 0.0
    %7725 = vmatpush1.msra.mxu0 0.0
    %7726 = vmatprep.subr.mxu0 0.0
    %7727 = vmatpush1.msra.mxu0 0.0
    %7728 = vmatprep.subr.mxu0 0.0
    %7729 = vmatpush1.msra.mxu0 0.0
    %7730 = vmatprep.subr.mxu0 0.0
    %7731 = vmatpush1.msra.mxu0 0.0
    %7732 = vmatprep.subr.mxu0 0.0
    %7733 = vmatpush1.msra.mxu0 0.0
    %7734 = vmatprep.subr.mxu0 0.0
    %7735 = vmatpush1.msra.mxu0 0.0
    %7736 = vmatprep.subr.mxu0 0.0
    %7737 = vmatpush1.msra.mxu0 0.0
    %7738 = vmatprep.subr.mxu0 0.0
    %7739 = vmatpush1.msra.mxu0 0.0
    %7740 = vmatprep.subr.mxu0 0.0
    %7741 = vmatpush1.msra.mxu0 0.0
    %7742 = vmatprep.subr.mxu0 0.0
    %7743 = vmatpush1.msra.mxu0 0.0
    %7744 = vmatprep.mubr.f32.mxu0 0.0
    %7745 = vmatmul.mubr.f32.gmra.mrb[0].mxu0 %v7607
    %v7746 = vpop.f32.mrb[0].mxu0
    %v7747 = vadd.f32 0.0, %v7746
    %v7748 = vpop.f32.mrb[0].mxu0
    %v7749 = vadd.f32 0.0, %v7748
    %7750 = vdwg.mxu0
    %7751 = vmatprep.subr.mxu0 %v4701
    %7752 = vmatpush1.msra.mxu0 %v4700
    %7753 = vmatprep.subr.mxu0 %v7440
    %7754 = vmatpush1.msra.mxu0 %v7439
    %7755 = vmatprep.subr.mxu0 %v7554
    %7756 = vmatpush1.msra.mxu0 %v7553
    %7757 = vmatprep.subr.mxu0 0.0
    %7758 = vmatpush1.msra.mxu0 0.0
    %7759 = vmatprep.subr.mxu0 0.0
    %7760 = vmatpush1.msra.mxu0 0.0
    %7761 = vmatprep.subr.mxu0 0.0
    %7762 = vmatpush1.msra.mxu0 0.0
    %7763 = vmatprep.subr.mxu0 0.0
    %7764 = vmatpush1.msra.mxu0 0.0
    %7765 = vmatprep.subr.mxu0 0.0
    %7766 = vmatpush1.msra.mxu0 0.0
    %7767 = vmatprep.subr.mxu0 0.0
    %7768 = vmatpush1.msra.mxu0 0.0
    %7769 = vmatprep.subr.mxu0 0.0
    %7770 = vmatpush1.msra.mxu0 0.0
    %7771 = vmatprep.subr.mxu0 0.0
    %7772 = vmatpush1.msra.mxu0 0.0
    %7773 = vmatprep.subr.mxu0 0.0
    %7774 = vmatpush1.msra.mxu0 0.0
    %7775 = vmatprep.subr.mxu0 0.0
    %7776 = vmatpush1.msra.mxu0 0.0
    %7777 = vmatprep.subr.mxu0 0.0
    %7778 = vmatpush1.msra.mxu0 0.0
    %7779 = vmatprep.subr.mxu0 0.0
    %7780 = vmatpush1.msra.mxu0 0.0
    %7781 = vmatprep.subr.mxu0 0.0
    %7782 = vmatpush1.msra.mxu0 0.0
    %7783 = vmatprep.subr.mxu0 0.0
    %7784 = vmatpush1.msra.mxu0 0.0
    %7785 = vmatprep.subr.mxu0 0.0
    %7786 = vmatpush1.msra.mxu0 0.0
    %7787 = vmatprep.subr.mxu0 0.0
    %7788 = vmatpush1.msra.mxu0 0.0
    %7789 = vmatprep.subr.mxu0 0.0
    %7790 = vmatpush1.msra.mxu0 0.0
    %7791 = vmatprep.subr.mxu0 0.0
    %7792 = vmatpush1.msra.mxu0 0.0
    %7793 = vmatprep.subr.mxu0 0.0
    %7794 = vmatpush1.msra.mxu0 0.0
    %7795 = vmatprep.subr.mxu0 0.0
    %7796 = vmatpush1.msra.mxu0 0.0
    %7797 = vmatprep.subr.mxu0 0.0
    %7798 = vmatpush1.msra.mxu0 0.0
    %7799 = vmatprep.subr.mxu0 0.0
    %7800 = vmatpush1.msra.mxu0 0.0
    %7801 = vmatprep.subr.mxu0 0.0
    %7802 = vmatpush1.msra.mxu0 0.0
    %7803 = vmatprep.subr.mxu0 0.0
    %7804 = vmatpush1.msra.mxu0 0.0
    %7805 = vmatprep.subr.mxu0 0.0
    %7806 = vmatpush1.msra.mxu0 0.0
    %7807 = vmatprep.subr.mxu0 0.0
    %7808 = vmatpush1.msra.mxu0 0.0
    %7809 = vmatprep.subr.mxu0 0.0
    %7810 = vmatpush1.msra.mxu0 0.0
    %7811 = vmatprep.subr.mxu0 0.0
    %7812 = vmatpush1.msra.mxu0 0.0
    %7813 = vmatprep.subr.mxu0 0.0
    %7814 = vmatpush1.msra.mxu0 0.0
    %7815 = vmatprep.mubr.f32.mxu0 0.0
    %7816 = vmatmul.mubr.f32.gmra.mrb[0].mxu0 %v7607
    %v7817 = vpop.f32.mrb[0].mxu0
    %v7818 = vadd.f32 0.0, %v7817
    %v7819 = vpop.f32.mrb[0].mxu0
    %v7820 = vadd.f32 0.0, %v7819
    %7821 = vdwg.mxu0
    %7822 = vmatprep.subr.mxu0 %v4703
    %7823 = vmatpush1.msra.mxu0 %v4702
    %7824 = vmatprep.subr.mxu0 %v7442
    %7825 = vmatpush1.msra.mxu0 %v7441
    %7826 = vmatprep.subr.mxu0 %v7556
    %7827 = vmatpush1.msra.mxu0 %v7555
    %7828 = vmatprep.subr.mxu0 0.0
    %7829 = vmatpush1.msra.mxu0 0.0
    %7830 = vmatprep.subr.mxu0 0.0
    %7831 = vmatpush1.msra.mxu0 0.0
    %7832 = vmatprep.subr.mxu0 0.0
    %7833 = vmatpush1.msra.mxu0 0.0
    %7834 = vmatprep.subr.mxu0 0.0
    %7835 = vmatpush1.msra.mxu0 0.0
    %7836 = vmatprep.subr.mxu0 0.0
    %7837 = vmatpush1.msra.mxu0 0.0
    %7838 = vmatprep.subr.mxu0 0.0
    %7839 = vmatpush1.msra.mxu0 0.0
    %7840 = vmatprep.subr.mxu0 0.0
    %7841 = vmatpush1.msra.mxu0 0.0
    %7842 = vmatprep.subr.mxu0 0.0
    %7843 = vmatpush1.msra.mxu0 0.0
    %7844 = vmatprep.subr.mxu0 0.0
    %7845 = vmatpush1.msra.mxu0 0.0
    %7846 = vmatprep.subr.mxu0 0.0
    %7847 = vmatpush1.msra.mxu0 0.0
    %7848 = vmatprep.subr.mxu0 0.0
    %7849 = vmatpush1.msra.mxu0 0.0
    %7850 = vmatprep.subr.mxu0 0.0
    %7851 = vmatpush1.msra.mxu0 0.0
    %7852 = vmatprep.subr.mxu0 0.0
    %7853 = vmatpush1.msra.mxu0 0.0
    %7854 = vmatprep.subr.mxu0 0.0
    %7855 = vmatpush1.msra.mxu0 0.0
    %7856 = vmatprep.subr.mxu0 0.0
    %7857 = vmatpush1.msra.mxu0 0.0
    %7858 = vmatprep.subr.mxu0 0.0
    %7859 = vmatpush1.msra.mxu0 0.0
    %7860 = vmatprep.subr.mxu0 0.0
    %7861 = vmatpush1.msra.mxu0 0.0
    %7862 = vmatprep.subr.mxu0 0.0
    %7863 = vmatpush1.msra.mxu0 0.0
    %7864 = vmatprep.subr.mxu0 0.0
    %7865 = vmatpush1.msra.mxu0 0.0
    %7866 = vmatprep.subr.mxu0 0.0
    %7867 = vmatpush1.msra.mxu0 0.0
    %7868 = vmatprep.subr.mxu0 0.0
    %7869 = vmatpush1.msra.mxu0 0.0
    %7870 = vmatprep.subr.mxu0 0.0
    %7871 = vmatpush1.msra.mxu0 0.0
    %7872 = vmatprep.subr.mxu0 0.0
    %7873 = vmatpush1.msra.mxu0 0.0
    %7874 = vmatprep.subr.mxu0 0.0
    %7875 = vmatpush1.msra.mxu0 0.0
    %7876 = vmatprep.subr.mxu0 0.0
    %7877 = vmatpush1.msra.mxu0 0.0
    %7878 = vmatprep.subr.mxu0 0.0
    %7879 = vmatpush1.msra.mxu0 0.0
    %7880 = vmatprep.subr.mxu0 0.0
    %7881 = vmatpush1.msra.mxu0 0.0
    %7882 = vmatprep.subr.mxu0 0.0
    %7883 = vmatpush1.msra.mxu0 0.0
    %7884 = vmatprep.subr.mxu0 0.0
    %7885 = vmatpush1.msra.mxu0 0.0
    %7886 = vmatprep.mubr.f32.mxu0 0.0
    %7887 = vmatmul.mubr.f32.gmra.mrb[0].mxu0 %v7607
    %v7888 = vpop.f32.mrb[0].mxu0
    %v7889 = vadd.f32 0.0, %v7888
    %v7890 = vpop.f32.mrb[0].mxu0
    %v7891 = vadd.f32 0.0, %v7890
    %7892 = vdwg.mxu0
    %7893 = vmatprep.subr.mxu0 %v4705
    %7894 = vmatpush1.msra.mxu0 %v4704
    %7895 = vmatprep.subr.mxu0 %v7444
    %7896 = vmatpush1.msra.mxu0 %v7443
    %7897 = vmatprep.subr.mxu0 %v7558
    %7898 = vmatpush1.msra.mxu0 %v7557
    %7899 = vmatprep.subr.mxu0 0.0
    %7900 = vmatpush1.msra.mxu0 0.0
    %7901 = vmatprep.subr.mxu0 0.0
    %7902 = vmatpush1.msra.mxu0 0.0
    %7903 = vmatprep.subr.mxu0 0.0
    %7904 = vmatpush1.msra.mxu0 0.0
    %7905 = vmatprep.subr.mxu0 0.0
    %7906 = vmatpush1.msra.mxu0 0.0
    %7907 = vmatprep.subr.mxu0 0.0
    %7908 = vmatpush1.msra.mxu0 0.0
    %7909 = vmatprep.subr.mxu0 0.0
    %7910 = vmatpush1.msra.mxu0 0.0
    %7911 = vmatprep.subr.mxu0 0.0
    %7912 = vmatpush1.msra.mxu0 0.0
    %7913 = vmatprep.subr.mxu0 0.0
    %7914 = vmatpush1.msra.mxu0 0.0
    %7915 = vmatprep.subr.mxu0 0.0
    %7916 = vmatpush1.msra.mxu0 0.0
    %7917 = vmatprep.subr.mxu0 0.0
    %7918 = vmatpush1.msra.mxu0 0.0
    %7919 = vmatprep.subr.mxu0 0.0
    %7920 = vmatpush1.msra.mxu0 0.0
    %7921 = vmatprep.subr.mxu0 0.0
    %7922 = vmatpush1.msra.mxu0 0.0
    %7923 = vmatprep.subr.mxu0 0.0
    %7924 = vmatpush1.msra.mxu0 0.0
    %7925 = vmatprep.subr.mxu0 0.0
    %7926 = vmatpush1.msra.mxu0 0.0
    %7927 = vmatprep.subr.mxu0 0.0
    %7928 = vmatpush1.msra.mxu0 0.0
    %7929 = vmatprep.subr.mxu0 0.0
    %7930 = vmatpush1.msra.mxu0 0.0
    %7931 = vmatprep.subr.mxu0 0.0
    %7932 = vmatpush1.msra.mxu0 0.0
    %7933 = vmatprep.subr.mxu0 0.0
    %7934 = vmatpush1.msra.mxu0 0.0
    %7935 = vmatprep.subr.mxu0 0.0
    %7936 = vmatpush1.msra.mxu0 0.0
    %7937 = vmatprep.subr.mxu0 0.0
    %7938 = vmatpush1.msra.mxu0 0.0
    %7939 = vmatprep.subr.mxu0 0.0
    %7940 = vmatpush1.msra.mxu0 0.0
    %7941 = vmatprep.subr.mxu0 0.0
    %7942 = vmatpush1.msra.mxu0 0.0
    %7943 = vmatprep.subr.mxu0 0.0
    %7944 = vmatpush1.msra.mxu0 0.0
    %7945 = vmatprep.subr.mxu0 0.0
    %7946 = vmatpush1.msra.mxu0 0.0
    %7947 = vmatprep.subr.mxu0 0.0
    %7948 = vmatpush1.msra.mxu0 0.0
    %7949 = vmatprep.subr.mxu0 0.0
    %7950 = vmatpush1.msra.mxu0 0.0
    %7951 = vmatprep.subr.mxu0 0.0
    %7952 = vmatpush1.msra.mxu0 0.0
    %7953 = vmatprep.subr.mxu0 0.0
    %7954 = vmatpush1.msra.mxu0 0.0
    %7955 = vmatprep.subr.mxu0 0.0
    %7956 = vmatpush1.msra.mxu0 0.0
    %7957 = vmatprep.mubr.f32.mxu0 0.0
    %7958 = vmatmul.mubr.f32.gmra.mrb[0].mxu0 %v7607
    %v7959 = vpop.f32.mrb[0].mxu0
    %v7960 = vadd.f32 0.0, %v7959
    %v7961 = vpop.f32.mrb[0].mxu0
    %v7962 = vadd.f32 0.0, %v7961
    %7963 = vdwg.mxu0
    %7964 = vmatprep.subr.mxu0 %v4707
    %7965 = vmatpush1.msra.mxu0 %v4706
    %7966 = vmatprep.subr.mxu0 %v7446
    %7967 = vmatpush1.msra.mxu0 %v7445
    %7968 = vmatprep.subr.mxu0 %v7560
    %7969 = vmatpush1.msra.mxu0 %v7559
    %7970 = vmatprep.subr.mxu0 0.0
    %7971 = vmatpush1.msra.mxu0 0.0
    %7972 = vmatprep.subr.mxu0 0.0
    %7973 = vmatpush1.msra.mxu0 0.0
    %7974 = vmatprep.subr.mxu0 0.0
    %7975 = vmatpush1.msra.mxu0 0.0
    %7976 = vmatprep.subr.mxu0 0.0
    %7977 = vmatpush1.msra.mxu0 0.0
    %7978 = vmatprep.subr.mxu0 0.0
    %7979 = vmatpush1.msra.mxu0 0.0
    %7980 = vmatprep.subr.mxu0 0.0
    %7981 = vmatpush1.msra.mxu0 0.0
    %7982 = vmatprep.subr.mxu0 0.0
    %7983 = vmatpush1.msra.mxu0 0.0
    %7984 = vmatprep.subr.mxu0 0.0
    %7985 = vmatpush1.msra.mxu0 0.0
    %7986 = vmatprep.subr.mxu0 0.0
    %7987 = vmatpush1.msra.mxu0 0.0
    %7988 = vmatprep.subr.mxu0 0.0
    %7989 = vmatpush1.msra.mxu0 0.0
    %7990 = vmatprep.subr.mxu0 0.0
    %7991 = vmatpush1.msra.mxu0 0.0
    %7992 = vmatprep.subr.mxu0 0.0
    %7993 = vmatpush1.msra.mxu0 0.0
    %7994 = vmatprep.subr.mxu0 0.0
    %7995 = vmatpush1.msra.mxu0 0.0
    %7996 = vmatprep.subr.mxu0 0.0
    %7997 = vmatpush1.msra.mxu0 0.0
    %7998 = vmatprep.subr.mxu0 0.0
    %7999 = vmatpush1.msra.mxu0 0.0
    %8000 = vmatprep.subr.mxu0 0.0
    %8001 = vmatpush1.msra.mxu0 0.0
    %8002 = vmatprep.subr.mxu0 0.0
    %8003 = vmatpush1.msra.mxu0 0.0
    %8004 = vmatprep.subr.mxu0 0.0
    %8005 = vmatpush1.msra.mxu0 0.0
    %8006 = vmatprep.subr.mxu0 0.0
    %8007 = vmatpush1.msra.mxu0 0.0
    %8008 = vmatprep.subr.mxu0 0.0
    %8009 = vmatpush1.msra.mxu0 0.0
    %8010 = vmatprep.subr.mxu0 0.0
    %8011 = vmatpush1.msra.mxu0 0.0
    %8012 = vmatprep.subr.mxu0 0.0
    %8013 = vmatpush1.msra.mxu0 0.0
    %8014 = vmatprep.subr.mxu0 0.0
    %8015 = vmatpush1.msra.mxu0 0.0
    %8016 = vmatprep.subr.mxu0 0.0
    %8017 = vmatpush1.msra.mxu0 0.0
    %8018 = vmatprep.subr.mxu0 0.0
    %8019 = vmatpush1.msra.mxu0 0.0
    %8020 = vmatprep.subr.mxu0 0.0
    %8021 = vmatpush1.msra.mxu0 0.0
    %8022 = vmatprep.subr.mxu0 0.0
    %8023 = vmatpush1.msra.mxu0 0.0
    %8024 = vmatprep.subr.mxu0 0.0
    %8025 = vmatpush1.msra.mxu0 0.0
    %8026 = vmatprep.subr.mxu0 0.0
    %8027 = vmatpush1.msra.mxu0 0.0
    %8028 = vmatprep.mubr.f32.mxu0 0.0
    %8029 = vmatmul.mubr.f32.gmra.mrb[0].mxu0 %v7607
    %v8030 = vpop.f32.mrb[0].mxu0
    %v8031 = vadd.f32 0.0, %v8030
    %v8032 = vpop.f32.mrb[0].mxu0
    %v8033 = vadd.f32 0.0, %v8032
    %8034 = vdwg.mxu0
    %8035 = vmatprep.subr.mxu0 %v4709
    %8036 = vmatpush1.msra.mxu0 %v4708
    %8037 = vmatprep.subr.mxu0 %v7448
    %8038 = vmatpush1.msra.mxu0 %v7447
    %8039 = vmatprep.subr.mxu0 %v7562
    %8040 = vmatpush1.msra.mxu0 %v7561
    %8041 = vmatprep.subr.mxu0 0.0
    %8042 = vmatpush1.msra.mxu0 0.0
    %8043 = vmatprep.subr.mxu0 0.0
    %8044 = vmatpush1.msra.mxu0 0.0
    %8045 = vmatprep.subr.mxu0 0.0
    %8046 = vmatpush1.msra.mxu0 0.0
    %8047 = vmatprep.subr.mxu0 0.0
    %8048 = vmatpush1.msra.mxu0 0.0
    %8049 = vmatprep.subr.mxu0 0.0
    %8050 = vmatpush1.msra.mxu0 0.0
    %8051 = vmatprep.subr.mxu0 0.0
    %8052 = vmatpush1.msra.mxu0 0.0
    %8053 = vmatprep.subr.mxu0 0.0
    %8054 = vmatpush1.msra.mxu0 0.0
    %8055 = vmatprep.subr.mxu0 0.0
    %8056 = vmatpush1.msra.mxu0 0.0
    %8057 = vmatprep.subr.mxu0 0.0
    %8058 = vmatpush1.msra.mxu0 0.0
    %8059 = vmatprep.subr.mxu0 0.0
    %8060 = vmatpush1.msra.mxu0 0.0
    %8061 = vmatprep.subr.mxu0 0.0
    %8062 = vmatpush1.msra.mxu0 0.0
    %8063 = vmatprep.subr.mxu0 0.0
    %8064 = vmatpush1.msra.mxu0 0.0
    %8065 = vmatprep.subr.mxu0 0.0
    %8066 = vmatpush1.msra.mxu0 0.0
    %8067 = vmatprep.subr.mxu0 0.0
    %8068 = vmatpush1.msra.mxu0 0.0
    %8069 = vmatprep.subr.mxu0 0.0
    %8070 = vmatpush1.msra.mxu0 0.0
    %8071 = vmatprep.subr.mxu0 0.0
    %8072 = vmatpush1.msra.mxu0 0.0
    %8073 = vmatprep.subr.mxu0 0.0
    %8074 = vmatpush1.msra.mxu0 0.0
    %8075 = vmatprep.subr.mxu0 0.0
    %8076 = vmatpush1.msra.mxu0 0.0
    %8077 = vmatprep.subr.mxu0 0.0
    %8078 = vmatpush1.msra.mxu0 0.0
    %8079 = vmatprep.subr.mxu0 0.0
    %8080 = vmatpush1.msra.mxu0 0.0
    %8081 = vmatprep.subr.mxu0 0.0
    %8082 = vmatpush1.msra.mxu0 0.0
    %8083 = vmatprep.subr.mxu0 0.0
    %8084 = vmatpush1.msra.mxu0 0.0
    %8085 = vmatprep.subr.mxu0 0.0
    %8086 = vmatpush1.msra.mxu0 0.0
    %8087 = vmatprep.subr.mxu0 0.0
    %8088 = vmatpush1.msra.mxu0 0.0
    %8089 = vmatprep.subr.mxu0 0.0
    %8090 = vmatpush1.msra.mxu0 0.0
    %8091 = vmatprep.subr.mxu0 0.0
    %8092 = vmatpush1.msra.mxu0 0.0
    %8093 = vmatprep.subr.mxu0 0.0
    %8094 = vmatpush1.msra.mxu0 0.0
    %8095 = vmatprep.subr.mxu0 0.0
    %8096 = vmatpush1.msra.mxu0 0.0
    %8097 = vmatprep.subr.mxu0 0.0
    %8098 = vmatpush1.msra.mxu0 0.0
    %8099 = vmatprep.mubr.f32.mxu0 0.0
    %8100 = vmatmul.mubr.f32.gmra.mrb[0].mxu0 %v7607
    %v8101 = vpop.f32.mrb[0].mxu0
    %v8102 = vadd.f32 0.0, %v8101
    %v8103 = vpop.f32.mrb[0].mxu0
    %v8104 = vadd.f32 0.0, %v8103
    %8105 = vdwg.mxu0
    %8106 = vmatprep.subr.mxu0 %v4711
    %8107 = vmatpush1.msra.mxu0 %v4710
    %8108 = vmatprep.subr.mxu0 %v7450
    %8109 = vmatpush1.msra.mxu0 %v7449
    %8110 = vmatprep.subr.mxu0 %v7564
    %8111 = vmatpush1.msra.mxu0 %v7563
    %8112 = vmatprep.subr.mxu0 0.0
    %8113 = vmatpush1.msra.mxu0 0.0
    %8114 = vmatprep.subr.mxu0 0.0
    %8115 = vmatpush1.msra.mxu0 0.0
    %8116 = vmatprep.subr.mxu0 0.0
    %8117 = vmatpush1.msra.mxu0 0.0
    %8118 = vmatprep.subr.mxu0 0.0
    %8119 = vmatpush1.msra.mxu0 0.0
    %8120 = vmatprep.subr.mxu0 0.0
    %8121 = vmatpush1.msra.mxu0 0.0
    %8122 = vmatprep.subr.mxu0 0.0
    %8123 = vmatpush1.msra.mxu0 0.0
    %8124 = vmatprep.subr.mxu0 0.0
    %8125 = vmatpush1.msra.mxu0 0.0
    %8126 = vmatprep.subr.mxu0 0.0
    %8127 = vmatpush1.msra.mxu0 0.0
    %8128 = vmatprep.subr.mxu0 0.0
    %8129 = vmatpush1.msra.mxu0 0.0
    %8130 = vmatprep.subr.mxu0 0.0
    %8131 = vmatpush1.msra.mxu0 0.0
    %8132 = vmatprep.subr.mxu0 0.0
    %8133 = vmatpush1.msra.mxu0 0.0
    %8134 = vmatprep.subr.mxu0 0.0
    %8135 = vmatpush1.msra.mxu0 0.0
    %8136 = vmatprep.subr.mxu0 0.0
    %8137 = vmatpush1.msra.mxu0 0.0
    %8138 = vmatprep.subr.mxu0 0.0
    %8139 = vmatpush1.msra.mxu0 0.0
    %8140 = vmatprep.subr.mxu0 0.0
    %8141 = vmatpush1.msra.mxu0 0.0
    %8142 = vmatprep.subr.mxu0 0.0
    %8143 = vmatpush1.msra.mxu0 0.0
    %8144 = vmatprep.subr.mxu0 0.0
    %8145 = vmatpush1.msra.mxu0 0.0
    %8146 = vmatprep.subr.mxu0 0.0
    %8147 = vmatpush1.msra.mxu0 0.0
    %8148 = vmatprep.subr.mxu0 0.0
    %8149 = vmatpush1.msra.mxu0 0.0
    %8150 = vmatprep.subr.mxu0 0.0
    %8151 = vmatpush1.msra.mxu0 0.0
    %8152 = vmatprep.subr.mxu0 0.0
    %8153 = vmatpush1.msra.mxu0 0.0
    %8154 = vmatprep.subr.mxu0 0.0
    %8155 = vmatpush1.msra.mxu0 0.0
    %8156 = vmatprep.subr.mxu0 0.0
    %8157 = vmatpush1.msra.mxu0 0.0
    %8158 = vmatprep.subr.mxu0 0.0
    %8159 = vmatpush1.msra.mxu0 0.0
    %8160 = vmatprep.subr.mxu0 0.0
    %8161 = vmatpush1.msra.mxu0 0.0
    %8162 = vmatprep.subr.mxu0 0.0
    %8163 = vmatpush1.msra.mxu0 0.0
    %8164 = vmatprep.subr.mxu0 0.0
    %8165 = vmatpush1.msra.mxu0 0.0
    %8166 = vmatprep.subr.mxu0 0.0
    %8167 = vmatpush1.msra.mxu0 0.0
    %8168 = vmatprep.subr.mxu0 0.0
    %8169 = vmatpush1.msra.mxu0 0.0
    %8170 = vmatprep.mubr.f32.mxu0 0.0
    %8171 = vmatmul.mubr.f32.gmra.mrb[0].mxu0 %v7607
    %v8172 = vpop.f32.mrb[0].mxu0
    %v8173 = vadd.f32 0.0, %v8172
    %v8174 = vpop.f32.mrb[0].mxu0
    %v8175 = vadd.f32 0.0, %v8174
    %8176 = vdwg.mxu0
    %8177 = vmatprep.subr.mxu0 %v4713
    %8178 = vmatpush1.msra.mxu0 %v4712
    %8179 = vmatprep.subr.mxu0 %v7452
    %8180 = vmatpush1.msra.mxu0 %v7451
    %8181 = vmatprep.subr.mxu0 %v7566
    %8182 = vmatpush1.msra.mxu0 %v7565
    %8183 = vmatprep.subr.mxu0 0.0
    %8184 = vmatpush1.msra.mxu0 0.0
    %8185 = vmatprep.subr.mxu0 0.0
    %8186 = vmatpush1.msra.mxu0 0.0
    %8187 = vmatprep.subr.mxu0 0.0
    %8188 = vmatpush1.msra.mxu0 0.0
    %8189 = vmatprep.subr.mxu0 0.0
    %8190 = vmatpush1.msra.mxu0 0.0
    %8191 = vmatprep.subr.mxu0 0.0
    %8192 = vmatpush1.msra.mxu0 0.0
    %8193 = vmatprep.subr.mxu0 0.0
    %8194 = vmatpush1.msra.mxu0 0.0
    %8195 = vmatprep.subr.mxu0 0.0
    %8196 = vmatpush1.msra.mxu0 0.0
    %8197 = vmatprep.subr.mxu0 0.0
    %8198 = vmatpush1.msra.mxu0 0.0
    %8199 = vmatprep.subr.mxu0 0.0
    %8200 = vmatpush1.msra.mxu0 0.0
    %8201 = vmatprep.subr.mxu0 0.0
    %8202 = vmatpush1.msra.mxu0 0.0
    %8203 = vmatprep.subr.mxu0 0.0
    %8204 = vmatpush1.msra.mxu0 0.0
    %8205 = vmatprep.subr.mxu0 0.0
    %8206 = vmatpush1.msra.mxu0 0.0
    %8207 = vmatprep.subr.mxu0 0.0
    %8208 = vmatpush1.msra.mxu0 0.0
    %8209 = vmatprep.subr.mxu0 0.0
    %8210 = vmatpush1.msra.mxu0 0.0
    %8211 = vmatprep.subr.mxu0 0.0
    %8212 = vmatpush1.msra.mxu0 0.0
    %8213 = vmatprep.subr.mxu0 0.0
    %8214 = vmatpush1.msra.mxu0 0.0
    %8215 = vmatprep.subr.mxu0 0.0
    %8216 = vmatpush1.msra.mxu0 0.0
    %8217 = vmatprep.subr.mxu0 0.0
    %8218 = vmatpush1.msra.mxu0 0.0
    %8219 = vmatprep.subr.mxu0 0.0
    %8220 = vmatpush1.msra.mxu0 0.0
    %8221 = vmatprep.subr.mxu0 0.0
    %8222 = vmatpush1.msra.mxu0 0.0
    %8223 = vmatprep.subr.mxu0 0.0
    %8224 = vmatpush1.msra.mxu0 0.0
    %8225 = vmatprep.subr.mxu0 0.0
    %8226 = vmatpush1.msra.mxu0 0.0
    %8227 = vmatprep.subr.mxu0 0.0
    %8228 = vmatpush1.msra.mxu0 0.0
    %8229 = vmatprep.subr.mxu0 0.0
    %8230 = vmatpush1.msra.mxu0 0.0
    %8231 = vmatprep.subr.mxu0 0.0
    %8232 = vmatpush1.msra.mxu0 0.0
    %8233 = vmatprep.subr.mxu0 0.0
    %8234 = vmatpush1.msra.mxu0 0.0
    %8235 = vmatprep.subr.mxu0 0.0
    %8236 = vmatpush1.msra.mxu0 0.0
    %8237 = vmatprep.subr.mxu0 0.0
    %8238 = vmatpush1.msra.mxu0 0.0
    %8239 = vmatprep.subr.mxu0 0.0
    %8240 = vmatpush1.msra.mxu0 0.0
    %8241 = vmatprep.mubr.f32.mxu0 0.0
    %8242 = vmatmul.mubr.f32.gmra.mrb[0].mxu0 %v7607
    %v8243 = vpop.f32.mrb[0].mxu0
    %v8244 = vadd.f32 0.0, %v8243
    %v8245 = vpop.f32.mrb[0].mxu0
    %v8246 = vadd.f32 0.0, %v8245
    %8247 = vdwg.mxu0
    %8248 = vmatprep.subr.mxu0 %v4715
    %8249 = vmatpush1.msra.mxu0 %v4714
    %8250 = vmatprep.subr.mxu0 %v7454
    %8251 = vmatpush1.msra.mxu0 %v7453
    %8252 = vmatprep.subr.mxu0 %v7568
    %8253 = vmatpush1.msra.mxu0 %v7567
    %8254 = vmatprep.subr.mxu0 0.0
    %8255 = vmatpush1.msra.mxu0 0.0
    %8256 = vmatprep.subr.mxu0 0.0
    %8257 = vmatpush1.msra.mxu0 0.0
    %8258 = vmatprep.subr.mxu0 0.0
    %8259 = vmatpush1.msra.mxu0 0.0
    %8260 = vmatprep.subr.mxu0 0.0
    %8261 = vmatpush1.msra.mxu0 0.0
    %8262 = vmatprep.subr.mxu0 0.0
    %8263 = vmatpush1.msra.mxu0 0.0
    %8264 = vmatprep.subr.mxu0 0.0
    %8265 = vmatpush1.msra.mxu0 0.0
    %8266 = vmatprep.subr.mxu0 0.0
    %8267 = vmatpush1.msra.mxu0 0.0
    %8268 = vmatprep.subr.mxu0 0.0
    %8269 = vmatpush1.msra.mxu0 0.0
    %8270 = vmatprep.subr.mxu0 0.0
    %8271 = vmatpush1.msra.mxu0 0.0
    %8272 = vmatprep.subr.mxu0 0.0
    %8273 = vmatpush1.msra.mxu0 0.0
    %8274 = vmatprep.subr.mxu0 0.0
    %8275 = vmatpush1.msra.mxu0 0.0
    %8276 = vmatprep.subr.mxu0 0.0
    %8277 = vmatpush1.msra.mxu0 0.0
    %8278 = vmatprep.subr.mxu0 0.0
    %8279 = vmatpush1.msra.mxu0 0.0
    %8280 = vmatprep.subr.mxu0 0.0
    %8281 = vmatpush1.msra.mxu0 0.0
    %8282 = vmatprep.subr.mxu0 0.0
    %8283 = vmatpush1.msra.mxu0 0.0
    %8284 = vmatprep.subr.mxu0 0.0
    %8285 = vmatpush1.msra.mxu0 0.0
    %8286 = vmatprep.subr.mxu0 0.0
    %8287 = vmatpush1.msra.mxu0 0.0
    %8288 = vmatprep.subr.mxu0 0.0
    %8289 = vmatpush1.msra.mxu0 0.0
    %8290 = vmatprep.subr.mxu0 0.0
    %8291 = vmatpush1.msra.mxu0 0.0
    %8292 = vmatprep.subr.mxu0 0.0
    %8293 = vmatpush1.msra.mxu0 0.0
    %8294 = vmatprep.subr.mxu0 0.0
    %8295 = vmatpush1.msra.mxu0 0.0
    %8296 = vmatprep.subr.mxu0 0.0
    %8297 = vmatpush1.msra.mxu0 0.0
    %8298 = vmatprep.subr.mxu0 0.0
    %8299 = vmatpush1.msra.mxu0 0.0
    %8300 = vmatprep.subr.mxu0 0.0
    %8301 = vmatpush1.msra.mxu0 0.0
    %8302 = vmatprep.subr.mxu0 0.0
    %8303 = vmatpush1.msra.mxu0 0.0
    %8304 = vmatprep.subr.mxu0 0.0
    %8305 = vmatpush1.msra.mxu0 0.0
    %8306 = vmatprep.subr.mxu0 0.0
    %8307 = vmatpush1.msra.mxu0 0.0
    %8308 = vmatprep.subr.mxu0 0.0
    %8309 = vmatpush1.msra.mxu0 0.0
    %8310 = vmatprep.subr.mxu0 0.0
    %8311 = vmatpush1.msra.mxu0 0.0
    %8312 = vmatprep.mubr.f32.mxu0 0.0
    %8313 = vmatmul.mubr.f32.gmra.mrb[0].mxu0 %v7607
    %v8314 = vpop.f32.mrb[0].mxu0
    %v8315 = vadd.f32 0.0, %v8314
    %v8316 = vpop.f32.mrb[0].mxu0
    %v8317 = vadd.f32 0.0, %v8316
    %8318 = vdwg.mxu0
    %8319 = vmatprep.subr.mxu0 %v4717
    %8320 = vmatpush1.msra.mxu0 %v4716
    %8321 = vmatprep.subr.mxu0 %v7456
    %8322 = vmatpush1.msra.mxu0 %v7455
    %8323 = vmatprep.subr.mxu0 %v7570
    %8324 = vmatpush1.msra.mxu0 %v7569
    %8325 = vmatprep.subr.mxu0 0.0
    %8326 = vmatpush1.msra.mxu0 0.0
    %8327 = vmatprep.subr.mxu0 0.0
    %8328 = vmatpush1.msra.mxu0 0.0
    %8329 = vmatprep.subr.mxu0 0.0
    %8330 = vmatpush1.msra.mxu0 0.0
    %8331 = vmatprep.subr.mxu0 0.0
    %8332 = vmatpush1.msra.mxu0 0.0
    %8333 = vmatprep.subr.mxu0 0.0
    %8334 = vmatpush1.msra.mxu0 0.0
    %8335 = vmatprep.subr.mxu0 0.0
    %8336 = vmatpush1.msra.mxu0 0.0
    %8337 = vmatprep.subr.mxu0 0.0
    %8338 = vmatpush1.msra.mxu0 0.0
    %8339 = vmatprep.subr.mxu0 0.0
    %8340 = vmatpush1.msra.mxu0 0.0
    %8341 = vmatprep.subr.mxu0 0.0
    %8342 = vmatpush1.msra.mxu0 0.0
    %8343 = vmatprep.subr.mxu0 0.0
    %8344 = vmatpush1.msra.mxu0 0.0
    %8345 = vmatprep.subr.mxu0 0.0
    %8346 = vmatpush1.msra.mxu0 0.0
    %8347 = vmatprep.subr.mxu0 0.0
    %8348 = vmatpush1.msra.mxu0 0.0
    %8349 = vmatprep.subr.mxu0 0.0
    %8350 = vmatpush1.msra.mxu0 0.0
    %8351 = vmatprep.subr.mxu0 0.0
    %8352 = vmatpush1.msra.mxu0 0.0
    %8353 = vmatprep.subr.mxu0 0.0
    %8354 = vmatpush1.msra.mxu0 0.0
    %8355 = vmatprep.subr.mxu0 0.0
    %8356 = vmatpush1.msra.mxu0 0.0
    %8357 = vmatprep.subr.mxu0 0.0
    %8358 = vmatpush1.msra.mxu0 0.0
    %8359 = vmatprep.subr.mxu0 0.0
    %8360 = vmatpush1.msra.mxu0 0.0
    %8361 = vmatprep.subr.mxu0 0.0
    %8362 = vmatpush1.msra.mxu0 0.0
    %8363 = vmatprep.subr.mxu0 0.0
    %8364 = vmatpush1.msra.mxu0 0.0
    %8365 = vmatprep.subr.mxu0 0.0
    %8366 = vmatpush1.msra.mxu0 0.0
    %8367 = vmatprep.subr.mxu0 0.0
    %8368 = vmatpush1.msra.mxu0 0.0
    %8369 = vmatprep.subr.mxu0 0.0
    %8370 = vmatpush1.msra.mxu0 0.0
    %8371 = vmatprep.subr.mxu0 0.0
    %8372 = vmatpush1.msra.mxu0 0.0
    %8373 = vmatprep.subr.mxu0 0.0
    %8374 = vmatpush1.msra.mxu0 0.0
    %8375 = vmatprep.subr.mxu0 0.0
    %8376 = vmatpush1.msra.mxu0 0.0
    %8377 = vmatprep.subr.mxu0 0.0
    %8378 = vmatpush1.msra.mxu0 0.0
    %8379 = vmatprep.subr.mxu0 0.0
    %8380 = vmatpush1.msra.mxu0 0.0
    %8381 = vmatprep.subr.mxu0 0.0
    %8382 = vmatpush1.msra.mxu0 0.0
    %8383 = vmatprep.mubr.f32.mxu0 0.0
    %8384 = vmatmul.mubr.f32.gmra.mrb[0].mxu0 %v7607
    %v8385 = vpop.f32.mrb[0].mxu0
    %v8386 = vadd.f32 0.0, %v8385
    %v8387 = vpop.f32.mrb[0].mxu0
    %v8388 = vadd.f32 0.0, %v8387
    %8389 = vdwg.mxu0
    %8390 = vmatprep.subr.mxu0 %v4719
    %8391 = vmatpush1.msra.mxu0 %v4718
    %8392 = vmatprep.subr.mxu0 %v7458
    %8393 = vmatpush1.msra.mxu0 %v7457
    %8394 = vmatprep.subr.mxu0 %v7572
    %8395 = vmatpush1.msra.mxu0 %v7571
    %8396 = vmatprep.subr.mxu0 0.0
    %8397 = vmatpush1.msra.mxu0 0.0
    %8398 = vmatprep.subr.mxu0 0.0
    %8399 = vmatpush1.msra.mxu0 0.0
    %8400 = vmatprep.subr.mxu0 0.0
    %8401 = vmatpush1.msra.mxu0 0.0
    %8402 = vmatprep.subr.mxu0 0.0
    %8403 = vmatpush1.msra.mxu0 0.0
    %8404 = vmatprep.subr.mxu0 0.0
    %8405 = vmatpush1.msra.mxu0 0.0
    %8406 = vmatprep.subr.mxu0 0.0
    %8407 = vmatpush1.msra.mxu0 0.0
    %8408 = vmatprep.subr.mxu0 0.0
    %8409 = vmatpush1.msra.mxu0 0.0
    %8410 = vmatprep.subr.mxu0 0.0
    %8411 = vmatpush1.msra.mxu0 0.0
    %8412 = vmatprep.subr.mxu0 0.0
    %8413 = vmatpush1.msra.mxu0 0.0
    %8414 = vmatprep.subr.mxu0 0.0
    %8415 = vmatpush1.msra.mxu0 0.0
    %8416 = vmatprep.subr.mxu0 0.0
    %8417 = vmatpush1.msra.mxu0 0.0
    %8418 = vmatprep.subr.mxu0 0.0
    %8419 = vmatpush1.msra.mxu0 0.0
    %8420 = vmatprep.subr.mxu0 0.0
    %8421 = vmatpush1.msra.mxu0 0.0
    %8422 = vmatprep.subr.mxu0 0.0
    %8423 = vmatpush1.msra.mxu0 0.0
    %8424 = vmatprep.subr.mxu0 0.0
    %8425 = vmatpush1.msra.mxu0 0.0
    %8426 = vmatprep.subr.mxu0 0.0
    %8427 = vmatpush1.msra.mxu0 0.0
    %8428 = vmatprep.subr.mxu0 0.0
    %8429 = vmatpush1.msra.mxu0 0.0
    %8430 = vmatprep.subr.mxu0 0.0
    %8431 = vmatpush1.msra.mxu0 0.0
    %8432 = vmatprep.subr.mxu0 0.0
    %8433 = vmatpush1.msra.mxu0 0.0
    %8434 = vmatprep.subr.mxu0 0.0
    %8435 = vmatpush1.msra.mxu0 0.0
    %8436 = vmatprep.subr.mxu0 0.0
    %8437 = vmatpush1.msra.mxu0 0.0
    %8438 = vmatprep.subr.mxu0 0.0
    %8439 = vmatpush1.msra.mxu0 0.0
    %8440 = vmatprep.subr.mxu0 0.0
    %8441 = vmatpush1.msra.mxu0 0.0
    %8442 = vmatprep.subr.mxu0 0.0
    %8443 = vmatpush1.msra.mxu0 0.0
    %8444 = vmatprep.subr.mxu0 0.0
    %8445 = vmatpush1.msra.mxu0 0.0
    %8446 = vmatprep.subr.mxu0 0.0
    %8447 = vmatpush1.msra.mxu0 0.0
    %8448 = vmatprep.subr.mxu0 0.0
    %8449 = vmatpush1.msra.mxu0 0.0
    %8450 = vmatprep.subr.mxu0 0.0
    %8451 = vmatpush1.msra.mxu0 0.0
    %8452 = vmatprep.subr.mxu0 0.0
    %8453 = vmatpush1.msra.mxu0 0.0
    %8454 = vmatprep.mubr.f32.mxu0 0.0
    %8455 = vmatmul.mubr.f32.gmra.mrb[0].mxu0 %v7607
    %v8456 = vpop.f32.mrb[0].mxu0
    %v8457 = vadd.f32 0.0, %v8456
    %v8458 = vpop.f32.mrb[0].mxu0
    %v8459 = vadd.f32 0.0, %v8458
    %8460 = vdwg.mxu0
    %8461 = vmatprep.subr.mxu0 %v4721
    %8462 = vmatpush1.msra.mxu0 %v4720
    %8463 = vmatprep.subr.mxu0 %v7460
    %8464 = vmatpush1.msra.mxu0 %v7459
    %8465 = vmatprep.subr.mxu0 %v7574
    %8466 = vmatpush1.msra.mxu0 %v7573
    %8467 = vmatprep.subr.mxu0 0.0
    %8468 = vmatpush1.msra.mxu0 0.0
    %8469 = vmatprep.subr.mxu0 0.0
    %8470 = vmatpush1.msra.mxu0 0.0
    %8471 = vmatprep.subr.mxu0 0.0
    %8472 = vmatpush1.msra.mxu0 0.0
    %8473 = vmatprep.subr.mxu0 0.0
    %8474 = vmatpush1.msra.mxu0 0.0
    %8475 = vmatprep.subr.mxu0 0.0
    %8476 = vmatpush1.msra.mxu0 0.0
    %8477 = vmatprep.subr.mxu0 0.0
    %8478 = vmatpush1.msra.mxu0 0.0
    %8479 = vmatprep.subr.mxu0 0.0
    %8480 = vmatpush1.msra.mxu0 0.0
    %8481 = vmatprep.subr.mxu0 0.0
    %8482 = vmatpush1.msra.mxu0 0.0
    %8483 = vmatprep.subr.mxu0 0.0
    %8484 = vmatpush1.msra.mxu0 0.0
    %8485 = vmatprep.subr.mxu0 0.0
    %8486 = vmatpush1.msra.mxu0 0.0
    %8487 = vmatprep.subr.mxu0 0.0
    %8488 = vmatpush1.msra.mxu0 0.0
    %8489 = vmatprep.subr.mxu0 0.0
    %8490 = vmatpush1.msra.mxu0 0.0
    %8491 = vmatprep.subr.mxu0 0.0
    %8492 = vmatpush1.msra.mxu0 0.0
    %8493 = vmatprep.subr.mxu0 0.0
    %8494 = vmatpush1.msra.mxu0 0.0
    %8495 = vmatprep.subr.mxu0 0.0
    %8496 = vmatpush1.msra.mxu0 0.0
    %8497 = vmatprep.subr.mxu0 0.0
    %8498 = vmatpush1.msra.mxu0 0.0
    %8499 = vmatprep.subr.mxu0 0.0
    %8500 = vmatpush1.msra.mxu0 0.0
    %8501 = vmatprep.subr.mxu0 0.0
    %8502 = vmatpush1.msra.mxu0 0.0
    %8503 = vmatprep.subr.mxu0 0.0
    %8504 = vmatpush1.msra.mxu0 0.0
    %8505 = vmatprep.subr.mxu0 0.0
    %8506 = vmatpush1.msra.mxu0 0.0
    %8507 = vmatprep.subr.mxu0 0.0
    %8508 = vmatpush1.msra.mxu0 0.0
    %8509 = vmatprep.subr.mxu0 0.0
    %8510 = vmatpush1.msra.mxu0 0.0
    %8511 = vmatprep.subr.mxu0 0.0
    %8512 = vmatpush1.msra.mxu0 0.0
    %8513 = vmatprep.subr.mxu0 0.0
    %8514 = vmatpush1.msra.mxu0 0.0
    %8515 = vmatprep.subr.mxu0 0.0
    %8516 = vmatpush1.msra.mxu0 0.0
    %8517 = vmatprep.subr.mxu0 0.0
    %8518 = vmatpush1.msra.mxu0 0.0
    %8519 = vmatprep.subr.mxu0 0.0
    %8520 = vmatpush1.msra.mxu0 0.0
    %8521 = vmatprep.subr.mxu0 0.0
    %8522 = vmatpush1.msra.mxu0 0.0
    %8523 = vmatprep.subr.mxu0 0.0
    %8524 = vmatpush1.msra.mxu0 0.0
    %8525 = vmatprep.mubr.f32.mxu0 0.0
    %8526 = vmatmul.mubr.f32.gmra.mrb[0].mxu0 %v7607
    %v8527 = vpop.f32.mrb[0].mxu0
    %v8528 = vadd.f32 0.0, %v8527
    %v8529 = vpop.f32.mrb[0].mxu0
    %v8530 = vadd.f32 0.0, %v8529
    %8531 = vdwg.mxu0
    %8532 = vmatprep.subr.mxu0 %v4723
    %8533 = vmatpush1.msra.mxu0 %v4722
    %8534 = vmatprep.subr.mxu0 %v7462
    %8535 = vmatpush1.msra.mxu0 %v7461
    %8536 = vmatprep.subr.mxu0 %v7576
    %8537 = vmatpush1.msra.mxu0 %v7575
    %8538 = vmatprep.subr.mxu0 0.0
    %8539 = vmatpush1.msra.mxu0 0.0
    %8540 = vmatprep.subr.mxu0 0.0
    %8541 = vmatpush1.msra.mxu0 0.0
    %8542 = vmatprep.subr.mxu0 0.0
    %8543 = vmatpush1.msra.mxu0 0.0
    %8544 = vmatprep.subr.mxu0 0.0
    %8545 = vmatpush1.msra.mxu0 0.0
    %8546 = vmatprep.subr.mxu0 0.0
    %8547 = vmatpush1.msra.mxu0 0.0
    %8548 = vmatprep.subr.mxu0 0.0
    %8549 = vmatpush1.msra.mxu0 0.0
    %8550 = vmatprep.subr.mxu0 0.0
    %8551 = vmatpush1.msra.mxu0 0.0
    %8552 = vmatprep.subr.mxu0 0.0
    %8553 = vmatpush1.msra.mxu0 0.0
    %8554 = vmatprep.subr.mxu0 0.0
    %8555 = vmatpush1.msra.mxu0 0.0
    %8556 = vmatprep.subr.mxu0 0.0
    %8557 = vmatpush1.msra.mxu0 0.0
    %8558 = vmatprep.subr.mxu0 0.0
    %8559 = vmatpush1.msra.mxu0 0.0
    %8560 = vmatprep.subr.mxu0 0.0
    %8561 = vmatpush1.msra.mxu0 0.0
    %8562 = vmatprep.subr.mxu0 0.0
    %8563 = vmatpush1.msra.mxu0 0.0
    %8564 = vmatprep.subr.mxu0 0.0
    %8565 = vmatpush1.msra.mxu0 0.0
    %8566 = vmatprep.subr.mxu0 0.0
    %8567 = vmatpush1.msra.mxu0 0.0
    %8568 = vmatprep.subr.mxu0 0.0
    %8569 = vmatpush1.msra.mxu0 0.0
    %8570 = vmatprep.subr.mxu0 0.0
    %8571 = vmatpush1.msra.mxu0 0.0
    %8572 = vmatprep.subr.mxu0 0.0
    %8573 = vmatpush1.msra.mxu0 0.0
    %8574 = vmatprep.subr.mxu0 0.0
    %8575 = vmatpush1.msra.mxu0 0.0
    %8576 = vmatprep.subr.mxu0 0.0
    %8577 = vmatpush1.msra.mxu0 0.0
    %8578 = vmatprep.subr.mxu0 0.0
    %8579 = vmatpush1.msra.mxu0 0.0
    %8580 = vmatprep.subr.mxu0 0.0
    %8581 = vmatpush1.msra.mxu0 0.0
    %8582 = vmatprep.subr.mxu0 0.0
    %8583 = vmatpush1.msra.mxu0 0.0
    %8584 = vmatprep.subr.mxu0 0.0
    %8585 = vmatpush1.msra.mxu0 0.0
    %8586 = vmatprep.subr.mxu0 0.0
    %8587 = vmatpush1.msra.mxu0 0.0
    %8588 = vmatprep.subr.mxu0 0.0
    %8589 = vmatpush1.msra.mxu0 0.0
    %8590 = vmatprep.subr.mxu0 0.0
    %8591 = vmatpush1.msra.mxu0 0.0
    %8592 = vmatprep.subr.mxu0 0.0
    %8593 = vmatpush1.msra.mxu0 0.0
    %8594 = vmatprep.subr.mxu0 0.0
    %8595 = vmatpush1.msra.mxu0 0.0
    %8596 = vmatprep.mubr.f32.mxu0 0.0
    %8597 = vmatmul.mubr.f32.gmra.mrb[0].mxu0 %v7607
    %v8598 = vpop.f32.mrb[0].mxu0
    %v8599 = vadd.f32 0.0, %v8598
    %v8600 = vpop.f32.mrb[0].mxu0
    %v8601 = vadd.f32 0.0, %v8600
    %8602 = vdwg.mxu0
    %v8603 = vadd.f32 %v6392, %v7676
    %v8604 = vadd.f32 %v6394, %v7678
    %v8605 = vadd.f32 %v6463, %v7747
    %v8606 = vadd.f32 %v6465, %v7749
    %v8607 = vadd.f32 %v6534, %v7818
    %v8608 = vadd.f32 %v6536, %v7820
    %v8609 = vadd.f32 %v6605, %v7889
    %v8610 = vadd.f32 %v6607, %v7891
    %v8611 = vadd.f32 %v6676, %v7960
    %v8612 = vadd.f32 %v6678, %v7962
    %v8613 = vadd.f32 %v6747, %v8031
    %v8614 = vadd.f32 %v6749, %v8033
    %v8615 = vadd.f32 %v6818, %v8102
    %v8616 = vadd.f32 %v6820, %v8104
    %v8617 = vadd.f32 %v6889, %v8173
    %v8618 = vadd.f32 %v6891, %v8175
    %v8619 = vadd.f32 %v6960, %v8244
    %v8620 = vadd.f32 %v6962, %v8246
    %v8621 = vadd.f32 %v7031, %v8315
    %v8622 = vadd.f32 %v7033, %v8317
    %v8623 = vadd.f32 %v7102, %v8386
    %v8624 = vadd.f32 %v7104, %v8388
    %v8625 = vadd.f32 %v7173, %v8457
    %v8626 = vadd.f32 %v7175, %v8459
    %v8627 = vadd.f32 %v7244, %v8528
    %v8628 = vadd.f32 %v7246, %v8530
    %v8629 = vadd.f32 %v7315, %v8599
    %v8630 = vadd.f32 %v7317, %v8601
    %v8631 = vadd.f32 %v8603, %v4094
    %v8632 = vadd.f32 %v8604, %v4094
    %v8633 = vadd.f32 %v8605, %v4094
    %v8634 = vadd.f32 %v8606, %v4094
    %v8635 = vadd.f32 %v8607, %v4094
    %v8636 = vadd.f32 %v8608, %v4094
    %v8637 = vadd.f32 %v8609, %v4094
    %v8638 = vadd.f32 %v8610, %v4094
    %v8639 = vadd.f32 %v8611, %v4094
    %v8640 = vadd.f32 %v8612, %v4094
    %v8641 = vadd.f32 %v8613, %v4094
    %v8642 = vadd.f32 %v8614, %v4094
    %v8643 = vadd.f32 %v8615, %v4094
    %v8644 = vadd.f32 %v8616, %v4094
    %v8645 = vadd.f32 %v8617, %v4094
    %v8646 = vadd.f32 %v8618, %v4094
    %v8647 = vadd.f32 %v8619, %v4094
    %v8648 = vadd.f32 %v8620, %v4094
    %v8649 = vadd.f32 %v8621, %v4094
    %v8650 = vadd.f32 %v8622, %v4094
    %v8651 = vadd.f32 %v8623, %v4094
    %v8652 = vadd.f32 %v8624, %v4094
    %v8653 = vadd.f32 %v8625, %v4094
    %v8654 = vadd.f32 %v8626, %v4094
    %v8655 = vadd.f32 %v8627, %v4094
    %v8656 = vadd.f32 %v8628, %v4094
    %v8657 = vadd.f32 %v8629, %v4094
    %v8658 = vadd.f32 %v8630, %v4094
    %v8659 = vmax.f32 %v8631, 0.0
    %v8660 = vmax.f32 %v8632, 0.0
    %v8661 = vmax.f32 %v8633, 0.0
    %v8662 = vmax.f32 %v8634, 0.0
    %v8663 = vmax.f32 %v8635, 0.0
    %v8664 = vmax.f32 %v8636, 0.0
    %v8665 = vmax.f32 %v8637, 0.0
    %v8666 = vmax.f32 %v8638, 0.0
    %v8667 = vmax.f32 %v8639, 0.0
    %v8668 = vmax.f32 %v8640, 0.0
    %v8669 = vmax.f32 %v8641, 0.0
    %v8670 = vmax.f32 %v8642, 0.0
    %v8671 = vmax.f32 %v8643, 0.0
    %v8672 = vmax.f32 %v8644, 0.0
    %v8673 = vmax.f32 %v8645, 0.0
    %v8674 = vmax.f32 %v8646, 0.0
    %v8675 = vmax.f32 %v8647, 0.0
    %v8676 = vmax.f32 %v8648, 0.0
    %v8677 = vmax.f32 %v8649, 0.0
    %v8678 = vmax.f32 %v8650, 0.0
    %v8679 = vmax.f32 %v8651, 0.0
    %v8680 = vmax.f32 %v8652, 0.0
    %v8681 = vmax.f32 %v8653, 0.0
    %v8682 = vmax.f32 %v8654, 0.0
    %v8683 = vmax.f32 %v8655, 0.0
    %v8684 = vmax.f32 %v8656, 0.0
    %v8685 = vmax.f32 %v8657, 0.0
    %v8686 = vmax.f32 %v8658, 0.0
    %v8687 = vpack.c.bf16 %v8659, %v8659
    %v8688 = vpack.c.bf16 %v8660, %v8660
    %v8689 = vpack.c.bf16 %v8661, %v8661
    %v8690 = vpack.c.bf16 %v8662, %v8662
    %v8691 = vpack.c.bf16 %v8663, %v8663
    %v8692 = vpack.c.bf16 %v8664, %v8664
    %v8693 = vpack.c.bf16 %v8665, %v8665
    %v8694 = vpack.c.bf16 %v8666, %v8666
    %v8695 = vpack.c.bf16 %v8667, %v8667
    %v8696 = vpack.c.bf16 %v8668, %v8668
    %v8697 = vpack.c.bf16 %v8669, %v8669
    %v8698 = vpack.c.bf16 %v8670, %v8670
    %v8699 = vpack.c.bf16 %v8671, %v8671
    %v8700 = vpack.c.bf16 %v8672, %v8672
    %v8701 = vpack.c.bf16 %v8673, %v8673
    %v8702 = vpack.c.bf16 %v8674, %v8674
    %v8703 = vpack.c.bf16 %v8675, %v8675
    %v8704 = vpack.c.bf16 %v8676, %v8676
    %v8705 = vpack.c.bf16 %v8677, %v8677
    %v8706 = vpack.c.bf16 %v8678, %v8678
    %v8707 = vpack.c.bf16 %v8679, %v8679
    %v8708 = vpack.c.bf16 %v8680, %v8680
    %v8709 = vpack.c.bf16 %v8681, %v8681
    %v8710 = vpack.c.bf16 %v8682, %v8682
    %v8711 = vpack.c.bf16 %v8683, %v8683
    %v8712 = vpack.c.bf16 %v8684, %v8684
    %v8713 = vpack.c.bf16 %v8685, %v8685
    %v8714 = vpack.c.bf16 %v8686, %v8686
    %v8716 = vshrl.u32 %v8687, 16
    %v8719 = vshrl.u32 %v8688, 16
    %v8722 = vshrl.u32 %v8689, 16
    %v8725 = vshrl.u32 %v8690, 16
    %v8728 = vshrl.u32 %v8691, 16
    %v8731 = vshrl.u32 %v8692, 16
    %v8734 = vshrl.u32 %v8693, 16
    %v8737 = vshrl.u32 %v8694, 16
    %v8740 = vshrl.u32 %v8695, 16
    %v8743 = vshrl.u32 %v8696, 16
    %v8746 = vshrl.u32 %v8697, 16
    %v8749 = vshrl.u32 %v8698, 16
    %v8752 = vshrl.u32 %v8699, 16
    %v8755 = vshrl.u32 %v8700, 16
    %v8758 = vshrl.u32 %v8701, 16
    %v8761 = vshrl.u32 %v8702, 16
    %v8764 = vshrl.u32 %v8703, 16
    %v8767 = vshrl.u32 %v8704, 16
    %v8770 = vshrl.u32 %v8705, 16
    %v8773 = vshrl.u32 %v8706, 16
    %v8776 = vshrl.u32 %v8707, 16
    %v8779 = vshrl.u32 %v8708, 16
    %v8782 = vshrl.u32 %v8709, 16
    %v8785 = vshrl.u32 %v8710, 16
    %v8788 = vshrl.u32 %v8711, 16
    %v8791 = vshrl.u32 %v8712, 16
    %v8794 = vshrl.u32 %v8713, 16
    %v8797 = vshrl.u32 %v8714, 16
    %v8827 = vcombine.low %v8687, %v8688
    %v8828 = vcombine.low %v8689, %v8690
    %v8829 = vcombine.low %v8691, %v8692
    %v8830 = vcombine.low %v8693, %v8694
    %v8832 = vunpack.c.l.s4 1966171168
    %v8833 = vunpack.c.0.s8 %v8832
    %v8834 = vlaneseq
    %v8835 = vshrl.u32 %v8834, 7
    %v8836 = vsub.s32 %v8833, %v8835
    %v8837 = vrot.slane %v8827, %v8836
    %v8839 = vunpack.c.l.s4 1966171168
    %v8840 = vunpack.c.0.s8 %v8839
    %v8841 = vlaneseq
    %v8842 = vshrl.u32 %v8841, 7
    %v8843 = vsub.s32 %v8840, %v8842
    %v8844 = vrot.slane %v8828, %v8843
    %v8846 = vunpack.c.l.s4 1966171168
    %v8847 = vunpack.c.0.s8 %v8846
    %v8848 = vlaneseq
    %v8849 = vshrl.u32 %v8848, 7
    %v8850 = vsub.s32 %v8847, %v8849
    %v8851 = vrot.slane %v8829, %v8850
    %v8853 = vunpack.c.l.s4 1966171168
    %v8854 = vunpack.c.0.s8 %v8853
    %v8855 = vlaneseq
    %v8856 = vshrl.u32 %v8855, 7
    %v8857 = vsub.s32 %v8854, %v8856
    %v8858 = vrot.slane %v8830, %v8857
    %v8859 = vcombine.low %v8837, %v8844
    %v8860 = vcombine.low %v8851, %v8858
    %v8862 = vunpack.c.l.s4 1966171168
    %v8863 = vunpack.c.0.s8 %v8862
    %v8864 = vlaneseq
    %v8865 = vshrl.u32 %v8864, 7
    %v8866 = vsub.s32 %v8863, %v8865
    %v8867 = vrot.slane %v8859, %v8866
    %v8869 = vunpack.c.l.s4 1966171168
    %v8870 = vunpack.c.0.s8 %v8869
    %v8871 = vlaneseq
    %v8872 = vshrl.u32 %v8871, 7
    %v8873 = vsub.s32 %v8870, %v8872
    %v8874 = vrot.slane %v8860, %v8873
    %v8875 = vcombine.low %v8867, %v8874
    %v8876 = vcombine.low %v8695, %v8696
    %v8877 = vcombine.low %v8697, %v8698
    %v8878 = vcombine.low %v8699, %v8700
    %v8879 = vcombine.low %v8701, %v8702
    %v8881 = vunpack.c.l.s4 1966171168
    %v8882 = vunpack.c.0.s8 %v8881
    %v8883 = vlaneseq
    %v8884 = vshrl.u32 %v8883, 7
    %v8885 = vsub.s32 %v8882, %v8884
    %v8886 = vrot.slane %v8876, %v8885
    %v8888 = vunpack.c.l.s4 1966171168
    %v8889 = vunpack.c.0.s8 %v8888
    %v8890 = vlaneseq
    %v8891 = vshrl.u32 %v8890, 7
    %v8892 = vsub.s32 %v8889, %v8891
    %v8893 = vrot.slane %v8877, %v8892
    %v8895 = vunpack.c.l.s4 1966171168
    %v8896 = vunpack.c.0.s8 %v8895
    %v8897 = vlaneseq
    %v8898 = vshrl.u32 %v8897, 7
    %v8899 = vsub.s32 %v8896, %v8898
    %v8900 = vrot.slane %v8878, %v8899
    %v8902 = vunpack.c.l.s4 1966171168
    %v8903 = vunpack.c.0.s8 %v8902
    %v8904 = vlaneseq
    %v8905 = vshrl.u32 %v8904, 7
    %v8906 = vsub.s32 %v8903, %v8905
    %v8907 = vrot.slane %v8879, %v8906
    %v8908 = vcombine.low %v8886, %v8893
    %v8909 = vcombine.low %v8900, %v8907
    %v8911 = vunpack.c.l.s4 1966171168
    %v8912 = vunpack.c.0.s8 %v8911
    %v8913 = vlaneseq
    %v8914 = vshrl.u32 %v8913, 7
    %v8915 = vsub.s32 %v8912, %v8914
    %v8916 = vrot.slane %v8908, %v8915
    %v8918 = vunpack.c.l.s4 1966171168
    %v8919 = vunpack.c.0.s8 %v8918
    %v8920 = vlaneseq
    %v8921 = vshrl.u32 %v8920, 7
    %v8922 = vsub.s32 %v8919, %v8921
    %v8923 = vrot.slane %v8909, %v8922
    %v8924 = vcombine.low %v8916, %v8923
    %v8925 = vcombine.low %v8703, %v8704
    %v8926 = vcombine.low %v8705, %v8706
    %v8927 = vcombine.low %v8707, %v8708
    %v8928 = vcombine.low %v8709, %v8710
    %v8930 = vunpack.c.l.s4 1966171168
    %v8931 = vunpack.c.0.s8 %v8930
    %v8932 = vlaneseq
    %v8933 = vshrl.u32 %v8932, 7
    %v8934 = vsub.s32 %v8931, %v8933
    %v8935 = vrot.slane %v8925, %v8934
    %v8937 = vunpack.c.l.s4 1966171168
    %v8938 = vunpack.c.0.s8 %v8937
    %v8939 = vlaneseq
    %v8940 = vshrl.u32 %v8939, 7
    %v8941 = vsub.s32 %v8938, %v8940
    %v8942 = vrot.slane %v8926, %v8941
    %v8944 = vunpack.c.l.s4 1966171168
    %v8945 = vunpack.c.0.s8 %v8944
    %v8946 = vlaneseq
    %v8947 = vshrl.u32 %v8946, 7
    %v8948 = vsub.s32 %v8945, %v8947
    %v8949 = vrot.slane %v8927, %v8948
    %v8951 = vunpack.c.l.s4 1966171168
    %v8952 = vunpack.c.0.s8 %v8951
    %v8953 = vlaneseq
    %v8954 = vshrl.u32 %v8953, 7
    %v8955 = vsub.s32 %v8952, %v8954
    %v8956 = vrot.slane %v8928, %v8955
    %v8957 = vcombine.low %v8935, %v8942
    %v8958 = vcombine.low %v8949, %v8956
    %v8960 = vunpack.c.l.s4 1966171168
    %v8961 = vunpack.c.0.s8 %v8960
    %v8962 = vlaneseq
    %v8963 = vshrl.u32 %v8962, 7
    %v8964 = vsub.s32 %v8961, %v8963
    %v8965 = vrot.slane %v8957, %v8964
    %v8967 = vunpack.c.l.s4 1966171168
    %v8968 = vunpack.c.0.s8 %v8967
    %v8969 = vlaneseq
    %v8970 = vshrl.u32 %v8969, 7
    %v8971 = vsub.s32 %v8968, %v8970
    %v8972 = vrot.slane %v8958, %v8971
    %v8973 = vcombine.low %v8965, %v8972
    %v8974 = vcombine.low %v8711, %v8712
    %v8975 = vcombine.low %v8713, %v8714
    %v8976 = vcombine.low %v8716, %v8719
    %v8977 = vcombine.low %v8722, %v8725
    %v8979 = vunpack.c.l.s4 1966171168
    %v8980 = vunpack.c.0.s8 %v8979
    %v8981 = vlaneseq
    %v8982 = vshrl.u32 %v8981, 7
    %v8983 = vsub.s32 %v8980, %v8982
    %v8984 = vrot.slane %v8974, %v8983
    %v8986 = vunpack.c.l.s4 1966171168
    %v8987 = vunpack.c.0.s8 %v8986
    %v8988 = vlaneseq
    %v8989 = vshrl.u32 %v8988, 7
    %v8990 = vsub.s32 %v8987, %v8989
    %v8991 = vrot.slane %v8975, %v8990
    %v8993 = vunpack.c.l.s4 1966171168
    %v8994 = vunpack.c.0.s8 %v8993
    %v8995 = vlaneseq
    %v8996 = vshrl.u32 %v8995, 7
    %v8997 = vsub.s32 %v8994, %v8996
    %v8998 = vrot.slane %v8976, %v8997
    %v9000 = vunpack.c.l.s4 1966171168
    %v9001 = vunpack.c.0.s8 %v9000
    %v9002 = vlaneseq
    %v9003 = vshrl.u32 %v9002, 7
    %v9004 = vsub.s32 %v9001, %v9003
    %v9005 = vrot.slane %v8977, %v9004
    %v9006 = vcombine.low %v8984, %v8991
    %v9007 = vcombine.low %v8998, %v9005
    %v9009 = vunpack.c.l.s4 1966171168
    %v9010 = vunpack.c.0.s8 %v9009
    %v9011 = vlaneseq
    %v9012 = vshrl.u32 %v9011, 7
    %v9013 = vsub.s32 %v9010, %v9012
    %v9014 = vrot.slane %v9006, %v9013
    %v9016 = vunpack.c.l.s4 1966171168
    %v9017 = vunpack.c.0.s8 %v9016
    %v9018 = vlaneseq
    %v9019 = vshrl.u32 %v9018, 7
    %v9020 = vsub.s32 %v9017, %v9019
    %v9021 = vrot.slane %v9007, %v9020
    %v9022 = vcombine.low %v9014, %v9021
    %v9023 = vcombine.low %v8728, %v8731
    %v9024 = vcombine.low %v8734, %v8737
    %v9025 = vcombine.low %v8740, %v8743
    %v9026 = vcombine.low %v8746, %v8749
    %v9028 = vunpack.c.l.s4 1966171168
    %v9029 = vunpack.c.0.s8 %v9028
    %v9030 = vlaneseq
    %v9031 = vshrl.u32 %v9030, 7
    %v9032 = vsub.s32 %v9029, %v9031
    %v9033 = vrot.slane %v9023, %v9032
    %v9035 = vunpack.c.l.s4 1966171168
    %v9036 = vunpack.c.0.s8 %v9035
    %v9037 = vlaneseq
    %v9038 = vshrl.u32 %v9037, 7
    %v9039 = vsub.s32 %v9036, %v9038
    %v9040 = vrot.slane %v9024, %v9039
    %v9042 = vunpack.c.l.s4 1966171168
    %v9043 = vunpack.c.0.s8 %v9042
    %v9044 = vlaneseq
    %v9045 = vshrl.u32 %v9044, 7
    %v9046 = vsub.s32 %v9043, %v9045
    %v9047 = vrot.slane %v9025, %v9046
    %v9049 = vunpack.c.l.s4 1966171168
    %v9050 = vunpack.c.0.s8 %v9049
    %v9051 = vlaneseq
    %v9052 = vshrl.u32 %v9051, 7
    %v9053 = vsub.s32 %v9050, %v9052
    %v9054 = vrot.slane %v9026, %v9053
    %v9055 = vcombine.low %v9033, %v9040
    %v9056 = vcombine.low %v9047, %v9054
    %v9058 = vunpack.c.l.s4 1966171168
    %v9059 = vunpack.c.0.s8 %v9058
    %v9060 = vlaneseq
    %v9061 = vshrl.u32 %v9060, 7
    %v9062 = vsub.s32 %v9059, %v9061
    %v9063 = vrot.slane %v9055, %v9062
    %v9065 = vunpack.c.l.s4 1966171168
    %v9066 = vunpack.c.0.s8 %v9065
    %v9067 = vlaneseq
    %v9068 = vshrl.u32 %v9067, 7
    %v9069 = vsub.s32 %v9066, %v9068
    %v9070 = vrot.slane %v9056, %v9069
    %v9071 = vcombine.low %v9063, %v9070
    %v9072 = vcombine.low %v8752, %v8755
    %v9073 = vcombine.low %v8758, %v8761
    %v9074 = vcombine.low %v8764, %v8767
    %v9075 = vcombine.low %v8770, %v8773
    %v9077 = vunpack.c.l.s4 1966171168
    %v9078 = vunpack.c.0.s8 %v9077
    %v9079 = vlaneseq
    %v9080 = vshrl.u32 %v9079, 7
    %v9081 = vsub.s32 %v9078, %v9080
    %v9082 = vrot.slane %v9072, %v9081
    %v9084 = vunpack.c.l.s4 1966171168
    %v9085 = vunpack.c.0.s8 %v9084
    %v9086 = vlaneseq
    %v9087 = vshrl.u32 %v9086, 7
    %v9088 = vsub.s32 %v9085, %v9087
    %v9089 = vrot.slane %v9073, %v9088
    %v9091 = vunpack.c.l.s4 1966171168
    %v9092 = vunpack.c.0.s8 %v9091
    %v9093 = vlaneseq
    %v9094 = vshrl.u32 %v9093, 7
    %v9095 = vsub.s32 %v9092, %v9094
    %v9096 = vrot.slane %v9074, %v9095
    %v9098 = vunpack.c.l.s4 1966171168
    %v9099 = vunpack.c.0.s8 %v9098
    %v9100 = vlaneseq
    %v9101 = vshrl.u32 %v9100, 7
    %v9102 = vsub.s32 %v9099, %v9101
    %v9103 = vrot.slane %v9075, %v9102
    %v9104 = vcombine.low %v9082, %v9089
    %v9105 = vcombine.low %v9096, %v9103
    %v9107 = vunpack.c.l.s4 1966171168
    %v9108 = vunpack.c.0.s8 %v9107
    %v9109 = vlaneseq
    %v9110 = vshrl.u32 %v9109, 7
    %v9111 = vsub.s32 %v9108, %v9110
    %v9112 = vrot.slane %v9104, %v9111
    %v9114 = vunpack.c.l.s4 1966171168
    %v9115 = vunpack.c.0.s8 %v9114
    %v9116 = vlaneseq
    %v9117 = vshrl.u32 %v9116, 7
    %v9118 = vsub.s32 %v9115, %v9117
    %v9119 = vrot.slane %v9105, %v9118
    %v9120 = vcombine.low %v9112, %v9119
    %v9121 = vcombine.low %v8776, %v8779
    %v9122 = vcombine.low %v8782, %v8785
    %v9123 = vcombine.low %v8788, %v8791
    %v9124 = vcombine.low %v8794, %v8797
    %v9126 = vunpack.c.l.s4 1966171168
    %v9127 = vunpack.c.0.s8 %v9126
    %v9128 = vlaneseq
    %v9129 = vshrl.u32 %v9128, 7
    %v9130 = vsub.s32 %v9127, %v9129
    %v9131 = vrot.slane %v9121, %v9130
    %v9133 = vunpack.c.l.s4 1966171168
    %v9134 = vunpack.c.0.s8 %v9133
    %v9135 = vlaneseq
    %v9136 = vshrl.u32 %v9135, 7
    %v9137 = vsub.s32 %v9134, %v9136
    %v9138 = vrot.slane %v9122, %v9137
    %v9140 = vunpack.c.l.s4 1966171168
    %v9141 = vunpack.c.0.s8 %v9140
    %v9142 = vlaneseq
    %v9143 = vshrl.u32 %v9142, 7
    %v9144 = vsub.s32 %v9141, %v9143
    %v9145 = vrot.slane %v9123, %v9144
    %v9147 = vunpack.c.l.s4 1966171168
    %v9148 = vunpack.c.0.s8 %v9147
    %v9149 = vlaneseq
    %v9150 = vshrl.u32 %v9149, 7
    %v9151 = vsub.s32 %v9148, %v9150
    %v9152 = vrot.slane %v9124, %v9151
    %v9153 = vcombine.low %v9131, %v9138
    %v9154 = vcombine.low %v9145, %v9152
    %v9156 = vunpack.c.l.s4 1966171168
    %v9157 = vunpack.c.0.s8 %v9156
    %v9158 = vlaneseq
    %v9159 = vshrl.u32 %v9158, 7
    %v9160 = vsub.s32 %v9157, %v9159
    %v9161 = vrot.slane %v9153, %v9160
    %v9163 = vunpack.c.l.s4 1966171168
    %v9164 = vunpack.c.0.s8 %v9163
    %v9165 = vlaneseq
    %v9166 = vshrl.u32 %v9165, 7
    %v9167 = vsub.s32 %v9164, %v9166
    %v9168 = vrot.slane %v9154, %v9167
    %v9169 = vcombine.low %v9161, %v9168
    %v9171 = vshll.u32 %v8875, 16
    %v9174 = vshll.u32 %v8924, 16
    %v9177 = vshll.u32 %v8973, 16
    %v9180 = vshll.u32 %v9022, 16
    %v9183 = vshll.u32 %v9071, 16
    %v9186 = vshll.u32 %v9120, 16
    %v9189 = vshll.u32 %v9169, 16
    %vm9198 = vsmask.f32 7938
    %vm9199 = vmand %vm4642, %vm9198
    %vm9200 = vsmask.f32 7942
    %vm9201 = vmand %vm4645, %vm9200
    %vm9202 = vmor %vm9201, %vm9199
    %vm9203 = vsmask.f32 7946
    %vm9204 = vmand %vm4649, %vm9203
    %vm9205 = vmor %vm9204, %vm9202
    %vm9206 = vsmask.f32 7950
    %vm9207 = vmand %vm4653, %vm9206
    %vm9208 = vmor %vm9207, %vm9205
    %vm9209 = vsmask.f32 7954
    %vm9210 = vmand %vm4657, %vm9209
    %vm9211 = vmor %vm9210, %vm9208
    %vm9212 = vsmask.f32 7958
    %vm9213 = vmand %vm4661, %vm9212
    %vm9214 = vmor %vm9213, %vm9211
    %vm9215 = vsmask.f32 7962
    %vm9216 = vmand %vm4665, %vm9215
    %vm9217 = vmor %vm9216, %vm9214
    %vm9218 = vsmask.f32 7966
    %vm9219 = vmand %vm4669, %vm9218
    %vm9220 = vmor %vm9219, %vm9217
    %v9221 = vld [vmem:[#allocation2] sm:$0xff]
    %v9222 = vsel %vm9220, %v9171, %v9221
    %9223 = vst [vmem:[#allocation2] sm:$0xff] %v9222
    %v9224 = vld [vmem:[#allocation2 + $0x8] sm:$0xff]
    %v9225 = vsel %vm9220, %v9174, %v9224
    %9226 = vst [vmem:[#allocation2 + $0x8] sm:$0xff] %v9225
    %v9227 = vld [vmem:[#allocation2 + $0x10] sm:$0xff]
    %v9228 = vsel %vm9220, %v9177, %v9227
    %9229 = vst [vmem:[#allocation2 + $0x10] sm:$0xff] %v9228
    %v9230 = vld [vmem:[#allocation2 + $0x18] sm:$0xff]
    %v9231 = vsel %vm9220, %v9180, %v9230
    %9232 = vst [vmem:[#allocation2 + $0x18] sm:$0xff] %v9231
    %v9233 = vld [vmem:[#allocation2 + $0x20] sm:$0xff]
    %v9234 = vsel %vm9220, %v9183, %v9233
    %9235 = vst [vmem:[#allocation2 + $0x20] sm:$0xff] %v9234
    %v9236 = vld [vmem:[#allocation2 + $0x28] sm:$0xff]
    %v9237 = vsel %vm9220, %v9186, %v9236
    %9238 = vst [vmem:[#allocation2 + $0x28] sm:$0xff] %v9237
    %v9239 = vld [vmem:[#allocation2 + $0x30] sm:$0xff]
    %v9240 = vsel %vm9220, %v9189, %v9239
    %9241 = vst [vmem:[#allocation2 + $0x30] sm:$0xff] %v9240
    %v9242 = vld [vmem:[#allocation2] sm:$0xff]
    %v9243 = vld [vmem:[#allocation2 + $0x8] sm:$0xff]
    %v9244 = vld [vmem:[#allocation2 + $0x10] sm:$0xff]
    %v9245 = vld [vmem:[#allocation2 + $0x18] sm:$0xff]
    %v9246 = vld [vmem:[#allocation2 + $0x20] sm:$0xff]
    %v9247 = vld [vmem:[#allocation2 + $0x28] sm:$0xff]
    %v9248 = vld [vmem:[#allocation2 + $0x30] sm:$0xff]
    %v9249 = vld [vmem:[#allocation9] sm:$0xff]
    %v9250 = vld [vmem:[#allocation9 + $0x8] sm:$0xff]
    %v9251 = vld [vmem:[#allocation9 + $0x10] sm:$0xff]
    %v9252 = vld [vmem:[#allocation9 + $0x18] sm:$0xff]
    %v9253 = vld [vmem:[#allocation9 + $0x20] sm:$0xff]
    %v9254 = vld [vmem:[#allocation9 + $0x28] sm:$0xff]
    %v9255 = vld [vmem:[#allocation9 + $0x30] sm:$0xff]
    %v9256 = vld [vmem:[#allocation9 + $0x38] sm:$0xff]
    %v9257 = vld [vmem:[#allocation9 + $0x40] sm:$0xff]
    %v9258 = vld [vmem:[#allocation9 + $0x48] sm:$0xff]
    %v9259 = vld [vmem:[#allocation9 + $0x50] sm:$0xff]
    %v9260 = vld [vmem:[#allocation9 + $0x58] sm:$0xff]
    %v9261 = vld [vmem:[#allocation9 + $0x60] sm:$0xff]
    %v9262 = vld [vmem:[#allocation9 + $0x68] sm:$0xff]
    %v9263 = vld [vmem:[#allocation9 + $0x70] sm:$0xff]
    %v9264 = vld [vmem:[#allocation9 + $0x78] sm:$0xff]
    %v9265 = vld [vmem:[#allocation9 + $0x80] sm:$0xff]
    %v9266 = vld [vmem:[#allocation9 + $0x88] sm:$0xff]
    %v9267 = vld [vmem:[#allocation9 + $0x90] sm:$0xff]
    %v9268 = vld [vmem:[#allocation9 + $0x98] sm:$0xff]
    %v9269 = vld [vmem:[#allocation9 + $0xa0] sm:$0xff]
    %v9270 = vld [vmem:[#allocation9 + $0xa8] sm:$0xff]
    %v9271 = vld [vmem:[#allocation9 + $0xb0] sm:$0xff]
    %v9272 = vld [vmem:[#allocation9 + $0xb8] sm:$0xff]
    %v9273 = vld [vmem:[#allocation9 + $0xc0] sm:$0xff]
    %v9274 = vld [vmem:[#allocation9 + $0xc8] sm:$0xff]
    %v9275 = vld [vmem:[#allocation9 + $0xd0] sm:$0xff]
    %v9276 = vld [vmem:[#allocation9 + $0xd8] sm:$0xff]
    %v9277 = vld [vmem:[#allocation9 + $0xe0] sm:$0xff]
    %v9278 = vld [vmem:[#allocation9 + $0xe8] sm:$0xff]
    %v9279 = vld [vmem:[#allocation9 + $0xf0] sm:$0xff]
    %v9280 = vld [vmem:[#allocation9 + $0xf8] sm:$0xff]
    %v9281 = vld [vmem:[#allocation9 + $0x100] sm:$0xff]
    %v9282 = vld [vmem:[#allocation9 + $0x108] sm:$0xff]
    %v9283 = vld [vmem:[#allocation9 + $0x110] sm:$0xff]
    %v9284 = vld [vmem:[#allocation9 + $0x118] sm:$0xff]
    %v9285 = vld [vmem:[#allocation9 + $0x120] sm:$0xff]
    %v9286 = vld [vmem:[#allocation9 + $0x128] sm:$0xff]
    %v9287 = vld [vmem:[#allocation9 + $0x130] sm:$0xff]
    %v9288 = vld [vmem:[#allocation9 + $0x138] sm:$0xff]
    %v9289 = vld [vmem:[#allocation9 + $0x140] sm:$0xff]
    %v9290 = vld [vmem:[#allocation9 + $0x148] sm:$0xff]
    %v9291 = vld [vmem:[#allocation9 + $0x150] sm:$0xff]
    %v9292 = vld [vmem:[#allocation9 + $0x158] sm:$0xff]
    %v9293 = vld [vmem:[#allocation9 + $0x160] sm:$0xff]
    %v9294 = vld [vmem:[#allocation9 + $0x168] sm:$0xff]
    %v9295 = vld [vmem:[#allocation9 + $0x170] sm:$0xff]
    %v9296 = vld [vmem:[#allocation9 + $0x178] sm:$0xff]
    %v9297 = vld [vmem:[#allocation9 + $0x180] sm:$0xff]
    %v9298 = vld [vmem:[#allocation9 + $0x188] sm:$0xff]
    %v9299 = vld [vmem:[#allocation9 + $0x190] sm:$0xff]
    %v9300 = vld [vmem:[#allocation9 + $0x198] sm:$0xff]
    %v9301 = vld [vmem:[#allocation9 + $0x1a0] sm:$0xff]
    %v9302 = vld [vmem:[#allocation9 + $0x1a8] sm:$0xff]
    %v9303 = vld [vmem:[#allocation9 + $0x1b0] sm:$0xff]
    %v9304 = vld [vmem:[#allocation9 + $0x1b8] sm:$0xff]
    %v9305 = vld [vmem:[#allocation9 + $0x1c0] sm:$0xff]
    %v9306 = vld [vmem:[#allocation9 + $0x1c8] sm:$0xff]
    %v9307 = vld [vmem:[#allocation9 + $0x1d0] sm:$0xff]
    %v9308 = vld [vmem:[#allocation9 + $0x1d8] sm:$0xff]
    %v9309 = vld [vmem:[#allocation9 + $0x1e0] sm:$0xff]
    %v9310 = vld [vmem:[#allocation9 + $0x1e8] sm:$0xff]
    %v9311 = vld [vmem:[#allocation9 + $0x1f0] sm:$0xff]
    %v9312 = vld [vmem:[#allocation9 + $0x1f8] sm:$0xff]
    %v9313 = vld [vmem:[#allocation9 + $0x200] sm:$0xff]
    %v9314 = vld [vmem:[#allocation9 + $0x208] sm:$0xff]
    %v9315 = vld [vmem:[#allocation9 + $0x210] sm:$0xff]
    %v9316 = vld [vmem:[#allocation9 + $0x218] sm:$0xff]
    %v9317 = vld [vmem:[#allocation9 + $0x220] sm:$0xff]
    %v9318 = vld [vmem:[#allocation9 + $0x228] sm:$0xff]
    %v9319 = vld [vmem:[#allocation9 + $0x230] sm:$0xff]
    %v9320 = vld [vmem:[#allocation9 + $0x238] sm:$0xff]
    %v9321 = vld [vmem:[#allocation9 + $0x240] sm:$0xff]
    %v9322 = vld [vmem:[#allocation9 + $0x248] sm:$0xff]
    %v9323 = vld [vmem:[#allocation9 + $0x250] sm:$0xff]
    %v9324 = vld [vmem:[#allocation9 + $0x258] sm:$0xff]
    %v9325 = vld [vmem:[#allocation9 + $0x260] sm:$0xff]
    %v9326 = vld [vmem:[#allocation9 + $0x268] sm:$0xff]
    %v9327 = vld [vmem:[#allocation9 + $0x270] sm:$0xff]
    %v9328 = vld [vmem:[#allocation9 + $0x278] sm:$0xff]
    %v9329 = vld [vmem:[#allocation9 + $0x280] sm:$0xff]
    %v9330 = vld [vmem:[#allocation9 + $0x288] sm:$0xff]
    %v9331 = vld [vmem:[#allocation9 + $0x290] sm:$0xff]
    %v9332 = vld [vmem:[#allocation9 + $0x298] sm:$0xff]
    %v9333 = vld [vmem:[#allocation9 + $0x2a0] sm:$0x77]
    %v9334 = vld [vmem:[#allocation9 + $0x2a8] sm:$0x77]
    %v9335 = vld [vmem:[#allocation9 + $0x2b0] sm:$0x77]
    %v9336 = vld [vmem:[#allocation9 + $0x2b8] sm:$0x77]
    %v9337 = vld [vmem:[#allocation9 + $0x2c0] sm:$0x77]
    %v9338 = vld [vmem:[#allocation9 + $0x2c8] sm:$0x77]
    %v9339 = vld [vmem:[#allocation9 + $0x2d0] sm:$0x77]
    %v9340 = vld [vmem:[#allocation9 + $0x2d8] sm:$0x77]
    %v9341 = vld [vmem:[#allocation9 + $0x2e0] sm:$0x77]
    %v9342 = vld [vmem:[#allocation9 + $0x2e8] sm:$0x77]
    %v9343 = vld [vmem:[#allocation9 + $0x2f0] sm:$0x77]
    %v9344 = vld [vmem:[#allocation9 + $0x2f8] sm:$0x77]
    %v9345 = vld [vmem:[#allocation9 + $0x300] sm:$0x77]
    %v9346 = vld [vmem:[#allocation9 + $0x308] sm:$0x77]
    %v9347 = vld [vmem:[#allocation9 + $0x310] sm:$0x77]
    %v9348 = vld [vmem:[#allocation9 + $0x318] sm:$0x77]
    %v9349 = vld [vmem:[#allocation9 + $0x320] sm:$0x77]
    %v9350 = vld [vmem:[#allocation9 + $0x328] sm:$0x77]
    %v9351 = vld [vmem:[#allocation9 + $0x330] sm:$0x77]
    %v9352 = vld [vmem:[#allocation9 + $0x338] sm:$0x77]
    %v9353 = vld [vmem:[#allocation9 + $0x340] sm:$0x77]
    %v9354 = vld [vmem:[#allocation9 + $0x348] sm:$0x77]
    %v9355 = vld [vmem:[#allocation9 + $0x350] sm:$0x77]
    %v9356 = vld [vmem:[#allocation9 + $0x358] sm:$0x77]
    %v9357 = vld [vmem:[#allocation9 + $0x360] sm:$0x77]
    %v9358 = vld [vmem:[#allocation9 + $0x368] sm:$0x77]
    %v9359 = vld [vmem:[#allocation9 + $0x370] sm:$0x77]
    %v9360 = vld [vmem:[#allocation9 + $0x378] sm:$0x77]
    %v9361 = vld [vmem:[#allocation11] sm:$0x1]
    %v9363 = vlaneseq
    %v9364 = vshrl.u32 %v9363, 7
    %v9365 = vsub.s32 0, %v9364
    %v9366 = vrot.slane %v9361, %v9365
    %v9375 = vcombine.high %v9242, %v9242
    %v9377 = vunpack.c.l.s4 1966171168
    %v9378 = vunpack.c.0.s8 %v9377
    %v9379 = vlaneseq
    %v9380 = vshrl.u32 %v9379, 7
    %v9381 = vsub.s32 %v9378, %v9380
    %v9382 = vrot.slane %v9242, %v9381
    %v9384 = vunpack.c.l.s4 1966171168
    %v9385 = vunpack.c.0.s8 %v9384
    %v9386 = vlaneseq
    %v9387 = vshrl.u32 %v9386, 7
    %v9388 = vsub.s32 %v9385, %v9387
    %v9389 = vrot.slane %v9375, %v9388
    %v9390 = vcombine.high %v9382, %v9382
    %v9391 = vcombine.high %v9389, %v9389
    %v9393 = vunpack.c.l.s4 1966171168
    %v9394 = vunpack.c.0.s8 %v9393
    %v9395 = vlaneseq
    %v9396 = vshrl.u32 %v9395, 7
    %v9397 = vsub.s32 %v9394, %v9396
    %v9398 = vrot.slane %v9382, %v9397
    %v9400 = vunpack.c.l.s4 1966171168
    %v9401 = vunpack.c.0.s8 %v9400
    %v9402 = vlaneseq
    %v9403 = vshrl.u32 %v9402, 7
    %v9404 = vsub.s32 %v9401, %v9403
    %v9405 = vrot.slane %v9389, %v9404
    %v9407 = vunpack.c.l.s4 1966171168
    %v9408 = vunpack.c.0.s8 %v9407
    %v9409 = vlaneseq
    %v9410 = vshrl.u32 %v9409, 7
    %v9411 = vsub.s32 %v9408, %v9410
    %v9412 = vrot.slane %v9390, %v9411
    %v9414 = vunpack.c.l.s4 1966171168
    %v9415 = vunpack.c.0.s8 %v9414
    %v9416 = vlaneseq
    %v9417 = vshrl.u32 %v9416, 7
    %v9418 = vsub.s32 %v9415, %v9417
    %v9419 = vrot.slane %v9391, %v9418
    %v9420 = vcombine.high %v9398, %v9398
    %v9421 = vcombine.high %v9405, %v9405
    %v9422 = vcombine.high %v9412, %v9412
    %v9423 = vcombine.high %v9419, %v9419
    %v9424 = vcombine.high %v9243, %v9243
    %v9426 = vunpack.c.l.s4 1966171168
    %v9427 = vunpack.c.0.s8 %v9426
    %v9428 = vlaneseq
    %v9429 = vshrl.u32 %v9428, 7
    %v9430 = vsub.s32 %v9427, %v9429
    %v9431 = vrot.slane %v9243, %v9430
    %v9433 = vunpack.c.l.s4 1966171168
    %v9434 = vunpack.c.0.s8 %v9433
    %v9435 = vlaneseq
    %v9436 = vshrl.u32 %v9435, 7
    %v9437 = vsub.s32 %v9434, %v9436
    %v9438 = vrot.slane %v9424, %v9437
    %v9439 = vcombine.high %v9431, %v9431
    %v9440 = vcombine.high %v9438, %v9438
    %v9442 = vunpack.c.l.s4 1966171168
    %v9443 = vunpack.c.0.s8 %v9442
    %v9444 = vlaneseq
    %v9445 = vshrl.u32 %v9444, 7
    %v9446 = vsub.s32 %v9443, %v9445
    %v9447 = vrot.slane %v9431, %v9446
    %v9449 = vunpack.c.l.s4 1966171168
    %v9450 = vunpack.c.0.s8 %v9449
    %v9451 = vlaneseq
    %v9452 = vshrl.u32 %v9451, 7
    %v9453 = vsub.s32 %v9450, %v9452
    %v9454 = vrot.slane %v9438, %v9453
    %v9456 = vunpack.c.l.s4 1966171168
    %v9457 = vunpack.c.0.s8 %v9456
    %v9458 = vlaneseq
    %v9459 = vshrl.u32 %v9458, 7
    %v9460 = vsub.s32 %v9457, %v9459
    %v9461 = vrot.slane %v9439, %v9460
    %v9463 = vunpack.c.l.s4 1966171168
    %v9464 = vunpack.c.0.s8 %v9463
    %v9465 = vlaneseq
    %v9466 = vshrl.u32 %v9465, 7
    %v9467 = vsub.s32 %v9464, %v9466
    %v9468 = vrot.slane %v9440, %v9467
    %v9469 = vcombine.high %v9447, %v9447
    %v9470 = vcombine.high %v9454, %v9454
    %v9471 = vcombine.high %v9461, %v9461
    %v9472 = vcombine.high %v9468, %v9468
    %v9473 = vcombine.high %v9244, %v9244
    %v9475 = vunpack.c.l.s4 1966171168
    %v9476 = vunpack.c.0.s8 %v9475
    %v9477 = vlaneseq
    %v9478 = vshrl.u32 %v9477, 7
    %v9479 = vsub.s32 %v9476, %v9478
    %v9480 = vrot.slane %v9244, %v9479
    %v9482 = vunpack.c.l.s4 1966171168
    %v9483 = vunpack.c.0.s8 %v9482
    %v9484 = vlaneseq
    %v9485 = vshrl.u32 %v9484, 7
    %v9486 = vsub.s32 %v9483, %v9485
    %v9487 = vrot.slane %v9473, %v9486
    %v9488 = vcombine.high %v9480, %v9480
    %v9489 = vcombine.high %v9487, %v9487
    %v9491 = vunpack.c.l.s4 1966171168
    %v9492 = vunpack.c.0.s8 %v9491
    %v9493 = vlaneseq
    %v9494 = vshrl.u32 %v9493, 7
    %v9495 = vsub.s32 %v9492, %v9494
    %v9496 = vrot.slane %v9480, %v9495
    %v9498 = vunpack.c.l.s4 1966171168
    %v9499 = vunpack.c.0.s8 %v9498
    %v9500 = vlaneseq
    %v9501 = vshrl.u32 %v9500, 7
    %v9502 = vsub.s32 %v9499, %v9501
    %v9503 = vrot.slane %v9487, %v9502
    %v9505 = vunpack.c.l.s4 1966171168
    %v9506 = vunpack.c.0.s8 %v9505
    %v9507 = vlaneseq
    %v9508 = vshrl.u32 %v9507, 7
    %v9509 = vsub.s32 %v9506, %v9508
    %v9510 = vrot.slane %v9488, %v9509
    %v9512 = vunpack.c.l.s4 1966171168
    %v9513 = vunpack.c.0.s8 %v9512
    %v9514 = vlaneseq
    %v9515 = vshrl.u32 %v9514, 7
    %v9516 = vsub.s32 %v9513, %v9515
    %v9517 = vrot.slane %v9489, %v9516
    %v9518 = vcombine.high %v9496, %v9496
    %v9519 = vcombine.high %v9503, %v9503
    %v9520 = vcombine.high %v9510, %v9510
    %v9521 = vcombine.high %v9517, %v9517
    %v9522 = vcombine.high %v9245, %v9245
    %v9524 = vunpack.c.l.s4 1966171168
    %v9525 = vunpack.c.0.s8 %v9524
    %v9526 = vlaneseq
    %v9527 = vshrl.u32 %v9526, 7
    %v9528 = vsub.s32 %v9525, %v9527
    %v9529 = vrot.slane %v9245, %v9528
    %v9531 = vunpack.c.l.s4 1966171168
    %v9532 = vunpack.c.0.s8 %v9531
    %v9533 = vlaneseq
    %v9534 = vshrl.u32 %v9533, 7
    %v9535 = vsub.s32 %v9532, %v9534
    %v9536 = vrot.slane %v9522, %v9535
    %v9537 = vcombine.high %v9529, %v9529
    %v9538 = vcombine.high %v9536, %v9536
    %v9540 = vunpack.c.l.s4 1966171168
    %v9541 = vunpack.c.0.s8 %v9540
    %v9542 = vlaneseq
    %v9543 = vshrl.u32 %v9542, 7
    %v9544 = vsub.s32 %v9541, %v9543
    %v9545 = vrot.slane %v9529, %v9544
    %v9547 = vunpack.c.l.s4 1966171168
    %v9548 = vunpack.c.0.s8 %v9547
    %v9549 = vlaneseq
    %v9550 = vshrl.u32 %v9549, 7
    %v9551 = vsub.s32 %v9548, %v9550
    %v9552 = vrot.slane %v9536, %v9551
    %v9554 = vunpack.c.l.s4 1966171168
    %v9555 = vunpack.c.0.s8 %v9554
    %v9556 = vlaneseq
    %v9557 = vshrl.u32 %v9556, 7
    %v9558 = vsub.s32 %v9555, %v9557
    %v9559 = vrot.slane %v9537, %v9558
    %v9561 = vunpack.c.l.s4 1966171168
    %v9562 = vunpack.c.0.s8 %v9561
    %v9563 = vlaneseq
    %v9564 = vshrl.u32 %v9563, 7
    %v9565 = vsub.s32 %v9562, %v9564
    %v9566 = vrot.slane %v9538, %v9565
    %v9567 = vcombine.high %v9545, %v9545
    %v9568 = vcombine.high %v9552, %v9552
    %v9569 = vcombine.high %v9559, %v9559
    %v9570 = vcombine.high %v9566, %v9566
    %v9571 = vcombine.high %v9246, %v9246
    %v9573 = vunpack.c.l.s4 1966171168
    %v9574 = vunpack.c.0.s8 %v9573
    %v9575 = vlaneseq
    %v9576 = vshrl.u32 %v9575, 7
    %v9577 = vsub.s32 %v9574, %v9576
    %v9578 = vrot.slane %v9246, %v9577
    %v9580 = vunpack.c.l.s4 1966171168
    %v9581 = vunpack.c.0.s8 %v9580
    %v9582 = vlaneseq
    %v9583 = vshrl.u32 %v9582, 7
    %v9584 = vsub.s32 %v9581, %v9583
    %v9585 = vrot.slane %v9571, %v9584
    %v9586 = vcombine.high %v9578, %v9578
    %v9587 = vcombine.high %v9585, %v9585
    %v9589 = vunpack.c.l.s4 1966171168
    %v9590 = vunpack.c.0.s8 %v9589
    %v9591 = vlaneseq
    %v9592 = vshrl.u32 %v9591, 7
    %v9593 = vsub.s32 %v9590, %v9592
    %v9594 = vrot.slane %v9578, %v9593
    %v9596 = vunpack.c.l.s4 1966171168
    %v9597 = vunpack.c.0.s8 %v9596
    %v9598 = vlaneseq
    %v9599 = vshrl.u32 %v9598, 7
    %v9600 = vsub.s32 %v9597, %v9599
    %v9601 = vrot.slane %v9585, %v9600
    %v9603 = vunpack.c.l.s4 1966171168
    %v9604 = vunpack.c.0.s8 %v9603
    %v9605 = vlaneseq
    %v9606 = vshrl.u32 %v9605, 7
    %v9607 = vsub.s32 %v9604, %v9606
    %v9608 = vrot.slane %v9586, %v9607
    %v9610 = vunpack.c.l.s4 1966171168
    %v9611 = vunpack.c.0.s8 %v9610
    %v9612 = vlaneseq
    %v9613 = vshrl.u32 %v9612, 7
    %v9614 = vsub.s32 %v9611, %v9613
    %v9615 = vrot.slane %v9587, %v9614
    %v9616 = vcombine.high %v9594, %v9594
    %v9617 = vcombine.high %v9601, %v9601
    %v9618 = vcombine.high %v9608, %v9608
    %v9619 = vcombine.high %v9615, %v9615
    %v9620 = vcombine.high %v9247, %v9247
    %v9622 = vunpack.c.l.s4 1966171168
    %v9623 = vunpack.c.0.s8 %v9622
    %v9624 = vlaneseq
    %v9625 = vshrl.u32 %v9624, 7
    %v9626 = vsub.s32 %v9623, %v9625
    %v9627 = vrot.slane %v9247, %v9626
    %v9629 = vunpack.c.l.s4 1966171168
    %v9630 = vunpack.c.0.s8 %v9629
    %v9631 = vlaneseq
    %v9632 = vshrl.u32 %v9631, 7
    %v9633 = vsub.s32 %v9630, %v9632
    %v9634 = vrot.slane %v9620, %v9633
    %v9635 = vcombine.high %v9627, %v9627
    %v9636 = vcombine.high %v9634, %v9634
    %v9638 = vunpack.c.l.s4 1966171168
    %v9639 = vunpack.c.0.s8 %v9638
    %v9640 = vlaneseq
    %v9641 = vshrl.u32 %v9640, 7
    %v9642 = vsub.s32 %v9639, %v9641
    %v9643 = vrot.slane %v9627, %v9642
    %v9645 = vunpack.c.l.s4 1966171168
    %v9646 = vunpack.c.0.s8 %v9645
    %v9647 = vlaneseq
    %v9648 = vshrl.u32 %v9647, 7
    %v9649 = vsub.s32 %v9646, %v9648
    %v9650 = vrot.slane %v9634, %v9649
    %v9652 = vunpack.c.l.s4 1966171168
    %v9653 = vunpack.c.0.s8 %v9652
    %v9654 = vlaneseq
    %v9655 = vshrl.u32 %v9654, 7
    %v9656 = vsub.s32 %v9653, %v9655
    %v9657 = vrot.slane %v9635, %v9656
    %v9659 = vunpack.c.l.s4 1966171168
    %v9660 = vunpack.c.0.s8 %v9659
    %v9661 = vlaneseq
    %v9662 = vshrl.u32 %v9661, 7
    %v9663 = vsub.s32 %v9660, %v9662
    %v9664 = vrot.slane %v9636, %v9663
    %v9665 = vcombine.high %v9643, %v9643
    %v9666 = vcombine.high %v9650, %v9650
    %v9667 = vcombine.high %v9657, %v9657
    %v9668 = vcombine.high %v9664, %v9664
    %v9669 = vcombine.high %v9248, %v9248
    %v9671 = vunpack.c.l.s4 1966171168
    %v9672 = vunpack.c.0.s8 %v9671
    %v9673 = vlaneseq
    %v9674 = vshrl.u32 %v9673, 7
    %v9675 = vsub.s32 %v9672, %v9674
    %v9676 = vrot.slane %v9248, %v9675
    %v9678 = vunpack.c.l.s4 1966171168
    %v9679 = vunpack.c.0.s8 %v9678
    %v9680 = vlaneseq
    %v9681 = vshrl.u32 %v9680, 7
    %v9682 = vsub.s32 %v9679, %v9681
    %v9683 = vrot.slane %v9669, %v9682
    %v9684 = vcombine.high %v9676, %v9676
    %v9685 = vcombine.high %v9683, %v9683
    %v9687 = vunpack.c.l.s4 1966171168
    %v9688 = vunpack.c.0.s8 %v9687
    %v9689 = vlaneseq
    %v9690 = vshrl.u32 %v9689, 7
    %v9691 = vsub.s32 %v9688, %v9690
    %v9692 = vrot.slane %v9676, %v9691
    %v9694 = vunpack.c.l.s4 1966171168
    %v9695 = vunpack.c.0.s8 %v9694
    %v9696 = vlaneseq
    %v9697 = vshrl.u32 %v9696, 7
    %v9698 = vsub.s32 %v9695, %v9697
    %v9699 = vrot.slane %v9683, %v9698
    %v9701 = vunpack.c.l.s4 1966171168
    %v9702 = vunpack.c.0.s8 %v9701
    %v9703 = vlaneseq
    %v9704 = vshrl.u32 %v9703, 7
    %v9705 = vsub.s32 %v9702, %v9704
    %v9706 = vrot.slane %v9684, %v9705
    %v9708 = vunpack.c.l.s4 1966171168
    %v9709 = vunpack.c.0.s8 %v9708
    %v9710 = vlaneseq
    %v9711 = vshrl.u32 %v9710, 7
    %v9712 = vsub.s32 %v9709, %v9711
    %v9713 = vrot.slane %v9685, %v9712
    %v9714 = vcombine.high %v9692, %v9692
    %v9715 = vcombine.high %v9699, %v9699
    %v9716 = vcombine.high %v9706, %v9706
    %v9717 = vcombine.high %v9713, %v9713
    %v9886 = vunpack.c.l.b16 %v9249
    %v9887 = vunpack.c.h.b16 %v9249
    %v9888 = vunpack.c.l.b16 %v9250
    %v9889 = vunpack.c.h.b16 %v9250
    %v9890 = vunpack.c.l.b16 %v9251
    %v9891 = vunpack.c.h.b16 %v9251
    %v9892 = vunpack.c.l.b16 %v9252
    %v9893 = vunpack.c.h.b16 %v9252
    %v9894 = vunpack.c.l.b16 %v9253
    %v9895 = vunpack.c.h.b16 %v9253
    %v9896 = vunpack.c.l.b16 %v9254
    %v9897 = vunpack.c.h.b16 %v9254
    %v9898 = vunpack.c.l.b16 %v9255
    %v9899 = vunpack.c.h.b16 %v9255
    %v9900 = vunpack.c.l.b16 %v9256
    %v9901 = vunpack.c.h.b16 %v9256
    %v9902 = vunpack.c.l.b16 %v9257
    %v9903 = vunpack.c.h.b16 %v9257
    %v9904 = vunpack.c.l.b16 %v9258
    %v9905 = vunpack.c.h.b16 %v9258
    %v9906 = vunpack.c.l.b16 %v9259
    %v9907 = vunpack.c.h.b16 %v9259
    %v9908 = vunpack.c.l.b16 %v9260
    %v9909 = vunpack.c.h.b16 %v9260
    %v9910 = vunpack.c.l.b16 %v9261
    %v9911 = vunpack.c.h.b16 %v9261
    %v9912 = vunpack.c.l.b16 %v9262
    %v9913 = vunpack.c.h.b16 %v9262
    %v9914 = vunpack.c.l.b16 %v9263
    %v9915 = vunpack.c.h.b16 %v9263
    %v9916 = vunpack.c.l.b16 %v9264
    %v9917 = vunpack.c.h.b16 %v9264
    %v9918 = vunpack.c.l.b16 %v9265
    %v9919 = vunpack.c.h.b16 %v9265
    %v9920 = vunpack.c.l.b16 %v9266
    %v9921 = vunpack.c.h.b16 %v9266
    %v9922 = vunpack.c.l.b16 %v9267
    %v9923 = vunpack.c.h.b16 %v9267
    %v9924 = vunpack.c.l.b16 %v9268
    %v9925 = vunpack.c.h.b16 %v9268
    %v9926 = vunpack.c.l.b16 %v9269
    %v9927 = vunpack.c.h.b16 %v9269
    %v9928 = vunpack.c.l.b16 %v9270
    %v9929 = vunpack.c.h.b16 %v9270
    %v9930 = vunpack.c.l.b16 %v9271
    %v9931 = vunpack.c.h.b16 %v9271
    %v9932 = vunpack.c.l.b16 %v9272
    %v9933 = vunpack.c.h.b16 %v9272
    %v9934 = vunpack.c.l.b16 %v9273
    %v9935 = vunpack.c.h.b16 %v9273
    %v9936 = vunpack.c.l.b16 %v9274
    %v9937 = vunpack.c.h.b16 %v9274
    %v9938 = vunpack.c.l.b16 %v9275
    %v9939 = vunpack.c.h.b16 %v9275
    %v9940 = vunpack.c.l.b16 %v9276
    %v9941 = vunpack.c.h.b16 %v9276
    %v9942 = vunpack.c.l.b16 %v9277
    %v9943 = vunpack.c.h.b16 %v9277
    %v9944 = vunpack.c.l.b16 %v9278
    %v9945 = vunpack.c.h.b16 %v9278
    %v9946 = vunpack.c.l.b16 %v9279
    %v9947 = vunpack.c.h.b16 %v9279
    %v9948 = vunpack.c.l.b16 %v9280
    %v9949 = vunpack.c.h.b16 %v9280
    %v9950 = vunpack.c.l.b16 %v9281
    %v9951 = vunpack.c.h.b16 %v9281
    %v9952 = vunpack.c.l.b16 %v9282
    %v9953 = vunpack.c.h.b16 %v9282
    %v9954 = vunpack.c.l.b16 %v9283
    %v9955 = vunpack.c.h.b16 %v9283
    %v9956 = vunpack.c.l.b16 %v9284
    %v9957 = vunpack.c.h.b16 %v9284
    %v9958 = vunpack.c.l.b16 %v9285
    %v9959 = vunpack.c.h.b16 %v9285
    %v9960 = vunpack.c.l.b16 %v9286
    %v9961 = vunpack.c.h.b16 %v9286
    %v9962 = vunpack.c.l.b16 %v9287
    %v9963 = vunpack.c.h.b16 %v9287
    %v9964 = vunpack.c.l.b16 %v9288
    %v9965 = vunpack.c.h.b16 %v9288
    %v9966 = vunpack.c.l.b16 %v9289
    %v9967 = vunpack.c.h.b16 %v9289
    %v9968 = vunpack.c.l.b16 %v9290
    %v9969 = vunpack.c.h.b16 %v9290
    %v9970 = vunpack.c.l.b16 %v9291
    %v9971 = vunpack.c.h.b16 %v9291
    %v9972 = vunpack.c.l.b16 %v9292
    %v9973 = vunpack.c.h.b16 %v9292
    %v9974 = vunpack.c.l.b16 %v9293
    %v9975 = vunpack.c.h.b16 %v9293
    %v9976 = vunpack.c.l.b16 %v9294
    %v9977 = vunpack.c.h.b16 %v9294
    %v9978 = vunpack.c.l.b16 %v9295
    %v9979 = vunpack.c.h.b16 %v9295
    %v9980 = vunpack.c.l.b16 %v9296
    %v9981 = vunpack.c.h.b16 %v9296
    %v9982 = vunpack.c.l.b16 %v9297
    %v9983 = vunpack.c.h.b16 %v9297
    %v9984 = vunpack.c.l.b16 %v9298
    %v9985 = vunpack.c.h.b16 %v9298
    %v9986 = vunpack.c.l.b16 %v9299
    %v9987 = vunpack.c.h.b16 %v9299
    %v9988 = vunpack.c.l.b16 %v9300
    %v9989 = vunpack.c.h.b16 %v9300
    %v9990 = vunpack.c.l.b16 %v9301
    %v9991 = vunpack.c.h.b16 %v9301
    %v9992 = vunpack.c.l.b16 %v9302
    %v9993 = vunpack.c.h.b16 %v9302
    %v9994 = vunpack.c.l.b16 %v9303
    %v9995 = vunpack.c.h.b16 %v9303
    %v9996 = vunpack.c.l.b16 %v9304
    %v9997 = vunpack.c.h.b16 %v9304
    %v9998 = vunpack.c.l.b16 %v9305
    %v9999 = vunpack.c.h.b16 %v9305
    %v10000 = vunpack.c.l.b16 %v9306
    %v10001 = vunpack.c.h.b16 %v9306
    %v10002 = vunpack.c.l.b16 %v9307
    %v10003 = vunpack.c.h.b16 %v9307
    %v10004 = vunpack.c.l.b16 %v9308
    %v10005 = vunpack.c.h.b16 %v9308
    %v10006 = vunpack.c.l.b16 %v9309
    %v10007 = vunpack.c.h.b16 %v9309
    %v10008 = vunpack.c.l.b16 %v9310
    %v10009 = vunpack.c.h.b16 %v9310
    %v10010 = vunpack.c.l.b16 %v9311
    %v10011 = vunpack.c.h.b16 %v9311
    %v10012 = vunpack.c.l.b16 %v9312
    %v10013 = vunpack.c.h.b16 %v9312
    %v10014 = vunpack.c.l.b16 %v9313
    %v10015 = vunpack.c.h.b16 %v9313
    %v10016 = vunpack.c.l.b16 %v9314
    %v10017 = vunpack.c.h.b16 %v9314
    %v10018 = vunpack.c.l.b16 %v9315
    %v10019 = vunpack.c.h.b16 %v9315
    %v10020 = vunpack.c.l.b16 %v9316
    %v10021 = vunpack.c.h.b16 %v9316
    %v10022 = vunpack.c.l.b16 %v9317
    %v10023 = vunpack.c.h.b16 %v9317
    %v10024 = vunpack.c.l.b16 %v9318
    %v10025 = vunpack.c.h.b16 %v9318
    %v10026 = vunpack.c.l.b16 %v9319
    %v10027 = vunpack.c.h.b16 %v9319
    %v10028 = vunpack.c.l.b16 %v9320
    %v10029 = vunpack.c.h.b16 %v9320
    %v10030 = vunpack.c.l.b16 %v9321
    %v10031 = vunpack.c.h.b16 %v9321
    %v10032 = vunpack.c.l.b16 %v9322
    %v10033 = vunpack.c.h.b16 %v9322
    %v10034 = vunpack.c.l.b16 %v9323
    %v10035 = vunpack.c.h.b16 %v9323
    %v10036 = vunpack.c.l.b16 %v9324
    %v10037 = vunpack.c.h.b16 %v9324
    %v10038 = vunpack.c.l.b16 %v9325
    %v10039 = vunpack.c.h.b16 %v9325
    %v10040 = vunpack.c.l.b16 %v9326
    %v10041 = vunpack.c.h.b16 %v9326
    %v10042 = vunpack.c.l.b16 %v9327
    %v10043 = vunpack.c.h.b16 %v9327
    %v10044 = vunpack.c.l.b16 %v9328
    %v10045 = vunpack.c.h.b16 %v9328
    %v10046 = vunpack.c.l.b16 %v9329
    %v10047 = vunpack.c.h.b16 %v9329
    %v10048 = vunpack.c.l.b16 %v9330
    %v10049 = vunpack.c.h.b16 %v9330
    %v10050 = vunpack.c.l.b16 %v9331
    %v10051 = vunpack.c.h.b16 %v9331
    %v10052 = vunpack.c.l.b16 %v9332
    %v10053 = vunpack.c.h.b16 %v9332
    %v10054 = vunpack.c.l.b16 %v9333
    %v10055 = vunpack.c.h.b16 %v9333
    %v10056 = vunpack.c.l.b16 %v9334
    %v10057 = vunpack.c.h.b16 %v9334
    %v10058 = vunpack.c.l.b16 %v9335
    %v10059 = vunpack.c.h.b16 %v9335
    %v10060 = vunpack.c.l.b16 %v9336
    %v10061 = vunpack.c.h.b16 %v9336
    %v10062 = vunpack.c.l.b16 %v9337
    %v10063 = vunpack.c.h.b16 %v9337
    %v10064 = vunpack.c.l.b16 %v9338
    %v10065 = vunpack.c.h.b16 %v9338
    %v10066 = vunpack.c.l.b16 %v9339
    %v10067 = vunpack.c.h.b16 %v9339
    %v10068 = vunpack.c.l.b16 %v9340
    %v10069 = vunpack.c.h.b16 %v9340
    %v10070 = vunpack.c.l.b16 %v9341
    %v10071 = vunpack.c.h.b16 %v9341
    %v10072 = vunpack.c.l.b16 %v9342
    %v10073 = vunpack.c.h.b16 %v9342
    %v10074 = vunpack.c.l.b16 %v9343
    %v10075 = vunpack.c.h.b16 %v9343
    %v10076 = vunpack.c.l.b16 %v9344
    %v10077 = vunpack.c.h.b16 %v9344
    %v10078 = vunpack.c.l.b16 %v9345
    %v10079 = vunpack.c.h.b16 %v9345
    %v10080 = vunpack.c.l.b16 %v9346
    %v10081 = vunpack.c.h.b16 %v9346
    %v10082 = vunpack.c.l.b16 %v9347
    %v10083 = vunpack.c.h.b16 %v9347
    %v10084 = vunpack.c.l.b16 %v9348
    %v10085 = vunpack.c.h.b16 %v9348
    %v10086 = vunpack.c.l.b16 %v9349
    %v10087 = vunpack.c.h.b16 %v9349
    %v10088 = vunpack.c.l.b16 %v9350
    %v10089 = vunpack.c.h.b16 %v9350
    %v10090 = vunpack.c.l.b16 %v9351
    %v10091 = vunpack.c.h.b16 %v9351
    %v10092 = vunpack.c.l.b16 %v9352
    %v10093 = vunpack.c.h.b16 %v9352
    %v10094 = vunpack.c.l.b16 %v9353
    %v10095 = vunpack.c.h.b16 %v9353
    %v10096 = vunpack.c.l.b16 %v9354
    %v10097 = vunpack.c.h.b16 %v9354
    %v10098 = vunpack.c.l.b16 %v9355
    %v10099 = vunpack.c.h.b16 %v9355
    %v10100 = vunpack.c.l.b16 %v9356
    %v10101 = vunpack.c.h.b16 %v9356
    %v10102 = vunpack.c.l.b16 %v9357
    %v10103 = vunpack.c.h.b16 %v9357
    %v10104 = vunpack.c.l.b16 %v9358
    %v10105 = vunpack.c.h.b16 %v9358
    %v10106 = vunpack.c.l.b16 %v9359
    %v10107 = vunpack.c.h.b16 %v9359
    %v10108 = vunpack.c.l.b16 %v9360
    %v10109 = vunpack.c.h.b16 %v9360
    %v10110 = vpack.c.b16 %v9942, %v9886
    %v10111 = vpack.c.b16 %v9943, %v9887
    %v10112 = vpack.c.b16 %v9944, %v9888
    %v10113 = vpack.c.b16 %v9945, %v9889
    %v10114 = vpack.c.b16 %v9946, %v9890
    %v10115 = vpack.c.b16 %v9947, %v9891
    %v10116 = vpack.c.b16 %v9948, %v9892
    %v10117 = vpack.c.b16 %v9949, %v9893
    %v10118 = vpack.c.b16 %v9950, %v9894
    %v10119 = vpack.c.b16 %v9951, %v9895
    %v10120 = vpack.c.b16 %v9952, %v9896
    %v10121 = vpack.c.b16 %v9953, %v9897
    %v10122 = vpack.c.b16 %v9954, %v9898
    %v10123 = vpack.c.b16 %v9955, %v9899
    %v10124 = vpack.c.b16 %v9956, %v9900
    %v10125 = vpack.c.b16 %v9957, %v9901
    %v10126 = vpack.c.b16 %v9958, %v9902
    %v10127 = vpack.c.b16 %v9959, %v9903
    %v10128 = vpack.c.b16 %v9960, %v9904
    %v10129 = vpack.c.b16 %v9961, %v9905
    %v10130 = vpack.c.b16 %v9962, %v9906
    %v10131 = vpack.c.b16 %v9963, %v9907
    %v10132 = vpack.c.b16 %v9964, %v9908
    %v10133 = vpack.c.b16 %v9965, %v9909
    %v10134 = vpack.c.b16 %v9966, %v9910
    %v10135 = vpack.c.b16 %v9967, %v9911
    %v10136 = vpack.c.b16 %v9968, %v9912
    %v10137 = vpack.c.b16 %v9969, %v9913
    %v10138 = vpack.c.b16 %v9970, %v9914
    %v10139 = vpack.c.b16 %v9971, %v9915
    %v10140 = vpack.c.b16 %v9972, %v9916
    %v10141 = vpack.c.b16 %v9973, %v9917
    %v10142 = vpack.c.b16 %v9974, %v9918
    %v10143 = vpack.c.b16 %v9975, %v9919
    %v10144 = vpack.c.b16 %v9976, %v9920
    %v10145 = vpack.c.b16 %v9977, %v9921
    %v10146 = vpack.c.b16 %v9978, %v9922
    %v10147 = vpack.c.b16 %v9979, %v9923
    %v10148 = vpack.c.b16 %v9980, %v9924
    %v10149 = vpack.c.b16 %v9981, %v9925
    %v10150 = vpack.c.b16 %v9982, %v9926
    %v10151 = vpack.c.b16 %v9983, %v9927
    %v10152 = vpack.c.b16 %v9984, %v9928
    %v10153 = vpack.c.b16 %v9985, %v9929
    %v10154 = vpack.c.b16 %v9986, %v9930
    %v10155 = vpack.c.b16 %v9987, %v9931
    %v10156 = vpack.c.b16 %v9988, %v9932
    %v10157 = vpack.c.b16 %v9989, %v9933
    %v10158 = vpack.c.b16 %v9990, %v9934
    %v10159 = vpack.c.b16 %v9991, %v9935
    %v10160 = vpack.c.b16 %v9992, %v9936
    %v10161 = vpack.c.b16 %v9993, %v9937
    %v10162 = vpack.c.b16 %v9994, %v9938
    %v10163 = vpack.c.b16 %v9995, %v9939
    %v10164 = vpack.c.b16 %v9996, %v9940
    %v10165 = vpack.c.b16 %v9997, %v9941
    %v10166 = vpack.c.b16 %v10054, %v9998
    %v10167 = vpack.c.b16 %v10055, %v9999
    %v10168 = vpack.c.b16 %v10056, %v10000
    %v10169 = vpack.c.b16 %v10057, %v10001
    %v10170 = vpack.c.b16 %v10058, %v10002
    %v10171 = vpack.c.b16 %v10059, %v10003
    %v10172 = vpack.c.b16 %v10060, %v10004
    %v10173 = vpack.c.b16 %v10061, %v10005
    %v10174 = vpack.c.b16 %v10062, %v10006
    %v10175 = vpack.c.b16 %v10063, %v10007
    %v10176 = vpack.c.b16 %v10064, %v10008
    %v10177 = vpack.c.b16 %v10065, %v10009
    %v10178 = vpack.c.b16 %v10066, %v10010
    %v10179 = vpack.c.b16 %v10067, %v10011
    %v10180 = vpack.c.b16 %v10068, %v10012
    %v10181 = vpack.c.b16 %v10069, %v10013
    %v10182 = vpack.c.b16 %v10070, %v10014
    %v10183 = vpack.c.b16 %v10071, %v10015
    %v10184 = vpack.c.b16 %v10072, %v10016
    %v10185 = vpack.c.b16 %v10073, %v10017
    %v10186 = vpack.c.b16 %v10074, %v10018
    %v10187 = vpack.c.b16 %v10075, %v10019
    %v10188 = vpack.c.b16 %v10076, %v10020
    %v10189 = vpack.c.b16 %v10077, %v10021
    %v10190 = vpack.c.b16 %v10078, %v10022
    %v10191 = vpack.c.b16 %v10079, %v10023
    %v10192 = vpack.c.b16 %v10080, %v10024
    %v10193 = vpack.c.b16 %v10081, %v10025
    %v10194 = vpack.c.b16 %v10082, %v10026
    %v10195 = vpack.c.b16 %v10083, %v10027
    %v10196 = vpack.c.b16 %v10084, %v10028
    %v10197 = vpack.c.b16 %v10085, %v10029
    %v10198 = vpack.c.b16 %v10086, %v10030
    %v10199 = vpack.c.b16 %v10087, %v10031
    %v10200 = vpack.c.b16 %v10088, %v10032
    %v10201 = vpack.c.b16 %v10089, %v10033
    %v10202 = vpack.c.b16 %v10090, %v10034
    %v10203 = vpack.c.b16 %v10091, %v10035
    %v10204 = vpack.c.b16 %v10092, %v10036
    %v10205 = vpack.c.b16 %v10093, %v10037
    %v10206 = vpack.c.b16 %v10094, %v10038
    %v10207 = vpack.c.b16 %v10095, %v10039
    %v10208 = vpack.c.b16 %v10096, %v10040
    %v10209 = vpack.c.b16 %v10097, %v10041
    %v10210 = vpack.c.b16 %v10098, %v10042
    %v10211 = vpack.c.b16 %v10099, %v10043
    %v10212 = vpack.c.b16 %v10100, %v10044
    %v10213 = vpack.c.b16 %v10101, %v10045
    %v10214 = vpack.c.b16 %v10102, %v10046
    %v10215 = vpack.c.b16 %v10103, %v10047
    %v10216 = vpack.c.b16 %v10104, %v10048
    %v10217 = vpack.c.b16 %v10105, %v10049
    %v10218 = vpack.c.b16 %v10106, %v10050
    %v10219 = vpack.c.b16 %v10107, %v10051
    %v10220 = vpack.c.b16 %v10108, %v10052
    %v10221 = vpack.c.b16 %v10109, %v10053
    %10334 = vmatprep.subr.bf16.mxu0 %v10111
    %10335 = vmatpush1.bf16.xpose.msra.mxu0 %v10110
    %10336 = vmatprep.subr.bf16.mxu0 %v10167
    %10337 = vmatpush1.bf16.xpose.msra.mxu0 %v10166
    %10338 = vmatprep.subr.bf16.mxu0 0
    %10339 = vmatpush1.bf16.xpose.msra.mxu0 0
    %10340 = vmatprep.subr.bf16.mxu0 0
    %10341 = vmatpush1.bf16.xpose.msra.mxu0 0
    %10342 = vmatprep.subr.bf16.mxu0 0
    %10343 = vmatpush1.bf16.xpose.msra.mxu0 0
    %10344 = vmatprep.subr.bf16.mxu0 0
    %10345 = vmatpush1.bf16.xpose.msra.mxu0 0
    %10346 = vmatprep.subr.bf16.mxu0 0
    %10347 = vmatpush1.bf16.xpose.msra.mxu0 0
    %10348 = vmatprep.subr.bf16.mxu0 0
    %10349 = vmatpush1.bf16.xpose.msra.mxu0 0
    %10350 = vmatprep.subr.bf16.mxu0 0
    %10351 = vmatpush1.bf16.xpose.msra.mxu0 0
    %10352 = vmatprep.subr.bf16.mxu0 0
    %10353 = vmatpush1.bf16.xpose.msra.mxu0 0
    %10354 = vmatprep.subr.bf16.mxu0 0
    %10355 = vmatpush1.bf16.xpose.msra.mxu0 0
    %10356 = vmatprep.subr.bf16.mxu0 0
    %10357 = vmatpush1.bf16.xpose.msra.mxu0 0
    %10358 = vmatprep.subr.bf16.mxu0 0
    %10359 = vmatpush1.bf16.xpose.msra.mxu0 0
    %10360 = vmatprep.subr.bf16.mxu0 0
    %10361 = vmatpush1.bf16.xpose.msra.mxu0 0
    %10362 = vmatprep.subr.bf16.mxu0 0
    %10363 = vmatpush1.bf16.xpose.msra.mxu0 0
    %10364 = vmatprep.subr.bf16.mxu0 0
    %10365 = vmatpush1.bf16.xpose.msra.mxu0 0
    %10366 = vmatprep.mubr.bf16.mxu0 %v9412
    %10367 = vmatmul.mubr.bf16.gmra.mrb[0].mxu0 %v9398
    %v10368 = vpop.f32.mrb[0].mxu0
    %v10369 = vadd.f32 %v9366, %v10368
    %v10370 = vpop.f32.mrb[0].mxu0
    %v10371 = vpop.f32.mrb[0].mxu0
    %v10372 = vpop.f32.mrb[0].mxu0
    %10373 = vdwg.mxu0
    %10374 = vmatprep.subr.bf16.mxu0 %v10113
    %10375 = vmatpush1.bf16.xpose.msra.mxu0 %v10112
    %10376 = vmatprep.subr.bf16.mxu0 %v10169
    %10377 = vmatpush1.bf16.xpose.msra.mxu0 %v10168
    %10378 = vmatprep.subr.bf16.mxu0 0
    %10379 = vmatpush1.bf16.xpose.msra.mxu0 0
    %10380 = vmatprep.subr.bf16.mxu0 0
    %10381 = vmatpush1.bf16.xpose.msra.mxu0 0
    %10382 = vmatprep.subr.bf16.mxu0 0
    %10383 = vmatpush1.bf16.xpose.msra.mxu0 0
    %10384 = vmatprep.subr.bf16.mxu0 0
    %10385 = vmatpush1.bf16.xpose.msra.mxu0 0
    %10386 = vmatprep.subr.bf16.mxu0 0
    %10387 = vmatpush1.bf16.xpose.msra.mxu0 0
    %10388 = vmatprep.subr.bf16.mxu0 0
    %10389 = vmatpush1.bf16.xpose.msra.mxu0 0
    %10390 = vmatprep.subr.bf16.mxu0 0
    %10391 = vmatpush1.bf16.xpose.msra.mxu0 0
    %10392 = vmatprep.subr.bf16.mxu0 0
    %10393 = vmatpush1.bf16.xpose.msra.mxu0 0
    %10394 = vmatprep.subr.bf16.mxu0 0
    %10395 = vmatpush1.bf16.xpose.msra.mxu0 0
    %10396 = vmatprep.subr.bf16.mxu0 0
    %10397 = vmatpush1.bf16.xpose.msra.mxu0 0
    %10398 = vmatprep.subr.bf16.mxu0 0
    %10399 = vmatpush1.bf16.xpose.msra.mxu0 0
    %10400 = vmatprep.subr.bf16.mxu0 0
    %10401 = vmatpush1.bf16.xpose.msra.mxu0 0
    %10402 = vmatprep.subr.bf16.mxu0 0
    %10403 = vmatpush1.bf16.xpose.msra.mxu0 0
    %10404 = vmatprep.subr.bf16.mxu0 0
    %10405 = vmatpush1.bf16.xpose.msra.mxu0 0
    %10406 = vmatprep.mubr.bf16.mxu0 %v9422
    %10407 = vmatmul.mubr.bf16.gmra.mrb[0].mxu0 %v9420
    %v10408 = vpop.f32.mrb[0].mxu0
    %v10409 = vadd.f32 %v10369, %v10408
    %v10410 = vpop.f32.mrb[0].mxu0
    %v10411 = vpop.f32.mrb[0].mxu0
    %v10412 = vpop.f32.mrb[0].mxu0
    %10413 = vdwg.mxu0
    %10414 = vmatprep.subr.bf16.mxu0 %v10115
    %10415 = vmatpush1.bf16.xpose.msra.mxu0 %v10114
    %10416 = vmatprep.subr.bf16.mxu0 %v10171
    %10417 = vmatpush1.bf16.xpose.msra.mxu0 %v10170
    %10418 = vmatprep.subr.bf16.mxu0 0
    %10419 = vmatpush1.bf16.xpose.msra.mxu0 0
    %10420 = vmatprep.subr.bf16.mxu0 0
    %10421 = vmatpush1.bf16.xpose.msra.mxu0 0
    %10422 = vmatprep.subr.bf16.mxu0 0
    %10423 = vmatpush1.bf16.xpose.msra.mxu0 0
    %10424 = vmatprep.subr.bf16.mxu0 0
    %10425 = vmatpush1.bf16.xpose.msra.mxu0 0
    %10426 = vmatprep.subr.bf16.mxu0 0
    %10427 = vmatpush1.bf16.xpose.msra.mxu0 0
    %10428 = vmatprep.subr.bf16.mxu0 0
    %10429 = vmatpush1.bf16.xpose.msra.mxu0 0
    %10430 = vmatprep.subr.bf16.mxu0 0
    %10431 = vmatpush1.bf16.xpose.msra.mxu0 0
    %10432 = vmatprep.subr.bf16.mxu0 0
    %10433 = vmatpush1.bf16.xpose.msra.mxu0 0
    %10434 = vmatprep.subr.bf16.mxu0 0
    %10435 = vmatpush1.bf16.xpose.msra.mxu0 0
    %10436 = vmatprep.subr.bf16.mxu0 0
    %10437 = vmatpush1.bf16.xpose.msra.mxu0 0
    %10438 = vmatprep.subr.bf16.mxu0 0
    %10439 = vmatpush1.bf16.xpose.msra.mxu0 0
    %10440 = vmatprep.subr.bf16.mxu0 0
    %10441 = vmatpush1.bf16.xpose.msra.mxu0 0
    %10442 = vmatprep.subr.bf16.mxu0 0
    %10443 = vmatpush1.bf16.xpose.msra.mxu0 0
    %10444 = vmatprep.subr.bf16.mxu0 0
    %10445 = vmatpush1.bf16.xpose.msra.mxu0 0
    %10446 = vmatprep.mubr.bf16.mxu0 %v9419
    %10447 = vmatmul.mubr.bf16.gmra.mrb[0].mxu0 %v9405
    %v10448 = vpop.f32.mrb[0].mxu0
    %v10449 = vadd.f32 %v10409, %v10448
    %v10450 = vpop.f32.mrb[0].mxu0
    %v10451 = vpop.f32.mrb[0].mxu0
    %v10452 = vpop.f32.mrb[0].mxu0
    %10453 = vdwg.mxu0
    %10454 = vmatprep.subr.bf16.mxu0 %v10117
    %10455 = vmatpush1.bf16.xpose.msra.mxu0 %v10116
    %10456 = vmatprep.subr.bf16.mxu0 %v10173
    %10457 = vmatpush1.bf16.xpose.msra.mxu0 %v10172
    %10458 = vmatprep.subr.bf16.mxu0 0
    %10459 = vmatpush1.bf16.xpose.msra.mxu0 0
    %10460 = vmatprep.subr.bf16.mxu0 0
    %10461 = vmatpush1.bf16.xpose.msra.mxu0 0
    %10462 = vmatprep.subr.bf16.mxu0 0
    %10463 = vmatpush1.bf16.xpose.msra.mxu0 0
    %10464 = vmatprep.subr.bf16.mxu0 0
    %10465 = vmatpush1.bf16.xpose.msra.mxu0 0
    %10466 = vmatprep.subr.bf16.mxu0 0
    %10467 = vmatpush1.bf16.xpose.msra.mxu0 0
    %10468 = vmatprep.subr.bf16.mxu0 0
    %10469 = vmatpush1.bf16.xpose.msra.mxu0 0
    %10470 = vmatprep.subr.bf16.mxu0 0
    %10471 = vmatpush1.bf16.xpose.msra.mxu0 0
    %10472 = vmatprep.subr.bf16.mxu0 0
    %10473 = vmatpush1.bf16.xpose.msra.mxu0 0
    %10474 = vmatprep.subr.bf16.mxu0 0
    %10475 = vmatpush1.bf16.xpose.msra.mxu0 0
    %10476 = vmatprep.subr.bf16.mxu0 0
    %10477 = vmatpush1.bf16.xpose.msra.mxu0 0
    %10478 = vmatprep.subr.bf16.mxu0 0
    %10479 = vmatpush1.bf16.xpose.msra.mxu0 0
    %10480 = vmatprep.subr.bf16.mxu0 0
    %10481 = vmatpush1.bf16.xpose.msra.mxu0 0
    %10482 = vmatprep.subr.bf16.mxu0 0
    %10483 = vmatpush1.bf16.xpose.msra.mxu0 0
    %10484 = vmatprep.subr.bf16.mxu0 0
    %10485 = vmatpush1.bf16.xpose.msra.mxu0 0
    %10486 = vmatprep.mubr.bf16.mxu0 %v9423
    %10487 = vmatmul.mubr.bf16.gmra.mrb[0].mxu0 %v9421
    %v10488 = vpop.f32.mrb[0].mxu0
    %v10489 = vadd.f32 %v10449, %v10488
    %v10490 = vpop.f32.mrb[0].mxu0
    %v10491 = vpop.f32.mrb[0].mxu0
    %v10492 = vpop.f32.mrb[0].mxu0
    %10493 = vdwg.mxu0
    %10494 = vmatprep.subr.bf16.mxu0 %v10119
    %10495 = vmatpush1.bf16.xpose.msra.mxu0 %v10118
    %10496 = vmatprep.subr.bf16.mxu0 %v10175
    %10497 = vmatpush1.bf16.xpose.msra.mxu0 %v10174
    %10498 = vmatprep.subr.bf16.mxu0 0
    %10499 = vmatpush1.bf16.xpose.msra.mxu0 0
    %10500 = vmatprep.subr.bf16.mxu0 0
    %10501 = vmatpush1.bf16.xpose.msra.mxu0 0
    %10502 = vmatprep.subr.bf16.mxu0 0
    %10503 = vmatpush1.bf16.xpose.msra.mxu0 0
    %10504 = vmatprep.subr.bf16.mxu0 0
    %10505 = vmatpush1.bf16.xpose.msra.mxu0 0
    %10506 = vmatprep.subr.bf16.mxu0 0
    %10507 = vmatpush1.bf16.xpose.msra.mxu0 0
    %10508 = vmatprep.subr.bf16.mxu0 0
    %10509 = vmatpush1.bf16.xpose.msra.mxu0 0
    %10510 = vmatprep.subr.bf16.mxu0 0
    %10511 = vmatpush1.bf16.xpose.msra.mxu0 0
    %10512 = vmatprep.subr.bf16.mxu0 0
    %10513 = vmatpush1.bf16.xpose.msra.mxu0 0
    %10514 = vmatprep.subr.bf16.mxu0 0
    %10515 = vmatpush1.bf16.xpose.msra.mxu0 0
    %10516 = vmatprep.subr.bf16.mxu0 0
    %10517 = vmatpush1.bf16.xpose.msra.mxu0 0
    %10518 = vmatprep.subr.bf16.mxu0 0
    %10519 = vmatpush1.bf16.xpose.msra.mxu0 0
    %10520 = vmatprep.subr.bf16.mxu0 0
    %10521 = vmatpush1.bf16.xpose.msra.mxu0 0
    %10522 = vmatprep.subr.bf16.mxu0 0
    %10523 = vmatpush1.bf16.xpose.msra.mxu0 0
    %10524 = vmatprep.subr.bf16.mxu0 0
    %10525 = vmatpush1.bf16.xpose.msra.mxu0 0
    %10526 = vmatprep.mubr.bf16.mxu0 %v9461
    %10527 = vmatmul.mubr.bf16.gmra.mrb[0].mxu0 %v9447
    %v10528 = vpop.f32.mrb[0].mxu0
    %v10529 = vadd.f32 %v10489, %v10528
    %v10530 = vpop.f32.mrb[0].mxu0
    %v10531 = vpop.f32.mrb[0].mxu0
    %v10532 = vpop.f32.mrb[0].mxu0
    %10533 = vdwg.mxu0
    %10534 = vmatprep.subr.bf16.mxu0 %v10121
    %10535 = vmatpush1.bf16.xpose.msra.mxu0 %v10120
    %10536 = vmatprep.subr.bf16.mxu0 %v10177
    %10537 = vmatpush1.bf16.xpose.msra.mxu0 %v10176
    %10538 = vmatprep.subr.bf16.mxu0 0
    %10539 = vmatpush1.bf16.xpose.msra.mxu0 0
    %10540 = vmatprep.subr.bf16.mxu0 0
    %10541 = vmatpush1.bf16.xpose.msra.mxu0 0
    %10542 = vmatprep.subr.bf16.mxu0 0
    %10543 = vmatpush1.bf16.xpose.msra.mxu0 0
    %10544 = vmatprep.subr.bf16.mxu0 0
    %10545 = vmatpush1.bf16.xpose.msra.mxu0 0
    %10546 = vmatprep.subr.bf16.mxu0 0
    %10547 = vmatpush1.bf16.xpose.msra.mxu0 0
    %10548 = vmatprep.subr.bf16.mxu0 0
    %10549 = vmatpush1.bf16.xpose.msra.mxu0 0
    %10550 = vmatprep.subr.bf16.mxu0 0
    %10551 = vmatpush1.bf16.xpose.msra.mxu0 0
    %10552 = vmatprep.subr.bf16.mxu0 0
    %10553 = vmatpush1.bf16.xpose.msra.mxu0 0
    %10554 = vmatprep.subr.bf16.mxu0 0
    %10555 = vmatpush1.bf16.xpose.msra.mxu0 0
    %10556 = vmatprep.subr.bf16.mxu0 0
    %10557 = vmatpush1.bf16.xpose.msra.mxu0 0
    %10558 = vmatprep.subr.bf16.mxu0 0
    %10559 = vmatpush1.bf16.xpose.msra.mxu0 0
    %10560 = vmatprep.subr.bf16.mxu0 0
    %10561 = vmatpush1.bf16.xpose.msra.mxu0 0
    %10562 = vmatprep.subr.bf16.mxu0 0
    %10563 = vmatpush1.bf16.xpose.msra.mxu0 0
    %10564 = vmatprep.subr.bf16.mxu0 0
    %10565 = vmatpush1.bf16.xpose.msra.mxu0 0
    %10566 = vmatprep.mubr.bf16.mxu0 %v9471
    %10567 = vmatmul.mubr.bf16.gmra.mrb[0].mxu0 %v9469
    %v10568 = vpop.f32.mrb[0].mxu0
    %v10569 = vadd.f32 %v10529, %v10568
    %v10570 = vpop.f32.mrb[0].mxu0
    %v10571 = vpop.f32.mrb[0].mxu0
    %v10572 = vpop.f32.mrb[0].mxu0
    %10573 = vdwg.mxu0
    %10574 = vmatprep.subr.bf16.mxu0 %v10123
    %10575 = vmatpush1.bf16.xpose.msra.mxu0 %v10122
    %10576 = vmatprep.subr.bf16.mxu0 %v10179
    %10577 = vmatpush1.bf16.xpose.msra.mxu0 %v10178
    %10578 = vmatprep.subr.bf16.mxu0 0
    %10579 = vmatpush1.bf16.xpose.msra.mxu0 0
    %10580 = vmatprep.subr.bf16.mxu0 0
    %10581 = vmatpush1.bf16.xpose.msra.mxu0 0
    %10582 = vmatprep.subr.bf16.mxu0 0
    %10583 = vmatpush1.bf16.xpose.msra.mxu0 0
    %10584 = vmatprep.subr.bf16.mxu0 0
    %10585 = vmatpush1.bf16.xpose.msra.mxu0 0
    %10586 = vmatprep.subr.bf16.mxu0 0
    %10587 = vmatpush1.bf16.xpose.msra.mxu0 0
    %10588 = vmatprep.subr.bf16.mxu0 0
    %10589 = vmatpush1.bf16.xpose.msra.mxu0 0
    %10590 = vmatprep.subr.bf16.mxu0 0
    %10591 = vmatpush1.bf16.xpose.msra.mxu0 0
    %10592 = vmatprep.subr.bf16.mxu0 0
    %10593 = vmatpush1.bf16.xpose.msra.mxu0 0
    %10594 = vmatprep.subr.bf16.mxu0 0
    %10595 = vmatpush1.bf16.xpose.msra.mxu0 0
    %10596 = vmatprep.subr.bf16.mxu0 0
    %10597 = vmatpush1.bf16.xpose.msra.mxu0 0
    %10598 = vmatprep.subr.bf16.mxu0 0
    %10599 = vmatpush1.bf16.xpose.msra.mxu0 0
    %10600 = vmatprep.subr.bf16.mxu0 0
    %10601 = vmatpush1.bf16.xpose.msra.mxu0 0
    %10602 = vmatprep.subr.bf16.mxu0 0
    %10603 = vmatpush1.bf16.xpose.msra.mxu0 0
    %10604 = vmatprep.subr.bf16.mxu0 0
    %10605 = vmatpush1.bf16.xpose.msra.mxu0 0
    %10606 = vmatprep.mubr.bf16.mxu0 %v9468
    %10607 = vmatmul.mubr.bf16.gmra.mrb[0].mxu0 %v9454
    %v10608 = vpop.f32.mrb[0].mxu0
    %v10609 = vadd.f32 %v10569, %v10608
    %v10610 = vpop.f32.mrb[0].mxu0
    %v10611 = vpop.f32.mrb[0].mxu0
    %v10612 = vpop.f32.mrb[0].mxu0
    %10613 = vdwg.mxu0
    %10614 = vmatprep.subr.bf16.mxu0 %v10125
    %10615 = vmatpush1.bf16.xpose.msra.mxu0 %v10124
    %10616 = vmatprep.subr.bf16.mxu0 %v10181
    %10617 = vmatpush1.bf16.xpose.msra.mxu0 %v10180
    %10618 = vmatprep.subr.bf16.mxu0 0
    %10619 = vmatpush1.bf16.xpose.msra.mxu0 0
    %10620 = vmatprep.subr.bf16.mxu0 0
    %10621 = vmatpush1.bf16.xpose.msra.mxu0 0
    %10622 = vmatprep.subr.bf16.mxu0 0
    %10623 = vmatpush1.bf16.xpose.msra.mxu0 0
    %10624 = vmatprep.subr.bf16.mxu0 0
    %10625 = vmatpush1.bf16.xpose.msra.mxu0 0
    %10626 = vmatprep.subr.bf16.mxu0 0
    %10627 = vmatpush1.bf16.xpose.msra.mxu0 0
    %10628 = vmatprep.subr.bf16.mxu0 0
    %10629 = vmatpush1.bf16.xpose.msra.mxu0 0
    %10630 = vmatprep.subr.bf16.mxu0 0
    %10631 = vmatpush1.bf16.xpose.msra.mxu0 0
    %10632 = vmatprep.subr.bf16.mxu0 0
    %10633 = vmatpush1.bf16.xpose.msra.mxu0 0
    %10634 = vmatprep.subr.bf16.mxu0 0
    %10635 = vmatpush1.bf16.xpose.msra.mxu0 0
    %10636 = vmatprep.subr.bf16.mxu0 0
    %10637 = vmatpush1.bf16.xpose.msra.mxu0 0
    %10638 = vmatprep.subr.bf16.mxu0 0
    %10639 = vmatpush1.bf16.xpose.msra.mxu0 0
    %10640 = vmatprep.subr.bf16.mxu0 0
    %10641 = vmatpush1.bf16.xpose.msra.mxu0 0
    %10642 = vmatprep.subr.bf16.mxu0 0
    %10643 = vmatpush1.bf16.xpose.msra.mxu0 0
    %10644 = vmatprep.subr.bf16.mxu0 0
    %10645 = vmatpush1.bf16.xpose.msra.mxu0 0
    %10646 = vmatprep.mubr.bf16.mxu0 %v9472
    %10647 = vmatmul.mubr.bf16.gmra.mrb[0].mxu0 %v9470
    %v10648 = vpop.f32.mrb[0].mxu0
    %v10649 = vadd.f32 %v10609, %v10648
    %v10650 = vpop.f32.mrb[0].mxu0
    %v10651 = vpop.f32.mrb[0].mxu0
    %v10652 = vpop.f32.mrb[0].mxu0
    %10653 = vdwg.mxu0
    %10654 = vmatprep.subr.bf16.mxu0 %v10127
    %10655 = vmatpush1.bf16.xpose.msra.mxu0 %v10126
    %10656 = vmatprep.subr.bf16.mxu0 %v10183
    %10657 = vmatpush1.bf16.xpose.msra.mxu0 %v10182
    %10658 = vmatprep.subr.bf16.mxu0 0
    %10659 = vmatpush1.bf16.xpose.msra.mxu0 0
    %10660 = vmatprep.subr.bf16.mxu0 0
    %10661 = vmatpush1.bf16.xpose.msra.mxu0 0
    %10662 = vmatprep.subr.bf16.mxu0 0
    %10663 = vmatpush1.bf16.xpose.msra.mxu0 0
    %10664 = vmatprep.subr.bf16.mxu0 0
    %10665 = vmatpush1.bf16.xpose.msra.mxu0 0
    %10666 = vmatprep.subr.bf16.mxu0 0
    %10667 = vmatpush1.bf16.xpose.msra.mxu0 0
    %10668 = vmatprep.subr.bf16.mxu0 0
    %10669 = vmatpush1.bf16.xpose.msra.mxu0 0
    %10670 = vmatprep.subr.bf16.mxu0 0
    %10671 = vmatpush1.bf16.xpose.msra.mxu0 0
    %10672 = vmatprep.subr.bf16.mxu0 0
    %10673 = vmatpush1.bf16.xpose.msra.mxu0 0
    %10674 = vmatprep.subr.bf16.mxu0 0
    %10675 = vmatpush1.bf16.xpose.msra.mxu0 0
    %10676 = vmatprep.subr.bf16.mxu0 0
    %10677 = vmatpush1.bf16.xpose.msra.mxu0 0
    %10678 = vmatprep.subr.bf16.mxu0 0
    %10679 = vmatpush1.bf16.xpose.msra.mxu0 0
    %10680 = vmatprep.subr.bf16.mxu0 0
    %10681 = vmatpush1.bf16.xpose.msra.mxu0 0
    %10682 = vmatprep.subr.bf16.mxu0 0
    %10683 = vmatpush1.bf16.xpose.msra.mxu0 0
    %10684 = vmatprep.subr.bf16.mxu0 0
    %10685 = vmatpush1.bf16.xpose.msra.mxu0 0
    %10686 = vmatprep.mubr.bf16.mxu0 %v9510
    %10687 = vmatmul.mubr.bf16.gmra.mrb[0].mxu0 %v9496
    %v10688 = vpop.f32.mrb[0].mxu0
    %v10689 = vadd.f32 %v10649, %v10688
    %v10690 = vpop.f32.mrb[0].mxu0
    %v10691 = vpop.f32.mrb[0].mxu0
    %v10692 = vpop.f32.mrb[0].mxu0
    %10693 = vdwg.mxu0
    %10694 = vmatprep.subr.bf16.mxu0 %v10129
    %10695 = vmatpush1.bf16.xpose.msra.mxu0 %v10128
    %10696 = vmatprep.subr.bf16.mxu0 %v10185
    %10697 = vmatpush1.bf16.xpose.msra.mxu0 %v10184
    %10698 = vmatprep.subr.bf16.mxu0 0
    %10699 = vmatpush1.bf16.xpose.msra.mxu0 0
    %10700 = vmatprep.subr.bf16.mxu0 0
    %10701 = vmatpush1.bf16.xpose.msra.mxu0 0
    %10702 = vmatprep.subr.bf16.mxu0 0
    %10703 = vmatpush1.bf16.xpose.msra.mxu0 0
    %10704 = vmatprep.subr.bf16.mxu0 0
    %10705 = vmatpush1.bf16.xpose.msra.mxu0 0
    %10706 = vmatprep.subr.bf16.mxu0 0
    %10707 = vmatpush1.bf16.xpose.msra.mxu0 0
    %10708 = vmatprep.subr.bf16.mxu0 0
    %10709 = vmatpush1.bf16.xpose.msra.mxu0 0
    %10710 = vmatprep.subr.bf16.mxu0 0
    %10711 = vmatpush1.bf16.xpose.msra.mxu0 0
    %10712 = vmatprep.subr.bf16.mxu0 0
    %10713 = vmatpush1.bf16.xpose.msra.mxu0 0
    %10714 = vmatprep.subr.bf16.mxu0 0
    %10715 = vmatpush1.bf16.xpose.msra.mxu0 0
    %10716 = vmatprep.subr.bf16.mxu0 0
    %10717 = vmatpush1.bf16.xpose.msra.mxu0 0
    %10718 = vmatprep.subr.bf16.mxu0 0
    %10719 = vmatpush1.bf16.xpose.msra.mxu0 0
    %10720 = vmatprep.subr.bf16.mxu0 0
    %10721 = vmatpush1.bf16.xpose.msra.mxu0 0
    %10722 = vmatprep.subr.bf16.mxu0 0
    %10723 = vmatpush1.bf16.xpose.msra.mxu0 0
    %10724 = vmatprep.subr.bf16.mxu0 0
    %10725 = vmatpush1.bf16.xpose.msra.mxu0 0
    %10726 = vmatprep.mubr.bf16.mxu0 %v9520
    %10727 = vmatmul.mubr.bf16.gmra.mrb[0].mxu0 %v9518
    %v10728 = vpop.f32.mrb[0].mxu0
    %v10729 = vadd.f32 %v10689, %v10728
    %v10730 = vpop.f32.mrb[0].mxu0
    %v10731 = vpop.f32.mrb[0].mxu0
    %v10732 = vpop.f32.mrb[0].mxu0
    %10733 = vdwg.mxu0
    %10734 = vmatprep.subr.bf16.mxu0 %v10131
    %10735 = vmatpush1.bf16.xpose.msra.mxu0 %v10130
    %10736 = vmatprep.subr.bf16.mxu0 %v10187
    %10737 = vmatpush1.bf16.xpose.msra.mxu0 %v10186
    %10738 = vmatprep.subr.bf16.mxu0 0
    %10739 = vmatpush1.bf16.xpose.msra.mxu0 0
    %10740 = vmatprep.subr.bf16.mxu0 0
    %10741 = vmatpush1.bf16.xpose.msra.mxu0 0
    %10742 = vmatprep.subr.bf16.mxu0 0
    %10743 = vmatpush1.bf16.xpose.msra.mxu0 0
    %10744 = vmatprep.subr.bf16.mxu0 0
    %10745 = vmatpush1.bf16.xpose.msra.mxu0 0
    %10746 = vmatprep.subr.bf16.mxu0 0
    %10747 = vmatpush1.bf16.xpose.msra.mxu0 0
    %10748 = vmatprep.subr.bf16.mxu0 0
    %10749 = vmatpush1.bf16.xpose.msra.mxu0 0
    %10750 = vmatprep.subr.bf16.mxu0 0
    %10751 = vmatpush1.bf16.xpose.msra.mxu0 0
    %10752 = vmatprep.subr.bf16.mxu0 0
    %10753 = vmatpush1.bf16.xpose.msra.mxu0 0
    %10754 = vmatprep.subr.bf16.mxu0 0
    %10755 = vmatpush1.bf16.xpose.msra.mxu0 0
    %10756 = vmatprep.subr.bf16.mxu0 0
    %10757 = vmatpush1.bf16.xpose.msra.mxu0 0
    %10758 = vmatprep.subr.bf16.mxu0 0
    %10759 = vmatpush1.bf16.xpose.msra.mxu0 0
    %10760 = vmatprep.subr.bf16.mxu0 0
    %10761 = vmatpush1.bf16.xpose.msra.mxu0 0
    %10762 = vmatprep.subr.bf16.mxu0 0
    %10763 = vmatpush1.bf16.xpose.msra.mxu0 0
    %10764 = vmatprep.subr.bf16.mxu0 0
    %10765 = vmatpush1.bf16.xpose.msra.mxu0 0
    %10766 = vmatprep.mubr.bf16.mxu0 %v9517
    %10767 = vmatmul.mubr.bf16.gmra.mrb[0].mxu0 %v9503
    %v10768 = vpop.f32.mrb[0].mxu0
    %v10769 = vadd.f32 %v10729, %v10768
    %v10770 = vpop.f32.mrb[0].mxu0
    %v10771 = vpop.f32.mrb[0].mxu0
    %v10772 = vpop.f32.mrb[0].mxu0
    %10773 = vdwg.mxu0
    %10774 = vmatprep.subr.bf16.mxu0 %v10133
    %10775 = vmatpush1.bf16.xpose.msra.mxu0 %v10132
    %10776 = vmatprep.subr.bf16.mxu0 %v10189
    %10777 = vmatpush1.bf16.xpose.msra.mxu0 %v10188
    %10778 = vmatprep.subr.bf16.mxu0 0
    %10779 = vmatpush1.bf16.xpose.msra.mxu0 0
    %10780 = vmatprep.subr.bf16.mxu0 0
    %10781 = vmatpush1.bf16.xpose.msra.mxu0 0
    %10782 = vmatprep.subr.bf16.mxu0 0
    %10783 = vmatpush1.bf16.xpose.msra.mxu0 0
    %10784 = vmatprep.subr.bf16.mxu0 0
    %10785 = vmatpush1.bf16.xpose.msra.mxu0 0
    %10786 = vmatprep.subr.bf16.mxu0 0
    %10787 = vmatpush1.bf16.xpose.msra.mxu0 0
    %10788 = vmatprep.subr.bf16.mxu0 0
    %10789 = vmatpush1.bf16.xpose.msra.mxu0 0
    %10790 = vmatprep.subr.bf16.mxu0 0
    %10791 = vmatpush1.bf16.xpose.msra.mxu0 0
    %10792 = vmatprep.subr.bf16.mxu0 0
    %10793 = vmatpush1.bf16.xpose.msra.mxu0 0
    %10794 = vmatprep.subr.bf16.mxu0 0
    %10795 = vmatpush1.bf16.xpose.msra.mxu0 0
    %10796 = vmatprep.subr.bf16.mxu0 0
    %10797 = vmatpush1.bf16.xpose.msra.mxu0 0
    %10798 = vmatprep.subr.bf16.mxu0 0
    %10799 = vmatpush1.bf16.xpose.msra.mxu0 0
    %10800 = vmatprep.subr.bf16.mxu0 0
    %10801 = vmatpush1.bf16.xpose.msra.mxu0 0
    %10802 = vmatprep.subr.bf16.mxu0 0
    %10803 = vmatpush1.bf16.xpose.msra.mxu0 0
    %10804 = vmatprep.subr.bf16.mxu0 0
    %10805 = vmatpush1.bf16.xpose.msra.mxu0 0
    %10806 = vmatprep.mubr.bf16.mxu0 %v9521
    %10807 = vmatmul.mubr.bf16.gmra.mrb[0].mxu0 %v9519
    %v10808 = vpop.f32.mrb[0].mxu0
    %v10809 = vadd.f32 %v10769, %v10808
    %v10810 = vpop.f32.mrb[0].mxu0
    %v10811 = vpop.f32.mrb[0].mxu0
    %v10812 = vpop.f32.mrb[0].mxu0
    %10813 = vdwg.mxu0
    %10814 = vmatprep.subr.bf16.mxu0 %v10135
    %10815 = vmatpush1.bf16.xpose.msra.mxu0 %v10134
    %10816 = vmatprep.subr.bf16.mxu0 %v10191
    %10817 = vmatpush1.bf16.xpose.msra.mxu0 %v10190
    %10818 = vmatprep.subr.bf16.mxu0 0
    %10819 = vmatpush1.bf16.xpose.msra.mxu0 0
    %10820 = vmatprep.subr.bf16.mxu0 0
    %10821 = vmatpush1.bf16.xpose.msra.mxu0 0
    %10822 = vmatprep.subr.bf16.mxu0 0
    %10823 = vmatpush1.bf16.xpose.msra.mxu0 0
    %10824 = vmatprep.subr.bf16.mxu0 0
    %10825 = vmatpush1.bf16.xpose.msra.mxu0 0
    %10826 = vmatprep.subr.bf16.mxu0 0
    %10827 = vmatpush1.bf16.xpose.msra.mxu0 0
    %10828 = vmatprep.subr.bf16.mxu0 0
    %10829 = vmatpush1.bf16.xpose.msra.mxu0 0
    %10830 = vmatprep.subr.bf16.mxu0 0
    %10831 = vmatpush1.bf16.xpose.msra.mxu0 0
    %10832 = vmatprep.subr.bf16.mxu0 0
    %10833 = vmatpush1.bf16.xpose.msra.mxu0 0
    %10834 = vmatprep.subr.bf16.mxu0 0
    %10835 = vmatpush1.bf16.xpose.msra.mxu0 0
    %10836 = vmatprep.subr.bf16.mxu0 0
    %10837 = vmatpush1.bf16.xpose.msra.mxu0 0
    %10838 = vmatprep.subr.bf16.mxu0 0
    %10839 = vmatpush1.bf16.xpose.msra.mxu0 0
    %10840 = vmatprep.subr.bf16.mxu0 0
    %10841 = vmatpush1.bf16.xpose.msra.mxu0 0
    %10842 = vmatprep.subr.bf16.mxu0 0
    %10843 = vmatpush1.bf16.xpose.msra.mxu0 0
    %10844 = vmatprep.subr.bf16.mxu0 0
    %10845 = vmatpush1.bf16.xpose.msra.mxu0 0
    %10846 = vmatprep.mubr.bf16.mxu0 %v9559
    %10847 = vmatmul.mubr.bf16.gmra.mrb[0].mxu0 %v9545
    %v10848 = vpop.f32.mrb[0].mxu0
    %v10849 = vadd.f32 %v10809, %v10848
    %v10850 = vpop.f32.mrb[0].mxu0
    %v10851 = vpop.f32.mrb[0].mxu0
    %v10852 = vpop.f32.mrb[0].mxu0
    %10853 = vdwg.mxu0
    %10854 = vmatprep.subr.bf16.mxu0 %v10137
    %10855 = vmatpush1.bf16.xpose.msra.mxu0 %v10136
    %10856 = vmatprep.subr.bf16.mxu0 %v10193
    %10857 = vmatpush1.bf16.xpose.msra.mxu0 %v10192
    %10858 = vmatprep.subr.bf16.mxu0 0
    %10859 = vmatpush1.bf16.xpose.msra.mxu0 0
    %10860 = vmatprep.subr.bf16.mxu0 0
    %10861 = vmatpush1.bf16.xpose.msra.mxu0 0
    %10862 = vmatprep.subr.bf16.mxu0 0
    %10863 = vmatpush1.bf16.xpose.msra.mxu0 0
    %10864 = vmatprep.subr.bf16.mxu0 0
    %10865 = vmatpush1.bf16.xpose.msra.mxu0 0
    %10866 = vmatprep.subr.bf16.mxu0 0
    %10867 = vmatpush1.bf16.xpose.msra.mxu0 0
    %10868 = vmatprep.subr.bf16.mxu0 0
    %10869 = vmatpush1.bf16.xpose.msra.mxu0 0
    %10870 = vmatprep.subr.bf16.mxu0 0
    %10871 = vmatpush1.bf16.xpose.msra.mxu0 0
    %10872 = vmatprep.subr.bf16.mxu0 0
    %10873 = vmatpush1.bf16.xpose.msra.mxu0 0
    %10874 = vmatprep.subr.bf16.mxu0 0
    %10875 = vmatpush1.bf16.xpose.msra.mxu0 0
    %10876 = vmatprep.subr.bf16.mxu0 0
    %10877 = vmatpush1.bf16.xpose.msra.mxu0 0
    %10878 = vmatprep.subr.bf16.mxu0 0
    %10879 = vmatpush1.bf16.xpose.msra.mxu0 0
    %10880 = vmatprep.subr.bf16.mxu0 0
    %10881 = vmatpush1.bf16.xpose.msra.mxu0 0
    %10882 = vmatprep.subr.bf16.mxu0 0
    %10883 = vmatpush1.bf16.xpose.msra.mxu0 0
    %10884 = vmatprep.subr.bf16.mxu0 0
    %10885 = vmatpush1.bf16.xpose.msra.mxu0 0
    %10886 = vmatprep.mubr.bf16.mxu0 %v9569
    %10887 = vmatmul.mubr.bf16.gmra.mrb[0].mxu0 %v9567
    %v10888 = vpop.f32.mrb[0].mxu0
    %v10889 = vadd.f32 %v10849, %v10888
    %v10890 = vpop.f32.mrb[0].mxu0
    %v10891 = vpop.f32.mrb[0].mxu0
    %v10892 = vpop.f32.mrb[0].mxu0
    %10893 = vdwg.mxu0
    %10894 = vmatprep.subr.bf16.mxu0 %v10139
    %10895 = vmatpush1.bf16.xpose.msra.mxu0 %v10138
    %10896 = vmatprep.subr.bf16.mxu0 %v10195
    %10897 = vmatpush1.bf16.xpose.msra.mxu0 %v10194
    %10898 = vmatprep.subr.bf16.mxu0 0
    %10899 = vmatpush1.bf16.xpose.msra.mxu0 0
    %10900 = vmatprep.subr.bf16.mxu0 0
    %10901 = vmatpush1.bf16.xpose.msra.mxu0 0
    %10902 = vmatprep.subr.bf16.mxu0 0
    %10903 = vmatpush1.bf16.xpose.msra.mxu0 0
    %10904 = vmatprep.subr.bf16.mxu0 0
    %10905 = vmatpush1.bf16.xpose.msra.mxu0 0
    %10906 = vmatprep.subr.bf16.mxu0 0
    %10907 = vmatpush1.bf16.xpose.msra.mxu0 0
    %10908 = vmatprep.subr.bf16.mxu0 0
    %10909 = vmatpush1.bf16.xpose.msra.mxu0 0
    %10910 = vmatprep.subr.bf16.mxu0 0
    %10911 = vmatpush1.bf16.xpose.msra.mxu0 0
    %10912 = vmatprep.subr.bf16.mxu0 0
    %10913 = vmatpush1.bf16.xpose.msra.mxu0 0
    %10914 = vmatprep.subr.bf16.mxu0 0
    %10915 = vmatpush1.bf16.xpose.msra.mxu0 0
    %10916 = vmatprep.subr.bf16.mxu0 0
    %10917 = vmatpush1.bf16.xpose.msra.mxu0 0
    %10918 = vmatprep.subr.bf16.mxu0 0
    %10919 = vmatpush1.bf16.xpose.msra.mxu0 0
    %10920 = vmatprep.subr.bf16.mxu0 0
    %10921 = vmatpush1.bf16.xpose.msra.mxu0 0
    %10922 = vmatprep.subr.bf16.mxu0 0
    %10923 = vmatpush1.bf16.xpose.msra.mxu0 0
    %10924 = vmatprep.subr.bf16.mxu0 0
    %10925 = vmatpush1.bf16.xpose.msra.mxu0 0
    %10926 = vmatprep.mubr.bf16.mxu0 %v9566
    %10927 = vmatmul.mubr.bf16.gmra.mrb[0].mxu0 %v9552
    %v10928 = vpop.f32.mrb[0].mxu0
    %v10929 = vadd.f32 %v10889, %v10928
    %v10930 = vpop.f32.mrb[0].mxu0
    %v10931 = vpop.f32.mrb[0].mxu0
    %v10932 = vpop.f32.mrb[0].mxu0
    %10933 = vdwg.mxu0
    %10934 = vmatprep.subr.bf16.mxu0 %v10141
    %10935 = vmatpush1.bf16.xpose.msra.mxu0 %v10140
    %10936 = vmatprep.subr.bf16.mxu0 %v10197
    %10937 = vmatpush1.bf16.xpose.msra.mxu0 %v10196
    %10938 = vmatprep.subr.bf16.mxu0 0
    %10939 = vmatpush1.bf16.xpose.msra.mxu0 0
    %10940 = vmatprep.subr.bf16.mxu0 0
    %10941 = vmatpush1.bf16.xpose.msra.mxu0 0
    %10942 = vmatprep.subr.bf16.mxu0 0
    %10943 = vmatpush1.bf16.xpose.msra.mxu0 0
    %10944 = vmatprep.subr.bf16.mxu0 0
    %10945 = vmatpush1.bf16.xpose.msra.mxu0 0
    %10946 = vmatprep.subr.bf16.mxu0 0
    %10947 = vmatpush1.bf16.xpose.msra.mxu0 0
    %10948 = vmatprep.subr.bf16.mxu0 0
    %10949 = vmatpush1.bf16.xpose.msra.mxu0 0
    %10950 = vmatprep.subr.bf16.mxu0 0
    %10951 = vmatpush1.bf16.xpose.msra.mxu0 0
    %10952 = vmatprep.subr.bf16.mxu0 0
    %10953 = vmatpush1.bf16.xpose.msra.mxu0 0
    %10954 = vmatprep.subr.bf16.mxu0 0
    %10955 = vmatpush1.bf16.xpose.msra.mxu0 0
    %10956 = vmatprep.subr.bf16.mxu0 0
    %10957 = vmatpush1.bf16.xpose.msra.mxu0 0
    %10958 = vmatprep.subr.bf16.mxu0 0
    %10959 = vmatpush1.bf16.xpose.msra.mxu0 0
    %10960 = vmatprep.subr.bf16.mxu0 0
    %10961 = vmatpush1.bf16.xpose.msra.mxu0 0
    %10962 = vmatprep.subr.bf16.mxu0 0
    %10963 = vmatpush1.bf16.xpose.msra.mxu0 0
    %10964 = vmatprep.subr.bf16.mxu0 0
    %10965 = vmatpush1.bf16.xpose.msra.mxu0 0
    %10966 = vmatprep.mubr.bf16.mxu0 %v9570
    %10967 = vmatmul.mubr.bf16.gmra.mrb[0].mxu0 %v9568
    %v10968 = vpop.f32.mrb[0].mxu0
    %v10969 = vadd.f32 %v10929, %v10968
    %v10970 = vpop.f32.mrb[0].mxu0
    %v10971 = vpop.f32.mrb[0].mxu0
    %v10972 = vpop.f32.mrb[0].mxu0
    %10973 = vdwg.mxu0
    %10974 = vmatprep.subr.bf16.mxu0 %v10143
    %10975 = vmatpush1.bf16.xpose.msra.mxu0 %v10142
    %10976 = vmatprep.subr.bf16.mxu0 %v10199
    %10977 = vmatpush1.bf16.xpose.msra.mxu0 %v10198
    %10978 = vmatprep.subr.bf16.mxu0 0
    %10979 = vmatpush1.bf16.xpose.msra.mxu0 0
    %10980 = vmatprep.subr.bf16.mxu0 0
    %10981 = vmatpush1.bf16.xpose.msra.mxu0 0
    %10982 = vmatprep.subr.bf16.mxu0 0
    %10983 = vmatpush1.bf16.xpose.msra.mxu0 0
    %10984 = vmatprep.subr.bf16.mxu0 0
    %10985 = vmatpush1.bf16.xpose.msra.mxu0 0
    %10986 = vmatprep.subr.bf16.mxu0 0
    %10987 = vmatpush1.bf16.xpose.msra.mxu0 0
    %10988 = vmatprep.subr.bf16.mxu0 0
    %10989 = vmatpush1.bf16.xpose.msra.mxu0 0
    %10990 = vmatprep.subr.bf16.mxu0 0
    %10991 = vmatpush1.bf16.xpose.msra.mxu0 0
    %10992 = vmatprep.subr.bf16.mxu0 0
    %10993 = vmatpush1.bf16.xpose.msra.mxu0 0
    %10994 = vmatprep.subr.bf16.mxu0 0
    %10995 = vmatpush1.bf16.xpose.msra.mxu0 0
    %10996 = vmatprep.subr.bf16.mxu0 0
    %10997 = vmatpush1.bf16.xpose.msra.mxu0 0
    %10998 = vmatprep.subr.bf16.mxu0 0
    %10999 = vmatpush1.bf16.xpose.msra.mxu0 0
    %11000 = vmatprep.subr.bf16.mxu0 0
    %11001 = vmatpush1.bf16.xpose.msra.mxu0 0
    %11002 = vmatprep.subr.bf16.mxu0 0
    %11003 = vmatpush1.bf16.xpose.msra.mxu0 0
    %11004 = vmatprep.subr.bf16.mxu0 0
    %11005 = vmatpush1.bf16.xpose.msra.mxu0 0
    %11006 = vmatprep.mubr.bf16.mxu0 %v9608
    %11007 = vmatmul.mubr.bf16.gmra.mrb[0].mxu0 %v9594
    %v11008 = vpop.f32.mrb[0].mxu0
    %v11009 = vadd.f32 %v10969, %v11008
    %v11010 = vpop.f32.mrb[0].mxu0
    %v11011 = vpop.f32.mrb[0].mxu0
    %v11012 = vpop.f32.mrb[0].mxu0
    %11013 = vdwg.mxu0
    %11014 = vmatprep.subr.bf16.mxu0 %v10145
    %11015 = vmatpush1.bf16.xpose.msra.mxu0 %v10144
    %11016 = vmatprep.subr.bf16.mxu0 %v10201
    %11017 = vmatpush1.bf16.xpose.msra.mxu0 %v10200
    %11018 = vmatprep.subr.bf16.mxu0 0
    %11019 = vmatpush1.bf16.xpose.msra.mxu0 0
    %11020 = vmatprep.subr.bf16.mxu0 0
    %11021 = vmatpush1.bf16.xpose.msra.mxu0 0
    %11022 = vmatprep.subr.bf16.mxu0 0
    %11023 = vmatpush1.bf16.xpose.msra.mxu0 0
    %11024 = vmatprep.subr.bf16.mxu0 0
    %11025 = vmatpush1.bf16.xpose.msra.mxu0 0
    %11026 = vmatprep.subr.bf16.mxu0 0
    %11027 = vmatpush1.bf16.xpose.msra.mxu0 0
    %11028 = vmatprep.subr.bf16.mxu0 0
    %11029 = vmatpush1.bf16.xpose.msra.mxu0 0
    %11030 = vmatprep.subr.bf16.mxu0 0
    %11031 = vmatpush1.bf16.xpose.msra.mxu0 0
    %11032 = vmatprep.subr.bf16.mxu0 0
    %11033 = vmatpush1.bf16.xpose.msra.mxu0 0
    %11034 = vmatprep.subr.bf16.mxu0 0
    %11035 = vmatpush1.bf16.xpose.msra.mxu0 0
    %11036 = vmatprep.subr.bf16.mxu0 0
    %11037 = vmatpush1.bf16.xpose.msra.mxu0 0
    %11038 = vmatprep.subr.bf16.mxu0 0
    %11039 = vmatpush1.bf16.xpose.msra.mxu0 0
    %11040 = vmatprep.subr.bf16.mxu0 0
    %11041 = vmatpush1.bf16.xpose.msra.mxu0 0
    %11042 = vmatprep.subr.bf16.mxu0 0
    %11043 = vmatpush1.bf16.xpose.msra.mxu0 0
    %11044 = vmatprep.subr.bf16.mxu0 0
    %11045 = vmatpush1.bf16.xpose.msra.mxu0 0
    %11046 = vmatprep.mubr.bf16.mxu0 %v9618
    %11047 = vmatmul.mubr.bf16.gmra.mrb[0].mxu0 %v9616
    %v11048 = vpop.f32.mrb[0].mxu0
    %v11049 = vadd.f32 %v11009, %v11048
    %v11050 = vpop.f32.mrb[0].mxu0
    %v11051 = vpop.f32.mrb[0].mxu0
    %v11052 = vpop.f32.mrb[0].mxu0
    %11053 = vdwg.mxu0
    %11054 = vmatprep.subr.bf16.mxu0 %v10147
    %11055 = vmatpush1.bf16.xpose.msra.mxu0 %v10146
    %11056 = vmatprep.subr.bf16.mxu0 %v10203
    %11057 = vmatpush1.bf16.xpose.msra.mxu0 %v10202
    %11058 = vmatprep.subr.bf16.mxu0 0
    %11059 = vmatpush1.bf16.xpose.msra.mxu0 0
    %11060 = vmatprep.subr.bf16.mxu0 0
    %11061 = vmatpush1.bf16.xpose.msra.mxu0 0
    %11062 = vmatprep.subr.bf16.mxu0 0
    %11063 = vmatpush1.bf16.xpose.msra.mxu0 0
    %11064 = vmatprep.subr.bf16.mxu0 0
    %11065 = vmatpush1.bf16.xpose.msra.mxu0 0
    %11066 = vmatprep.subr.bf16.mxu0 0
    %11067 = vmatpush1.bf16.xpose.msra.mxu0 0
    %11068 = vmatprep.subr.bf16.mxu0 0
    %11069 = vmatpush1.bf16.xpose.msra.mxu0 0
    %11070 = vmatprep.subr.bf16.mxu0 0
    %11071 = vmatpush1.bf16.xpose.msra.mxu0 0
    %11072 = vmatprep.subr.bf16.mxu0 0
    %11073 = vmatpush1.bf16.xpose.msra.mxu0 0
    %11074 = vmatprep.subr.bf16.mxu0 0
    %11075 = vmatpush1.bf16.xpose.msra.mxu0 0
    %11076 = vmatprep.subr.bf16.mxu0 0
    %11077 = vmatpush1.bf16.xpose.msra.mxu0 0
    %11078 = vmatprep.subr.bf16.mxu0 0
    %11079 = vmatpush1.bf16.xpose.msra.mxu0 0
    %11080 = vmatprep.subr.bf16.mxu0 0
    %11081 = vmatpush1.bf16.xpose.msra.mxu0 0
    %11082 = vmatprep.subr.bf16.mxu0 0
    %11083 = vmatpush1.bf16.xpose.msra.mxu0 0
    %11084 = vmatprep.subr.bf16.mxu0 0
    %11085 = vmatpush1.bf16.xpose.msra.mxu0 0
    %11086 = vmatprep.mubr.bf16.mxu0 %v9615
    %11087 = vmatmul.mubr.bf16.gmra.mrb[0].mxu0 %v9601
    %v11088 = vpop.f32.mrb[0].mxu0
    %v11089 = vadd.f32 %v11049, %v11088
    %v11090 = vpop.f32.mrb[0].mxu0
    %v11091 = vpop.f32.mrb[0].mxu0
    %v11092 = vpop.f32.mrb[0].mxu0
    %11093 = vdwg.mxu0
    %11094 = vmatprep.subr.bf16.mxu0 %v10149
    %11095 = vmatpush1.bf16.xpose.msra.mxu0 %v10148
    %11096 = vmatprep.subr.bf16.mxu0 %v10205
    %11097 = vmatpush1.bf16.xpose.msra.mxu0 %v10204
    %11098 = vmatprep.subr.bf16.mxu0 0
    %11099 = vmatpush1.bf16.xpose.msra.mxu0 0
    %11100 = vmatprep.subr.bf16.mxu0 0
    %11101 = vmatpush1.bf16.xpose.msra.mxu0 0
    %11102 = vmatprep.subr.bf16.mxu0 0
    %11103 = vmatpush1.bf16.xpose.msra.mxu0 0
    %11104 = vmatprep.subr.bf16.mxu0 0
    %11105 = vmatpush1.bf16.xpose.msra.mxu0 0
    %11106 = vmatprep.subr.bf16.mxu0 0
    %11107 = vmatpush1.bf16.xpose.msra.mxu0 0
    %11108 = vmatprep.subr.bf16.mxu0 0
    %11109 = vmatpush1.bf16.xpose.msra.mxu0 0
    %11110 = vmatprep.subr.bf16.mxu0 0
    %11111 = vmatpush1.bf16.xpose.msra.mxu0 0
    %11112 = vmatprep.subr.bf16.mxu0 0
    %11113 = vmatpush1.bf16.xpose.msra.mxu0 0
    %11114 = vmatprep.subr.bf16.mxu0 0
    %11115 = vmatpush1.bf16.xpose.msra.mxu0 0
    %11116 = vmatprep.subr.bf16.mxu0 0
    %11117 = vmatpush1.bf16.xpose.msra.mxu0 0
    %11118 = vmatprep.subr.bf16.mxu0 0
    %11119 = vmatpush1.bf16.xpose.msra.mxu0 0
    %11120 = vmatprep.subr.bf16.mxu0 0
    %11121 = vmatpush1.bf16.xpose.msra.mxu0 0
    %11122 = vmatprep.subr.bf16.mxu0 0
    %11123 = vmatpush1.bf16.xpose.msra.mxu0 0
    %11124 = vmatprep.subr.bf16.mxu0 0
    %11125 = vmatpush1.bf16.xpose.msra.mxu0 0
    %11126 = vmatprep.mubr.bf16.mxu0 %v9619
    %11127 = vmatmul.mubr.bf16.gmra.mrb[0].mxu0 %v9617
    %v11128 = vpop.f32.mrb[0].mxu0
    %v11129 = vadd.f32 %v11089, %v11128
    %v11130 = vpop.f32.mrb[0].mxu0
    %v11131 = vpop.f32.mrb[0].mxu0
    %v11132 = vpop.f32.mrb[0].mxu0
    %11133 = vdwg.mxu0
    %11134 = vmatprep.subr.bf16.mxu0 %v10151
    %11135 = vmatpush1.bf16.xpose.msra.mxu0 %v10150
    %11136 = vmatprep.subr.bf16.mxu0 %v10207
    %11137 = vmatpush1.bf16.xpose.msra.mxu0 %v10206
    %11138 = vmatprep.subr.bf16.mxu0 0
    %11139 = vmatpush1.bf16.xpose.msra.mxu0 0
    %11140 = vmatprep.subr.bf16.mxu0 0
    %11141 = vmatpush1.bf16.xpose.msra.mxu0 0
    %11142 = vmatprep.subr.bf16.mxu0 0
    %11143 = vmatpush1.bf16.xpose.msra.mxu0 0
    %11144 = vmatprep.subr.bf16.mxu0 0
    %11145 = vmatpush1.bf16.xpose.msra.mxu0 0
    %11146 = vmatprep.subr.bf16.mxu0 0
    %11147 = vmatpush1.bf16.xpose.msra.mxu0 0
    %11148 = vmatprep.subr.bf16.mxu0 0
    %11149 = vmatpush1.bf16.xpose.msra.mxu0 0
    %11150 = vmatprep.subr.bf16.mxu0 0
    %11151 = vmatpush1.bf16.xpose.msra.mxu0 0
    %11152 = vmatprep.subr.bf16.mxu0 0
    %11153 = vmatpush1.bf16.xpose.msra.mxu0 0
    %11154 = vmatprep.subr.bf16.mxu0 0
    %11155 = vmatpush1.bf16.xpose.msra.mxu0 0
    %11156 = vmatprep.subr.bf16.mxu0 0
    %11157 = vmatpush1.bf16.xpose.msra.mxu0 0
    %11158 = vmatprep.subr.bf16.mxu0 0
    %11159 = vmatpush1.bf16.xpose.msra.mxu0 0
    %11160 = vmatprep.subr.bf16.mxu0 0
    %11161 = vmatpush1.bf16.xpose.msra.mxu0 0
    %11162 = vmatprep.subr.bf16.mxu0 0
    %11163 = vmatpush1.bf16.xpose.msra.mxu0 0
    %11164 = vmatprep.subr.bf16.mxu0 0
    %11165 = vmatpush1.bf16.xpose.msra.mxu0 0
    %11166 = vmatprep.mubr.bf16.mxu0 %v9657
    %11167 = vmatmul.mubr.bf16.gmra.mrb[0].mxu0 %v9643
    %v11168 = vpop.f32.mrb[0].mxu0
    %v11169 = vadd.f32 %v11129, %v11168
    %v11170 = vpop.f32.mrb[0].mxu0
    %v11171 = vpop.f32.mrb[0].mxu0
    %v11172 = vpop.f32.mrb[0].mxu0
    %11173 = vdwg.mxu0
    %11174 = vmatprep.subr.bf16.mxu0 %v10153
    %11175 = vmatpush1.bf16.xpose.msra.mxu0 %v10152
    %11176 = vmatprep.subr.bf16.mxu0 %v10209
    %11177 = vmatpush1.bf16.xpose.msra.mxu0 %v10208
    %11178 = vmatprep.subr.bf16.mxu0 0
    %11179 = vmatpush1.bf16.xpose.msra.mxu0 0
    %11180 = vmatprep.subr.bf16.mxu0 0
    %11181 = vmatpush1.bf16.xpose.msra.mxu0 0
    %11182 = vmatprep.subr.bf16.mxu0 0
    %11183 = vmatpush1.bf16.xpose.msra.mxu0 0
    %11184 = vmatprep.subr.bf16.mxu0 0
    %11185 = vmatpush1.bf16.xpose.msra.mxu0 0
    %11186 = vmatprep.subr.bf16.mxu0 0
    %11187 = vmatpush1.bf16.xpose.msra.mxu0 0
    %11188 = vmatprep.subr.bf16.mxu0 0
    %11189 = vmatpush1.bf16.xpose.msra.mxu0 0
    %11190 = vmatprep.subr.bf16.mxu0 0
    %11191 = vmatpush1.bf16.xpose.msra.mxu0 0
    %11192 = vmatprep.subr.bf16.mxu0 0
    %11193 = vmatpush1.bf16.xpose.msra.mxu0 0
    %11194 = vmatprep.subr.bf16.mxu0 0
    %11195 = vmatpush1.bf16.xpose.msra.mxu0 0
    %11196 = vmatprep.subr.bf16.mxu0 0
    %11197 = vmatpush1.bf16.xpose.msra.mxu0 0
    %11198 = vmatprep.subr.bf16.mxu0 0
    %11199 = vmatpush1.bf16.xpose.msra.mxu0 0
    %11200 = vmatprep.subr.bf16.mxu0 0
    %11201 = vmatpush1.bf16.xpose.msra.mxu0 0
    %11202 = vmatprep.subr.bf16.mxu0 0
    %11203 = vmatpush1.bf16.xpose.msra.mxu0 0
    %11204 = vmatprep.subr.bf16.mxu0 0
    %11205 = vmatpush1.bf16.xpose.msra.mxu0 0
    %11206 = vmatprep.mubr.bf16.mxu0 %v9667
    %11207 = vmatmul.mubr.bf16.gmra.mrb[0].mxu0 %v9665
    %v11208 = vpop.f32.mrb[0].mxu0
    %v11209 = vadd.f32 %v11169, %v11208
    %v11210 = vpop.f32.mrb[0].mxu0
    %v11211 = vpop.f32.mrb[0].mxu0
    %v11212 = vpop.f32.mrb[0].mxu0
    %11213 = vdwg.mxu0
    %11214 = vmatprep.subr.bf16.mxu0 %v10155
    %11215 = vmatpush1.bf16.xpose.msra.mxu0 %v10154
    %11216 = vmatprep.subr.bf16.mxu0 %v10211
    %11217 = vmatpush1.bf16.xpose.msra.mxu0 %v10210
    %11218 = vmatprep.subr.bf16.mxu0 0
    %11219 = vmatpush1.bf16.xpose.msra.mxu0 0
    %11220 = vmatprep.subr.bf16.mxu0 0
    %11221 = vmatpush1.bf16.xpose.msra.mxu0 0
    %11222 = vmatprep.subr.bf16.mxu0 0
    %11223 = vmatpush1.bf16.xpose.msra.mxu0 0
    %11224 = vmatprep.subr.bf16.mxu0 0
    %11225 = vmatpush1.bf16.xpose.msra.mxu0 0
    %11226 = vmatprep.subr.bf16.mxu0 0
    %11227 = vmatpush1.bf16.xpose.msra.mxu0 0
    %11228 = vmatprep.subr.bf16.mxu0 0
    %11229 = vmatpush1.bf16.xpose.msra.mxu0 0
    %11230 = vmatprep.subr.bf16.mxu0 0
    %11231 = vmatpush1.bf16.xpose.msra.mxu0 0
    %11232 = vmatprep.subr.bf16.mxu0 0
    %11233 = vmatpush1.bf16.xpose.msra.mxu0 0
    %11234 = vmatprep.subr.bf16.mxu0 0
    %11235 = vmatpush1.bf16.xpose.msra.mxu0 0
    %11236 = vmatprep.subr.bf16.mxu0 0
    %11237 = vmatpush1.bf16.xpose.msra.mxu0 0
    %11238 = vmatprep.subr.bf16.mxu0 0
    %11239 = vmatpush1.bf16.xpose.msra.mxu0 0
    %11240 = vmatprep.subr.bf16.mxu0 0
    %11241 = vmatpush1.bf16.xpose.msra.mxu0 0
    %11242 = vmatprep.subr.bf16.mxu0 0
    %11243 = vmatpush1.bf16.xpose.msra.mxu0 0
    %11244 = vmatprep.subr.bf16.mxu0 0
    %11245 = vmatpush1.bf16.xpose.msra.mxu0 0
    %11246 = vmatprep.mubr.bf16.mxu0 %v9664
    %11247 = vmatmul.mubr.bf16.gmra.mrb[0].mxu0 %v9650
    %v11248 = vpop.f32.mrb[0].mxu0
    %v11249 = vadd.f32 %v11209, %v11248
    %v11250 = vpop.f32.mrb[0].mxu0
    %v11251 = vpop.f32.mrb[0].mxu0
    %v11252 = vpop.f32.mrb[0].mxu0
    %11253 = vdwg.mxu0
    %11254 = vmatprep.subr.bf16.mxu0 %v10157
    %11255 = vmatpush1.bf16.xpose.msra.mxu0 %v10156
    %11256 = vmatprep.subr.bf16.mxu0 %v10213
    %11257 = vmatpush1.bf16.xpose.msra.mxu0 %v10212
    %11258 = vmatprep.subr.bf16.mxu0 0
    %11259 = vmatpush1.bf16.xpose.msra.mxu0 0
    %11260 = vmatprep.subr.bf16.mxu0 0
    %11261 = vmatpush1.bf16.xpose.msra.mxu0 0
    %11262 = vmatprep.subr.bf16.mxu0 0
    %11263 = vmatpush1.bf16.xpose.msra.mxu0 0
    %11264 = vmatprep.subr.bf16.mxu0 0
    %11265 = vmatpush1.bf16.xpose.msra.mxu0 0
    %11266 = vmatprep.subr.bf16.mxu0 0
    %11267 = vmatpush1.bf16.xpose.msra.mxu0 0
    %11268 = vmatprep.subr.bf16.mxu0 0
    %11269 = vmatpush1.bf16.xpose.msra.mxu0 0
    %11270 = vmatprep.subr.bf16.mxu0 0
    %11271 = vmatpush1.bf16.xpose.msra.mxu0 0
    %11272 = vmatprep.subr.bf16.mxu0 0
    %11273 = vmatpush1.bf16.xpose.msra.mxu0 0
    %11274 = vmatprep.subr.bf16.mxu0 0
    %11275 = vmatpush1.bf16.xpose.msra.mxu0 0
    %11276 = vmatprep.subr.bf16.mxu0 0
    %11277 = vmatpush1.bf16.xpose.msra.mxu0 0
    %11278 = vmatprep.subr.bf16.mxu0 0
    %11279 = vmatpush1.bf16.xpose.msra.mxu0 0
    %11280 = vmatprep.subr.bf16.mxu0 0
    %11281 = vmatpush1.bf16.xpose.msra.mxu0 0
    %11282 = vmatprep.subr.bf16.mxu0 0
    %11283 = vmatpush1.bf16.xpose.msra.mxu0 0
    %11284 = vmatprep.subr.bf16.mxu0 0
    %11285 = vmatpush1.bf16.xpose.msra.mxu0 0
    %11286 = vmatprep.mubr.bf16.mxu0 %v9668
    %11287 = vmatmul.mubr.bf16.gmra.mrb[0].mxu0 %v9666
    %v11288 = vpop.f32.mrb[0].mxu0
    %v11289 = vadd.f32 %v11249, %v11288
    %v11290 = vpop.f32.mrb[0].mxu0
    %v11291 = vpop.f32.mrb[0].mxu0
    %v11292 = vpop.f32.mrb[0].mxu0
    %11293 = vdwg.mxu0
    %11294 = vmatprep.subr.bf16.mxu0 %v10159
    %11295 = vmatpush1.bf16.xpose.msra.mxu0 %v10158
    %11296 = vmatprep.subr.bf16.mxu0 %v10215
    %11297 = vmatpush1.bf16.xpose.msra.mxu0 %v10214
    %11298 = vmatprep.subr.bf16.mxu0 0
    %11299 = vmatpush1.bf16.xpose.msra.mxu0 0
    %11300 = vmatprep.subr.bf16.mxu0 0
    %11301 = vmatpush1.bf16.xpose.msra.mxu0 0
    %11302 = vmatprep.subr.bf16.mxu0 0
    %11303 = vmatpush1.bf16.xpose.msra.mxu0 0
    %11304 = vmatprep.subr.bf16.mxu0 0
    %11305 = vmatpush1.bf16.xpose.msra.mxu0 0
    %11306 = vmatprep.subr.bf16.mxu0 0
    %11307 = vmatpush1.bf16.xpose.msra.mxu0 0
    %11308 = vmatprep.subr.bf16.mxu0 0
    %11309 = vmatpush1.bf16.xpose.msra.mxu0 0
    %11310 = vmatprep.subr.bf16.mxu0 0
    %11311 = vmatpush1.bf16.xpose.msra.mxu0 0
    %11312 = vmatprep.subr.bf16.mxu0 0
    %11313 = vmatpush1.bf16.xpose.msra.mxu0 0
    %11314 = vmatprep.subr.bf16.mxu0 0
    %11315 = vmatpush1.bf16.xpose.msra.mxu0 0
    %11316 = vmatprep.subr.bf16.mxu0 0
    %11317 = vmatpush1.bf16.xpose.msra.mxu0 0
    %11318 = vmatprep.subr.bf16.mxu0 0
    %11319 = vmatpush1.bf16.xpose.msra.mxu0 0
    %11320 = vmatprep.subr.bf16.mxu0 0
    %11321 = vmatpush1.bf16.xpose.msra.mxu0 0
    %11322 = vmatprep.subr.bf16.mxu0 0
    %11323 = vmatpush1.bf16.xpose.msra.mxu0 0
    %11324 = vmatprep.subr.bf16.mxu0 0
    %11325 = vmatpush1.bf16.xpose.msra.mxu0 0
    %11326 = vmatprep.mubr.bf16.mxu0 %v9706
    %11327 = vmatmul.mubr.bf16.gmra.mrb[0].mxu0 %v9692
    %v11328 = vpop.f32.mrb[0].mxu0
    %v11329 = vadd.f32 %v11289, %v11328
    %v11330 = vpop.f32.mrb[0].mxu0
    %v11331 = vpop.f32.mrb[0].mxu0
    %v11332 = vpop.f32.mrb[0].mxu0
    %11333 = vdwg.mxu0
    %11334 = vmatprep.subr.bf16.mxu0 %v10161
    %11335 = vmatpush1.bf16.xpose.msra.mxu0 %v10160
    %11336 = vmatprep.subr.bf16.mxu0 %v10217
    %11337 = vmatpush1.bf16.xpose.msra.mxu0 %v10216
    %11338 = vmatprep.subr.bf16.mxu0 0
    %11339 = vmatpush1.bf16.xpose.msra.mxu0 0
    %11340 = vmatprep.subr.bf16.mxu0 0
    %11341 = vmatpush1.bf16.xpose.msra.mxu0 0
    %11342 = vmatprep.subr.bf16.mxu0 0
    %11343 = vmatpush1.bf16.xpose.msra.mxu0 0
    %11344 = vmatprep.subr.bf16.mxu0 0
    %11345 = vmatpush1.bf16.xpose.msra.mxu0 0
    %11346 = vmatprep.subr.bf16.mxu0 0
    %11347 = vmatpush1.bf16.xpose.msra.mxu0 0
    %11348 = vmatprep.subr.bf16.mxu0 0
    %11349 = vmatpush1.bf16.xpose.msra.mxu0 0
    %11350 = vmatprep.subr.bf16.mxu0 0
    %11351 = vmatpush1.bf16.xpose.msra.mxu0 0
    %11352 = vmatprep.subr.bf16.mxu0 0
    %11353 = vmatpush1.bf16.xpose.msra.mxu0 0
    %11354 = vmatprep.subr.bf16.mxu0 0
    %11355 = vmatpush1.bf16.xpose.msra.mxu0 0
    %11356 = vmatprep.subr.bf16.mxu0 0
    %11357 = vmatpush1.bf16.xpose.msra.mxu0 0
    %11358 = vmatprep.subr.bf16.mxu0 0
    %11359 = vmatpush1.bf16.xpose.msra.mxu0 0
    %11360 = vmatprep.subr.bf16.mxu0 0
    %11361 = vmatpush1.bf16.xpose.msra.mxu0 0
    %11362 = vmatprep.subr.bf16.mxu0 0
    %11363 = vmatpush1.bf16.xpose.msra.mxu0 0
    %11364 = vmatprep.subr.bf16.mxu0 0
    %11365 = vmatpush1.bf16.xpose.msra.mxu0 0
    %11366 = vmatprep.mubr.bf16.mxu0 %v9716
    %11367 = vmatmul.mubr.bf16.gmra.mrb[0].mxu0 %v9714
    %v11368 = vpop.f32.mrb[0].mxu0
    %v11369 = vadd.f32 %v11329, %v11368
    %v11370 = vpop.f32.mrb[0].mxu0
    %v11371 = vpop.f32.mrb[0].mxu0
    %v11372 = vpop.f32.mrb[0].mxu0
    %11373 = vdwg.mxu0
    %11374 = vmatprep.subr.bf16.mxu0 %v10163
    %11375 = vmatpush1.bf16.xpose.msra.mxu0 %v10162
    %11376 = vmatprep.subr.bf16.mxu0 %v10219
    %11377 = vmatpush1.bf16.xpose.msra.mxu0 %v10218
    %11378 = vmatprep.subr.bf16.mxu0 0
    %11379 = vmatpush1.bf16.xpose.msra.mxu0 0
    %11380 = vmatprep.subr.bf16.mxu0 0
    %11381 = vmatpush1.bf16.xpose.msra.mxu0 0
    %11382 = vmatprep.subr.bf16.mxu0 0
    %11383 = vmatpush1.bf16.xpose.msra.mxu0 0
    %11384 = vmatprep.subr.bf16.mxu0 0
    %11385 = vmatpush1.bf16.xpose.msra.mxu0 0
    %11386 = vmatprep.subr.bf16.mxu0 0
    %11387 = vmatpush1.bf16.xpose.msra.mxu0 0
    %11388 = vmatprep.subr.bf16.mxu0 0
    %11389 = vmatpush1.bf16.xpose.msra.mxu0 0
    %11390 = vmatprep.subr.bf16.mxu0 0
    %11391 = vmatpush1.bf16.xpose.msra.mxu0 0
    %11392 = vmatprep.subr.bf16.mxu0 0
    %11393 = vmatpush1.bf16.xpose.msra.mxu0 0
    %11394 = vmatprep.subr.bf16.mxu0 0
    %11395 = vmatpush1.bf16.xpose.msra.mxu0 0
    %11396 = vmatprep.subr.bf16.mxu0 0
    %11397 = vmatpush1.bf16.xpose.msra.mxu0 0
    %11398 = vmatprep.subr.bf16.mxu0 0
    %11399 = vmatpush1.bf16.xpose.msra.mxu0 0
    %11400 = vmatprep.subr.bf16.mxu0 0
    %11401 = vmatpush1.bf16.xpose.msra.mxu0 0
    %11402 = vmatprep.subr.bf16.mxu0 0
    %11403 = vmatpush1.bf16.xpose.msra.mxu0 0
    %11404 = vmatprep.subr.bf16.mxu0 0
    %11405 = vmatpush1.bf16.xpose.msra.mxu0 0
    %11406 = vmatprep.mubr.bf16.mxu0 %v9713
    %11407 = vmatmul.mubr.bf16.gmra.mrb[0].mxu0 %v9699
    %v11408 = vpop.f32.mrb[0].mxu0
    %v11409 = vadd.f32 %v11369, %v11408
    %v11410 = vpop.f32.mrb[0].mxu0
    %v11411 = vpop.f32.mrb[0].mxu0
    %v11412 = vpop.f32.mrb[0].mxu0
    %11413 = vdwg.mxu0
    %11414 = vmatprep.subr.bf16.mxu0 %v10165
    %11415 = vmatpush1.bf16.xpose.msra.mxu0 %v10164
    %11416 = vmatprep.subr.bf16.mxu0 %v10221
    %11417 = vmatpush1.bf16.xpose.msra.mxu0 %v10220
    %11418 = vmatprep.subr.bf16.mxu0 0
    %11419 = vmatpush1.bf16.xpose.msra.mxu0 0
    %11420 = vmatprep.subr.bf16.mxu0 0
    %11421 = vmatpush1.bf16.xpose.msra.mxu0 0
    %11422 = vmatprep.subr.bf16.mxu0 0
    %11423 = vmatpush1.bf16.xpose.msra.mxu0 0
    %11424 = vmatprep.subr.bf16.mxu0 0
    %11425 = vmatpush1.bf16.xpose.msra.mxu0 0
    %11426 = vmatprep.subr.bf16.mxu0 0
    %11427 = vmatpush1.bf16.xpose.msra.mxu0 0
    %11428 = vmatprep.subr.bf16.mxu0 0
    %11429 = vmatpush1.bf16.xpose.msra.mxu0 0
    %11430 = vmatprep.subr.bf16.mxu0 0
    %11431 = vmatpush1.bf16.xpose.msra.mxu0 0
    %11432 = vmatprep.subr.bf16.mxu0 0
    %11433 = vmatpush1.bf16.xpose.msra.mxu0 0
    %11434 = vmatprep.subr.bf16.mxu0 0
    %11435 = vmatpush1.bf16.xpose.msra.mxu0 0
    %11436 = vmatprep.subr.bf16.mxu0 0
    %11437 = vmatpush1.bf16.xpose.msra.mxu0 0
    %11438 = vmatprep.subr.bf16.mxu0 0
    %11439 = vmatpush1.bf16.xpose.msra.mxu0 0
    %11440 = vmatprep.subr.bf16.mxu0 0
    %11441 = vmatpush1.bf16.xpose.msra.mxu0 0
    %11442 = vmatprep.subr.bf16.mxu0 0
    %11443 = vmatpush1.bf16.xpose.msra.mxu0 0
    %11444 = vmatprep.subr.bf16.mxu0 0
    %11445 = vmatpush1.bf16.xpose.msra.mxu0 0
    %11446 = vmatprep.mubr.bf16.mxu0 %v9717
    %11447 = vmatmul.mubr.bf16.gmra.mrb[0].mxu0 %v9715
    %v11448 = vpop.f32.mrb[0].mxu0
    %v11449 = vadd.f32 %v11409, %v11448
    %v11450 = vpop.f32.mrb[0].mxu0
    %v11451 = vpop.f32.mrb[0].mxu0
    %v11452 = vpop.f32.mrb[0].mxu0
    %11453 = vdwg.mxu0
    %v11454 = vmax.f32 %v11449, 0.0
    %v11455 = vld [vmem:[#allocation12] sm:$0xff]
    %v11456 = vld [vmem:[#allocation12 + $0x8] sm:$0xff]
    %v11457 = vld [vmem:[#allocation12 + $0x10] sm:$0xff]
    %v11458 = vld [vmem:[#allocation12 + $0x18] sm:$0x3f]
    %v11459 = vld [vmem:[#allocation14] sm:$0x1]
    %v11461 = vlaneseq
    %v11462 = vshrl.u32 %v11461, 7
    %v11463 = vsub.s32 0, %v11462
    %v11464 = vrot.slane %v11459, %v11463
    %vm11466 = vcmask 244736
    %v11468 = vsel %vm11466, %v11454, 0
    %vm11470 = vcmask 1045504
    %v11472 = vsel %vm11470, %v11458, 0
    %11474 = vmatprep.subr.mxu0 0.0
    %11475 = vmatpush1.msra.mxu0 %v11455
    %11476 = vmatprep.subr.mxu0 0.0
    %11477 = vmatpush1.msra.mxu0 %v11456
    %11478 = vmatprep.subr.mxu0 0.0
    %11479 = vmatpush1.msra.mxu0 %v11457
    %11480 = vmatprep.subr.mxu0 0.0
    %11481 = vmatpush1.msra.mxu0 %v11472
    %11482 = vmatprep.subr.mxu0 0.0
    %11483 = vmatpush1.msra.mxu0 0.0
    %11484 = vmatprep.subr.mxu0 0.0
    %11485 = vmatpush1.msra.mxu0 0.0
    %11486 = vmatprep.subr.mxu0 0.0
    %11487 = vmatpush1.msra.mxu0 0.0
    %11488 = vmatprep.subr.mxu0 0.0
    %11489 = vmatpush1.msra.mxu0 0.0
    %11490 = vmatprep.subr.mxu0 0.0
    %11491 = vmatpush1.msra.mxu0 0.0
    %11492 = vmatprep.subr.mxu0 0.0
    %11493 = vmatpush1.msra.mxu0 0.0
    %11494 = vmatprep.subr.mxu0 0.0
    %11495 = vmatpush1.msra.mxu0 0.0
    %11496 = vmatprep.subr.mxu0 0.0
    %11497 = vmatpush1.msra.mxu0 0.0
    %11498 = vmatprep.subr.mxu0 0.0
    %11499 = vmatpush1.msra.mxu0 0.0
    %11500 = vmatprep.subr.mxu0 0.0
    %11501 = vmatpush1.msra.mxu0 0.0
    %11502 = vmatprep.subr.mxu0 0.0
    %11503 = vmatpush1.msra.mxu0 0.0
    %11504 = vmatprep.subr.mxu0 0.0
    %11505 = vmatpush1.msra.mxu0 0.0
    %11506 = vmatprep.subr.mxu0 0.0
    %11507 = vmatpush1.msra.mxu0 0.0
    %11508 = vmatprep.subr.mxu0 0.0
    %11509 = vmatpush1.msra.mxu0 0.0
    %11510 = vmatprep.subr.mxu0 0.0
    %11511 = vmatpush1.msra.mxu0 0.0
    %11512 = vmatprep.subr.mxu0 0.0
    %11513 = vmatpush1.msra.mxu0 0.0
    %11514 = vmatprep.subr.mxu0 0.0
    %11515 = vmatpush1.msra.mxu0 0.0
    %11516 = vmatprep.subr.mxu0 0.0
    %11517 = vmatpush1.msra.mxu0 0.0
    %11518 = vmatprep.subr.mxu0 0.0
    %11519 = vmatpush1.msra.mxu0 0.0
    %11520 = vmatprep.subr.mxu0 0.0
    %11521 = vmatpush1.msra.mxu0 0.0
    %11522 = vmatprep.subr.mxu0 0.0
    %11523 = vmatpush1.msra.mxu0 0.0
    %11524 = vmatprep.subr.mxu0 0.0
    %11525 = vmatpush1.msra.mxu0 0.0
    %11526 = vmatprep.subr.mxu0 0.0
    %11527 = vmatpush1.msra.mxu0 0.0
    %11528 = vmatprep.subr.mxu0 0.0
    %11529 = vmatpush1.msra.mxu0 0.0
    %11530 = vmatprep.subr.mxu0 0.0
    %11531 = vmatpush1.msra.mxu0 0.0
    %11532 = vmatprep.subr.mxu0 0.0
    %11533 = vmatpush1.msra.mxu0 0.0
    %11534 = vmatprep.subr.mxu0 0.0
    %11535 = vmatpush1.msra.mxu0 0.0
    %11536 = vmatprep.subr.mxu0 0.0
    %11537 = vmatpush1.msra.mxu0 0.0
    %11538 = vmatprep.mubr.f32.mxu0 0.0
    %11539 = vmatmul.mubr.f32.gmra.mrb[0].mxu0 %v11468
    %v11540 = vpop.f32.mrb[0].mxu0
    %v11541 = vadd.f32 %v11464, %v11540
    %v11542 = vpop.f32.mrb[0].mxu0
    %11543 = vdwg.mxu0
    %v11544 = vmax.f32 %v11541, 0.0
    %v11545 = vld [vmem:[#allocation15] sm:$0xff]
    %v11546 = vld [vmem:[#allocation15 + $0x8] sm:$0x3]
    %v11547 = vld [vmem:[#allocation17] sm:$0x1]
    %v11549 = vlaneseq
    %v11550 = vshrl.u32 %v11549, 7
    %v11551 = vsub.s32 0, %v11550
    %v11552 = vrot.slane %v11547, %v11551
    %vm11554 = vcmask 80896
    %v11556 = vsel %vm11554, %v11544, 0
    %vm11558 = vcmask 1041408
    %v11560 = vsel %vm11558, %v11546, 0
    %11562 = vmatprep.subr.mxu0 0.0
    %11563 = vmatpush1.msra.mxu0 %v11545
    %11564 = vmatprep.subr.mxu0 0.0
    %11565 = vmatpush1.msra.mxu0 %v11560
    %11566 = vmatprep.subr.mxu0 0.0
    %11567 = vmatpush1.msra.mxu0 0.0
    %11568 = vmatprep.subr.mxu0 0.0
    %11569 = vmatpush1.msra.mxu0 0.0
    %11570 = vmatprep.subr.mxu0 0.0
    %11571 = vmatpush1.msra.mxu0 0.0
    %11572 = vmatprep.subr.mxu0 0.0
    %11573 = vmatpush1.msra.mxu0 0.0
    %11574 = vmatprep.subr.mxu0 0.0
    %11575 = vmatpush1.msra.mxu0 0.0
    %11576 = vmatprep.subr.mxu0 0.0
    %11577 = vmatpush1.msra.mxu0 0.0
    %11578 = vmatprep.subr.mxu0 0.0
    %11579 = vmatpush1.msra.mxu0 0.0
    %11580 = vmatprep.subr.mxu0 0.0
    %11581 = vmatpush1.msra.mxu0 0.0
    %11582 = vmatprep.subr.mxu0 0.0
    %11583 = vmatpush1.msra.mxu0 0.0
    %11584 = vmatprep.subr.mxu0 0.0
    %11585 = vmatpush1.msra.mxu0 0.0
    %11586 = vmatprep.subr.mxu0 0.0
    %11587 = vmatpush1.msra.mxu0 0.0
    %11588 = vmatprep.subr.mxu0 0.0
    %11589 = vmatpush1.msra.mxu0 0.0
    %11590 = vmatprep.subr.mxu0 0.0
    %11591 = vmatpush1.msra.mxu0 0.0
    %11592 = vmatprep.subr.mxu0 0.0
    %11593 = vmatpush1.msra.mxu0 0.0
    %11594 = vmatprep.subr.mxu0 0.0
    %11595 = vmatpush1.msra.mxu0 0.0
    %11596 = vmatprep.subr.mxu0 0.0
    %11597 = vmatpush1.msra.mxu0 0.0
    %11598 = vmatprep.subr.mxu0 0.0
    %11599 = vmatpush1.msra.mxu0 0.0
    %11600 = vmatprep.subr.mxu0 0.0
    %11601 = vmatpush1.msra.mxu0 0.0
    %11602 = vmatprep.subr.mxu0 0.0
    %11603 = vmatpush1.msra.mxu0 0.0
    %11604 = vmatprep.subr.mxu0 0.0
    %11605 = vmatpush1.msra.mxu0 0.0
    %11606 = vmatprep.subr.mxu0 0.0
    %11607 = vmatpush1.msra.mxu0 0.0
    %11608 = vmatprep.subr.mxu0 0.0
    %11609 = vmatpush1.msra.mxu0 0.0
    %11610 = vmatprep.subr.mxu0 0.0
    %11611 = vmatpush1.msra.mxu0 0.0
    %11612 = vmatprep.subr.mxu0 0.0
    %11613 = vmatpush1.msra.mxu0 0.0
    %11614 = vmatprep.subr.mxu0 0.0
    %11615 = vmatpush1.msra.mxu0 0.0
    %11616 = vmatprep.subr.mxu0 0.0
    %11617 = vmatpush1.msra.mxu0 0.0
    %11618 = vmatprep.subr.mxu0 0.0
    %11619 = vmatpush1.msra.mxu0 0.0
    %11620 = vmatprep.subr.mxu0 0.0
    %11621 = vmatpush1.msra.mxu0 0.0
    %11622 = vmatprep.subr.mxu0 0.0
    %11623 = vmatpush1.msra.mxu0 0.0
    %11624 = vmatprep.subr.mxu0 0.0
    %11625 = vmatpush1.msra.mxu0 0.0
    %11626 = vmatprep.mubr.f32.mxu0 0.0
    %11627 = vmatmul.mubr.f32.gmra.mrb[0].mxu0 %v11556
    %v11628 = vpop.f32.mrb[0].mxu0
    %v11629 = vadd.f32 %v11552, %v11628
    %v11630 = vpop.f32.mrb[0].mxu0
    %11631 = vdwg.mxu0
    %vm11632 = vcmask 74752
    %11633 = vst.msk [vmem:[#allocation18] sm:$0x3] %vm11632, %v11629
    // Predicated region
    $region74: #{class_head_forward.1} parent=1 // pred_check
      _
    $region75: #{class_head_forward.1} parent=1 // pred_check_branch
      %11635 = sbr.rel (0) target = $region77
    $region76: #{class_head_forward.1} parent=1 // pred_region
      %s11637 = ssub.s32 32, 32
      %11638 = vsyncadd [#allocation5], %s11637
      %s11640 = sshll.u32 [#allocation18], 4
      %s11641 = int_to_ptr.vmem [resolvable:$true] %s11640
      %11643 = dma.vmem_to_hbm [thread:$0]  %s11641, 32, %s9, [#allocation5]
    $region77: #{class_head_forward.1} parent=1 // pred_fallthru
      _
    // Predicated region
    $region78: #{class_head_forward.1} parent=1 // pred_check
      _
    $region79: #{class_head_forward.1} parent=1 // pred_check_branch
      %11645 = sbr.rel (0) target = $region81
    $region80: #{class_head_forward.1} parent=1 // pred_region
      %11646 = dma.done [#allocation5], 32
    $region81: #{class_head_forward.1} parent=1 // pred_fallthru
      _
    %11647 = vsyncpa [#allocation4], 1
    %11648 = vsyncpa [#allocation7], 1
    %11649 = vsyncpa [#allocation10], 1
    %11650 = vsyncpa [#allocation13], 1
    %11651 = vsyncpa [#allocation16], 1
    %11652 = vsyncpa [#allocation5], 1

</llo_original>
